<compile_context>
chip_gen: v6e
topology: v6e:2x2x1
jax: 0.10.0
libtpu: 0.0.40
codegen_flags: <defaults>
</compile_context>

<pallas_src>
import functools

import jax
import jax.numpy as jnp
from jax.experimental import pallas as pl
from jax.experimental.pallas import tpu as pltpu

D_IN = 2000
D_HID = 1000
D_HID_PAD = 1024   # 1000 rounded up to a multiple of 128 (padded weight cols / bias are 0)
D_OUT = 128

# ~0.35 us of per-grid-step overhead expressed in "row equivalents" of MXU work; used by
# the tail-aware tile chooser to trade padding waste against step count.
_STEP_OVERHEAD_ROWS = 48


def _round_up(n, m):
    return (n + m - 1) // m * m


def _choose_tile(batch, tm_max):
    """Tail-aware batch-tile selection + >=2-step guarantee for v7x megacore.

    Returns (tm, b_pad) with tm a multiple of 8 and b_pad a multiple of tm.
    """
    b8 = _round_up(max(batch, 1), 8)
    cands = [t for t in (512, 256, 128, 64, 32, 16, 8) if t <= max(tm_max, 8)]

    def score(t):
        b_pad = _round_up(b8, t)
        steps = b_pad // t
        return b_pad + steps * _STEP_OVERHEAD_ROWS

    tm = min(cands, key=score)          # ties resolve to the larger tile (fewer steps)
    b_pad = _round_up(b8, tm)
    # If the whole (padded) batch fits one >=256-row tile, split it in two so the
    # "parallel" grid axis can shard across v7x's two TensorCores.
    if b_pad // tm == 1 and b_pad >= 256:
        tm = b_pad // 2                 # still a multiple of 8 (b_pad in {256, 512})
    return tm, _round_up(b8, tm)


def _mlp_kernel(x_ref, w1_ref, b1_ref, w2_ref, b2_ref, o_ref):
    # fc1: bf16 MXU matmul with f32 accumulation; truncate to bf16 at the dot epilogue so
    # the bias add + ReLU and the fc2 K-operand stay bf16 (halves the h intermediate).
    x = x_ref[...].astype(jnp.bfloat16)                      # no-op if x is already bf16
    h = jnp.dot(x, w1_ref[...], preferred_element_type=jnp.float32).astype(jnp.bfloat16)
    h = jnp.maximum(h + b1_ref[...], 0.0)                    # bf16 bias add + ReLU
    # fc2 + sigmoid in f32 (padded hidden cols/rows are exactly 0 -> no contribution).
    y = jnp.dot(h, w2_ref[...], preferred_element_type=jnp.float32)
    o_ref[...] = jax.nn.sigmoid(y + b2_ref[...]).astype(o_ref.dtype)


@functools.partial(jax.jit, static_argnames=("tm_max",))
def simple_mlp(x, w1_t, b1, w2_t, b2, *, tm_max=512):
    """x: (B, 2000) f32 or bf16 (bf16 halves activation HBM traffic on v6e).
    w1_t: (2000, 1024) bf16; b1: (1, 1024) bf16; w2_t: (1024, 128) bf16; b2: (1, 128) f32
    (as produced by prepare_params).  Returns (B, 128) f32."""
    B = x.shape[0]
    tm, b_pad = _choose_tile(B, tm_max)
    if b_pad != B:
        x = jnp.pad(x, ((0, b_pad - B), (0, 0)))

    bytes_accessed = (
        x.size * x.dtype.itemsize
        + w1_t.size * w1_t.dtype.itemsize
        + b1.size * b1.dtype.itemsize
        + w2_t.size * w2_t.dtype.itemsize
        + b2.size * b2.dtype.itemsize
        + b_pad * D_OUT * 4
    )
    cost = pl.CostEstimate(
        flops=2 * b_pad * (D_IN * D_HID_PAD + D_HID_PAD * D_OUT),
        transcendentals=b_pad * D_OUT,          # sigmoid
        bytes_accessed=bytes_accessed,
    )

    out = pl.pallas_call(
        _mlp_kernel,
        out_shape=jax.ShapeDtypeStruct((b_pad, D_OUT), jnp.float32),
        grid=(b_pad // tm,),
        in_specs=[
            pl.BlockSpec((tm, D_IN), lambda i: (i, 0)),          # streamed activations
            pl.BlockSpec((D_IN, D_HID_PAD), lambda i: (0, 0)),   # VMEM-resident weights
            pl.BlockSpec((1, D_HID_PAD), lambda i: (0, 0)),
            pl.BlockSpec((D_HID_PAD, D_OUT), lambda i: (0, 0)),
            pl.BlockSpec((1, D_OUT), lambda i: (0, 0)),
        ],
        out_specs=pl.BlockSpec((tm, D_OUT), lambda i: (i, 0)),
        compiler_params=pltpu.CompilerParams(
            dimension_semantics=("parallel",),   # megacore sharding of the batch axis
            vmem_limit_bytes=32 << 20,
        ),
        cost_estimate=cost,
    )(x, w1_t, b1, w2_t, b2)

    return out[:B] if b_pad != B else out


def prepare_params(w1, b1, w2, b2):
    """Torch-layout f32 params -> pre-transposed, hidden-padded kernel params.
    w1: (1000, 2000), b1: (1000,), w2: (128, 1000), b2: (128,)."""
    w1_t = (
        jnp.zeros((D_IN, D_HID_PAD), jnp.bfloat16)
        .at[:, :D_HID].set(w1.T.astype(jnp.bfloat16))
    )
    b1_p = jnp.zeros((1, D_HID_PAD), jnp.bfloat16).at[:, :D_HID].set(b1.astype(jnp.bfloat16))
    w2_t = (
        jnp.zeros((D_HID_PAD, D_OUT), jnp.bfloat16)
        .at[:D_HID, :].set(w2.T.astype(jnp.bfloat16))
    )
    b2_p = b2.reshape(1, D_OUT).astype(jnp.float32)
    return w1_t, b1_p, w2_t, b2_p


def _init_params(key):
    # Deterministic init mimicking nn.Linear's U(-1/sqrt(fan_in), 1/sqrt(fan_in)),
    # in torch layout (out_features, in_features).
    k1, k2, k3, k4 = jax.random.split(key, 4)
    lim1 = 1.0 / jnp.sqrt(D_IN)
    lim2 = 1.0 / jnp.sqrt(D_HID)
    w1 = jax.random.uniform(k1, (D_HID, D_IN), jnp.float32, -lim1, lim1)
    b1 = jax.random.uniform(k2, (D_HID,), jnp.float32, -lim1, lim1)
    w2 = jax.random.uniform(k3, (D_OUT, D_HID), jnp.float32, -lim2, lim2)
    b2 = jax.random.uniform(k4, (D_OUT,), jnp.float32, -lim2, lim2)
    return w1, b1, w2, b2


def _reference_bf16(x, w1, b1, w2, b2):
    # Mirrors the kernel numerics: bf16 operands, f32 MXU accumulation, bf16 h/bias/ReLU.
    h = jnp.dot(x.astype(jnp.bfloat16), w1.T.astype(jnp.bfloat16),
                preferred_element_type=jnp.float32).astype(jnp.bfloat16)
    h = jnp.maximum(h + b1.astype(jnp.bfloat16), 0.0)
    y = jnp.dot(h, w2.T.astype(jnp.bfloat16), preferred_element_type=jnp.float32) + b2
    return jax.nn.sigmoid(y)


def _reference_f32(x, w1, b1, w2, b2):
    h = jnp.maximum(x @ w1.T + b1, 0.0)
    return jax.nn.sigmoid(h @ w2.T + b2)


if __name__ == "__main__":
    key = jax.random.PRNGKey(0)
    kx, kp = jax.random.split(key)
    w1, b1, w2, b2 = _init_params(kp)
    w1_t, b1_p, w2_t, b2_p = prepare_params(w1, b1, w2, b2)

    # B=8: single small tile; B=40: exercises the ragged pad-and-slice path (tm=64).
    for B in (8, 40):
        x = jax.random.normal(jax.random.fold_in(kx, B), (B, D_IN), jnp.float32)
        out = jax.block_until_ready(simple_mlp(x, w1_t, b1_p, w2_t, b2_p))
        assert out.shape == (B, D_OUT)

        ref_bf16 = _reference_bf16(x, w1, b1, w2, b2)
        ref_f32 = _reference_f32(x, w1, b1, w2, b2)
        # Tight check vs. a reference with identical bf16/f32 numerics.
        assert jnp.allclose(out, ref_bf16, atol=5e-3, rtol=5e-3), (
            f"B={B} max|diff| vs bf16 ref = {jnp.max(jnp.abs(out - ref_bf16))}")
        # Looser check vs. the full-f32 PyTorch-equivalent forward (bf16 weight rounding).
        assert jnp.allclose(out, ref_f32, atol=2e-2, rtol=2e-2), (
            f"B={B} max|diff| vs f32 ref = {jnp.max(jnp.abs(out - ref_f32))}")

    print("KERNEL_OK")
</pallas_src>

<mosaic_0001>
module attributes {stable_mosaic.version = 11 : i64} {
  func.func @_mlp_kernel(%arg0: i32, %arg1: memref<8x2000xf32, #tpu.memory_space<vmem>>, %arg2: memref<2000x1024xbf16, #tpu.memory_space<vmem>>, %arg3: memref<1x1024xbf16, #tpu.memory_space<vmem>>, %arg4: memref<1024x128xbf16, #tpu.memory_space<vmem>>, %arg5: memref<1x128xf32, #tpu.memory_space<vmem>>, %arg6: memref<8x128xf32, #tpu.memory_space<vmem>>) attributes {dimension_semantics = [#tpu.dimension_semantics<parallel>], iteration_bounds = array<i64: 1>, scalar_prefetch = 0 : i64, scratch_operands = 0 : i64, tpu.core_type = #tpu.core_type<tc>, window_params = [{transform_indices = @transform_0, window_bounds = array<i64: 8, 2000>}, {pipeline_mode = #tpu.pipeline_mode<synchronous>, transform_indices = @transform_1, window_bounds = array<i64: 2000, 1024>}, {pipeline_mode = #tpu.pipeline_mode<synchronous>, transform_indices = @transform_2, window_bounds = array<i64: 1, 1024>}, {pipeline_mode = #tpu.pipeline_mode<synchronous>, transform_indices = @transform_3, window_bounds = array<i64: 1024, 128>}, {pipeline_mode = #tpu.pipeline_mode<synchronous>, transform_indices = @transform_4, window_bounds = array<i64: 1, 128>}, {transform_indices = @transform_5, window_bounds = array<i64: 8, 128>}]} {
    %c0 = arith.constant 0 : index
    %c0_0 = arith.constant 0 : index
    %0 = vector.load %arg1[%c0, %c0_0] : memref<8x2000xf32, #tpu.memory_space<vmem>>, vector<8x2000xf32>
    %1 = arith.truncf %0 : vector<8x2000xf32> to vector<8x2000xbf16>
    %c0_1 = arith.constant 0 : index
    %c0_2 = arith.constant 0 : index
    %2 = vector.load %arg2[%c0_1, %c0_2] : memref<2000x1024xbf16, #tpu.memory_space<vmem>>, vector<2000x1024xbf16>
    %cst = arith.constant dense<0.000000e+00> : vector<8x1024xf32>
    %3 = tpu.matmul %1, %2, %cst {dimension_numbers = #tpu.dot_dimension_numbers<[1], [0], [0], [1], [0, 0, 1, 1], [], []>} : vector<8x2000xbf16>, vector<2000x1024xbf16>, vector<8x1024xf32> -> vector<8x1024xf32>
    %4 = arith.truncf %3 : vector<8x1024xf32> to vector<8x1024xbf16>
    %c0_3 = arith.constant 0 : index
    %c0_4 = arith.constant 0 : index
    %5 = vector.load %arg3[%c0_3, %c0_4] : memref<1x1024xbf16, #tpu.memory_space<vmem>>, vector<1x1024xbf16>
    %6 = vector.broadcast %5 : vector<1x1024xbf16> to vector<8x1024xbf16>
    %7 = arith.addf %4, %6 : vector<8x1024xbf16>
    %cst_5 = arith.constant 0.000000e+00 : bf16
    %8 = vector.broadcast %cst_5 : bf16 to vector<8x1024xbf16>
    %9 = arith.maximumf %7, %8 : vector<8x1024xbf16>
    %c0_6 = arith.constant 0 : index
    %c0_7 = arith.constant 0 : index
    %10 = vector.load %arg4[%c0_6, %c0_7] : memref<1024x128xbf16, #tpu.memory_space<vmem>>, vector<1024x128xbf16>
    %cst_8 = arith.constant dense<0.000000e+00> : vector<8x128xf32>
    %11 = tpu.matmul %9, %10, %cst_8 {dimension_numbers = #tpu.dot_dimension_numbers<[1], [0], [0], [1], [0, 0, 1, 1], [], []>} : vector<8x1024xbf16>, vector<1024x128xbf16>, vector<8x128xf32> -> vector<8x128xf32>
    %c0_9 = arith.constant 0 : index
    %c0_10 = arith.constant 0 : index
    %12 = vector.load %arg5[%c0_9, %c0_10] : memref<1x128xf32, #tpu.memory_space<vmem>>, vector<1x128xf32>
    %13 = vector.broadcast %12 : vector<1x128xf32> to vector<8x128xf32>
    %14 = arith.addf %11, %13 : vector<8x128xf32>
    %15 = arith.negf %14 : vector<8x128xf32>
    %16 = math.exp %15 : vector<8x128xf32>
    %cst_11 = arith.constant 1.000000e+00 : f32
    %17 = vector.broadcast %cst_11 : f32 to vector<8x128xf32>
    %18 = arith.addf %17, %16 : vector<8x128xf32>
    %19 = arith.divf %17, %18 : vector<8x128xf32>
    %c0_12 = arith.constant 0 : index
    %c0_13 = arith.constant 0 : index
    %20 = vector.load %arg6[%c0_12, %c0_13] : memref<8x128xf32, #tpu.memory_space<vmem>>, vector<8x128xf32>
    tpu.vector_store %arg6[%c0_12, %c0_13], %19 {strides = array<i32>} : memref<8x128xf32, #tpu.memory_space<vmem>>, vector<8x128xf32>,
    return
  }
  func.func @transform_0(%arg0: i32) -> (i32, i32) {
    %c0_i32 = arith.constant 0 : i32
    %c0_i32_0 = arith.constant 0 : i32
    return %arg0, %c0_i32 : i32, i32
  }
  func.func @transform_1(%arg0: i32) -> (i32, i32) {
    %c0_i32 = arith.constant 0 : i32
    %c0_i32_0 = arith.constant 0 : i32
    %c0_i32_1 = arith.constant 0 : i32
    return %c0_i32, %c0_i32_0 : i32, i32
  }
  func.func @transform_2(%arg0: i32) -> (i32, i32) {
    %c0_i32 = arith.constant 0 : i32
    %c0_i32_0 = arith.constant 0 : i32
    %c0_i32_1 = arith.constant 0 : i32
    return %c0_i32, %c0_i32_0 : i32, i32
  }
  func.func @transform_3(%arg0: i32) -> (i32, i32) {
    %c0_i32 = arith.constant 0 : i32
    %c0_i32_0 = arith.constant 0 : i32
    %c0_i32_1 = arith.constant 0 : i32
    return %c0_i32, %c0_i32_0 : i32, i32
  }
  func.func @transform_4(%arg0: i32) -> (i32, i32) {
    %c0_i32 = arith.constant 0 : i32
    %c0_i32_0 = arith.constant 0 : i32
    %c0_i32_1 = arith.constant 0 : i32
    return %c0_i32, %c0_i32_0 : i32, i32
  }
  func.func @transform_5(%arg0: i32) -> (i32, i32) {
    %c0_i32 = arith.constant 0 : i32
    %c0_i32_0 = arith.constant 0 : i32
    return %arg0, %c0_i32 : i32, i32
  }
}

</mosaic_0001>

<llo_original>
// kernel: simple_mlp.1
$region0: #{simple_mlp.1}
  #allocation0 [shape = 'u32[]', space=smem, size = 0x4, offset = 0x4, fixed_abs, tag = 'smem constant byte address 0x4 - core index']
  #allocation1 [shape = 'u32[144,128]{1,0:T(1,128)}', space=vmem, size = 0x12000, scoped, tag = 'internal scratch']
  %s0 = inlined_call_operand.hbm [shape: f32[8,2000], index: 0, kind: input, shape index: {}]
  %s1 = inlined_call_operand.hbm [shape: bf16[2000,1024], index: 1, kind: input, shape index: {}]
  %s2 = inlined_call_operand.hbm [shape: bf16[1,1024], index: 2, kind: input, shape index: {}]
  %s3 = inlined_call_operand.hbm [shape: bf16[1024,128], index: 3, kind: input, shape index: {}]
  %s4 = inlined_call_operand.hbm [shape: f32[1,128], index: 4, kind: input, shape index: {}]
  %s5 = inlined_call_operand.hbm [shape: f32[8,128], index: 5, kind: output, shape index: {}]
  %s6 = sld [smem:[#allocation0]]
  $region50: #{simple_mlp.1} parent=0
    _
  %s8 = ssub.s32 1, %s6
  %s9 = scalar_select 0, %s8, %s6
  $region1: #{simple_mlp.1} parent=0
    #allocation2 [shape = 'u8[65536]{0}', space=vmem, size = 0x10000, scoped, tag = 'input window, operand 0, single buffered']
    #allocation3 [shape = 's32[1]{0}', space=sflag, size = 0x4, scoped, tag = 'scoped memory for simple_mlp.1']
    #allocation4 [shape = 's32[1]{0}', space=sflag, size = 0x4, scoped, tag = 'scoped memory for simple_mlp.1']
    #allocation5 [shape = 'u8[4096000]{0}', space=vmem, size = 0x3e8000, scoped, tag = 'input window, operand 1, single buffered']
    #allocation6 [shape = 's32[1]{0}', space=sflag, size = 0x4, scoped, tag = 'scoped memory for simple_mlp.1']
    #allocation7 [shape = 'u8[4096]{0}', space=vmem, size = 0x1000, scoped, tag = 'input window, operand 2, single buffered']
    #allocation8 [shape = 'u8[262144]{0}', space=vmem, size = 0x40000, scoped, tag = 'input window, operand 3, single buffered']
    #allocation9 [shape = 's32[1]{0}', space=sflag, size = 0x4, scoped, tag = 'scoped memory for simple_mlp.1']
    #allocation10 [shape = 'u8[512]{0}', space=vmem, size = 0x400, scoped, tag = 'input window, operand 4, single buffered']
    #allocation11 [shape = 'u8[4096]{0}', space=vmem, size = 0x1000, scoped, tag = 'output window, operand 0, single buffered']
    %10 = vsyncpa [#allocation3], 0
    %11 = vsyncpa [#allocation6], 0
    %12 = vsyncpa [#allocation9], 0
    %13 = vsyncpa [#allocation4], 0
    // Predicated region
    $region2: #{simple_mlp.1} parent=1 // pred_check
      _
    $region3: #{simple_mlp.1} parent=1 // pred_check_branch
      %15 = sbr.rel (0) target = $region5
    $region4: #{simple_mlp.1} parent=1 // pred_region
      %s17 = ssub.s32 2048, 2048
      %18 = vsyncadd [#allocation3], %s17
      %s20 = sshll.u32 [#allocation2], 4
      %s21 = int_to_ptr.vmem [resolvable:$true] %s20
      %23 = dma.hbm_to_vmem [thread:$0]  %s0, 2048, %s21, [#allocation3]
    $region5: #{simple_mlp.1} parent=1 // pred_fallthru
      _
    // Predicated region
    $region6: #{simple_mlp.1} parent=1 // pred_check
      _
    $region7: #{simple_mlp.1} parent=1 // pred_check_branch
      %25 = sbr.rel (0) target = $region9
    $region8: #{simple_mlp.1} parent=1 // pred_region
      %s27 = ssub.s32 128000, 128000
      %28 = vsyncadd [#allocation6], %s27
      %s29 = sshll.u32 [#allocation5], 4
      %s30 = int_to_ptr.vmem [resolvable:$true] %s29
      %35 = dma.hbm_to_vmem [thread:$0]  %s1, 128000, %s30, [#allocation6], 512, 512, 32
    $region9: #{simple_mlp.1} parent=1 // pred_fallthru
      _
    // Predicated region
    $region10: #{simple_mlp.1} parent=1 // pred_check
      _
    $region11: #{simple_mlp.1} parent=1 // pred_check_branch
      %37 = sbr.rel (0) target = $region13
    $region12: #{simple_mlp.1} parent=1 // pred_region
      %s39 = ssub.s32 128, 128
      %40 = vsyncadd [#allocation6], %s39
      %s42 = sshll.u32 [#allocation7], 4
      %s43 = int_to_ptr.vmem [resolvable:$true] %s42
      %45 = dma.hbm_to_vmem [thread:$0]  %s2, 128, %s43, [#allocation6]
    $region13: #{simple_mlp.1} parent=1 // pred_fallthru
      _
    // Predicated region
    $region14: #{simple_mlp.1} parent=1 // pred_check
      _
    $region15: #{simple_mlp.1} parent=1 // pred_check_branch
      %47 = sbr.rel (0) target = $region17
    $region16: #{simple_mlp.1} parent=1 // pred_region
      %s49 = ssub.s32 8192, 8192
      %50 = vsyncadd [#allocation9], %s49
      %s51 = sshll.u32 [#allocation8], 4
      %s52 = int_to_ptr.vmem [resolvable:$true] %s51
      %57 = dma.hbm_to_vmem [thread:$0]  %s3, 8192, %s52, [#allocation9], 64, 64, 4
    $region17: #{simple_mlp.1} parent=1 // pred_fallthru
      _
    // Predicated region
    $region18: #{simple_mlp.1} parent=1 // pred_check
      _
    $region19: #{simple_mlp.1} parent=1 // pred_check_branch
      %59 = sbr.rel (0) target = $region21
    $region20: #{simple_mlp.1} parent=1 // pred_region
      %s61 = ssub.s32 16, 16
      %62 = vsyncadd [#allocation9], %s61
      %s64 = sshll.u32 [#allocation10], 4
      %s65 = int_to_ptr.vmem [resolvable:$true] %s64
      %67 = dma.hbm_to_vmem [thread:$0]  %s4, 16, %s65, [#allocation9]
    $region21: #{simple_mlp.1} parent=1 // pred_fallthru
      _
    // Predicated region
    $region22: #{simple_mlp.1} parent=1 // pred_check
      _
    $region23: #{simple_mlp.1} parent=1 // pred_check_branch
      %69 = sbr.rel (0) target = $region25
    $region24: #{simple_mlp.1} parent=1 // pred_region
      %70 = dma.done [#allocation3], 2048
    $region25: #{simple_mlp.1} parent=1 // pred_fallthru
      _
    // Predicated region
    $region26: #{simple_mlp.1} parent=1 // pred_check
      _
    $region27: #{simple_mlp.1} parent=1 // pred_check_branch
      %72 = sbr.rel (0) target = $region29
    $region28: #{simple_mlp.1} parent=1 // pred_region
      %73 = dma.done [#allocation6], 128000
    $region29: #{simple_mlp.1} parent=1 // pred_fallthru
      _
    // Predicated region
    $region30: #{simple_mlp.1} parent=1 // pred_check
      _
    $region31: #{simple_mlp.1} parent=1 // pred_check_branch
      %75 = sbr.rel (0) target = $region33
    $region32: #{simple_mlp.1} parent=1 // pred_region
      %76 = dma.done [#allocation6], 128
    $region33: #{simple_mlp.1} parent=1 // pred_fallthru
      _
    // Predicated region
    $region34: #{simple_mlp.1} parent=1 // pred_check
      _
    $region35: #{simple_mlp.1} parent=1 // pred_check_branch
      %78 = sbr.rel (0) target = $region37
    $region36: #{simple_mlp.1} parent=1 // pred_region
      %79 = dma.done [#allocation9], 8192
    $region37: #{simple_mlp.1} parent=1 // pred_fallthru
      _
    // Predicated region
    $region38: #{simple_mlp.1} parent=1 // pred_check
      _
    $region39: #{simple_mlp.1} parent=1 // pred_check_branch
      %81 = sbr.rel (0) target = $region41
    $region40: #{simple_mlp.1} parent=1 // pred_region
      %82 = dma.done [#allocation9], 16
    $region41: #{simple_mlp.1} parent=1 // pred_fallthru
      _
    %v84 = vld [vmem:[#allocation2] sm:$0xff]
    %v85 = vld [vmem:[#allocation2 + $0x8] sm:$0xff]
    %v86 = vld [vmem:[#allocation2 + $0x10] sm:$0xff]
    %v87 = vld [vmem:[#allocation2 + $0x18] sm:$0xff]
    %v88 = vld [vmem:[#allocation2 + $0x20] sm:$0xff]
    %v89 = vld [vmem:[#allocation2 + $0x28] sm:$0xff]
    %v90 = vld [vmem:[#allocation2 + $0x30] sm:$0xff]
    %v91 = vld [vmem:[#allocation2 + $0x38] sm:$0xff]
    %v92 = vld [vmem:[#allocation2 + $0x40] sm:$0xff]
    %v93 = vld [vmem:[#allocation2 + $0x48] sm:$0xff]
    %v94 = vld [vmem:[#allocation2 + $0x50] sm:$0xff]
    %v95 = vld [vmem:[#allocation2 + $0x58] sm:$0xff]
    %v96 = vld [vmem:[#allocation2 + $0x60] sm:$0xff]
    %v97 = vld [vmem:[#allocation2 + $0x68] sm:$0xff]
    %v98 = vld [vmem:[#allocation2 + $0x70] sm:$0xff]
    %v99 = vld [vmem:[#allocation2 + $0x78] sm:$0xff]
    %v100 = vpack.c.bf16 %v84, %v84
    %v101 = vpack.c.bf16 %v85, %v85
    %v102 = vpack.c.bf16 %v86, %v86
    %v103 = vpack.c.bf16 %v87, %v87
    %v104 = vpack.c.bf16 %v88, %v88
    %v105 = vpack.c.bf16 %v89, %v89
    %v106 = vpack.c.bf16 %v90, %v90
    %v107 = vpack.c.bf16 %v91, %v91
    %v108 = vpack.c.bf16 %v92, %v92
    %v109 = vpack.c.bf16 %v93, %v93
    %v110 = vpack.c.bf16 %v94, %v94
    %v111 = vpack.c.bf16 %v95, %v95
    %v112 = vpack.c.bf16 %v96, %v96
    %v113 = vpack.c.bf16 %v97, %v97
    %v114 = vpack.c.bf16 %v98, %v98
    %v115 = vpack.c.bf16 %v99, %v99
    %v116 = vld [vmem:[#allocation5] sm:$0xff]
    %v117 = vld [vmem:[#allocation5 + $0x8] sm:$0xff]
    %v118 = vld [vmem:[#allocation5 + $0x10] sm:$0xff]
    %v119 = vld [vmem:[#allocation5 + $0x18] sm:$0xff]
    %v120 = vld [vmem:[#allocation5 + $0x20] sm:$0xff]
    %v121 = vld [vmem:[#allocation5 + $0x28] sm:$0xff]
    %v122 = vld [vmem:[#allocation5 + $0x30] sm:$0xff]
    %v123 = vld [vmem:[#allocation5 + $0x38] sm:$0xff]
    %v124 = vld [vmem:[#allocation5 + $0x40] sm:$0xff]
    %v125 = vld [vmem:[#allocation5 + $0x48] sm:$0xff]
    %v126 = vld [vmem:[#allocation5 + $0x50] sm:$0xff]
    %v127 = vld [vmem:[#allocation5 + $0x58] sm:$0xff]
    %v128 = vld [vmem:[#allocation5 + $0x60] sm:$0xff]
    %v129 = vld [vmem:[#allocation5 + $0x68] sm:$0xff]
    %v130 = vld [vmem:[#allocation5 + $0x70] sm:$0xff]
    %v131 = vld [vmem:[#allocation5 + $0x78] sm:$0xff]
    %v132 = vld [vmem:[#allocation5 + $0x80] sm:$0xff]
    %v133 = vld [vmem:[#allocation5 + $0x88] sm:$0xff]
    %v134 = vld [vmem:[#allocation5 + $0x90] sm:$0xff]
    %v135 = vld [vmem:[#allocation5 + $0x98] sm:$0xff]
    %v136 = vld [vmem:[#allocation5 + $0xa0] sm:$0xff]
    %v137 = vld [vmem:[#allocation5 + $0xa8] sm:$0xff]
    %v138 = vld [vmem:[#allocation5 + $0xb0] sm:$0xff]
    %v139 = vld [vmem:[#allocation5 + $0xb8] sm:$0xff]
    %v140 = vld [vmem:[#allocation5 + $0xc0] sm:$0xff]
    %v141 = vld [vmem:[#allocation5 + $0xc8] sm:$0xff]
    %v142 = vld [vmem:[#allocation5 + $0xd0] sm:$0xff]
    %v143 = vld [vmem:[#allocation5 + $0xd8] sm:$0xff]
    %v144 = vld [vmem:[#allocation5 + $0xe0] sm:$0xff]
    %v145 = vld [vmem:[#allocation5 + $0xe8] sm:$0xff]
    %v146 = vld [vmem:[#allocation5 + $0xf0] sm:$0xff]
    %v147 = vld [vmem:[#allocation5 + $0xf8] sm:$0xff]
    %v148 = vld [vmem:[#allocation5 + $0x100] sm:$0xff]
    %v149 = vld [vmem:[#allocation5 + $0x108] sm:$0xff]
    %v150 = vld [vmem:[#allocation5 + $0x110] sm:$0xff]
    %v151 = vld [vmem:[#allocation5 + $0x118] sm:$0xff]
    %v152 = vld [vmem:[#allocation5 + $0x120] sm:$0xff]
    %v153 = vld [vmem:[#allocation5 + $0x128] sm:$0xff]
    %v154 = vld [vmem:[#allocation5 + $0x130] sm:$0xff]
    %v155 = vld [vmem:[#allocation5 + $0x138] sm:$0xff]
    %v156 = vld [vmem:[#allocation5 + $0x140] sm:$0xff]
    %v157 = vld [vmem:[#allocation5 + $0x148] sm:$0xff]
    %v158 = vld [vmem:[#allocation5 + $0x150] sm:$0xff]
    %v159 = vld [vmem:[#allocation5 + $0x158] sm:$0xff]
    %v160 = vld [vmem:[#allocation5 + $0x160] sm:$0xff]
    %v161 = vld [vmem:[#allocation5 + $0x168] sm:$0xff]
    %v162 = vld [vmem:[#allocation5 + $0x170] sm:$0xff]
    %v163 = vld [vmem:[#allocation5 + $0x178] sm:$0xff]
    %v164 = vld [vmem:[#allocation5 + $0x180] sm:$0xff]
    %v165 = vld [vmem:[#allocation5 + $0x188] sm:$0xff]
    %v166 = vld [vmem:[#allocation5 + $0x190] sm:$0xff]
    %v167 = vld [vmem:[#allocation5 + $0x198] sm:$0xff]
    %v168 = vld [vmem:[#allocation5 + $0x1a0] sm:$0xff]
    %v169 = vld [vmem:[#allocation5 + $0x1a8] sm:$0xff]
    %v170 = vld [vmem:[#allocation5 + $0x1b0] sm:$0xff]
    %v171 = vld [vmem:[#allocation5 + $0x1b8] sm:$0xff]
    %v172 = vld [vmem:[#allocation5 + $0x1c0] sm:$0xff]
    %v173 = vld [vmem:[#allocation5 + $0x1c8] sm:$0xff]
    %v174 = vld [vmem:[#allocation5 + $0x1d0] sm:$0xff]
    %v175 = vld [vmem:[#allocation5 + $0x1d8] sm:$0xff]
    %v176 = vld [vmem:[#allocation5 + $0x1e0] sm:$0xff]
    %v177 = vld [vmem:[#allocation5 + $0x1e8] sm:$0xff]
    %v178 = vld [vmem:[#allocation5 + $0x1f0] sm:$0xff]
    %v179 = vld [vmem:[#allocation5 + $0x1f8] sm:$0xff]
    %v180 = vld [vmem:[#allocation5 + $0x200] sm:$0xff]
    %v181 = vld [vmem:[#allocation5 + $0x208] sm:$0xff]
    %v182 = vld [vmem:[#allocation5 + $0x210] sm:$0xff]
    %v183 = vld [vmem:[#allocation5 + $0x218] sm:$0xff]
    %v184 = vld [vmem:[#allocation5 + $0x220] sm:$0xff]
    %v185 = vld [vmem:[#allocation5 + $0x228] sm:$0xff]
    %v186 = vld [vmem:[#allocation5 + $0x230] sm:$0xff]
    %v187 = vld [vmem:[#allocation5 + $0x238] sm:$0xff]
    %v188 = vld [vmem:[#allocation5 + $0x240] sm:$0xff]
    %v189 = vld [vmem:[#allocation5 + $0x248] sm:$0xff]
    %v190 = vld [vmem:[#allocation5 + $0x250] sm:$0xff]
    %v191 = vld [vmem:[#allocation5 + $0x258] sm:$0xff]
    %v192 = vld [vmem:[#allocation5 + $0x260] sm:$0xff]
    %v193 = vld [vmem:[#allocation5 + $0x268] sm:$0xff]
    %v194 = vld [vmem:[#allocation5 + $0x270] sm:$0xff]
    %v195 = vld [vmem:[#allocation5 + $0x278] sm:$0xff]
    %v196 = vld [vmem:[#allocation5 + $0x280] sm:$0xff]
    %v197 = vld [vmem:[#allocation5 + $0x288] sm:$0xff]
    %v198 = vld [vmem:[#allocation5 + $0x290] sm:$0xff]
    %v199 = vld [vmem:[#allocation5 + $0x298] sm:$0xff]
    %v200 = vld [vmem:[#allocation5 + $0x2a0] sm:$0xff]
    %v201 = vld [vmem:[#allocation5 + $0x2a8] sm:$0xff]
    %v202 = vld [vmem:[#allocation5 + $0x2b0] sm:$0xff]
    %v203 = vld [vmem:[#allocation5 + $0x2b8] sm:$0xff]
    %v204 = vld [vmem:[#allocation5 + $0x2c0] sm:$0xff]
    %v205 = vld [vmem:[#allocation5 + $0x2c8] sm:$0xff]
    %v206 = vld [vmem:[#allocation5 + $0x2d0] sm:$0xff]
    %v207 = vld [vmem:[#allocation5 + $0x2d8] sm:$0xff]
    %v208 = vld [vmem:[#allocation5 + $0x2e0] sm:$0xff]
    %v209 = vld [vmem:[#allocation5 + $0x2e8] sm:$0xff]
    %v210 = vld [vmem:[#allocation5 + $0x2f0] sm:$0xff]
    %v211 = vld [vmem:[#allocation5 + $0x2f8] sm:$0xff]
    %v212 = vld [vmem:[#allocation5 + $0x300] sm:$0xff]
    %v213 = vld [vmem:[#allocation5 + $0x308] sm:$0xff]
    %v214 = vld [vmem:[#allocation5 + $0x310] sm:$0xff]
    %v215 = vld [vmem:[#allocation5 + $0x318] sm:$0xff]
    %v216 = vld [vmem:[#allocation5 + $0x320] sm:$0xff]
    %v217 = vld [vmem:[#allocation5 + $0x328] sm:$0xff]
    %v218 = vld [vmem:[#allocation5 + $0x330] sm:$0xff]
    %v219 = vld [vmem:[#allocation5 + $0x338] sm:$0xff]
    %v220 = vld [vmem:[#allocation5 + $0x340] sm:$0xff]
    %v221 = vld [vmem:[#allocation5 + $0x348] sm:$0xff]
    %v222 = vld [vmem:[#allocation5 + $0x350] sm:$0xff]
    %v223 = vld [vmem:[#allocation5 + $0x358] sm:$0xff]
    %v224 = vld [vmem:[#allocation5 + $0x360] sm:$0xff]
    %v225 = vld [vmem:[#allocation5 + $0x368] sm:$0xff]
    %v226 = vld [vmem:[#allocation5 + $0x370] sm:$0xff]
    %v227 = vld [vmem:[#allocation5 + $0x378] sm:$0xff]
    %v228 = vld [vmem:[#allocation5 + $0x380] sm:$0xff]
    %v229 = vld [vmem:[#allocation5 + $0x388] sm:$0xff]
    %v230 = vld [vmem:[#allocation5 + $0x390] sm:$0xff]
    %v231 = vld [vmem:[#allocation5 + $0x398] sm:$0xff]
    %v232 = vld [vmem:[#allocation5 + $0x3a0] sm:$0xff]
    %v233 = vld [vmem:[#allocation5 + $0x3a8] sm:$0xff]
    %v234 = vld [vmem:[#allocation5 + $0x3b0] sm:$0xff]
    %v235 = vld [vmem:[#allocation5 + $0x3b8] sm:$0xff]
    %v236 = vld [vmem:[#allocation5 + $0x3c0] sm:$0xff]
    %v237 = vld [vmem:[#allocation5 + $0x3c8] sm:$0xff]
    %v238 = vld [vmem:[#allocation5 + $0x3d0] sm:$0xff]
    %v239 = vld [vmem:[#allocation5 + $0x3d8] sm:$0xff]
    %v240 = vld [vmem:[#allocation5 + $0x3e0] sm:$0xff]
    %v241 = vld [vmem:[#allocation5 + $0x3e8] sm:$0xff]
    %v242 = vld [vmem:[#allocation5 + $0x3f0] sm:$0xff]
    %v243 = vld [vmem:[#allocation5 + $0x3f8] sm:$0xff]
    %v244 = vld [vmem:[#allocation5 + $0x400] sm:$0xff]
    %v245 = vld [vmem:[#allocation5 + $0x408] sm:$0xff]
    %v246 = vld [vmem:[#allocation5 + $0x410] sm:$0xff]
    %v247 = vld [vmem:[#allocation5 + $0x418] sm:$0xff]
    %v248 = vld [vmem:[#allocation5 + $0x420] sm:$0xff]
    %v249 = vld [vmem:[#allocation5 + $0x428] sm:$0xff]
    %v250 = vld [vmem:[#allocation5 + $0x430] sm:$0xff]
    %v251 = vld [vmem:[#allocation5 + $0x438] sm:$0xff]
    %v252 = vld [vmem:[#allocation5 + $0x440] sm:$0xff]
    %v253 = vld [vmem:[#allocation5 + $0x448] sm:$0xff]
    %v254 = vld [vmem:[#allocation5 + $0x450] sm:$0xff]
    %v255 = vld [vmem:[#allocation5 + $0x458] sm:$0xff]
    %v256 = vld [vmem:[#allocation5 + $0x460] sm:$0xff]
    %v257 = vld [vmem:[#allocation5 + $0x468] sm:$0xff]
    %v258 = vld [vmem:[#allocation5 + $0x470] sm:$0xff]
    %v259 = vld [vmem:[#allocation5 + $0x478] sm:$0xff]
    %v260 = vld [vmem:[#allocation5 + $0x480] sm:$0xff]
    %v261 = vld [vmem:[#allocation5 + $0x488] sm:$0xff]
    %v262 = vld [vmem:[#allocation5 + $0x490] sm:$0xff]
    %v263 = vld [vmem:[#allocation5 + $0x498] sm:$0xff]
    %v264 = vld [vmem:[#allocation5 + $0x4a0] sm:$0xff]
    %v265 = vld [vmem:[#allocation5 + $0x4a8] sm:$0xff]
    %v266 = vld [vmem:[#allocation5 + $0x4b0] sm:$0xff]
    %v267 = vld [vmem:[#allocation5 + $0x4b8] sm:$0xff]
    %v268 = vld [vmem:[#allocation5 + $0x4c0] sm:$0xff]
    %v269 = vld [vmem:[#allocation5 + $0x4c8] sm:$0xff]
    %v270 = vld [vmem:[#allocation5 + $0x4d0] sm:$0xff]
    %v271 = vld [vmem:[#allocation5 + $0x4d8] sm:$0xff]
    %v272 = vld [vmem:[#allocation5 + $0x4e0] sm:$0xff]
    %v273 = vld [vmem:[#allocation5 + $0x4e8] sm:$0xff]
    %v274 = vld [vmem:[#allocation5 + $0x4f0] sm:$0xff]
    %v275 = vld [vmem:[#allocation5 + $0x4f8] sm:$0xff]
    %v276 = vld [vmem:[#allocation5 + $0x500] sm:$0xff]
    %v277 = vld [vmem:[#allocation5 + $0x508] sm:$0xff]
    %v278 = vld [vmem:[#allocation5 + $0x510] sm:$0xff]
    %v279 = vld [vmem:[#allocation5 + $0x518] sm:$0xff]
    %v280 = vld [vmem:[#allocation5 + $0x520] sm:$0xff]
    %v281 = vld [vmem:[#allocation5 + $0x528] sm:$0xff]
    %v282 = vld [vmem:[#allocation5 + $0x530] sm:$0xff]
    %v283 = vld [vmem:[#allocation5 + $0x538] sm:$0xff]
    %v284 = vld [vmem:[#allocation5 + $0x540] sm:$0xff]
    %v285 = vld [vmem:[#allocation5 + $0x548] sm:$0xff]
    %v286 = vld [vmem:[#allocation5 + $0x550] sm:$0xff]
    %v287 = vld [vmem:[#allocation5 + $0x558] sm:$0xff]
    %v288 = vld [vmem:[#allocation5 + $0x560] sm:$0xff]
    %v289 = vld [vmem:[#allocation5 + $0x568] sm:$0xff]
    %v290 = vld [vmem:[#allocation5 + $0x570] sm:$0xff]
    %v291 = vld [vmem:[#allocation5 + $0x578] sm:$0xff]
    %v292 = vld [vmem:[#allocation5 + $0x580] sm:$0xff]
    %v293 = vld [vmem:[#allocation5 + $0x588] sm:$0xff]
    %v294 = vld [vmem:[#allocation5 + $0x590] sm:$0xff]
    %v295 = vld [vmem:[#allocation5 + $0x598] sm:$0xff]
    %v296 = vld [vmem:[#allocation5 + $0x5a0] sm:$0xff]
    %v297 = vld [vmem:[#allocation5 + $0x5a8] sm:$0xff]
    %v298 = vld [vmem:[#allocation5 + $0x5b0] sm:$0xff]
    %v299 = vld [vmem:[#allocation5 + $0x5b8] sm:$0xff]
    %v300 = vld [vmem:[#allocation5 + $0x5c0] sm:$0xff]
    %v301 = vld [vmem:[#allocation5 + $0x5c8] sm:$0xff]
    %v302 = vld [vmem:[#allocation5 + $0x5d0] sm:$0xff]
    %v303 = vld [vmem:[#allocation5 + $0x5d8] sm:$0xff]
    %v304 = vld [vmem:[#allocation5 + $0x5e0] sm:$0xff]
    %v305 = vld [vmem:[#allocation5 + $0x5e8] sm:$0xff]
    %v306 = vld [vmem:[#allocation5 + $0x5f0] sm:$0xff]
    %v307 = vld [vmem:[#allocation5 + $0x5f8] sm:$0xff]
    %v308 = vld [vmem:[#allocation5 + $0x600] sm:$0xff]
    %v309 = vld [vmem:[#allocation5 + $0x608] sm:$0xff]
    %v310 = vld [vmem:[#allocation5 + $0x610] sm:$0xff]
    %v311 = vld [vmem:[#allocation5 + $0x618] sm:$0xff]
    %v312 = vld [vmem:[#allocation5 + $0x620] sm:$0xff]
    %v313 = vld [vmem:[#allocation5 + $0x628] sm:$0xff]
    %v314 = vld [vmem:[#allocation5 + $0x630] sm:$0xff]
    %v315 = vld [vmem:[#allocation5 + $0x638] sm:$0xff]
    %v316 = vld [vmem:[#allocation5 + $0x640] sm:$0xff]
    %v317 = vld [vmem:[#allocation5 + $0x648] sm:$0xff]
    %v318 = vld [vmem:[#allocation5 + $0x650] sm:$0xff]
    %v319 = vld [vmem:[#allocation5 + $0x658] sm:$0xff]
    %v320 = vld [vmem:[#allocation5 + $0x660] sm:$0xff]
    %v321 = vld [vmem:[#allocation5 + $0x668] sm:$0xff]
    %v322 = vld [vmem:[#allocation5 + $0x670] sm:$0xff]
    %v323 = vld [vmem:[#allocation5 + $0x678] sm:$0xff]
    %v324 = vld [vmem:[#allocation5 + $0x680] sm:$0xff]
    %v325 = vld [vmem:[#allocation5 + $0x688] sm:$0xff]
    %v326 = vld [vmem:[#allocation5 + $0x690] sm:$0xff]
    %v327 = vld [vmem:[#allocation5 + $0x698] sm:$0xff]
    %v328 = vld [vmem:[#allocation5 + $0x6a0] sm:$0xff]
    %v329 = vld [vmem:[#allocation5 + $0x6a8] sm:$0xff]
    %v330 = vld [vmem:[#allocation5 + $0x6b0] sm:$0xff]
    %v331 = vld [vmem:[#allocation5 + $0x6b8] sm:$0xff]
    %v332 = vld [vmem:[#allocation5 + $0x6c0] sm:$0xff]
    %v333 = vld [vmem:[#allocation5 + $0x6c8] sm:$0xff]
    %v334 = vld [vmem:[#allocation5 + $0x6d0] sm:$0xff]
    %v335 = vld [vmem:[#allocation5 + $0x6d8] sm:$0xff]
    %v336 = vld [vmem:[#allocation5 + $0x6e0] sm:$0xff]
    %v337 = vld [vmem:[#allocation5 + $0x6e8] sm:$0xff]
    %v338 = vld [vmem:[#allocation5 + $0x6f0] sm:$0xff]
    %v339 = vld [vmem:[#allocation5 + $0x6f8] sm:$0xff]
    %v340 = vld [vmem:[#allocation5 + $0x700] sm:$0xff]
    %v341 = vld [vmem:[#allocation5 + $0x708] sm:$0xff]
    %v342 = vld [vmem:[#allocation5 + $0x710] sm:$0xff]
    %v343 = vld [vmem:[#allocation5 + $0x718] sm:$0xff]
    %v344 = vld [vmem:[#allocation5 + $0x720] sm:$0xff]
    %v345 = vld [vmem:[#allocation5 + $0x728] sm:$0xff]
    %v346 = vld [vmem:[#allocation5 + $0x730] sm:$0xff]
    %v347 = vld [vmem:[#allocation5 + $0x738] sm:$0xff]
    %v348 = vld [vmem:[#allocation5 + $0x740] sm:$0xff]
    %v349 = vld [vmem:[#allocation5 + $0x748] sm:$0xff]
    %v350 = vld [vmem:[#allocation5 + $0x750] sm:$0xff]
    %v351 = vld [vmem:[#allocation5 + $0x758] sm:$0xff]
    %v352 = vld [vmem:[#allocation5 + $0x760] sm:$0xff]
    %v353 = vld [vmem:[#allocation5 + $0x768] sm:$0xff]
    %v354 = vld [vmem:[#allocation5 + $0x770] sm:$0xff]
    %v355 = vld [vmem:[#allocation5 + $0x778] sm:$0xff]
    %v356 = vld [vmem:[#allocation5 + $0x780] sm:$0xff]
    %v357 = vld [vmem:[#allocation5 + $0x788] sm:$0xff]
    %v358 = vld [vmem:[#allocation5 + $0x790] sm:$0xff]
    %v359 = vld [vmem:[#allocation5 + $0x798] sm:$0xff]
    %v360 = vld [vmem:[#allocation5 + $0x7a0] sm:$0xff]
    %v361 = vld [vmem:[#allocation5 + $0x7a8] sm:$0xff]
    %v362 = vld [vmem:[#allocation5 + $0x7b0] sm:$0xff]
    %v363 = vld [vmem:[#allocation5 + $0x7b8] sm:$0xff]
    %v364 = vld [vmem:[#allocation5 + $0x7c0] sm:$0xff]
    %v365 = vld [vmem:[#allocation5 + $0x7c8] sm:$0xff]
    %v366 = vld [vmem:[#allocation5 + $0x7d0] sm:$0xff]
    %v367 = vld [vmem:[#allocation5 + $0x7d8] sm:$0xff]
    %v368 = vld [vmem:[#allocation5 + $0x7e0] sm:$0xff]
    %v369 = vld [vmem:[#allocation5 + $0x7e8] sm:$0xff]
    %v370 = vld [vmem:[#allocation5 + $0x7f0] sm:$0xff]
    %v371 = vld [vmem:[#allocation5 + $0x7f8] sm:$0xff]
    %v372 = vld [vmem:[#allocation5 + $0x800] sm:$0xff]
    %v373 = vld [vmem:[#allocation5 + $0x808] sm:$0xff]
    %v374 = vld [vmem:[#allocation5 + $0x810] sm:$0xff]
    %v375 = vld [vmem:[#allocation5 + $0x818] sm:$0xff]
    %v376 = vld [vmem:[#allocation5 + $0x820] sm:$0xff]
    %v377 = vld [vmem:[#allocation5 + $0x828] sm:$0xff]
    %v378 = vld [vmem:[#allocation5 + $0x830] sm:$0xff]
    %v379 = vld [vmem:[#allocation5 + $0x838] sm:$0xff]
    %v380 = vld [vmem:[#allocation5 + $0x840] sm:$0xff]
    %v381 = vld [vmem:[#allocation5 + $0x848] sm:$0xff]
    %v382 = vld [vmem:[#allocation5 + $0x850] sm:$0xff]
    %v383 = vld [vmem:[#allocation5 + $0x858] sm:$0xff]
    %v384 = vld [vmem:[#allocation5 + $0x860] sm:$0xff]
    %v385 = vld [vmem:[#allocation5 + $0x868] sm:$0xff]
    %v386 = vld [vmem:[#allocation5 + $0x870] sm:$0xff]
    %v387 = vld [vmem:[#allocation5 + $0x878] sm:$0xff]
    %v388 = vld [vmem:[#allocation5 + $0x880] sm:$0xff]
    %v389 = vld [vmem:[#allocation5 + $0x888] sm:$0xff]
    %v390 = vld [vmem:[#allocation5 + $0x890] sm:$0xff]
    %v391 = vld [vmem:[#allocation5 + $0x898] sm:$0xff]
    %v392 = vld [vmem:[#allocation5 + $0x8a0] sm:$0xff]
    %v393 = vld [vmem:[#allocation5 + $0x8a8] sm:$0xff]
    %v394 = vld [vmem:[#allocation5 + $0x8b0] sm:$0xff]
    %v395 = vld [vmem:[#allocation5 + $0x8b8] sm:$0xff]
    %v396 = vld [vmem:[#allocation5 + $0x8c0] sm:$0xff]
    %v397 = vld [vmem:[#allocation5 + $0x8c8] sm:$0xff]
    %v398 = vld [vmem:[#allocation5 + $0x8d0] sm:$0xff]
    %v399 = vld [vmem:[#allocation5 + $0x8d8] sm:$0xff]
    %v400 = vld [vmem:[#allocation5 + $0x8e0] sm:$0xff]
    %v401 = vld [vmem:[#allocation5 + $0x8e8] sm:$0xff]
    %v402 = vld [vmem:[#allocation5 + $0x8f0] sm:$0xff]
    %v403 = vld [vmem:[#allocation5 + $0x8f8] sm:$0xff]
    %v404 = vld [vmem:[#allocation5 + $0x900] sm:$0xff]
    %v405 = vld [vmem:[#allocation5 + $0x908] sm:$0xff]
    %v406 = vld [vmem:[#allocation5 + $0x910] sm:$0xff]
    %v407 = vld [vmem:[#allocation5 + $0x918] sm:$0xff]
    %v408 = vld [vmem:[#allocation5 + $0x920] sm:$0xff]
    %v409 = vld [vmem:[#allocation5 + $0x928] sm:$0xff]
    %v410 = vld [vmem:[#allocation5 + $0x930] sm:$0xff]
    %v411 = vld [vmem:[#allocation5 + $0x938] sm:$0xff]
    %v412 = vld [vmem:[#allocation5 + $0x940] sm:$0xff]
    %v413 = vld [vmem:[#allocation5 + $0x948] sm:$0xff]
    %v414 = vld [vmem:[#allocation5 + $0x950] sm:$0xff]
    %v415 = vld [vmem:[#allocation5 + $0x958] sm:$0xff]
    %v416 = vld [vmem:[#allocation5 + $0x960] sm:$0xff]
    %v417 = vld [vmem:[#allocation5 + $0x968] sm:$0xff]
    %v418 = vld [vmem:[#allocation5 + $0x970] sm:$0xff]
    %v419 = vld [vmem:[#allocation5 + $0x978] sm:$0xff]
    %v420 = vld [vmem:[#allocation5 + $0x980] sm:$0xff]
    %v421 = vld [vmem:[#allocation5 + $0x988] sm:$0xff]
    %v422 = vld [vmem:[#allocation5 + $0x990] sm:$0xff]
    %v423 = vld [vmem:[#allocation5 + $0x998] sm:$0xff]
    %v424 = vld [vmem:[#allocation5 + $0x9a0] sm:$0xff]
    %v425 = vld [vmem:[#allocation5 + $0x9a8] sm:$0xff]
    %v426 = vld [vmem:[#allocation5 + $0x9b0] sm:$0xff]
    %v427 = vld [vmem:[#allocation5 + $0x9b8] sm:$0xff]
    %v428 = vld [vmem:[#allocation5 + $0x9c0] sm:$0xff]
    %v429 = vld [vmem:[#allocation5 + $0x9c8] sm:$0xff]
    %v430 = vld [vmem:[#allocation5 + $0x9d0] sm:$0xff]
    %v431 = vld [vmem:[#allocation5 + $0x9d8] sm:$0xff]
    %v432 = vld [vmem:[#allocation5 + $0x9e0] sm:$0xff]
    %v433 = vld [vmem:[#allocation5 + $0x9e8] sm:$0xff]
    %v434 = vld [vmem:[#allocation5 + $0x9f0] sm:$0xff]
    %v435 = vld [vmem:[#allocation5 + $0x9f8] sm:$0xff]
    %v436 = vld [vmem:[#allocation5 + $0xa00] sm:$0xff]
    %v437 = vld [vmem:[#allocation5 + $0xa08] sm:$0xff]
    %v438 = vld [vmem:[#allocation5 + $0xa10] sm:$0xff]
    %v439 = vld [vmem:[#allocation5 + $0xa18] sm:$0xff]
    %v440 = vld [vmem:[#allocation5 + $0xa20] sm:$0xff]
    %v441 = vld [vmem:[#allocation5 + $0xa28] sm:$0xff]
    %v442 = vld [vmem:[#allocation5 + $0xa30] sm:$0xff]
    %v443 = vld [vmem:[#allocation5 + $0xa38] sm:$0xff]
    %v444 = vld [vmem:[#allocation5 + $0xa40] sm:$0xff]
    %v445 = vld [vmem:[#allocation5 + $0xa48] sm:$0xff]
    %v446 = vld [vmem:[#allocation5 + $0xa50] sm:$0xff]
    %v447 = vld [vmem:[#allocation5 + $0xa58] sm:$0xff]
    %v448 = vld [vmem:[#allocation5 + $0xa60] sm:$0xff]
    %v449 = vld [vmem:[#allocation5 + $0xa68] sm:$0xff]
    %v450 = vld [vmem:[#allocation5 + $0xa70] sm:$0xff]
    %v451 = vld [vmem:[#allocation5 + $0xa78] sm:$0xff]
    %v452 = vld [vmem:[#allocation5 + $0xa80] sm:$0xff]
    %v453 = vld [vmem:[#allocation5 + $0xa88] sm:$0xff]
    %v454 = vld [vmem:[#allocation5 + $0xa90] sm:$0xff]
    %v455 = vld [vmem:[#allocation5 + $0xa98] sm:$0xff]
    %v456 = vld [vmem:[#allocation5 + $0xaa0] sm:$0xff]
    %v457 = vld [vmem:[#allocation5 + $0xaa8] sm:$0xff]
    %v458 = vld [vmem:[#allocation5 + $0xab0] sm:$0xff]
    %v459 = vld [vmem:[#allocation5 + $0xab8] sm:$0xff]
    %v460 = vld [vmem:[#allocation5 + $0xac0] sm:$0xff]
    %v461 = vld [vmem:[#allocation5 + $0xac8] sm:$0xff]
    %v462 = vld [vmem:[#allocation5 + $0xad0] sm:$0xff]
    %v463 = vld [vmem:[#allocation5 + $0xad8] sm:$0xff]
    %v464 = vld [vmem:[#allocation5 + $0xae0] sm:$0xff]
    %v465 = vld [vmem:[#allocation5 + $0xae8] sm:$0xff]
    %v466 = vld [vmem:[#allocation5 + $0xaf0] sm:$0xff]
    %v467 = vld [vmem:[#allocation5 + $0xaf8] sm:$0xff]
    %v468 = vld [vmem:[#allocation5 + $0xb00] sm:$0xff]
    %v469 = vld [vmem:[#allocation5 + $0xb08] sm:$0xff]
    %v470 = vld [vmem:[#allocation5 + $0xb10] sm:$0xff]
    %v471 = vld [vmem:[#allocation5 + $0xb18] sm:$0xff]
    %v472 = vld [vmem:[#allocation5 + $0xb20] sm:$0xff]
    %v473 = vld [vmem:[#allocation5 + $0xb28] sm:$0xff]
    %v474 = vld [vmem:[#allocation5 + $0xb30] sm:$0xff]
    %v475 = vld [vmem:[#allocation5 + $0xb38] sm:$0xff]
    %v476 = vld [vmem:[#allocation5 + $0xb40] sm:$0xff]
    %v477 = vld [vmem:[#allocation5 + $0xb48] sm:$0xff]
    %v478 = vld [vmem:[#allocation5 + $0xb50] sm:$0xff]
    %v479 = vld [vmem:[#allocation5 + $0xb58] sm:$0xff]
    %v480 = vld [vmem:[#allocation5 + $0xb60] sm:$0xff]
    %v481 = vld [vmem:[#allocation5 + $0xb68] sm:$0xff]
    %v482 = vld [vmem:[#allocation5 + $0xb70] sm:$0xff]
    %v483 = vld [vmem:[#allocation5 + $0xb78] sm:$0xff]
    %v484 = vld [vmem:[#allocation5 + $0xb80] sm:$0xff]
    %v485 = vld [vmem:[#allocation5 + $0xb88] sm:$0xff]
    %v486 = vld [vmem:[#allocation5 + $0xb90] sm:$0xff]
    %v487 = vld [vmem:[#allocation5 + $0xb98] sm:$0xff]
    %v488 = vld [vmem:[#allocation5 + $0xba0] sm:$0xff]
    %v489 = vld [vmem:[#allocation5 + $0xba8] sm:$0xff]
    %v490 = vld [vmem:[#allocation5 + $0xbb0] sm:$0xff]
    %v491 = vld [vmem:[#allocation5 + $0xbb8] sm:$0xff]
    %v492 = vld [vmem:[#allocation5 + $0xbc0] sm:$0xff]
    %v493 = vld [vmem:[#allocation5 + $0xbc8] sm:$0xff]
    %v494 = vld [vmem:[#allocation5 + $0xbd0] sm:$0xff]
    %v495 = vld [vmem:[#allocation5 + $0xbd8] sm:$0xff]
    %v496 = vld [vmem:[#allocation5 + $0xbe0] sm:$0xff]
    %v497 = vld [vmem:[#allocation5 + $0xbe8] sm:$0xff]
    %v498 = vld [vmem:[#allocation5 + $0xbf0] sm:$0xff]
    %v499 = vld [vmem:[#allocation5 + $0xbf8] sm:$0xff]
    %v500 = vld [vmem:[#allocation5 + $0xc00] sm:$0xff]
    %v501 = vld [vmem:[#allocation5 + $0xc08] sm:$0xff]
    %v502 = vld [vmem:[#allocation5 + $0xc10] sm:$0xff]
    %v503 = vld [vmem:[#allocation5 + $0xc18] sm:$0xff]
    %v504 = vld [vmem:[#allocation5 + $0xc20] sm:$0xff]
    %v505 = vld [vmem:[#allocation5 + $0xc28] sm:$0xff]
    %v506 = vld [vmem:[#allocation5 + $0xc30] sm:$0xff]
    %v507 = vld [vmem:[#allocation5 + $0xc38] sm:$0xff]
    %v508 = vld [vmem:[#allocation5 + $0xc40] sm:$0xff]
    %v509 = vld [vmem:[#allocation5 + $0xc48] sm:$0xff]
    %v510 = vld [vmem:[#allocation5 + $0xc50] sm:$0xff]
    %v511 = vld [vmem:[#allocation5 + $0xc58] sm:$0xff]
    %v512 = vld [vmem:[#allocation5 + $0xc60] sm:$0xff]
    %v513 = vld [vmem:[#allocation5 + $0xc68] sm:$0xff]
    %v514 = vld [vmem:[#allocation5 + $0xc70] sm:$0xff]
    %v515 = vld [vmem:[#allocation5 + $0xc78] sm:$0xff]
    %v516 = vld [vmem:[#allocation5 + $0xc80] sm:$0xff]
    %v517 = vld [vmem:[#allocation5 + $0xc88] sm:$0xff]
    %v518 = vld [vmem:[#allocation5 + $0xc90] sm:$0xff]
    %v519 = vld [vmem:[#allocation5 + $0xc98] sm:$0xff]
    %v520 = vld [vmem:[#allocation5 + $0xca0] sm:$0xff]
    %v521 = vld [vmem:[#allocation5 + $0xca8] sm:$0xff]
    %v522 = vld [vmem:[#allocation5 + $0xcb0] sm:$0xff]
    %v523 = vld [vmem:[#allocation5 + $0xcb8] sm:$0xff]
    %v524 = vld [vmem:[#allocation5 + $0xcc0] sm:$0xff]
    %v525 = vld [vmem:[#allocation5 + $0xcc8] sm:$0xff]
    %v526 = vld [vmem:[#allocation5 + $0xcd0] sm:$0xff]
    %v527 = vld [vmem:[#allocation5 + $0xcd8] sm:$0xff]
    %v528 = vld [vmem:[#allocation5 + $0xce0] sm:$0xff]
    %v529 = vld [vmem:[#allocation5 + $0xce8] sm:$0xff]
    %v530 = vld [vmem:[#allocation5 + $0xcf0] sm:$0xff]
    %v531 = vld [vmem:[#allocation5 + $0xcf8] sm:$0xff]
    %v532 = vld [vmem:[#allocation5 + $0xd00] sm:$0xff]
    %v533 = vld [vmem:[#allocation5 + $0xd08] sm:$0xff]
    %v534 = vld [vmem:[#allocation5 + $0xd10] sm:$0xff]
    %v535 = vld [vmem:[#allocation5 + $0xd18] sm:$0xff]
    %v536 = vld [vmem:[#allocation5 + $0xd20] sm:$0xff]
    %v537 = vld [vmem:[#allocation5 + $0xd28] sm:$0xff]
    %v538 = vld [vmem:[#allocation5 + $0xd30] sm:$0xff]
    %v539 = vld [vmem:[#allocation5 + $0xd38] sm:$0xff]
    %v540 = vld [vmem:[#allocation5 + $0xd40] sm:$0xff]
    %v541 = vld [vmem:[#allocation5 + $0xd48] sm:$0xff]
    %v542 = vld [vmem:[#allocation5 + $0xd50] sm:$0xff]
    %v543 = vld [vmem:[#allocation5 + $0xd58] sm:$0xff]
    %v544 = vld [vmem:[#allocation5 + $0xd60] sm:$0xff]
    %v545 = vld [vmem:[#allocation5 + $0xd68] sm:$0xff]
    %v546 = vld [vmem:[#allocation5 + $0xd70] sm:$0xff]
    %v547 = vld [vmem:[#allocation5 + $0xd78] sm:$0xff]
    %v548 = vld [vmem:[#allocation5 + $0xd80] sm:$0xff]
    %v549 = vld [vmem:[#allocation5 + $0xd88] sm:$0xff]
    %v550 = vld [vmem:[#allocation5 + $0xd90] sm:$0xff]
    %v551 = vld [vmem:[#allocation5 + $0xd98] sm:$0xff]
    %v552 = vld [vmem:[#allocation5 + $0xda0] sm:$0xff]
    %v553 = vld [vmem:[#allocation5 + $0xda8] sm:$0xff]
    %v554 = vld [vmem:[#allocation5 + $0xdb0] sm:$0xff]
    %v555 = vld [vmem:[#allocation5 + $0xdb8] sm:$0xff]
    %v556 = vld [vmem:[#allocation5 + $0xdc0] sm:$0xff]
    %v557 = vld [vmem:[#allocation5 + $0xdc8] sm:$0xff]
    %v558 = vld [vmem:[#allocation5 + $0xdd0] sm:$0xff]
    %v559 = vld [vmem:[#allocation5 + $0xdd8] sm:$0xff]
    %v560 = vld [vmem:[#allocation5 + $0xde0] sm:$0xff]
    %v561 = vld [vmem:[#allocation5 + $0xde8] sm:$0xff]
    %v562 = vld [vmem:[#allocation5 + $0xdf0] sm:$0xff]
    %v563 = vld [vmem:[#allocation5 + $0xdf8] sm:$0xff]
    %v564 = vld [vmem:[#allocation5 + $0xe00] sm:$0xff]
    %v565 = vld [vmem:[#allocation5 + $0xe08] sm:$0xff]
    %v566 = vld [vmem:[#allocation5 + $0xe10] sm:$0xff]
    %v567 = vld [vmem:[#allocation5 + $0xe18] sm:$0xff]
    %v568 = vld [vmem:[#allocation5 + $0xe20] sm:$0xff]
    %v569 = vld [vmem:[#allocation5 + $0xe28] sm:$0xff]
    %v570 = vld [vmem:[#allocation5 + $0xe30] sm:$0xff]
    %v571 = vld [vmem:[#allocation5 + $0xe38] sm:$0xff]
    %v572 = vld [vmem:[#allocation5 + $0xe40] sm:$0xff]
    %v573 = vld [vmem:[#allocation5 + $0xe48] sm:$0xff]
    %v574 = vld [vmem:[#allocation5 + $0xe50] sm:$0xff]
    %v575 = vld [vmem:[#allocation5 + $0xe58] sm:$0xff]
    %v576 = vld [vmem:[#allocation5 + $0xe60] sm:$0xff]
    %v577 = vld [vmem:[#allocation5 + $0xe68] sm:$0xff]
    %v578 = vld [vmem:[#allocation5 + $0xe70] sm:$0xff]
    %v579 = vld [vmem:[#allocation5 + $0xe78] sm:$0xff]
    %v580 = vld [vmem:[#allocation5 + $0xe80] sm:$0xff]
    %v581 = vld [vmem:[#allocation5 + $0xe88] sm:$0xff]
    %v582 = vld [vmem:[#allocation5 + $0xe90] sm:$0xff]
    %v583 = vld [vmem:[#allocation5 + $0xe98] sm:$0xff]
    %v584 = vld [vmem:[#allocation5 + $0xea0] sm:$0xff]
    %v585 = vld [vmem:[#allocation5 + $0xea8] sm:$0xff]
    %v586 = vld [vmem:[#allocation5 + $0xeb0] sm:$0xff]
    %v587 = vld [vmem:[#allocation5 + $0xeb8] sm:$0xff]
    %v588 = vld [vmem:[#allocation5 + $0xec0] sm:$0xff]
    %v589 = vld [vmem:[#allocation5 + $0xec8] sm:$0xff]
    %v590 = vld [vmem:[#allocation5 + $0xed0] sm:$0xff]
    %v591 = vld [vmem:[#allocation5 + $0xed8] sm:$0xff]
    %v592 = vld [vmem:[#allocation5 + $0xee0] sm:$0xff]
    %v593 = vld [vmem:[#allocation5 + $0xee8] sm:$0xff]
    %v594 = vld [vmem:[#allocation5 + $0xef0] sm:$0xff]
    %v595 = vld [vmem:[#allocation5 + $0xef8] sm:$0xff]
    %v596 = vld [vmem:[#allocation5 + $0xf00] sm:$0xff]
    %v597 = vld [vmem:[#allocation5 + $0xf08] sm:$0xff]
    %v598 = vld [vmem:[#allocation5 + $0xf10] sm:$0xff]
    %v599 = vld [vmem:[#allocation5 + $0xf18] sm:$0xff]
    %v600 = vld [vmem:[#allocation5 + $0xf20] sm:$0xff]
    %v601 = vld [vmem:[#allocation5 + $0xf28] sm:$0xff]
    %v602 = vld [vmem:[#allocation5 + $0xf30] sm:$0xff]
    %v603 = vld [vmem:[#allocation5 + $0xf38] sm:$0xff]
    %v604 = vld [vmem:[#allocation5 + $0xf40] sm:$0xff]
    %v605 = vld [vmem:[#allocation5 + $0xf48] sm:$0xff]
    %v606 = vld [vmem:[#allocation5 + $0xf50] sm:$0xff]
    %v607 = vld [vmem:[#allocation5 + $0xf58] sm:$0xff]
    %v608 = vld [vmem:[#allocation5 + $0xf60] sm:$0xff]
    %v609 = vld [vmem:[#allocation5 + $0xf68] sm:$0xff]
    %v610 = vld [vmem:[#allocation5 + $0xf70] sm:$0xff]
    %v611 = vld [vmem:[#allocation5 + $0xf78] sm:$0xff]
    %v612 = vld [vmem:[#allocation5 + $0xf80] sm:$0xff]
    %v613 = vld [vmem:[#allocation5 + $0xf88] sm:$0xff]
    %v614 = vld [vmem:[#allocation5 + $0xf90] sm:$0xff]
    %v615 = vld [vmem:[#allocation5 + $0xf98] sm:$0xff]
    %v616 = vld [vmem:[#allocation5 + $0xfa0] sm:$0xff]
    %v617 = vld [vmem:[#allocation5 + $0xfa8] sm:$0xff]
    %v618 = vld [vmem:[#allocation5 + $0xfb0] sm:$0xff]
    %v619 = vld [vmem:[#allocation5 + $0xfb8] sm:$0xff]
    %v620 = vld [vmem:[#allocation5 + $0xfc0] sm:$0xff]
    %v621 = vld [vmem:[#allocation5 + $0xfc8] sm:$0xff]
    %v622 = vld [vmem:[#allocation5 + $0xfd0] sm:$0xff]
    %v623 = vld [vmem:[#allocation5 + $0xfd8] sm:$0xff]
    %v624 = vld [vmem:[#allocation5 + $0xfe0] sm:$0xff]
    %v625 = vld [vmem:[#allocation5 + $0xfe8] sm:$0xff]
    %v626 = vld [vmem:[#allocation5 + $0xff0] sm:$0xff]
    %v627 = vld [vmem:[#allocation5 + $0xff8] sm:$0xff]
    %v628 = vld [vmem:[#allocation5 + $0x1000] sm:$0xff]
    %v629 = vld [vmem:[#allocation5 + $0x1008] sm:$0xff]
    %v630 = vld [vmem:[#allocation5 + $0x1010] sm:$0xff]
    %v631 = vld [vmem:[#allocation5 + $0x1018] sm:$0xff]
    %v632 = vld [vmem:[#allocation5 + $0x1020] sm:$0xff]
    %v633 = vld [vmem:[#allocation5 + $0x1028] sm:$0xff]
    %v634 = vld [vmem:[#allocation5 + $0x1030] sm:$0xff]
    %v635 = vld [vmem:[#allocation5 + $0x1038] sm:$0xff]
    %v636 = vld [vmem:[#allocation5 + $0x1040] sm:$0xff]
    %v637 = vld [vmem:[#allocation5 + $0x1048] sm:$0xff]
    %v638 = vld [vmem:[#allocation5 + $0x1050] sm:$0xff]
    %v639 = vld [vmem:[#allocation5 + $0x1058] sm:$0xff]
    %v640 = vld [vmem:[#allocation5 + $0x1060] sm:$0xff]
    %v641 = vld [vmem:[#allocation5 + $0x1068] sm:$0xff]
    %v642 = vld [vmem:[#allocation5 + $0x1070] sm:$0xff]
    %v643 = vld [vmem:[#allocation5 + $0x1078] sm:$0xff]
    %v644 = vld [vmem:[#allocation5 + $0x1080] sm:$0xff]
    %v645 = vld [vmem:[#allocation5 + $0x1088] sm:$0xff]
    %v646 = vld [vmem:[#allocation5 + $0x1090] sm:$0xff]
    %v647 = vld [vmem:[#allocation5 + $0x1098] sm:$0xff]
    %v648 = vld [vmem:[#allocation5 + $0x10a0] sm:$0xff]
    %v649 = vld [vmem:[#allocation5 + $0x10a8] sm:$0xff]
    %v650 = vld [vmem:[#allocation5 + $0x10b0] sm:$0xff]
    %v651 = vld [vmem:[#allocation5 + $0x10b8] sm:$0xff]
    %v652 = vld [vmem:[#allocation5 + $0x10c0] sm:$0xff]
    %v653 = vld [vmem:[#allocation5 + $0x10c8] sm:$0xff]
    %v654 = vld [vmem:[#allocation5 + $0x10d0] sm:$0xff]
    %v655 = vld [vmem:[#allocation5 + $0x10d8] sm:$0xff]
    %v656 = vld [vmem:[#allocation5 + $0x10e0] sm:$0xff]
    %v657 = vld [vmem:[#allocation5 + $0x10e8] sm:$0xff]
    %v658 = vld [vmem:[#allocation5 + $0x10f0] sm:$0xff]
    %v659 = vld [vmem:[#allocation5 + $0x10f8] sm:$0xff]
    %v660 = vld [vmem:[#allocation5 + $0x1100] sm:$0xff]
    %v661 = vld [vmem:[#allocation5 + $0x1108] sm:$0xff]
    %v662 = vld [vmem:[#allocation5 + $0x1110] sm:$0xff]
    %v663 = vld [vmem:[#allocation5 + $0x1118] sm:$0xff]
    %v664 = vld [vmem:[#allocation5 + $0x1120] sm:$0xff]
    %v665 = vld [vmem:[#allocation5 + $0x1128] sm:$0xff]
    %v666 = vld [vmem:[#allocation5 + $0x1130] sm:$0xff]
    %v667 = vld [vmem:[#allocation5 + $0x1138] sm:$0xff]
    %v668 = vld [vmem:[#allocation5 + $0x1140] sm:$0xff]
    %v669 = vld [vmem:[#allocation5 + $0x1148] sm:$0xff]
    %v670 = vld [vmem:[#allocation5 + $0x1150] sm:$0xff]
    %v671 = vld [vmem:[#allocation5 + $0x1158] sm:$0xff]
    %v672 = vld [vmem:[#allocation5 + $0x1160] sm:$0xff]
    %v673 = vld [vmem:[#allocation5 + $0x1168] sm:$0xff]
    %v674 = vld [vmem:[#allocation5 + $0x1170] sm:$0xff]
    %v675 = vld [vmem:[#allocation5 + $0x1178] sm:$0xff]
    %v676 = vld [vmem:[#allocation5 + $0x1180] sm:$0xff]
    %v677 = vld [vmem:[#allocation5 + $0x1188] sm:$0xff]
    %v678 = vld [vmem:[#allocation5 + $0x1190] sm:$0xff]
    %v679 = vld [vmem:[#allocation5 + $0x1198] sm:$0xff]
    %v680 = vld [vmem:[#allocation5 + $0x11a0] sm:$0xff]
    %v681 = vld [vmem:[#allocation5 + $0x11a8] sm:$0xff]
    %v682 = vld [vmem:[#allocation5 + $0x11b0] sm:$0xff]
    %v683 = vld [vmem:[#allocation5 + $0x11b8] sm:$0xff]
    %v684 = vld [vmem:[#allocation5 + $0x11c0] sm:$0xff]
    %v685 = vld [vmem:[#allocation5 + $0x11c8] sm:$0xff]
    %v686 = vld [vmem:[#allocation5 + $0x11d0] sm:$0xff]
    %v687 = vld [vmem:[#allocation5 + $0x11d8] sm:$0xff]
    %v688 = vld [vmem:[#allocation5 + $0x11e0] sm:$0xff]
    %v689 = vld [vmem:[#allocation5 + $0x11e8] sm:$0xff]
    %v690 = vld [vmem:[#allocation5 + $0x11f0] sm:$0xff]
    %v691 = vld [vmem:[#allocation5 + $0x11f8] sm:$0xff]
    %v692 = vld [vmem:[#allocation5 + $0x1200] sm:$0xff]
    %v693 = vld [vmem:[#allocation5 + $0x1208] sm:$0xff]
    %v694 = vld [vmem:[#allocation5 + $0x1210] sm:$0xff]
    %v695 = vld [vmem:[#allocation5 + $0x1218] sm:$0xff]
    %v696 = vld [vmem:[#allocation5 + $0x1220] sm:$0xff]
    %v697 = vld [vmem:[#allocation5 + $0x1228] sm:$0xff]
    %v698 = vld [vmem:[#allocation5 + $0x1230] sm:$0xff]
    %v699 = vld [vmem:[#allocation5 + $0x1238] sm:$0xff]
    %v700 = vld [vmem:[#allocation5 + $0x1240] sm:$0xff]
    %v701 = vld [vmem:[#allocation5 + $0x1248] sm:$0xff]
    %v702 = vld [vmem:[#allocation5 + $0x1250] sm:$0xff]
    %v703 = vld [vmem:[#allocation5 + $0x1258] sm:$0xff]
    %v704 = vld [vmem:[#allocation5 + $0x1260] sm:$0xff]
    %v705 = vld [vmem:[#allocation5 + $0x1268] sm:$0xff]
    %v706 = vld [vmem:[#allocation5 + $0x1270] sm:$0xff]
    %v707 = vld [vmem:[#allocation5 + $0x1278] sm:$0xff]
    %v708 = vld [vmem:[#allocation5 + $0x1280] sm:$0xff]
    %v709 = vld [vmem:[#allocation5 + $0x1288] sm:$0xff]
    %v710 = vld [vmem:[#allocation5 + $0x1290] sm:$0xff]
    %v711 = vld [vmem:[#allocation5 + $0x1298] sm:$0xff]
    %v712 = vld [vmem:[#allocation5 + $0x12a0] sm:$0xff]
    %v713 = vld [vmem:[#allocation5 + $0x12a8] sm:$0xff]
    %v714 = vld [vmem:[#allocation5 + $0x12b0] sm:$0xff]
    %v715 = vld [vmem:[#allocation5 + $0x12b8] sm:$0xff]
    %v716 = vld [vmem:[#allocation5 + $0x12c0] sm:$0xff]
    %v717 = vld [vmem:[#allocation5 + $0x12c8] sm:$0xff]
    %v718 = vld [vmem:[#allocation5 + $0x12d0] sm:$0xff]
    %v719 = vld [vmem:[#allocation5 + $0x12d8] sm:$0xff]
    %v720 = vld [vmem:[#allocation5 + $0x12e0] sm:$0xff]
    %v721 = vld [vmem:[#allocation5 + $0x12e8] sm:$0xff]
    %v722 = vld [vmem:[#allocation5 + $0x12f0] sm:$0xff]
    %v723 = vld [vmem:[#allocation5 + $0x12f8] sm:$0xff]
    %v724 = vld [vmem:[#allocation5 + $0x1300] sm:$0xff]
    %v725 = vld [vmem:[#allocation5 + $0x1308] sm:$0xff]
    %v726 = vld [vmem:[#allocation5 + $0x1310] sm:$0xff]
    %v727 = vld [vmem:[#allocation5 + $0x1318] sm:$0xff]
    %v728 = vld [vmem:[#allocation5 + $0x1320] sm:$0xff]
    %v729 = vld [vmem:[#allocation5 + $0x1328] sm:$0xff]
    %v730 = vld [vmem:[#allocation5 + $0x1330] sm:$0xff]
    %v731 = vld [vmem:[#allocation5 + $0x1338] sm:$0xff]
    %v732 = vld [vmem:[#allocation5 + $0x1340] sm:$0xff]
    %v733 = vld [vmem:[#allocation5 + $0x1348] sm:$0xff]
    %v734 = vld [vmem:[#allocation5 + $0x1350] sm:$0xff]
    %v735 = vld [vmem:[#allocation5 + $0x1358] sm:$0xff]
    %v736 = vld [vmem:[#allocation5 + $0x1360] sm:$0xff]
    %v737 = vld [vmem:[#allocation5 + $0x1368] sm:$0xff]
    %v738 = vld [vmem:[#allocation5 + $0x1370] sm:$0xff]
    %v739 = vld [vmem:[#allocation5 + $0x1378] sm:$0xff]
    %v740 = vld [vmem:[#allocation5 + $0x1380] sm:$0xff]
    %v741 = vld [vmem:[#allocation5 + $0x1388] sm:$0xff]
    %v742 = vld [vmem:[#allocation5 + $0x1390] sm:$0xff]
    %v743 = vld [vmem:[#allocation5 + $0x1398] sm:$0xff]
    %v744 = vld [vmem:[#allocation5 + $0x13a0] sm:$0xff]
    %v745 = vld [vmem:[#allocation5 + $0x13a8] sm:$0xff]
    %v746 = vld [vmem:[#allocation5 + $0x13b0] sm:$0xff]
    %v747 = vld [vmem:[#allocation5 + $0x13b8] sm:$0xff]
    %v748 = vld [vmem:[#allocation5 + $0x13c0] sm:$0xff]
    %v749 = vld [vmem:[#allocation5 + $0x13c8] sm:$0xff]
    %v750 = vld [vmem:[#allocation5 + $0x13d0] sm:$0xff]
    %v751 = vld [vmem:[#allocation5 + $0x13d8] sm:$0xff]
    %v752 = vld [vmem:[#allocation5 + $0x13e0] sm:$0xff]
    %v753 = vld [vmem:[#allocation5 + $0x13e8] sm:$0xff]
    %v754 = vld [vmem:[#allocation5 + $0x13f0] sm:$0xff]
    %v755 = vld [vmem:[#allocation5 + $0x13f8] sm:$0xff]
    %v756 = vld [vmem:[#allocation5 + $0x1400] sm:$0xff]
    %v757 = vld [vmem:[#allocation5 + $0x1408] sm:$0xff]
    %v758 = vld [vmem:[#allocation5 + $0x1410] sm:$0xff]
    %v759 = vld [vmem:[#allocation5 + $0x1418] sm:$0xff]
    %v760 = vld [vmem:[#allocation5 + $0x1420] sm:$0xff]
    %v761 = vld [vmem:[#allocation5 + $0x1428] sm:$0xff]
    %v762 = vld [vmem:[#allocation5 + $0x1430] sm:$0xff]
    %v763 = vld [vmem:[#allocation5 + $0x1438] sm:$0xff]
    %v764 = vld [vmem:[#allocation5 + $0x1440] sm:$0xff]
    %v765 = vld [vmem:[#allocation5 + $0x1448] sm:$0xff]
    %v766 = vld [vmem:[#allocation5 + $0x1450] sm:$0xff]
    %v767 = vld [vmem:[#allocation5 + $0x1458] sm:$0xff]
    %v768 = vld [vmem:[#allocation5 + $0x1460] sm:$0xff]
    %v769 = vld [vmem:[#allocation5 + $0x1468] sm:$0xff]
    %v770 = vld [vmem:[#allocation5 + $0x1470] sm:$0xff]
    %v771 = vld [vmem:[#allocation5 + $0x1478] sm:$0xff]
    %v772 = vld [vmem:[#allocation5 + $0x1480] sm:$0xff]
    %v773 = vld [vmem:[#allocation5 + $0x1488] sm:$0xff]
    %v774 = vld [vmem:[#allocation5 + $0x1490] sm:$0xff]
    %v775 = vld [vmem:[#allocation5 + $0x1498] sm:$0xff]
    %v776 = vld [vmem:[#allocation5 + $0x14a0] sm:$0xff]
    %v777 = vld [vmem:[#allocation5 + $0x14a8] sm:$0xff]
    %v778 = vld [vmem:[#allocation5 + $0x14b0] sm:$0xff]
    %v779 = vld [vmem:[#allocation5 + $0x14b8] sm:$0xff]
    %v780 = vld [vmem:[#allocation5 + $0x14c0] sm:$0xff]
    %v781 = vld [vmem:[#allocation5 + $0x14c8] sm:$0xff]
    %v782 = vld [vmem:[#allocation5 + $0x14d0] sm:$0xff]
    %v783 = vld [vmem:[#allocation5 + $0x14d8] sm:$0xff]
    %v784 = vld [vmem:[#allocation5 + $0x14e0] sm:$0xff]
    %v785 = vld [vmem:[#allocation5 + $0x14e8] sm:$0xff]
    %v786 = vld [vmem:[#allocation5 + $0x14f0] sm:$0xff]
    %v787 = vld [vmem:[#allocation5 + $0x14f8] sm:$0xff]
    %v788 = vld [vmem:[#allocation5 + $0x1500] sm:$0xff]
    %v789 = vld [vmem:[#allocation5 + $0x1508] sm:$0xff]
    %v790 = vld [vmem:[#allocation5 + $0x1510] sm:$0xff]
    %v791 = vld [vmem:[#allocation5 + $0x1518] sm:$0xff]
    %v792 = vld [vmem:[#allocation5 + $0x1520] sm:$0xff]
    %v793 = vld [vmem:[#allocation5 + $0x1528] sm:$0xff]
    %v794 = vld [vmem:[#allocation5 + $0x1530] sm:$0xff]
    %v795 = vld [vmem:[#allocation5 + $0x1538] sm:$0xff]
    %v796 = vld [vmem:[#allocation5 + $0x1540] sm:$0xff]
    %v797 = vld [vmem:[#allocation5 + $0x1548] sm:$0xff]
    %v798 = vld [vmem:[#allocation5 + $0x1550] sm:$0xff]
    %v799 = vld [vmem:[#allocation5 + $0x1558] sm:$0xff]
    %v800 = vld [vmem:[#allocation5 + $0x1560] sm:$0xff]
    %v801 = vld [vmem:[#allocation5 + $0x1568] sm:$0xff]
    %v802 = vld [vmem:[#allocation5 + $0x1570] sm:$0xff]
    %v803 = vld [vmem:[#allocation5 + $0x1578] sm:$0xff]
    %v804 = vld [vmem:[#allocation5 + $0x1580] sm:$0xff]
    %v805 = vld [vmem:[#allocation5 + $0x1588] sm:$0xff]
    %v806 = vld [vmem:[#allocation5 + $0x1590] sm:$0xff]
    %v807 = vld [vmem:[#allocation5 + $0x1598] sm:$0xff]
    %v808 = vld [vmem:[#allocation5 + $0x15a0] sm:$0xff]
    %v809 = vld [vmem:[#allocation5 + $0x15a8] sm:$0xff]
    %v810 = vld [vmem:[#allocation5 + $0x15b0] sm:$0xff]
    %v811 = vld [vmem:[#allocation5 + $0x15b8] sm:$0xff]
    %v812 = vld [vmem:[#allocation5 + $0x15c0] sm:$0xff]
    %v813 = vld [vmem:[#allocation5 + $0x15c8] sm:$0xff]
    %v814 = vld [vmem:[#allocation5 + $0x15d0] sm:$0xff]
    %v815 = vld [vmem:[#allocation5 + $0x15d8] sm:$0xff]
    %v816 = vld [vmem:[#allocation5 + $0x15e0] sm:$0xff]
    %v817 = vld [vmem:[#allocation5 + $0x15e8] sm:$0xff]
    %v818 = vld [vmem:[#allocation5 + $0x15f0] sm:$0xff]
    %v819 = vld [vmem:[#allocation5 + $0x15f8] sm:$0xff]
    %v820 = vld [vmem:[#allocation5 + $0x1600] sm:$0xff]
    %v821 = vld [vmem:[#allocation5 + $0x1608] sm:$0xff]
    %v822 = vld [vmem:[#allocation5 + $0x1610] sm:$0xff]
    %v823 = vld [vmem:[#allocation5 + $0x1618] sm:$0xff]
    %v824 = vld [vmem:[#allocation5 + $0x1620] sm:$0xff]
    %v825 = vld [vmem:[#allocation5 + $0x1628] sm:$0xff]
    %v826 = vld [vmem:[#allocation5 + $0x1630] sm:$0xff]
    %v827 = vld [vmem:[#allocation5 + $0x1638] sm:$0xff]
    %v828 = vld [vmem:[#allocation5 + $0x1640] sm:$0xff]
    %v829 = vld [vmem:[#allocation5 + $0x1648] sm:$0xff]
    %v830 = vld [vmem:[#allocation5 + $0x1650] sm:$0xff]
    %v831 = vld [vmem:[#allocation5 + $0x1658] sm:$0xff]
    %v832 = vld [vmem:[#allocation5 + $0x1660] sm:$0xff]
    %v833 = vld [vmem:[#allocation5 + $0x1668] sm:$0xff]
    %v834 = vld [vmem:[#allocation5 + $0x1670] sm:$0xff]
    %v835 = vld [vmem:[#allocation5 + $0x1678] sm:$0xff]
    %v836 = vld [vmem:[#allocation5 + $0x1680] sm:$0xff]
    %v837 = vld [vmem:[#allocation5 + $0x1688] sm:$0xff]
    %v838 = vld [vmem:[#allocation5 + $0x1690] sm:$0xff]
    %v839 = vld [vmem:[#allocation5 + $0x1698] sm:$0xff]
    %v840 = vld [vmem:[#allocation5 + $0x16a0] sm:$0xff]
    %v841 = vld [vmem:[#allocation5 + $0x16a8] sm:$0xff]
    %v842 = vld [vmem:[#allocation5 + $0x16b0] sm:$0xff]
    %v843 = vld [vmem:[#allocation5 + $0x16b8] sm:$0xff]
    %v844 = vld [vmem:[#allocation5 + $0x16c0] sm:$0xff]
    %v845 = vld [vmem:[#allocation5 + $0x16c8] sm:$0xff]
    %v846 = vld [vmem:[#allocation5 + $0x16d0] sm:$0xff]
    %v847 = vld [vmem:[#allocation5 + $0x16d8] sm:$0xff]
    %v848 = vld [vmem:[#allocation5 + $0x16e0] sm:$0xff]
    %v849 = vld [vmem:[#allocation5 + $0x16e8] sm:$0xff]
    %v850 = vld [vmem:[#allocation5 + $0x16f0] sm:$0xff]
    %v851 = vld [vmem:[#allocation5 + $0x16f8] sm:$0xff]
    %v852 = vld [vmem:[#allocation5 + $0x1700] sm:$0xff]
    %v853 = vld [vmem:[#allocation5 + $0x1708] sm:$0xff]
    %v854 = vld [vmem:[#allocation5 + $0x1710] sm:$0xff]
    %v855 = vld [vmem:[#allocation5 + $0x1718] sm:$0xff]
    %v856 = vld [vmem:[#allocation5 + $0x1720] sm:$0xff]
    %v857 = vld [vmem:[#allocation5 + $0x1728] sm:$0xff]
    %v858 = vld [vmem:[#allocation5 + $0x1730] sm:$0xff]
    %v859 = vld [vmem:[#allocation5 + $0x1738] sm:$0xff]
    %v860 = vld [vmem:[#allocation5 + $0x1740] sm:$0xff]
    %v861 = vld [vmem:[#allocation5 + $0x1748] sm:$0xff]
    %v862 = vld [vmem:[#allocation5 + $0x1750] sm:$0xff]
    %v863 = vld [vmem:[#allocation5 + $0x1758] sm:$0xff]
    %v864 = vld [vmem:[#allocation5 + $0x1760] sm:$0xff]
    %v865 = vld [vmem:[#allocation5 + $0x1768] sm:$0xff]
    %v866 = vld [vmem:[#allocation5 + $0x1770] sm:$0xff]
    %v867 = vld [vmem:[#allocation5 + $0x1778] sm:$0xff]
    %v868 = vld [vmem:[#allocation5 + $0x1780] sm:$0xff]
    %v869 = vld [vmem:[#allocation5 + $0x1788] sm:$0xff]
    %v870 = vld [vmem:[#allocation5 + $0x1790] sm:$0xff]
    %v871 = vld [vmem:[#allocation5 + $0x1798] sm:$0xff]
    %v872 = vld [vmem:[#allocation5 + $0x17a0] sm:$0xff]
    %v873 = vld [vmem:[#allocation5 + $0x17a8] sm:$0xff]
    %v874 = vld [vmem:[#allocation5 + $0x17b0] sm:$0xff]
    %v875 = vld [vmem:[#allocation5 + $0x17b8] sm:$0xff]
    %v876 = vld [vmem:[#allocation5 + $0x17c0] sm:$0xff]
    %v877 = vld [vmem:[#allocation5 + $0x17c8] sm:$0xff]
    %v878 = vld [vmem:[#allocation5 + $0x17d0] sm:$0xff]
    %v879 = vld [vmem:[#allocation5 + $0x17d8] sm:$0xff]
    %v880 = vld [vmem:[#allocation5 + $0x17e0] sm:$0xff]
    %v881 = vld [vmem:[#allocation5 + $0x17e8] sm:$0xff]
    %v882 = vld [vmem:[#allocation5 + $0x17f0] sm:$0xff]
    %v883 = vld [vmem:[#allocation5 + $0x17f8] sm:$0xff]
    %v884 = vld [vmem:[#allocation5 + $0x1800] sm:$0xff]
    %v885 = vld [vmem:[#allocation5 + $0x1808] sm:$0xff]
    %v886 = vld [vmem:[#allocation5 + $0x1810] sm:$0xff]
    %v887 = vld [vmem:[#allocation5 + $0x1818] sm:$0xff]
    %v888 = vld [vmem:[#allocation5 + $0x1820] sm:$0xff]
    %v889 = vld [vmem:[#allocation5 + $0x1828] sm:$0xff]
    %v890 = vld [vmem:[#allocation5 + $0x1830] sm:$0xff]
    %v891 = vld [vmem:[#allocation5 + $0x1838] sm:$0xff]
    %v892 = vld [vmem:[#allocation5 + $0x1840] sm:$0xff]
    %v893 = vld [vmem:[#allocation5 + $0x1848] sm:$0xff]
    %v894 = vld [vmem:[#allocation5 + $0x1850] sm:$0xff]
    %v895 = vld [vmem:[#allocation5 + $0x1858] sm:$0xff]
    %v896 = vld [vmem:[#allocation5 + $0x1860] sm:$0xff]
    %v897 = vld [vmem:[#allocation5 + $0x1868] sm:$0xff]
    %v898 = vld [vmem:[#allocation5 + $0x1870] sm:$0xff]
    %v899 = vld [vmem:[#allocation5 + $0x1878] sm:$0xff]
    %v900 = vld [vmem:[#allocation5 + $0x1880] sm:$0xff]
    %v901 = vld [vmem:[#allocation5 + $0x1888] sm:$0xff]
    %v902 = vld [vmem:[#allocation5 + $0x1890] sm:$0xff]
    %v903 = vld [vmem:[#allocation5 + $0x1898] sm:$0xff]
    %v904 = vld [vmem:[#allocation5 + $0x18a0] sm:$0xff]
    %v905 = vld [vmem:[#allocation5 + $0x18a8] sm:$0xff]
    %v906 = vld [vmem:[#allocation5 + $0x18b0] sm:$0xff]
    %v907 = vld [vmem:[#allocation5 + $0x18b8] sm:$0xff]
    %v908 = vld [vmem:[#allocation5 + $0x18c0] sm:$0xff]
    %v909 = vld [vmem:[#allocation5 + $0x18c8] sm:$0xff]
    %v910 = vld [vmem:[#allocation5 + $0x18d0] sm:$0xff]
    %v911 = vld [vmem:[#allocation5 + $0x18d8] sm:$0xff]
    %v912 = vld [vmem:[#allocation5 + $0x18e0] sm:$0xff]
    %v913 = vld [vmem:[#allocation5 + $0x18e8] sm:$0xff]
    %v914 = vld [vmem:[#allocation5 + $0x18f0] sm:$0xff]
    %v915 = vld [vmem:[#allocation5 + $0x18f8] sm:$0xff]
    %v916 = vld [vmem:[#allocation5 + $0x1900] sm:$0xff]
    %v917 = vld [vmem:[#allocation5 + $0x1908] sm:$0xff]
    %v918 = vld [vmem:[#allocation5 + $0x1910] sm:$0xff]
    %v919 = vld [vmem:[#allocation5 + $0x1918] sm:$0xff]
    %v920 = vld [vmem:[#allocation5 + $0x1920] sm:$0xff]
    %v921 = vld [vmem:[#allocation5 + $0x1928] sm:$0xff]
    %v922 = vld [vmem:[#allocation5 + $0x1930] sm:$0xff]
    %v923 = vld [vmem:[#allocation5 + $0x1938] sm:$0xff]
    %v924 = vld [vmem:[#allocation5 + $0x1940] sm:$0xff]
    %v925 = vld [vmem:[#allocation5 + $0x1948] sm:$0xff]
    %v926 = vld [vmem:[#allocation5 + $0x1950] sm:$0xff]
    %v927 = vld [vmem:[#allocation5 + $0x1958] sm:$0xff]
    %v928 = vld [vmem:[#allocation5 + $0x1960] sm:$0xff]
    %v929 = vld [vmem:[#allocation5 + $0x1968] sm:$0xff]
    %v930 = vld [vmem:[#allocation5 + $0x1970] sm:$0xff]
    %v931 = vld [vmem:[#allocation5 + $0x1978] sm:$0xff]
    %v932 = vld [vmem:[#allocation5 + $0x1980] sm:$0xff]
    %v933 = vld [vmem:[#allocation5 + $0x1988] sm:$0xff]
    %v934 = vld [vmem:[#allocation5 + $0x1990] sm:$0xff]
    %v935 = vld [vmem:[#allocation5 + $0x1998] sm:$0xff]
    %v936 = vld [vmem:[#allocation5 + $0x19a0] sm:$0xff]
    %v937 = vld [vmem:[#allocation5 + $0x19a8] sm:$0xff]
    %v938 = vld [vmem:[#allocation5 + $0x19b0] sm:$0xff]
    %v939 = vld [vmem:[#allocation5 + $0x19b8] sm:$0xff]
    %v940 = vld [vmem:[#allocation5 + $0x19c0] sm:$0xff]
    %v941 = vld [vmem:[#allocation5 + $0x19c8] sm:$0xff]
    %v942 = vld [vmem:[#allocation5 + $0x19d0] sm:$0xff]
    %v943 = vld [vmem:[#allocation5 + $0x19d8] sm:$0xff]
    %v944 = vld [vmem:[#allocation5 + $0x19e0] sm:$0xff]
    %v945 = vld [vmem:[#allocation5 + $0x19e8] sm:$0xff]
    %v946 = vld [vmem:[#allocation5 + $0x19f0] sm:$0xff]
    %v947 = vld [vmem:[#allocation5 + $0x19f8] sm:$0xff]
    %v948 = vld [vmem:[#allocation5 + $0x1a00] sm:$0xff]
    %v949 = vld [vmem:[#allocation5 + $0x1a08] sm:$0xff]
    %v950 = vld [vmem:[#allocation5 + $0x1a10] sm:$0xff]
    %v951 = vld [vmem:[#allocation5 + $0x1a18] sm:$0xff]
    %v952 = vld [vmem:[#allocation5 + $0x1a20] sm:$0xff]
    %v953 = vld [vmem:[#allocation5 + $0x1a28] sm:$0xff]
    %v954 = vld [vmem:[#allocation5 + $0x1a30] sm:$0xff]
    %v955 = vld [vmem:[#allocation5 + $0x1a38] sm:$0xff]
    %v956 = vld [vmem:[#allocation5 + $0x1a40] sm:$0xff]
    %v957 = vld [vmem:[#allocation5 + $0x1a48] sm:$0xff]
    %v958 = vld [vmem:[#allocation5 + $0x1a50] sm:$0xff]
    %v959 = vld [vmem:[#allocation5 + $0x1a58] sm:$0xff]
    %v960 = vld [vmem:[#allocation5 + $0x1a60] sm:$0xff]
    %v961 = vld [vmem:[#allocation5 + $0x1a68] sm:$0xff]
    %v962 = vld [vmem:[#allocation5 + $0x1a70] sm:$0xff]
    %v963 = vld [vmem:[#allocation5 + $0x1a78] sm:$0xff]
    %v964 = vld [vmem:[#allocation5 + $0x1a80] sm:$0xff]
    %v965 = vld [vmem:[#allocation5 + $0x1a88] sm:$0xff]
    %v966 = vld [vmem:[#allocation5 + $0x1a90] sm:$0xff]
    %v967 = vld [vmem:[#allocation5 + $0x1a98] sm:$0xff]
    %v968 = vld [vmem:[#allocation5 + $0x1aa0] sm:$0xff]
    %v969 = vld [vmem:[#allocation5 + $0x1aa8] sm:$0xff]
    %v970 = vld [vmem:[#allocation5 + $0x1ab0] sm:$0xff]
    %v971 = vld [vmem:[#allocation5 + $0x1ab8] sm:$0xff]
    %v972 = vld [vmem:[#allocation5 + $0x1ac0] sm:$0xff]
    %v973 = vld [vmem:[#allocation5 + $0x1ac8] sm:$0xff]
    %v974 = vld [vmem:[#allocation5 + $0x1ad0] sm:$0xff]
    %v975 = vld [vmem:[#allocation5 + $0x1ad8] sm:$0xff]
    %v976 = vld [vmem:[#allocation5 + $0x1ae0] sm:$0xff]
    %v977 = vld [vmem:[#allocation5 + $0x1ae8] sm:$0xff]
    %v978 = vld [vmem:[#allocation5 + $0x1af0] sm:$0xff]
    %v979 = vld [vmem:[#allocation5 + $0x1af8] sm:$0xff]
    %v980 = vld [vmem:[#allocation5 + $0x1b00] sm:$0xff]
    %v981 = vld [vmem:[#allocation5 + $0x1b08] sm:$0xff]
    %v982 = vld [vmem:[#allocation5 + $0x1b10] sm:$0xff]
    %v983 = vld [vmem:[#allocation5 + $0x1b18] sm:$0xff]
    %v984 = vld [vmem:[#allocation5 + $0x1b20] sm:$0xff]
    %v985 = vld [vmem:[#allocation5 + $0x1b28] sm:$0xff]
    %v986 = vld [vmem:[#allocation5 + $0x1b30] sm:$0xff]
    %v987 = vld [vmem:[#allocation5 + $0x1b38] sm:$0xff]
    %v988 = vld [vmem:[#allocation5 + $0x1b40] sm:$0xff]
    %v989 = vld [vmem:[#allocation5 + $0x1b48] sm:$0xff]
    %v990 = vld [vmem:[#allocation5 + $0x1b50] sm:$0xff]
    %v991 = vld [vmem:[#allocation5 + $0x1b58] sm:$0xff]
    %v992 = vld [vmem:[#allocation5 + $0x1b60] sm:$0xff]
    %v993 = vld [vmem:[#allocation5 + $0x1b68] sm:$0xff]
    %v994 = vld [vmem:[#allocation5 + $0x1b70] sm:$0xff]
    %v995 = vld [vmem:[#allocation5 + $0x1b78] sm:$0xff]
    %v996 = vld [vmem:[#allocation5 + $0x1b80] sm:$0xff]
    %v997 = vld [vmem:[#allocation5 + $0x1b88] sm:$0xff]
    %v998 = vld [vmem:[#allocation5 + $0x1b90] sm:$0xff]
    %v999 = vld [vmem:[#allocation5 + $0x1b98] sm:$0xff]
    %v1000 = vld [vmem:[#allocation5 + $0x1ba0] sm:$0xff]
    %v1001 = vld [vmem:[#allocation5 + $0x1ba8] sm:$0xff]
    %v1002 = vld [vmem:[#allocation5 + $0x1bb0] sm:$0xff]
    %v1003 = vld [vmem:[#allocation5 + $0x1bb8] sm:$0xff]
    %v1004 = vld [vmem:[#allocation5 + $0x1bc0] sm:$0xff]
    %v1005 = vld [vmem:[#allocation5 + $0x1bc8] sm:$0xff]
    %v1006 = vld [vmem:[#allocation5 + $0x1bd0] sm:$0xff]
    %v1007 = vld [vmem:[#allocation5 + $0x1bd8] sm:$0xff]
    %v1008 = vld [vmem:[#allocation5 + $0x1be0] sm:$0xff]
    %v1009 = vld [vmem:[#allocation5 + $0x1be8] sm:$0xff]
    %v1010 = vld [vmem:[#allocation5 + $0x1bf0] sm:$0xff]
    %v1011 = vld [vmem:[#allocation5 + $0x1bf8] sm:$0xff]
    %v1012 = vld [vmem:[#allocation5 + $0x1c00] sm:$0xff]
    %v1013 = vld [vmem:[#allocation5 + $0x1c08] sm:$0xff]
    %v1014 = vld [vmem:[#allocation5 + $0x1c10] sm:$0xff]
    %v1015 = vld [vmem:[#allocation5 + $0x1c18] sm:$0xff]
    %v1016 = vld [vmem:[#allocation5 + $0x1c20] sm:$0xff]
    %v1017 = vld [vmem:[#allocation5 + $0x1c28] sm:$0xff]
    %v1018 = vld [vmem:[#allocation5 + $0x1c30] sm:$0xff]
    %v1019 = vld [vmem:[#allocation5 + $0x1c38] sm:$0xff]
    %v1020 = vld [vmem:[#allocation5 + $0x1c40] sm:$0xff]
    %v1021 = vld [vmem:[#allocation5 + $0x1c48] sm:$0xff]
    %v1022 = vld [vmem:[#allocation5 + $0x1c50] sm:$0xff]
    %v1023 = vld [vmem:[#allocation5 + $0x1c58] sm:$0xff]
    %v1024 = vld [vmem:[#allocation5 + $0x1c60] sm:$0xff]
    %v1025 = vld [vmem:[#allocation5 + $0x1c68] sm:$0xff]
    %v1026 = vld [vmem:[#allocation5 + $0x1c70] sm:$0xff]
    %v1027 = vld [vmem:[#allocation5 + $0x1c78] sm:$0xff]
    %v1028 = vld [vmem:[#allocation5 + $0x1c80] sm:$0xff]
    %v1029 = vld [vmem:[#allocation5 + $0x1c88] sm:$0xff]
    %v1030 = vld [vmem:[#allocation5 + $0x1c90] sm:$0xff]
    %v1031 = vld [vmem:[#allocation5 + $0x1c98] sm:$0xff]
    %v1032 = vld [vmem:[#allocation5 + $0x1ca0] sm:$0xff]
    %v1033 = vld [vmem:[#allocation5 + $0x1ca8] sm:$0xff]
    %v1034 = vld [vmem:[#allocation5 + $0x1cb0] sm:$0xff]
    %v1035 = vld [vmem:[#allocation5 + $0x1cb8] sm:$0xff]
    %v1036 = vld [vmem:[#allocation5 + $0x1cc0] sm:$0xff]
    %v1037 = vld [vmem:[#allocation5 + $0x1cc8] sm:$0xff]
    %v1038 = vld [vmem:[#allocation5 + $0x1cd0] sm:$0xff]
    %v1039 = vld [vmem:[#allocation5 + $0x1cd8] sm:$0xff]
    %v1040 = vld [vmem:[#allocation5 + $0x1ce0] sm:$0xff]
    %v1041 = vld [vmem:[#allocation5 + $0x1ce8] sm:$0xff]
    %v1042 = vld [vmem:[#allocation5 + $0x1cf0] sm:$0xff]
    %v1043 = vld [vmem:[#allocation5 + $0x1cf8] sm:$0xff]
    %v1044 = vld [vmem:[#allocation5 + $0x1d00] sm:$0xff]
    %v1045 = vld [vmem:[#allocation5 + $0x1d08] sm:$0xff]
    %v1046 = vld [vmem:[#allocation5 + $0x1d10] sm:$0xff]
    %v1047 = vld [vmem:[#allocation5 + $0x1d18] sm:$0xff]
    %v1048 = vld [vmem:[#allocation5 + $0x1d20] sm:$0xff]
    %v1049 = vld [vmem:[#allocation5 + $0x1d28] sm:$0xff]
    %v1050 = vld [vmem:[#allocation5 + $0x1d30] sm:$0xff]
    %v1051 = vld [vmem:[#allocation5 + $0x1d38] sm:$0xff]
    %v1052 = vld [vmem:[#allocation5 + $0x1d40] sm:$0xff]
    %v1053 = vld [vmem:[#allocation5 + $0x1d48] sm:$0xff]
    %v1054 = vld [vmem:[#allocation5 + $0x1d50] sm:$0xff]
    %v1055 = vld [vmem:[#allocation5 + $0x1d58] sm:$0xff]
    %v1056 = vld [vmem:[#allocation5 + $0x1d60] sm:$0xff]
    %v1057 = vld [vmem:[#allocation5 + $0x1d68] sm:$0xff]
    %v1058 = vld [vmem:[#allocation5 + $0x1d70] sm:$0xff]
    %v1059 = vld [vmem:[#allocation5 + $0x1d78] sm:$0xff]
    %v1060 = vld [vmem:[#allocation5 + $0x1d80] sm:$0xff]
    %v1061 = vld [vmem:[#allocation5 + $0x1d88] sm:$0xff]
    %v1062 = vld [vmem:[#allocation5 + $0x1d90] sm:$0xff]
    %v1063 = vld [vmem:[#allocation5 + $0x1d98] sm:$0xff]
    %v1064 = vld [vmem:[#allocation5 + $0x1da0] sm:$0xff]
    %v1065 = vld [vmem:[#allocation5 + $0x1da8] sm:$0xff]
    %v1066 = vld [vmem:[#allocation5 + $0x1db0] sm:$0xff]
    %v1067 = vld [vmem:[#allocation5 + $0x1db8] sm:$0xff]
    %v1068 = vld [vmem:[#allocation5 + $0x1dc0] sm:$0xff]
    %v1069 = vld [vmem:[#allocation5 + $0x1dc8] sm:$0xff]
    %v1070 = vld [vmem:[#allocation5 + $0x1dd0] sm:$0xff]
    %v1071 = vld [vmem:[#allocation5 + $0x1dd8] sm:$0xff]
    %v1072 = vld [vmem:[#allocation5 + $0x1de0] sm:$0xff]
    %v1073 = vld [vmem:[#allocation5 + $0x1de8] sm:$0xff]
    %v1074 = vld [vmem:[#allocation5 + $0x1df0] sm:$0xff]
    %v1075 = vld [vmem:[#allocation5 + $0x1df8] sm:$0xff]
    %v1076 = vld [vmem:[#allocation5 + $0x1e00] sm:$0xff]
    %v1077 = vld [vmem:[#allocation5 + $0x1e08] sm:$0xff]
    %v1078 = vld [vmem:[#allocation5 + $0x1e10] sm:$0xff]
    %v1079 = vld [vmem:[#allocation5 + $0x1e18] sm:$0xff]
    %v1080 = vld [vmem:[#allocation5 + $0x1e20] sm:$0xff]
    %v1081 = vld [vmem:[#allocation5 + $0x1e28] sm:$0xff]
    %v1082 = vld [vmem:[#allocation5 + $0x1e30] sm:$0xff]
    %v1083 = vld [vmem:[#allocation5 + $0x1e38] sm:$0xff]
    %v1084 = vld [vmem:[#allocation5 + $0x1e40] sm:$0xff]
    %v1085 = vld [vmem:[#allocation5 + $0x1e48] sm:$0xff]
    %v1086 = vld [vmem:[#allocation5 + $0x1e50] sm:$0xff]
    %v1087 = vld [vmem:[#allocation5 + $0x1e58] sm:$0xff]
    %v1088 = vld [vmem:[#allocation5 + $0x1e60] sm:$0xff]
    %v1089 = vld [vmem:[#allocation5 + $0x1e68] sm:$0xff]
    %v1090 = vld [vmem:[#allocation5 + $0x1e70] sm:$0xff]
    %v1091 = vld [vmem:[#allocation5 + $0x1e78] sm:$0xff]
    %v1092 = vld [vmem:[#allocation5 + $0x1e80] sm:$0xff]
    %v1093 = vld [vmem:[#allocation5 + $0x1e88] sm:$0xff]
    %v1094 = vld [vmem:[#allocation5 + $0x1e90] sm:$0xff]
    %v1095 = vld [vmem:[#allocation5 + $0x1e98] sm:$0xff]
    %v1096 = vld [vmem:[#allocation5 + $0x1ea0] sm:$0xff]
    %v1097 = vld [vmem:[#allocation5 + $0x1ea8] sm:$0xff]
    %v1098 = vld [vmem:[#allocation5 + $0x1eb0] sm:$0xff]
    %v1099 = vld [vmem:[#allocation5 + $0x1eb8] sm:$0xff]
    %v1100 = vld [vmem:[#allocation5 + $0x1ec0] sm:$0xff]
    %v1101 = vld [vmem:[#allocation5 + $0x1ec8] sm:$0xff]
    %v1102 = vld [vmem:[#allocation5 + $0x1ed0] sm:$0xff]
    %v1103 = vld [vmem:[#allocation5 + $0x1ed8] sm:$0xff]
    %v1104 = vld [vmem:[#allocation5 + $0x1ee0] sm:$0xff]
    %v1105 = vld [vmem:[#allocation5 + $0x1ee8] sm:$0xff]
    %v1106 = vld [vmem:[#allocation5 + $0x1ef0] sm:$0xff]
    %v1107 = vld [vmem:[#allocation5 + $0x1ef8] sm:$0xff]
    %v1108 = vld [vmem:[#allocation5 + $0x1f00] sm:$0xff]
    %v1109 = vld [vmem:[#allocation5 + $0x1f08] sm:$0xff]
    %v1110 = vld [vmem:[#allocation5 + $0x1f10] sm:$0xff]
    %v1111 = vld [vmem:[#allocation5 + $0x1f18] sm:$0xff]
    %v1112 = vld [vmem:[#allocation5 + $0x1f20] sm:$0xff]
    %v1113 = vld [vmem:[#allocation5 + $0x1f28] sm:$0xff]
    %v1114 = vld [vmem:[#allocation5 + $0x1f30] sm:$0xff]
    %v1115 = vld [vmem:[#allocation5 + $0x1f38] sm:$0xff]
    %v2116 = vunpack.c.l.b16 %v116
    %v2117 = vunpack.c.h.b16 %v116
    %v2118 = vunpack.c.l.b16 %v117
    %v2119 = vunpack.c.h.b16 %v117
    %v2120 = vunpack.c.l.b16 %v118
    %v2121 = vunpack.c.h.b16 %v118
    %v2122 = vunpack.c.l.b16 %v119
    %v2123 = vunpack.c.h.b16 %v119
    %v2124 = vunpack.c.l.b16 %v120
    %v2125 = vunpack.c.h.b16 %v120
    %v2126 = vunpack.c.l.b16 %v121
    %v2127 = vunpack.c.h.b16 %v121
    %v2128 = vunpack.c.l.b16 %v122
    %v2129 = vunpack.c.h.b16 %v122
    %v2130 = vunpack.c.l.b16 %v123
    %v2131 = vunpack.c.h.b16 %v123
    %v2132 = vunpack.c.l.b16 %v124
    %v2133 = vunpack.c.h.b16 %v124
    %v2134 = vunpack.c.l.b16 %v125
    %v2135 = vunpack.c.h.b16 %v125
    %v2136 = vunpack.c.l.b16 %v126
    %v2137 = vunpack.c.h.b16 %v126
    %v2138 = vunpack.c.l.b16 %v127
    %v2139 = vunpack.c.h.b16 %v127
    %v2140 = vunpack.c.l.b16 %v128
    %v2141 = vunpack.c.h.b16 %v128
    %v2142 = vunpack.c.l.b16 %v129
    %v2143 = vunpack.c.h.b16 %v129
    %v2144 = vunpack.c.l.b16 %v130
    %v2145 = vunpack.c.h.b16 %v130
    %v2146 = vunpack.c.l.b16 %v131
    %v2147 = vunpack.c.h.b16 %v131
    %v2148 = vunpack.c.l.b16 %v132
    %v2149 = vunpack.c.h.b16 %v132
    %v2150 = vunpack.c.l.b16 %v133
    %v2151 = vunpack.c.h.b16 %v133
    %v2152 = vunpack.c.l.b16 %v134
    %v2153 = vunpack.c.h.b16 %v134
    %v2154 = vunpack.c.l.b16 %v135
    %v2155 = vunpack.c.h.b16 %v135
    %v2156 = vunpack.c.l.b16 %v136
    %v2157 = vunpack.c.h.b16 %v136
    %v2158 = vunpack.c.l.b16 %v137
    %v2159 = vunpack.c.h.b16 %v137
    %v2160 = vunpack.c.l.b16 %v138
    %v2161 = vunpack.c.h.b16 %v138
    %v2162 = vunpack.c.l.b16 %v139
    %v2163 = vunpack.c.h.b16 %v139
    %v2164 = vunpack.c.l.b16 %v140
    %v2165 = vunpack.c.h.b16 %v140
    %v2166 = vunpack.c.l.b16 %v141
    %v2167 = vunpack.c.h.b16 %v141
    %v2168 = vunpack.c.l.b16 %v142
    %v2169 = vunpack.c.h.b16 %v142
    %v2170 = vunpack.c.l.b16 %v143
    %v2171 = vunpack.c.h.b16 %v143
    %v2172 = vunpack.c.l.b16 %v144
    %v2173 = vunpack.c.h.b16 %v144
    %v2174 = vunpack.c.l.b16 %v145
    %v2175 = vunpack.c.h.b16 %v145
    %v2176 = vunpack.c.l.b16 %v146
    %v2177 = vunpack.c.h.b16 %v146
    %v2178 = vunpack.c.l.b16 %v147
    %v2179 = vunpack.c.h.b16 %v147
    %v2180 = vunpack.c.l.b16 %v148
    %v2181 = vunpack.c.h.b16 %v148
    %v2182 = vunpack.c.l.b16 %v149
    %v2183 = vunpack.c.h.b16 %v149
    %v2184 = vunpack.c.l.b16 %v150
    %v2185 = vunpack.c.h.b16 %v150
    %v2186 = vunpack.c.l.b16 %v151
    %v2187 = vunpack.c.h.b16 %v151
    %v2188 = vunpack.c.l.b16 %v152
    %v2189 = vunpack.c.h.b16 %v152
    %v2190 = vunpack.c.l.b16 %v153
    %v2191 = vunpack.c.h.b16 %v153
    %v2192 = vunpack.c.l.b16 %v154
    %v2193 = vunpack.c.h.b16 %v154
    %v2194 = vunpack.c.l.b16 %v155
    %v2195 = vunpack.c.h.b16 %v155
    %v2196 = vunpack.c.l.b16 %v156
    %v2197 = vunpack.c.h.b16 %v156
    %v2198 = vunpack.c.l.b16 %v157
    %v2199 = vunpack.c.h.b16 %v157
    %v2200 = vunpack.c.l.b16 %v158
    %v2201 = vunpack.c.h.b16 %v158
    %v2202 = vunpack.c.l.b16 %v159
    %v2203 = vunpack.c.h.b16 %v159
    %v2204 = vunpack.c.l.b16 %v160
    %v2205 = vunpack.c.h.b16 %v160
    %v2206 = vunpack.c.l.b16 %v161
    %v2207 = vunpack.c.h.b16 %v161
    %v2208 = vunpack.c.l.b16 %v162
    %v2209 = vunpack.c.h.b16 %v162
    %v2210 = vunpack.c.l.b16 %v163
    %v2211 = vunpack.c.h.b16 %v163
    %v2212 = vunpack.c.l.b16 %v164
    %v2213 = vunpack.c.h.b16 %v164
    %v2214 = vunpack.c.l.b16 %v165
    %v2215 = vunpack.c.h.b16 %v165
    %v2216 = vunpack.c.l.b16 %v166
    %v2217 = vunpack.c.h.b16 %v166
    %v2218 = vunpack.c.l.b16 %v167
    %v2219 = vunpack.c.h.b16 %v167
    %v2220 = vunpack.c.l.b16 %v168
    %v2221 = vunpack.c.h.b16 %v168
    %v2222 = vunpack.c.l.b16 %v169
    %v2223 = vunpack.c.h.b16 %v169
    %v2224 = vunpack.c.l.b16 %v170
    %v2225 = vunpack.c.h.b16 %v170
    %v2226 = vunpack.c.l.b16 %v171
    %v2227 = vunpack.c.h.b16 %v171
    %v2228 = vunpack.c.l.b16 %v172
    %v2229 = vunpack.c.h.b16 %v172
    %v2230 = vunpack.c.l.b16 %v173
    %v2231 = vunpack.c.h.b16 %v173
    %v2232 = vunpack.c.l.b16 %v174
    %v2233 = vunpack.c.h.b16 %v174
    %v2234 = vunpack.c.l.b16 %v175
    %v2235 = vunpack.c.h.b16 %v175
    %v2236 = vunpack.c.l.b16 %v176
    %v2237 = vunpack.c.h.b16 %v176
    %v2238 = vunpack.c.l.b16 %v177
    %v2239 = vunpack.c.h.b16 %v177
    %v2240 = vunpack.c.l.b16 %v178
    %v2241 = vunpack.c.h.b16 %v178
    %v2242 = vunpack.c.l.b16 %v179
    %v2243 = vunpack.c.h.b16 %v179
    %v2244 = vunpack.c.l.b16 %v180
    %v2245 = vunpack.c.h.b16 %v180
    %v2246 = vunpack.c.l.b16 %v181
    %v2247 = vunpack.c.h.b16 %v181
    %v2248 = vunpack.c.l.b16 %v182
    %v2249 = vunpack.c.h.b16 %v182
    %v2250 = vunpack.c.l.b16 %v183
    %v2251 = vunpack.c.h.b16 %v183
    %v2252 = vunpack.c.l.b16 %v184
    %v2253 = vunpack.c.h.b16 %v184
    %v2254 = vunpack.c.l.b16 %v185
    %v2255 = vunpack.c.h.b16 %v185
    %v2256 = vunpack.c.l.b16 %v186
    %v2257 = vunpack.c.h.b16 %v186
    %v2258 = vunpack.c.l.b16 %v187
    %v2259 = vunpack.c.h.b16 %v187
    %v2260 = vunpack.c.l.b16 %v188
    %v2261 = vunpack.c.h.b16 %v188
    %v2262 = vunpack.c.l.b16 %v189
    %v2263 = vunpack.c.h.b16 %v189
    %v2264 = vunpack.c.l.b16 %v190
    %v2265 = vunpack.c.h.b16 %v190
    %v2266 = vunpack.c.l.b16 %v191
    %v2267 = vunpack.c.h.b16 %v191
    %v2268 = vunpack.c.l.b16 %v192
    %v2269 = vunpack.c.h.b16 %v192
    %v2270 = vunpack.c.l.b16 %v193
    %v2271 = vunpack.c.h.b16 %v193
    %v2272 = vunpack.c.l.b16 %v194
    %v2273 = vunpack.c.h.b16 %v194
    %v2274 = vunpack.c.l.b16 %v195
    %v2275 = vunpack.c.h.b16 %v195
    %v2276 = vunpack.c.l.b16 %v196
    %v2277 = vunpack.c.h.b16 %v196
    %v2278 = vunpack.c.l.b16 %v197
    %v2279 = vunpack.c.h.b16 %v197
    %v2280 = vunpack.c.l.b16 %v198
    %v2281 = vunpack.c.h.b16 %v198
    %v2282 = vunpack.c.l.b16 %v199
    %v2283 = vunpack.c.h.b16 %v199
    %v2284 = vunpack.c.l.b16 %v200
    %v2285 = vunpack.c.h.b16 %v200
    %v2286 = vunpack.c.l.b16 %v201
    %v2287 = vunpack.c.h.b16 %v201
    %v2288 = vunpack.c.l.b16 %v202
    %v2289 = vunpack.c.h.b16 %v202
    %v2290 = vunpack.c.l.b16 %v203
    %v2291 = vunpack.c.h.b16 %v203
    %v2292 = vunpack.c.l.b16 %v204
    %v2293 = vunpack.c.h.b16 %v204
    %v2294 = vunpack.c.l.b16 %v205
    %v2295 = vunpack.c.h.b16 %v205
    %v2296 = vunpack.c.l.b16 %v206
    %v2297 = vunpack.c.h.b16 %v206
    %v2298 = vunpack.c.l.b16 %v207
    %v2299 = vunpack.c.h.b16 %v207
    %v2300 = vunpack.c.l.b16 %v208
    %v2301 = vunpack.c.h.b16 %v208
    %v2302 = vunpack.c.l.b16 %v209
    %v2303 = vunpack.c.h.b16 %v209
    %v2304 = vunpack.c.l.b16 %v210
    %v2305 = vunpack.c.h.b16 %v210
    %v2306 = vunpack.c.l.b16 %v211
    %v2307 = vunpack.c.h.b16 %v211
    %v2308 = vunpack.c.l.b16 %v212
    %v2309 = vunpack.c.h.b16 %v212
    %v2310 = vunpack.c.l.b16 %v213
    %v2311 = vunpack.c.h.b16 %v213
    %v2312 = vunpack.c.l.b16 %v214
    %v2313 = vunpack.c.h.b16 %v214
    %v2314 = vunpack.c.l.b16 %v215
    %v2315 = vunpack.c.h.b16 %v215
    %v2316 = vunpack.c.l.b16 %v216
    %v2317 = vunpack.c.h.b16 %v216
    %v2318 = vunpack.c.l.b16 %v217
    %v2319 = vunpack.c.h.b16 %v217
    %v2320 = vunpack.c.l.b16 %v218
    %v2321 = vunpack.c.h.b16 %v218
    %v2322 = vunpack.c.l.b16 %v219
    %v2323 = vunpack.c.h.b16 %v219
    %v2324 = vunpack.c.l.b16 %v220
    %v2325 = vunpack.c.h.b16 %v220
    %v2326 = vunpack.c.l.b16 %v221
    %v2327 = vunpack.c.h.b16 %v221
    %v2328 = vunpack.c.l.b16 %v222
    %v2329 = vunpack.c.h.b16 %v222
    %v2330 = vunpack.c.l.b16 %v223
    %v2331 = vunpack.c.h.b16 %v223
    %v2332 = vunpack.c.l.b16 %v224
    %v2333 = vunpack.c.h.b16 %v224
    %v2334 = vunpack.c.l.b16 %v225
    %v2335 = vunpack.c.h.b16 %v225
    %v2336 = vunpack.c.l.b16 %v226
    %v2337 = vunpack.c.h.b16 %v226
    %v2338 = vunpack.c.l.b16 %v227
    %v2339 = vunpack.c.h.b16 %v227
    %v2340 = vunpack.c.l.b16 %v228
    %v2341 = vunpack.c.h.b16 %v228
    %v2342 = vunpack.c.l.b16 %v229
    %v2343 = vunpack.c.h.b16 %v229
    %v2344 = vunpack.c.l.b16 %v230
    %v2345 = vunpack.c.h.b16 %v230
    %v2346 = vunpack.c.l.b16 %v231
    %v2347 = vunpack.c.h.b16 %v231
    %v2348 = vunpack.c.l.b16 %v232
    %v2349 = vunpack.c.h.b16 %v232
    %v2350 = vunpack.c.l.b16 %v233
    %v2351 = vunpack.c.h.b16 %v233
    %v2352 = vunpack.c.l.b16 %v234
    %v2353 = vunpack.c.h.b16 %v234
    %v2354 = vunpack.c.l.b16 %v235
    %v2355 = vunpack.c.h.b16 %v235
    %v2356 = vunpack.c.l.b16 %v236
    %v2357 = vunpack.c.h.b16 %v236
    %v2358 = vunpack.c.l.b16 %v237
    %v2359 = vunpack.c.h.b16 %v237
    %v2360 = vunpack.c.l.b16 %v238
    %v2361 = vunpack.c.h.b16 %v238
    %v2362 = vunpack.c.l.b16 %v239
    %v2363 = vunpack.c.h.b16 %v239
    %v2364 = vunpack.c.l.b16 %v240
    %v2365 = vunpack.c.h.b16 %v240
    %v2366 = vunpack.c.l.b16 %v241
    %v2367 = vunpack.c.h.b16 %v241
    %v2368 = vunpack.c.l.b16 %v242
    %v2369 = vunpack.c.h.b16 %v242
    %v2370 = vunpack.c.l.b16 %v243
    %v2371 = vunpack.c.h.b16 %v243
    %v2372 = vunpack.c.l.b16 %v244
    %v2373 = vunpack.c.h.b16 %v244
    %v2374 = vunpack.c.l.b16 %v245
    %v2375 = vunpack.c.h.b16 %v245
    %v2376 = vunpack.c.l.b16 %v246
    %v2377 = vunpack.c.h.b16 %v246
    %v2378 = vunpack.c.l.b16 %v247
    %v2379 = vunpack.c.h.b16 %v247
    %v2380 = vunpack.c.l.b16 %v248
    %v2381 = vunpack.c.h.b16 %v248
    %v2382 = vunpack.c.l.b16 %v249
    %v2383 = vunpack.c.h.b16 %v249
    %v2384 = vunpack.c.l.b16 %v250
    %v2385 = vunpack.c.h.b16 %v250
    %v2386 = vunpack.c.l.b16 %v251
    %v2387 = vunpack.c.h.b16 %v251
    %v2388 = vunpack.c.l.b16 %v252
    %v2389 = vunpack.c.h.b16 %v252
    %v2390 = vunpack.c.l.b16 %v253
    %v2391 = vunpack.c.h.b16 %v253
    %v2392 = vunpack.c.l.b16 %v254
    %v2393 = vunpack.c.h.b16 %v254
    %v2394 = vunpack.c.l.b16 %v255
    %v2395 = vunpack.c.h.b16 %v255
    %v2396 = vunpack.c.l.b16 %v256
    %v2397 = vunpack.c.h.b16 %v256
    %v2398 = vunpack.c.l.b16 %v257
    %v2399 = vunpack.c.h.b16 %v257
    %v2400 = vunpack.c.l.b16 %v258
    %v2401 = vunpack.c.h.b16 %v258
    %v2402 = vunpack.c.l.b16 %v259
    %v2403 = vunpack.c.h.b16 %v259
    %v2404 = vunpack.c.l.b16 %v260
    %v2405 = vunpack.c.h.b16 %v260
    %v2406 = vunpack.c.l.b16 %v261
    %v2407 = vunpack.c.h.b16 %v261
    %v2408 = vunpack.c.l.b16 %v262
    %v2409 = vunpack.c.h.b16 %v262
    %v2410 = vunpack.c.l.b16 %v263
    %v2411 = vunpack.c.h.b16 %v263
    %v2412 = vunpack.c.l.b16 %v264
    %v2413 = vunpack.c.h.b16 %v264
    %v2414 = vunpack.c.l.b16 %v265
    %v2415 = vunpack.c.h.b16 %v265
    %v2416 = vunpack.c.l.b16 %v266
    %v2417 = vunpack.c.h.b16 %v266
    %v2418 = vunpack.c.l.b16 %v267
    %v2419 = vunpack.c.h.b16 %v267
    %v2420 = vunpack.c.l.b16 %v268
    %v2421 = vunpack.c.h.b16 %v268
    %v2422 = vunpack.c.l.b16 %v269
    %v2423 = vunpack.c.h.b16 %v269
    %v2424 = vunpack.c.l.b16 %v270
    %v2425 = vunpack.c.h.b16 %v270
    %v2426 = vunpack.c.l.b16 %v271
    %v2427 = vunpack.c.h.b16 %v271
    %v2428 = vunpack.c.l.b16 %v272
    %v2429 = vunpack.c.h.b16 %v272
    %v2430 = vunpack.c.l.b16 %v273
    %v2431 = vunpack.c.h.b16 %v273
    %v2432 = vunpack.c.l.b16 %v274
    %v2433 = vunpack.c.h.b16 %v274
    %v2434 = vunpack.c.l.b16 %v275
    %v2435 = vunpack.c.h.b16 %v275
    %v2436 = vunpack.c.l.b16 %v276
    %v2437 = vunpack.c.h.b16 %v276
    %v2438 = vunpack.c.l.b16 %v277
    %v2439 = vunpack.c.h.b16 %v277
    %v2440 = vunpack.c.l.b16 %v278
    %v2441 = vunpack.c.h.b16 %v278
    %v2442 = vunpack.c.l.b16 %v279
    %v2443 = vunpack.c.h.b16 %v279
    %v2444 = vunpack.c.l.b16 %v280
    %v2445 = vunpack.c.h.b16 %v280
    %v2446 = vunpack.c.l.b16 %v281
    %v2447 = vunpack.c.h.b16 %v281
    %v2448 = vunpack.c.l.b16 %v282
    %v2449 = vunpack.c.h.b16 %v282
    %v2450 = vunpack.c.l.b16 %v283
    %v2451 = vunpack.c.h.b16 %v283
    %v2452 = vunpack.c.l.b16 %v284
    %v2453 = vunpack.c.h.b16 %v284
    %v2454 = vunpack.c.l.b16 %v285
    %v2455 = vunpack.c.h.b16 %v285
    %v2456 = vunpack.c.l.b16 %v286
    %v2457 = vunpack.c.h.b16 %v286
    %v2458 = vunpack.c.l.b16 %v287
    %v2459 = vunpack.c.h.b16 %v287
    %v2460 = vunpack.c.l.b16 %v288
    %v2461 = vunpack.c.h.b16 %v288
    %v2462 = vunpack.c.l.b16 %v289
    %v2463 = vunpack.c.h.b16 %v289
    %v2464 = vunpack.c.l.b16 %v290
    %v2465 = vunpack.c.h.b16 %v290
    %v2466 = vunpack.c.l.b16 %v291
    %v2467 = vunpack.c.h.b16 %v291
    %v2468 = vunpack.c.l.b16 %v292
    %v2469 = vunpack.c.h.b16 %v292
    %v2470 = vunpack.c.l.b16 %v293
    %v2471 = vunpack.c.h.b16 %v293
    %v2472 = vunpack.c.l.b16 %v294
    %v2473 = vunpack.c.h.b16 %v294
    %v2474 = vunpack.c.l.b16 %v295
    %v2475 = vunpack.c.h.b16 %v295
    %v2476 = vunpack.c.l.b16 %v296
    %v2477 = vunpack.c.h.b16 %v296
    %v2478 = vunpack.c.l.b16 %v297
    %v2479 = vunpack.c.h.b16 %v297
    %v2480 = vunpack.c.l.b16 %v298
    %v2481 = vunpack.c.h.b16 %v298
    %v2482 = vunpack.c.l.b16 %v299
    %v2483 = vunpack.c.h.b16 %v299
    %v2484 = vunpack.c.l.b16 %v300
    %v2485 = vunpack.c.h.b16 %v300
    %v2486 = vunpack.c.l.b16 %v301
    %v2487 = vunpack.c.h.b16 %v301
    %v2488 = vunpack.c.l.b16 %v302
    %v2489 = vunpack.c.h.b16 %v302
    %v2490 = vunpack.c.l.b16 %v303
    %v2491 = vunpack.c.h.b16 %v303
    %v2492 = vunpack.c.l.b16 %v304
    %v2493 = vunpack.c.h.b16 %v304
    %v2494 = vunpack.c.l.b16 %v305
    %v2495 = vunpack.c.h.b16 %v305
    %v2496 = vunpack.c.l.b16 %v306
    %v2497 = vunpack.c.h.b16 %v306
    %v2498 = vunpack.c.l.b16 %v307
    %v2499 = vunpack.c.h.b16 %v307
    %v2500 = vunpack.c.l.b16 %v308
    %v2501 = vunpack.c.h.b16 %v308
    %v2502 = vunpack.c.l.b16 %v309
    %v2503 = vunpack.c.h.b16 %v309
    %v2504 = vunpack.c.l.b16 %v310
    %v2505 = vunpack.c.h.b16 %v310
    %v2506 = vunpack.c.l.b16 %v311
    %v2507 = vunpack.c.h.b16 %v311
    %v2508 = vunpack.c.l.b16 %v312
    %v2509 = vunpack.c.h.b16 %v312
    %v2510 = vunpack.c.l.b16 %v313
    %v2511 = vunpack.c.h.b16 %v313
    %v2512 = vunpack.c.l.b16 %v314
    %v2513 = vunpack.c.h.b16 %v314
    %v2514 = vunpack.c.l.b16 %v315
    %v2515 = vunpack.c.h.b16 %v315
    %v2516 = vunpack.c.l.b16 %v316
    %v2517 = vunpack.c.h.b16 %v316
    %v2518 = vunpack.c.l.b16 %v317
    %v2519 = vunpack.c.h.b16 %v317
    %v2520 = vunpack.c.l.b16 %v318
    %v2521 = vunpack.c.h.b16 %v318
    %v2522 = vunpack.c.l.b16 %v319
    %v2523 = vunpack.c.h.b16 %v319
    %v2524 = vunpack.c.l.b16 %v320
    %v2525 = vunpack.c.h.b16 %v320
    %v2526 = vunpack.c.l.b16 %v321
    %v2527 = vunpack.c.h.b16 %v321
    %v2528 = vunpack.c.l.b16 %v322
    %v2529 = vunpack.c.h.b16 %v322
    %v2530 = vunpack.c.l.b16 %v323
    %v2531 = vunpack.c.h.b16 %v323
    %v2532 = vunpack.c.l.b16 %v324
    %v2533 = vunpack.c.h.b16 %v324
    %v2534 = vunpack.c.l.b16 %v325
    %v2535 = vunpack.c.h.b16 %v325
    %v2536 = vunpack.c.l.b16 %v326
    %v2537 = vunpack.c.h.b16 %v326
    %v2538 = vunpack.c.l.b16 %v327
    %v2539 = vunpack.c.h.b16 %v327
    %v2540 = vunpack.c.l.b16 %v328
    %v2541 = vunpack.c.h.b16 %v328
    %v2542 = vunpack.c.l.b16 %v329
    %v2543 = vunpack.c.h.b16 %v329
    %v2544 = vunpack.c.l.b16 %v330
    %v2545 = vunpack.c.h.b16 %v330
    %v2546 = vunpack.c.l.b16 %v331
    %v2547 = vunpack.c.h.b16 %v331
    %v2548 = vunpack.c.l.b16 %v332
    %v2549 = vunpack.c.h.b16 %v332
    %v2550 = vunpack.c.l.b16 %v333
    %v2551 = vunpack.c.h.b16 %v333
    %v2552 = vunpack.c.l.b16 %v334
    %v2553 = vunpack.c.h.b16 %v334
    %v2554 = vunpack.c.l.b16 %v335
    %v2555 = vunpack.c.h.b16 %v335
    %v2556 = vunpack.c.l.b16 %v336
    %v2557 = vunpack.c.h.b16 %v336
    %v2558 = vunpack.c.l.b16 %v337
    %v2559 = vunpack.c.h.b16 %v337
    %v2560 = vunpack.c.l.b16 %v338
    %v2561 = vunpack.c.h.b16 %v338
    %v2562 = vunpack.c.l.b16 %v339
    %v2563 = vunpack.c.h.b16 %v339
    %v2564 = vunpack.c.l.b16 %v340
    %v2565 = vunpack.c.h.b16 %v340
    %v2566 = vunpack.c.l.b16 %v341
    %v2567 = vunpack.c.h.b16 %v341
    %v2568 = vunpack.c.l.b16 %v342
    %v2569 = vunpack.c.h.b16 %v342
    %v2570 = vunpack.c.l.b16 %v343
    %v2571 = vunpack.c.h.b16 %v343
    %v2572 = vunpack.c.l.b16 %v344
    %v2573 = vunpack.c.h.b16 %v344
    %v2574 = vunpack.c.l.b16 %v345
    %v2575 = vunpack.c.h.b16 %v345
    %v2576 = vunpack.c.l.b16 %v346
    %v2577 = vunpack.c.h.b16 %v346
    %v2578 = vunpack.c.l.b16 %v347
    %v2579 = vunpack.c.h.b16 %v347
    %v2580 = vunpack.c.l.b16 %v348
    %v2581 = vunpack.c.h.b16 %v348
    %v2582 = vunpack.c.l.b16 %v349
    %v2583 = vunpack.c.h.b16 %v349
    %v2584 = vunpack.c.l.b16 %v350
    %v2585 = vunpack.c.h.b16 %v350
    %v2586 = vunpack.c.l.b16 %v351
    %v2587 = vunpack.c.h.b16 %v351
    %v2588 = vunpack.c.l.b16 %v352
    %v2589 = vunpack.c.h.b16 %v352
    %v2590 = vunpack.c.l.b16 %v353
    %v2591 = vunpack.c.h.b16 %v353
    %v2592 = vunpack.c.l.b16 %v354
    %v2593 = vunpack.c.h.b16 %v354
    %v2594 = vunpack.c.l.b16 %v355
    %v2595 = vunpack.c.h.b16 %v355
    %v2596 = vunpack.c.l.b16 %v356
    %v2597 = vunpack.c.h.b16 %v356
    %v2598 = vunpack.c.l.b16 %v357
    %v2599 = vunpack.c.h.b16 %v357
    %v2600 = vunpack.c.l.b16 %v358
    %v2601 = vunpack.c.h.b16 %v358
    %v2602 = vunpack.c.l.b16 %v359
    %v2603 = vunpack.c.h.b16 %v359
    %v2604 = vunpack.c.l.b16 %v360
    %v2605 = vunpack.c.h.b16 %v360
    %v2606 = vunpack.c.l.b16 %v361
    %v2607 = vunpack.c.h.b16 %v361
    %v2608 = vunpack.c.l.b16 %v362
    %v2609 = vunpack.c.h.b16 %v362
    %v2610 = vunpack.c.l.b16 %v363
    %v2611 = vunpack.c.h.b16 %v363
    %v2612 = vunpack.c.l.b16 %v364
    %v2613 = vunpack.c.h.b16 %v364
    %v2614 = vunpack.c.l.b16 %v365
    %v2615 = vunpack.c.h.b16 %v365
    %v2616 = vunpack.c.l.b16 %v366
    %v2617 = vunpack.c.h.b16 %v366
    %v2618 = vunpack.c.l.b16 %v367
    %v2619 = vunpack.c.h.b16 %v367
    %v2620 = vunpack.c.l.b16 %v368
    %v2621 = vunpack.c.h.b16 %v368
    %v2622 = vunpack.c.l.b16 %v369
    %v2623 = vunpack.c.h.b16 %v369
    %v2624 = vunpack.c.l.b16 %v370
    %v2625 = vunpack.c.h.b16 %v370
    %v2626 = vunpack.c.l.b16 %v371
    %v2627 = vunpack.c.h.b16 %v371
    %v2628 = vunpack.c.l.b16 %v372
    %v2629 = vunpack.c.h.b16 %v372
    %v2630 = vunpack.c.l.b16 %v373
    %v2631 = vunpack.c.h.b16 %v373
    %v2632 = vunpack.c.l.b16 %v374
    %v2633 = vunpack.c.h.b16 %v374
    %v2634 = vunpack.c.l.b16 %v375
    %v2635 = vunpack.c.h.b16 %v375
    %v2636 = vunpack.c.l.b16 %v376
    %v2637 = vunpack.c.h.b16 %v376
    %v2638 = vunpack.c.l.b16 %v377
    %v2639 = vunpack.c.h.b16 %v377
    %v2640 = vunpack.c.l.b16 %v378
    %v2641 = vunpack.c.h.b16 %v378
    %v2642 = vunpack.c.l.b16 %v379
    %v2643 = vunpack.c.h.b16 %v379
    %v2644 = vunpack.c.l.b16 %v380
    %v2645 = vunpack.c.h.b16 %v380
    %v2646 = vunpack.c.l.b16 %v381
    %v2647 = vunpack.c.h.b16 %v381
    %v2648 = vunpack.c.l.b16 %v382
    %v2649 = vunpack.c.h.b16 %v382
    %v2650 = vunpack.c.l.b16 %v383
    %v2651 = vunpack.c.h.b16 %v383
    %v2652 = vunpack.c.l.b16 %v384
    %v2653 = vunpack.c.h.b16 %v384
    %v2654 = vunpack.c.l.b16 %v385
    %v2655 = vunpack.c.h.b16 %v385
    %v2656 = vunpack.c.l.b16 %v386
    %v2657 = vunpack.c.h.b16 %v386
    %v2658 = vunpack.c.l.b16 %v387
    %v2659 = vunpack.c.h.b16 %v387
    %v2660 = vunpack.c.l.b16 %v388
    %v2661 = vunpack.c.h.b16 %v388
    %v2662 = vunpack.c.l.b16 %v389
    %v2663 = vunpack.c.h.b16 %v389
    %v2664 = vunpack.c.l.b16 %v390
    %v2665 = vunpack.c.h.b16 %v390
    %v2666 = vunpack.c.l.b16 %v391
    %v2667 = vunpack.c.h.b16 %v391
    %v2668 = vunpack.c.l.b16 %v392
    %v2669 = vunpack.c.h.b16 %v392
    %v2670 = vunpack.c.l.b16 %v393
    %v2671 = vunpack.c.h.b16 %v393
    %v2672 = vunpack.c.l.b16 %v394
    %v2673 = vunpack.c.h.b16 %v394
    %v2674 = vunpack.c.l.b16 %v395
    %v2675 = vunpack.c.h.b16 %v395
    %v2676 = vunpack.c.l.b16 %v396
    %v2677 = vunpack.c.h.b16 %v396
    %v2678 = vunpack.c.l.b16 %v397
    %v2679 = vunpack.c.h.b16 %v397
    %v2680 = vunpack.c.l.b16 %v398
    %v2681 = vunpack.c.h.b16 %v398
    %v2682 = vunpack.c.l.b16 %v399
    %v2683 = vunpack.c.h.b16 %v399
    %v2684 = vunpack.c.l.b16 %v400
    %v2685 = vunpack.c.h.b16 %v400
    %v2686 = vunpack.c.l.b16 %v401
    %v2687 = vunpack.c.h.b16 %v401
    %v2688 = vunpack.c.l.b16 %v402
    %v2689 = vunpack.c.h.b16 %v402
    %v2690 = vunpack.c.l.b16 %v403
    %v2691 = vunpack.c.h.b16 %v403
    %v2692 = vunpack.c.l.b16 %v404
    %v2693 = vunpack.c.h.b16 %v404
    %v2694 = vunpack.c.l.b16 %v405
    %v2695 = vunpack.c.h.b16 %v405
    %v2696 = vunpack.c.l.b16 %v406
    %v2697 = vunpack.c.h.b16 %v406
    %v2698 = vunpack.c.l.b16 %v407
    %v2699 = vunpack.c.h.b16 %v407
    %v2700 = vunpack.c.l.b16 %v408
    %v2701 = vunpack.c.h.b16 %v408
    %v2702 = vunpack.c.l.b16 %v409
    %v2703 = vunpack.c.h.b16 %v409
    %v2704 = vunpack.c.l.b16 %v410
    %v2705 = vunpack.c.h.b16 %v410
    %v2706 = vunpack.c.l.b16 %v411
    %v2707 = vunpack.c.h.b16 %v411
    %v2708 = vunpack.c.l.b16 %v412
    %v2709 = vunpack.c.h.b16 %v412
    %v2710 = vunpack.c.l.b16 %v413
    %v2711 = vunpack.c.h.b16 %v413
    %v2712 = vunpack.c.l.b16 %v414
    %v2713 = vunpack.c.h.b16 %v414
    %v2714 = vunpack.c.l.b16 %v415
    %v2715 = vunpack.c.h.b16 %v415
    %v2716 = vunpack.c.l.b16 %v416
    %v2717 = vunpack.c.h.b16 %v416
    %v2718 = vunpack.c.l.b16 %v417
    %v2719 = vunpack.c.h.b16 %v417
    %v2720 = vunpack.c.l.b16 %v418
    %v2721 = vunpack.c.h.b16 %v418
    %v2722 = vunpack.c.l.b16 %v419
    %v2723 = vunpack.c.h.b16 %v419
    %v2724 = vunpack.c.l.b16 %v420
    %v2725 = vunpack.c.h.b16 %v420
    %v2726 = vunpack.c.l.b16 %v421
    %v2727 = vunpack.c.h.b16 %v421
    %v2728 = vunpack.c.l.b16 %v422
    %v2729 = vunpack.c.h.b16 %v422
    %v2730 = vunpack.c.l.b16 %v423
    %v2731 = vunpack.c.h.b16 %v423
    %v2732 = vunpack.c.l.b16 %v424
    %v2733 = vunpack.c.h.b16 %v424
    %v2734 = vunpack.c.l.b16 %v425
    %v2735 = vunpack.c.h.b16 %v425
    %v2736 = vunpack.c.l.b16 %v426
    %v2737 = vunpack.c.h.b16 %v426
    %v2738 = vunpack.c.l.b16 %v427
    %v2739 = vunpack.c.h.b16 %v427
    %v2740 = vunpack.c.l.b16 %v428
    %v2741 = vunpack.c.h.b16 %v428
    %v2742 = vunpack.c.l.b16 %v429
    %v2743 = vunpack.c.h.b16 %v429
    %v2744 = vunpack.c.l.b16 %v430
    %v2745 = vunpack.c.h.b16 %v430
    %v2746 = vunpack.c.l.b16 %v431
    %v2747 = vunpack.c.h.b16 %v431
    %v2748 = vunpack.c.l.b16 %v432
    %v2749 = vunpack.c.h.b16 %v432
    %v2750 = vunpack.c.l.b16 %v433
    %v2751 = vunpack.c.h.b16 %v433
    %v2752 = vunpack.c.l.b16 %v434
    %v2753 = vunpack.c.h.b16 %v434
    %v2754 = vunpack.c.l.b16 %v435
    %v2755 = vunpack.c.h.b16 %v435
    %v2756 = vunpack.c.l.b16 %v436
    %v2757 = vunpack.c.h.b16 %v436
    %v2758 = vunpack.c.l.b16 %v437
    %v2759 = vunpack.c.h.b16 %v437
    %v2760 = vunpack.c.l.b16 %v438
    %v2761 = vunpack.c.h.b16 %v438
    %v2762 = vunpack.c.l.b16 %v439
    %v2763 = vunpack.c.h.b16 %v439
    %v2764 = vunpack.c.l.b16 %v440
    %v2765 = vunpack.c.h.b16 %v440
    %v2766 = vunpack.c.l.b16 %v441
    %v2767 = vunpack.c.h.b16 %v441
    %v2768 = vunpack.c.l.b16 %v442
    %v2769 = vunpack.c.h.b16 %v442
    %v2770 = vunpack.c.l.b16 %v443
    %v2771 = vunpack.c.h.b16 %v443
    %v2772 = vunpack.c.l.b16 %v444
    %v2773 = vunpack.c.h.b16 %v444
    %v2774 = vunpack.c.l.b16 %v445
    %v2775 = vunpack.c.h.b16 %v445
    %v2776 = vunpack.c.l.b16 %v446
    %v2777 = vunpack.c.h.b16 %v446
    %v2778 = vunpack.c.l.b16 %v447
    %v2779 = vunpack.c.h.b16 %v447
    %v2780 = vunpack.c.l.b16 %v448
    %v2781 = vunpack.c.h.b16 %v448
    %v2782 = vunpack.c.l.b16 %v449
    %v2783 = vunpack.c.h.b16 %v449
    %v2784 = vunpack.c.l.b16 %v450
    %v2785 = vunpack.c.h.b16 %v450
    %v2786 = vunpack.c.l.b16 %v451
    %v2787 = vunpack.c.h.b16 %v451
    %v2788 = vunpack.c.l.b16 %v452
    %v2789 = vunpack.c.h.b16 %v452
    %v2790 = vunpack.c.l.b16 %v453
    %v2791 = vunpack.c.h.b16 %v453
    %v2792 = vunpack.c.l.b16 %v454
    %v2793 = vunpack.c.h.b16 %v454
    %v2794 = vunpack.c.l.b16 %v455
    %v2795 = vunpack.c.h.b16 %v455
    %v2796 = vunpack.c.l.b16 %v456
    %v2797 = vunpack.c.h.b16 %v456
    %v2798 = vunpack.c.l.b16 %v457
    %v2799 = vunpack.c.h.b16 %v457
    %v2800 = vunpack.c.l.b16 %v458
    %v2801 = vunpack.c.h.b16 %v458
    %v2802 = vunpack.c.l.b16 %v459
    %v2803 = vunpack.c.h.b16 %v459
    %v2804 = vunpack.c.l.b16 %v460
    %v2805 = vunpack.c.h.b16 %v460
    %v2806 = vunpack.c.l.b16 %v461
    %v2807 = vunpack.c.h.b16 %v461
    %v2808 = vunpack.c.l.b16 %v462
    %v2809 = vunpack.c.h.b16 %v462
    %v2810 = vunpack.c.l.b16 %v463
    %v2811 = vunpack.c.h.b16 %v463
    %v2812 = vunpack.c.l.b16 %v464
    %v2813 = vunpack.c.h.b16 %v464
    %v2814 = vunpack.c.l.b16 %v465
    %v2815 = vunpack.c.h.b16 %v465
    %v2816 = vunpack.c.l.b16 %v466
    %v2817 = vunpack.c.h.b16 %v466
    %v2818 = vunpack.c.l.b16 %v467
    %v2819 = vunpack.c.h.b16 %v467
    %v2820 = vunpack.c.l.b16 %v468
    %v2821 = vunpack.c.h.b16 %v468
    %v2822 = vunpack.c.l.b16 %v469
    %v2823 = vunpack.c.h.b16 %v469
    %v2824 = vunpack.c.l.b16 %v470
    %v2825 = vunpack.c.h.b16 %v470
    %v2826 = vunpack.c.l.b16 %v471
    %v2827 = vunpack.c.h.b16 %v471
    %v2828 = vunpack.c.l.b16 %v472
    %v2829 = vunpack.c.h.b16 %v472
    %v2830 = vunpack.c.l.b16 %v473
    %v2831 = vunpack.c.h.b16 %v473
    %v2832 = vunpack.c.l.b16 %v474
    %v2833 = vunpack.c.h.b16 %v474
    %v2834 = vunpack.c.l.b16 %v475
    %v2835 = vunpack.c.h.b16 %v475
    %v2836 = vunpack.c.l.b16 %v476
    %v2837 = vunpack.c.h.b16 %v476
    %v2838 = vunpack.c.l.b16 %v477
    %v2839 = vunpack.c.h.b16 %v477
    %v2840 = vunpack.c.l.b16 %v478
    %v2841 = vunpack.c.h.b16 %v478
    %v2842 = vunpack.c.l.b16 %v479
    %v2843 = vunpack.c.h.b16 %v479
    %v2844 = vunpack.c.l.b16 %v480
    %v2845 = vunpack.c.h.b16 %v480
    %v2846 = vunpack.c.l.b16 %v481
    %v2847 = vunpack.c.h.b16 %v481
    %v2848 = vunpack.c.l.b16 %v482
    %v2849 = vunpack.c.h.b16 %v482
    %v2850 = vunpack.c.l.b16 %v483
    %v2851 = vunpack.c.h.b16 %v483
    %v2852 = vunpack.c.l.b16 %v484
    %v2853 = vunpack.c.h.b16 %v484
    %v2854 = vunpack.c.l.b16 %v485
    %v2855 = vunpack.c.h.b16 %v485
    %v2856 = vunpack.c.l.b16 %v486
    %v2857 = vunpack.c.h.b16 %v486
    %v2858 = vunpack.c.l.b16 %v487
    %v2859 = vunpack.c.h.b16 %v487
    %v2860 = vunpack.c.l.b16 %v488
    %v2861 = vunpack.c.h.b16 %v488
    %v2862 = vunpack.c.l.b16 %v489
    %v2863 = vunpack.c.h.b16 %v489
    %v2864 = vunpack.c.l.b16 %v490
    %v2865 = vunpack.c.h.b16 %v490
    %v2866 = vunpack.c.l.b16 %v491
    %v2867 = vunpack.c.h.b16 %v491
    %v2868 = vunpack.c.l.b16 %v492
    %v2869 = vunpack.c.h.b16 %v492
    %v2870 = vunpack.c.l.b16 %v493
    %v2871 = vunpack.c.h.b16 %v493
    %v2872 = vunpack.c.l.b16 %v494
    %v2873 = vunpack.c.h.b16 %v494
    %v2874 = vunpack.c.l.b16 %v495
    %v2875 = vunpack.c.h.b16 %v495
    %v2876 = vunpack.c.l.b16 %v496
    %v2877 = vunpack.c.h.b16 %v496
    %v2878 = vunpack.c.l.b16 %v497
    %v2879 = vunpack.c.h.b16 %v497
    %v2880 = vunpack.c.l.b16 %v498
    %v2881 = vunpack.c.h.b16 %v498
    %v2882 = vunpack.c.l.b16 %v499
    %v2883 = vunpack.c.h.b16 %v499
    %v2884 = vunpack.c.l.b16 %v500
    %v2885 = vunpack.c.h.b16 %v500
    %v2886 = vunpack.c.l.b16 %v501
    %v2887 = vunpack.c.h.b16 %v501
    %v2888 = vunpack.c.l.b16 %v502
    %v2889 = vunpack.c.h.b16 %v502
    %v2890 = vunpack.c.l.b16 %v503
    %v2891 = vunpack.c.h.b16 %v503
    %v2892 = vunpack.c.l.b16 %v504
    %v2893 = vunpack.c.h.b16 %v504
    %v2894 = vunpack.c.l.b16 %v505
    %v2895 = vunpack.c.h.b16 %v505
    %v2896 = vunpack.c.l.b16 %v506
    %v2897 = vunpack.c.h.b16 %v506
    %v2898 = vunpack.c.l.b16 %v507
    %v2899 = vunpack.c.h.b16 %v507
    %v2900 = vunpack.c.l.b16 %v508
    %v2901 = vunpack.c.h.b16 %v508
    %v2902 = vunpack.c.l.b16 %v509
    %v2903 = vunpack.c.h.b16 %v509
    %v2904 = vunpack.c.l.b16 %v510
    %v2905 = vunpack.c.h.b16 %v510
    %v2906 = vunpack.c.l.b16 %v511
    %v2907 = vunpack.c.h.b16 %v511
    %v2908 = vunpack.c.l.b16 %v512
    %v2909 = vunpack.c.h.b16 %v512
    %v2910 = vunpack.c.l.b16 %v513
    %v2911 = vunpack.c.h.b16 %v513
    %v2912 = vunpack.c.l.b16 %v514
    %v2913 = vunpack.c.h.b16 %v514
    %v2914 = vunpack.c.l.b16 %v515
    %v2915 = vunpack.c.h.b16 %v515
    %v2916 = vunpack.c.l.b16 %v516
    %v2917 = vunpack.c.h.b16 %v516
    %v2918 = vunpack.c.l.b16 %v517
    %v2919 = vunpack.c.h.b16 %v517
    %v2920 = vunpack.c.l.b16 %v518
    %v2921 = vunpack.c.h.b16 %v518
    %v2922 = vunpack.c.l.b16 %v519
    %v2923 = vunpack.c.h.b16 %v519
    %v2924 = vunpack.c.l.b16 %v520
    %v2925 = vunpack.c.h.b16 %v520
    %v2926 = vunpack.c.l.b16 %v521
    %v2927 = vunpack.c.h.b16 %v521
    %v2928 = vunpack.c.l.b16 %v522
    %v2929 = vunpack.c.h.b16 %v522
    %v2930 = vunpack.c.l.b16 %v523
    %v2931 = vunpack.c.h.b16 %v523
    %v2932 = vunpack.c.l.b16 %v524
    %v2933 = vunpack.c.h.b16 %v524
    %v2934 = vunpack.c.l.b16 %v525
    %v2935 = vunpack.c.h.b16 %v525
    %v2936 = vunpack.c.l.b16 %v526
    %v2937 = vunpack.c.h.b16 %v526
    %v2938 = vunpack.c.l.b16 %v527
    %v2939 = vunpack.c.h.b16 %v527
    %v2940 = vunpack.c.l.b16 %v528
    %v2941 = vunpack.c.h.b16 %v528
    %v2942 = vunpack.c.l.b16 %v529
    %v2943 = vunpack.c.h.b16 %v529
    %v2944 = vunpack.c.l.b16 %v530
    %v2945 = vunpack.c.h.b16 %v530
    %v2946 = vunpack.c.l.b16 %v531
    %v2947 = vunpack.c.h.b16 %v531
    %v2948 = vunpack.c.l.b16 %v532
    %v2949 = vunpack.c.h.b16 %v532
    %v2950 = vunpack.c.l.b16 %v533
    %v2951 = vunpack.c.h.b16 %v533
    %v2952 = vunpack.c.l.b16 %v534
    %v2953 = vunpack.c.h.b16 %v534
    %v2954 = vunpack.c.l.b16 %v535
    %v2955 = vunpack.c.h.b16 %v535
    %v2956 = vunpack.c.l.b16 %v536
    %v2957 = vunpack.c.h.b16 %v536
    %v2958 = vunpack.c.l.b16 %v537
    %v2959 = vunpack.c.h.b16 %v537
    %v2960 = vunpack.c.l.b16 %v538
    %v2961 = vunpack.c.h.b16 %v538
    %v2962 = vunpack.c.l.b16 %v539
    %v2963 = vunpack.c.h.b16 %v539
    %v2964 = vunpack.c.l.b16 %v540
    %v2965 = vunpack.c.h.b16 %v540
    %v2966 = vunpack.c.l.b16 %v541
    %v2967 = vunpack.c.h.b16 %v541
    %v2968 = vunpack.c.l.b16 %v542
    %v2969 = vunpack.c.h.b16 %v542
    %v2970 = vunpack.c.l.b16 %v543
    %v2971 = vunpack.c.h.b16 %v543
    %v2972 = vunpack.c.l.b16 %v544
    %v2973 = vunpack.c.h.b16 %v544
    %v2974 = vunpack.c.l.b16 %v545
    %v2975 = vunpack.c.h.b16 %v545
    %v2976 = vunpack.c.l.b16 %v546
    %v2977 = vunpack.c.h.b16 %v546
    %v2978 = vunpack.c.l.b16 %v547
    %v2979 = vunpack.c.h.b16 %v547
    %v2980 = vunpack.c.l.b16 %v548
    %v2981 = vunpack.c.h.b16 %v548
    %v2982 = vunpack.c.l.b16 %v549
    %v2983 = vunpack.c.h.b16 %v549
    %v2984 = vunpack.c.l.b16 %v550
    %v2985 = vunpack.c.h.b16 %v550
    %v2986 = vunpack.c.l.b16 %v551
    %v2987 = vunpack.c.h.b16 %v551
    %v2988 = vunpack.c.l.b16 %v552
    %v2989 = vunpack.c.h.b16 %v552
    %v2990 = vunpack.c.l.b16 %v553
    %v2991 = vunpack.c.h.b16 %v553
    %v2992 = vunpack.c.l.b16 %v554
    %v2993 = vunpack.c.h.b16 %v554
    %v2994 = vunpack.c.l.b16 %v555
    %v2995 = vunpack.c.h.b16 %v555
    %v2996 = vunpack.c.l.b16 %v556
    %v2997 = vunpack.c.h.b16 %v556
    %v2998 = vunpack.c.l.b16 %v557
    %v2999 = vunpack.c.h.b16 %v557
    %v3000 = vunpack.c.l.b16 %v558
    %v3001 = vunpack.c.h.b16 %v558
    %v3002 = vunpack.c.l.b16 %v559
    %v3003 = vunpack.c.h.b16 %v559
    %v3004 = vunpack.c.l.b16 %v560
    %v3005 = vunpack.c.h.b16 %v560
    %v3006 = vunpack.c.l.b16 %v561
    %v3007 = vunpack.c.h.b16 %v561
    %v3008 = vunpack.c.l.b16 %v562
    %v3009 = vunpack.c.h.b16 %v562
    %v3010 = vunpack.c.l.b16 %v563
    %v3011 = vunpack.c.h.b16 %v563
    %v3012 = vunpack.c.l.b16 %v564
    %v3013 = vunpack.c.h.b16 %v564
    %v3014 = vunpack.c.l.b16 %v565
    %v3015 = vunpack.c.h.b16 %v565
    %v3016 = vunpack.c.l.b16 %v566
    %v3017 = vunpack.c.h.b16 %v566
    %v3018 = vunpack.c.l.b16 %v567
    %v3019 = vunpack.c.h.b16 %v567
    %v3020 = vunpack.c.l.b16 %v568
    %v3021 = vunpack.c.h.b16 %v568
    %v3022 = vunpack.c.l.b16 %v569
    %v3023 = vunpack.c.h.b16 %v569
    %v3024 = vunpack.c.l.b16 %v570
    %v3025 = vunpack.c.h.b16 %v570
    %v3026 = vunpack.c.l.b16 %v571
    %v3027 = vunpack.c.h.b16 %v571
    %v3028 = vunpack.c.l.b16 %v572
    %v3029 = vunpack.c.h.b16 %v572
    %v3030 = vunpack.c.l.b16 %v573
    %v3031 = vunpack.c.h.b16 %v573
    %v3032 = vunpack.c.l.b16 %v574
    %v3033 = vunpack.c.h.b16 %v574
    %v3034 = vunpack.c.l.b16 %v575
    %v3035 = vunpack.c.h.b16 %v575
    %v3036 = vunpack.c.l.b16 %v576
    %v3037 = vunpack.c.h.b16 %v576
    %v3038 = vunpack.c.l.b16 %v577
    %v3039 = vunpack.c.h.b16 %v577
    %v3040 = vunpack.c.l.b16 %v578
    %v3041 = vunpack.c.h.b16 %v578
    %v3042 = vunpack.c.l.b16 %v579
    %v3043 = vunpack.c.h.b16 %v579
    %v3044 = vunpack.c.l.b16 %v580
    %v3045 = vunpack.c.h.b16 %v580
    %v3046 = vunpack.c.l.b16 %v581
    %v3047 = vunpack.c.h.b16 %v581
    %v3048 = vunpack.c.l.b16 %v582
    %v3049 = vunpack.c.h.b16 %v582
    %v3050 = vunpack.c.l.b16 %v583
    %v3051 = vunpack.c.h.b16 %v583
    %v3052 = vunpack.c.l.b16 %v584
    %v3053 = vunpack.c.h.b16 %v584
    %v3054 = vunpack.c.l.b16 %v585
    %v3055 = vunpack.c.h.b16 %v585
    %v3056 = vunpack.c.l.b16 %v586
    %v3057 = vunpack.c.h.b16 %v586
    %v3058 = vunpack.c.l.b16 %v587
    %v3059 = vunpack.c.h.b16 %v587
    %v3060 = vunpack.c.l.b16 %v588
    %v3061 = vunpack.c.h.b16 %v588
    %v3062 = vunpack.c.l.b16 %v589
    %v3063 = vunpack.c.h.b16 %v589
    %v3064 = vunpack.c.l.b16 %v590
    %v3065 = vunpack.c.h.b16 %v590
    %v3066 = vunpack.c.l.b16 %v591
    %v3067 = vunpack.c.h.b16 %v591
    %v3068 = vunpack.c.l.b16 %v592
    %v3069 = vunpack.c.h.b16 %v592
    %v3070 = vunpack.c.l.b16 %v593
    %v3071 = vunpack.c.h.b16 %v593
    %v3072 = vunpack.c.l.b16 %v594
    %v3073 = vunpack.c.h.b16 %v594
    %v3074 = vunpack.c.l.b16 %v595
    %v3075 = vunpack.c.h.b16 %v595
    %v3076 = vunpack.c.l.b16 %v596
    %v3077 = vunpack.c.h.b16 %v596
    %v3078 = vunpack.c.l.b16 %v597
    %v3079 = vunpack.c.h.b16 %v597
    %v3080 = vunpack.c.l.b16 %v598
    %v3081 = vunpack.c.h.b16 %v598
    %v3082 = vunpack.c.l.b16 %v599
    %v3083 = vunpack.c.h.b16 %v599
    %v3084 = vunpack.c.l.b16 %v600
    %v3085 = vunpack.c.h.b16 %v600
    %v3086 = vunpack.c.l.b16 %v601
    %v3087 = vunpack.c.h.b16 %v601
    %v3088 = vunpack.c.l.b16 %v602
    %v3089 = vunpack.c.h.b16 %v602
    %v3090 = vunpack.c.l.b16 %v603
    %v3091 = vunpack.c.h.b16 %v603
    %v3092 = vunpack.c.l.b16 %v604
    %v3093 = vunpack.c.h.b16 %v604
    %v3094 = vunpack.c.l.b16 %v605
    %v3095 = vunpack.c.h.b16 %v605
    %v3096 = vunpack.c.l.b16 %v606
    %v3097 = vunpack.c.h.b16 %v606
    %v3098 = vunpack.c.l.b16 %v607
    %v3099 = vunpack.c.h.b16 %v607
    %v3100 = vunpack.c.l.b16 %v608
    %v3101 = vunpack.c.h.b16 %v608
    %v3102 = vunpack.c.l.b16 %v609
    %v3103 = vunpack.c.h.b16 %v609
    %v3104 = vunpack.c.l.b16 %v610
    %v3105 = vunpack.c.h.b16 %v610
    %v3106 = vunpack.c.l.b16 %v611
    %v3107 = vunpack.c.h.b16 %v611
    %v3108 = vunpack.c.l.b16 %v612
    %v3109 = vunpack.c.h.b16 %v612
    %v3110 = vunpack.c.l.b16 %v613
    %v3111 = vunpack.c.h.b16 %v613
    %v3112 = vunpack.c.l.b16 %v614
    %v3113 = vunpack.c.h.b16 %v614
    %v3114 = vunpack.c.l.b16 %v615
    %v3115 = vunpack.c.h.b16 %v615
    %v3116 = vunpack.c.l.b16 %v616
    %v3117 = vunpack.c.h.b16 %v616
    %v3118 = vunpack.c.l.b16 %v617
    %v3119 = vunpack.c.h.b16 %v617
    %v3120 = vunpack.c.l.b16 %v618
    %v3121 = vunpack.c.h.b16 %v618
    %v3122 = vunpack.c.l.b16 %v619
    %v3123 = vunpack.c.h.b16 %v619
    %v3124 = vunpack.c.l.b16 %v620
    %v3125 = vunpack.c.h.b16 %v620
    %v3126 = vunpack.c.l.b16 %v621
    %v3127 = vunpack.c.h.b16 %v621
    %v3128 = vunpack.c.l.b16 %v622
    %v3129 = vunpack.c.h.b16 %v622
    %v3130 = vunpack.c.l.b16 %v623
    %v3131 = vunpack.c.h.b16 %v623
    %v3132 = vunpack.c.l.b16 %v624
    %v3133 = vunpack.c.h.b16 %v624
    %v3134 = vunpack.c.l.b16 %v625
    %v3135 = vunpack.c.h.b16 %v625
    %v3136 = vunpack.c.l.b16 %v626
    %v3137 = vunpack.c.h.b16 %v626
    %v3138 = vunpack.c.l.b16 %v627
    %v3139 = vunpack.c.h.b16 %v627
    %v3140 = vunpack.c.l.b16 %v628
    %v3141 = vunpack.c.h.b16 %v628
    %v3142 = vunpack.c.l.b16 %v629
    %v3143 = vunpack.c.h.b16 %v629
    %v3144 = vunpack.c.l.b16 %v630
    %v3145 = vunpack.c.h.b16 %v630
    %v3146 = vunpack.c.l.b16 %v631
    %v3147 = vunpack.c.h.b16 %v631
    %v3148 = vunpack.c.l.b16 %v632
    %v3149 = vunpack.c.h.b16 %v632
    %v3150 = vunpack.c.l.b16 %v633
    %v3151 = vunpack.c.h.b16 %v633
    %v3152 = vunpack.c.l.b16 %v634
    %v3153 = vunpack.c.h.b16 %v634
    %v3154 = vunpack.c.l.b16 %v635
    %v3155 = vunpack.c.h.b16 %v635
    %v3156 = vunpack.c.l.b16 %v636
    %v3157 = vunpack.c.h.b16 %v636
    %v3158 = vunpack.c.l.b16 %v637
    %v3159 = vunpack.c.h.b16 %v637
    %v3160 = vunpack.c.l.b16 %v638
    %v3161 = vunpack.c.h.b16 %v638
    %v3162 = vunpack.c.l.b16 %v639
    %v3163 = vunpack.c.h.b16 %v639
    %v3164 = vunpack.c.l.b16 %v640
    %v3165 = vunpack.c.h.b16 %v640
    %v3166 = vunpack.c.l.b16 %v641
    %v3167 = vunpack.c.h.b16 %v641
    %v3168 = vunpack.c.l.b16 %v642
    %v3169 = vunpack.c.h.b16 %v642
    %v3170 = vunpack.c.l.b16 %v643
    %v3171 = vunpack.c.h.b16 %v643
    %v3172 = vunpack.c.l.b16 %v644
    %v3173 = vunpack.c.h.b16 %v644
    %v3174 = vunpack.c.l.b16 %v645
    %v3175 = vunpack.c.h.b16 %v645
    %v3176 = vunpack.c.l.b16 %v646
    %v3177 = vunpack.c.h.b16 %v646
    %v3178 = vunpack.c.l.b16 %v647
    %v3179 = vunpack.c.h.b16 %v647
    %v3180 = vunpack.c.l.b16 %v648
    %v3181 = vunpack.c.h.b16 %v648
    %v3182 = vunpack.c.l.b16 %v649
    %v3183 = vunpack.c.h.b16 %v649
    %v3184 = vunpack.c.l.b16 %v650
    %v3185 = vunpack.c.h.b16 %v650
    %v3186 = vunpack.c.l.b16 %v651
    %v3187 = vunpack.c.h.b16 %v651
    %v3188 = vunpack.c.l.b16 %v652
    %v3189 = vunpack.c.h.b16 %v652
    %v3190 = vunpack.c.l.b16 %v653
    %v3191 = vunpack.c.h.b16 %v653
    %v3192 = vunpack.c.l.b16 %v654
    %v3193 = vunpack.c.h.b16 %v654
    %v3194 = vunpack.c.l.b16 %v655
    %v3195 = vunpack.c.h.b16 %v655
    %v3196 = vunpack.c.l.b16 %v656
    %v3197 = vunpack.c.h.b16 %v656
    %v3198 = vunpack.c.l.b16 %v657
    %v3199 = vunpack.c.h.b16 %v657
    %v3200 = vunpack.c.l.b16 %v658
    %v3201 = vunpack.c.h.b16 %v658
    %v3202 = vunpack.c.l.b16 %v659
    %v3203 = vunpack.c.h.b16 %v659
    %v3204 = vunpack.c.l.b16 %v660
    %v3205 = vunpack.c.h.b16 %v660
    %v3206 = vunpack.c.l.b16 %v661
    %v3207 = vunpack.c.h.b16 %v661
    %v3208 = vunpack.c.l.b16 %v662
    %v3209 = vunpack.c.h.b16 %v662
    %v3210 = vunpack.c.l.b16 %v663
    %v3211 = vunpack.c.h.b16 %v663
    %v3212 = vunpack.c.l.b16 %v664
    %v3213 = vunpack.c.h.b16 %v664
    %v3214 = vunpack.c.l.b16 %v665
    %v3215 = vunpack.c.h.b16 %v665
    %v3216 = vunpack.c.l.b16 %v666
    %v3217 = vunpack.c.h.b16 %v666
    %v3218 = vunpack.c.l.b16 %v667
    %v3219 = vunpack.c.h.b16 %v667
    %v3220 = vunpack.c.l.b16 %v668
    %v3221 = vunpack.c.h.b16 %v668
    %v3222 = vunpack.c.l.b16 %v669
    %v3223 = vunpack.c.h.b16 %v669
    %v3224 = vunpack.c.l.b16 %v670
    %v3225 = vunpack.c.h.b16 %v670
    %v3226 = vunpack.c.l.b16 %v671
    %v3227 = vunpack.c.h.b16 %v671
    %v3228 = vunpack.c.l.b16 %v672
    %v3229 = vunpack.c.h.b16 %v672
    %v3230 = vunpack.c.l.b16 %v673
    %v3231 = vunpack.c.h.b16 %v673
    %v3232 = vunpack.c.l.b16 %v674
    %v3233 = vunpack.c.h.b16 %v674
    %v3234 = vunpack.c.l.b16 %v675
    %v3235 = vunpack.c.h.b16 %v675
    %v3236 = vunpack.c.l.b16 %v676
    %v3237 = vunpack.c.h.b16 %v676
    %v3238 = vunpack.c.l.b16 %v677
    %v3239 = vunpack.c.h.b16 %v677
    %v3240 = vunpack.c.l.b16 %v678
    %v3241 = vunpack.c.h.b16 %v678
    %v3242 = vunpack.c.l.b16 %v679
    %v3243 = vunpack.c.h.b16 %v679
    %v3244 = vunpack.c.l.b16 %v680
    %v3245 = vunpack.c.h.b16 %v680
    %v3246 = vunpack.c.l.b16 %v681
    %v3247 = vunpack.c.h.b16 %v681
    %v3248 = vunpack.c.l.b16 %v682
    %v3249 = vunpack.c.h.b16 %v682
    %v3250 = vunpack.c.l.b16 %v683
    %v3251 = vunpack.c.h.b16 %v683
    %v3252 = vunpack.c.l.b16 %v684
    %v3253 = vunpack.c.h.b16 %v684
    %v3254 = vunpack.c.l.b16 %v685
    %v3255 = vunpack.c.h.b16 %v685
    %v3256 = vunpack.c.l.b16 %v686
    %v3257 = vunpack.c.h.b16 %v686
    %v3258 = vunpack.c.l.b16 %v687
    %v3259 = vunpack.c.h.b16 %v687
    %v3260 = vunpack.c.l.b16 %v688
    %v3261 = vunpack.c.h.b16 %v688
    %v3262 = vunpack.c.l.b16 %v689
    %v3263 = vunpack.c.h.b16 %v689
    %v3264 = vunpack.c.l.b16 %v690
    %v3265 = vunpack.c.h.b16 %v690
    %v3266 = vunpack.c.l.b16 %v691
    %v3267 = vunpack.c.h.b16 %v691
    %v3268 = vunpack.c.l.b16 %v692
    %v3269 = vunpack.c.h.b16 %v692
    %v3270 = vunpack.c.l.b16 %v693
    %v3271 = vunpack.c.h.b16 %v693
    %v3272 = vunpack.c.l.b16 %v694
    %v3273 = vunpack.c.h.b16 %v694
    %v3274 = vunpack.c.l.b16 %v695
    %v3275 = vunpack.c.h.b16 %v695
    %v3276 = vunpack.c.l.b16 %v696
    %v3277 = vunpack.c.h.b16 %v696
    %v3278 = vunpack.c.l.b16 %v697
    %v3279 = vunpack.c.h.b16 %v697
    %v3280 = vunpack.c.l.b16 %v698
    %v3281 = vunpack.c.h.b16 %v698
    %v3282 = vunpack.c.l.b16 %v699
    %v3283 = vunpack.c.h.b16 %v699
    %v3284 = vunpack.c.l.b16 %v700
    %v3285 = vunpack.c.h.b16 %v700
    %v3286 = vunpack.c.l.b16 %v701
    %v3287 = vunpack.c.h.b16 %v701
    %v3288 = vunpack.c.l.b16 %v702
    %v3289 = vunpack.c.h.b16 %v702
    %v3290 = vunpack.c.l.b16 %v703
    %v3291 = vunpack.c.h.b16 %v703
    %v3292 = vunpack.c.l.b16 %v704
    %v3293 = vunpack.c.h.b16 %v704
    %v3294 = vunpack.c.l.b16 %v705
    %v3295 = vunpack.c.h.b16 %v705
    %v3296 = vunpack.c.l.b16 %v706
    %v3297 = vunpack.c.h.b16 %v706
    %v3298 = vunpack.c.l.b16 %v707
    %v3299 = vunpack.c.h.b16 %v707
    %v3300 = vunpack.c.l.b16 %v708
    %v3301 = vunpack.c.h.b16 %v708
    %v3302 = vunpack.c.l.b16 %v709
    %v3303 = vunpack.c.h.b16 %v709
    %v3304 = vunpack.c.l.b16 %v710
    %v3305 = vunpack.c.h.b16 %v710
    %v3306 = vunpack.c.l.b16 %v711
    %v3307 = vunpack.c.h.b16 %v711
    %v3308 = vunpack.c.l.b16 %v712
    %v3309 = vunpack.c.h.b16 %v712
    %v3310 = vunpack.c.l.b16 %v713
    %v3311 = vunpack.c.h.b16 %v713
    %v3312 = vunpack.c.l.b16 %v714
    %v3313 = vunpack.c.h.b16 %v714
    %v3314 = vunpack.c.l.b16 %v715
    %v3315 = vunpack.c.h.b16 %v715
    %v3316 = vunpack.c.l.b16 %v716
    %v3317 = vunpack.c.h.b16 %v716
    %v3318 = vunpack.c.l.b16 %v717
    %v3319 = vunpack.c.h.b16 %v717
    %v3320 = vunpack.c.l.b16 %v718
    %v3321 = vunpack.c.h.b16 %v718
    %v3322 = vunpack.c.l.b16 %v719
    %v3323 = vunpack.c.h.b16 %v719
    %v3324 = vunpack.c.l.b16 %v720
    %v3325 = vunpack.c.h.b16 %v720
    %v3326 = vunpack.c.l.b16 %v721
    %v3327 = vunpack.c.h.b16 %v721
    %v3328 = vunpack.c.l.b16 %v722
    %v3329 = vunpack.c.h.b16 %v722
    %v3330 = vunpack.c.l.b16 %v723
    %v3331 = vunpack.c.h.b16 %v723
    %v3332 = vunpack.c.l.b16 %v724
    %v3333 = vunpack.c.h.b16 %v724
    %v3334 = vunpack.c.l.b16 %v725
    %v3335 = vunpack.c.h.b16 %v725
    %v3336 = vunpack.c.l.b16 %v726
    %v3337 = vunpack.c.h.b16 %v726
    %v3338 = vunpack.c.l.b16 %v727
    %v3339 = vunpack.c.h.b16 %v727
    %v3340 = vunpack.c.l.b16 %v728
    %v3341 = vunpack.c.h.b16 %v728
    %v3342 = vunpack.c.l.b16 %v729
    %v3343 = vunpack.c.h.b16 %v729
    %v3344 = vunpack.c.l.b16 %v730
    %v3345 = vunpack.c.h.b16 %v730
    %v3346 = vunpack.c.l.b16 %v731
    %v3347 = vunpack.c.h.b16 %v731
    %v3348 = vunpack.c.l.b16 %v732
    %v3349 = vunpack.c.h.b16 %v732
    %v3350 = vunpack.c.l.b16 %v733
    %v3351 = vunpack.c.h.b16 %v733
    %v3352 = vunpack.c.l.b16 %v734
    %v3353 = vunpack.c.h.b16 %v734
    %v3354 = vunpack.c.l.b16 %v735
    %v3355 = vunpack.c.h.b16 %v735
    %v3356 = vunpack.c.l.b16 %v736
    %v3357 = vunpack.c.h.b16 %v736
    %v3358 = vunpack.c.l.b16 %v737
    %v3359 = vunpack.c.h.b16 %v737
    %v3360 = vunpack.c.l.b16 %v738
    %v3361 = vunpack.c.h.b16 %v738
    %v3362 = vunpack.c.l.b16 %v739
    %v3363 = vunpack.c.h.b16 %v739
    %v3364 = vunpack.c.l.b16 %v740
    %v3365 = vunpack.c.h.b16 %v740
    %v3366 = vunpack.c.l.b16 %v741
    %v3367 = vunpack.c.h.b16 %v741
    %v3368 = vunpack.c.l.b16 %v742
    %v3369 = vunpack.c.h.b16 %v742
    %v3370 = vunpack.c.l.b16 %v743
    %v3371 = vunpack.c.h.b16 %v743
    %v3372 = vunpack.c.l.b16 %v744
    %v3373 = vunpack.c.h.b16 %v744
    %v3374 = vunpack.c.l.b16 %v745
    %v3375 = vunpack.c.h.b16 %v745
    %v3376 = vunpack.c.l.b16 %v746
    %v3377 = vunpack.c.h.b16 %v746
    %v3378 = vunpack.c.l.b16 %v747
    %v3379 = vunpack.c.h.b16 %v747
    %v3380 = vunpack.c.l.b16 %v748
    %v3381 = vunpack.c.h.b16 %v748
    %v3382 = vunpack.c.l.b16 %v749
    %v3383 = vunpack.c.h.b16 %v749
    %v3384 = vunpack.c.l.b16 %v750
    %v3385 = vunpack.c.h.b16 %v750
    %v3386 = vunpack.c.l.b16 %v751
    %v3387 = vunpack.c.h.b16 %v751
    %v3388 = vunpack.c.l.b16 %v752
    %v3389 = vunpack.c.h.b16 %v752
    %v3390 = vunpack.c.l.b16 %v753
    %v3391 = vunpack.c.h.b16 %v753
    %v3392 = vunpack.c.l.b16 %v754
    %v3393 = vunpack.c.h.b16 %v754
    %v3394 = vunpack.c.l.b16 %v755
    %v3395 = vunpack.c.h.b16 %v755
    %v3396 = vunpack.c.l.b16 %v756
    %v3397 = vunpack.c.h.b16 %v756
    %v3398 = vunpack.c.l.b16 %v757
    %v3399 = vunpack.c.h.b16 %v757
    %v3400 = vunpack.c.l.b16 %v758
    %v3401 = vunpack.c.h.b16 %v758
    %v3402 = vunpack.c.l.b16 %v759
    %v3403 = vunpack.c.h.b16 %v759
    %v3404 = vunpack.c.l.b16 %v760
    %v3405 = vunpack.c.h.b16 %v760
    %v3406 = vunpack.c.l.b16 %v761
    %v3407 = vunpack.c.h.b16 %v761
    %v3408 = vunpack.c.l.b16 %v762
    %v3409 = vunpack.c.h.b16 %v762
    %v3410 = vunpack.c.l.b16 %v763
    %v3411 = vunpack.c.h.b16 %v763
    %v3412 = vunpack.c.l.b16 %v764
    %v3413 = vunpack.c.h.b16 %v764
    %v3414 = vunpack.c.l.b16 %v765
    %v3415 = vunpack.c.h.b16 %v765
    %v3416 = vunpack.c.l.b16 %v766
    %v3417 = vunpack.c.h.b16 %v766
    %v3418 = vunpack.c.l.b16 %v767
    %v3419 = vunpack.c.h.b16 %v767
    %v3420 = vunpack.c.l.b16 %v768
    %v3421 = vunpack.c.h.b16 %v768
    %v3422 = vunpack.c.l.b16 %v769
    %v3423 = vunpack.c.h.b16 %v769
    %v3424 = vunpack.c.l.b16 %v770
    %v3425 = vunpack.c.h.b16 %v770
    %v3426 = vunpack.c.l.b16 %v771
    %v3427 = vunpack.c.h.b16 %v771
    %v3428 = vunpack.c.l.b16 %v772
    %v3429 = vunpack.c.h.b16 %v772
    %v3430 = vunpack.c.l.b16 %v773
    %v3431 = vunpack.c.h.b16 %v773
    %v3432 = vunpack.c.l.b16 %v774
    %v3433 = vunpack.c.h.b16 %v774
    %v3434 = vunpack.c.l.b16 %v775
    %v3435 = vunpack.c.h.b16 %v775
    %v3436 = vunpack.c.l.b16 %v776
    %v3437 = vunpack.c.h.b16 %v776
    %v3438 = vunpack.c.l.b16 %v777
    %v3439 = vunpack.c.h.b16 %v777
    %v3440 = vunpack.c.l.b16 %v778
    %v3441 = vunpack.c.h.b16 %v778
    %v3442 = vunpack.c.l.b16 %v779
    %v3443 = vunpack.c.h.b16 %v779
    %v3444 = vunpack.c.l.b16 %v780
    %v3445 = vunpack.c.h.b16 %v780
    %v3446 = vunpack.c.l.b16 %v781
    %v3447 = vunpack.c.h.b16 %v781
    %v3448 = vunpack.c.l.b16 %v782
    %v3449 = vunpack.c.h.b16 %v782
    %v3450 = vunpack.c.l.b16 %v783
    %v3451 = vunpack.c.h.b16 %v783
    %v3452 = vunpack.c.l.b16 %v784
    %v3453 = vunpack.c.h.b16 %v784
    %v3454 = vunpack.c.l.b16 %v785
    %v3455 = vunpack.c.h.b16 %v785
    %v3456 = vunpack.c.l.b16 %v786
    %v3457 = vunpack.c.h.b16 %v786
    %v3458 = vunpack.c.l.b16 %v787
    %v3459 = vunpack.c.h.b16 %v787
    %v3460 = vunpack.c.l.b16 %v788
    %v3461 = vunpack.c.h.b16 %v788
    %v3462 = vunpack.c.l.b16 %v789
    %v3463 = vunpack.c.h.b16 %v789
    %v3464 = vunpack.c.l.b16 %v790
    %v3465 = vunpack.c.h.b16 %v790
    %v3466 = vunpack.c.l.b16 %v791
    %v3467 = vunpack.c.h.b16 %v791
    %v3468 = vunpack.c.l.b16 %v792
    %v3469 = vunpack.c.h.b16 %v792
    %v3470 = vunpack.c.l.b16 %v793
    %v3471 = vunpack.c.h.b16 %v793
    %v3472 = vunpack.c.l.b16 %v794
    %v3473 = vunpack.c.h.b16 %v794
    %v3474 = vunpack.c.l.b16 %v795
    %v3475 = vunpack.c.h.b16 %v795
    %v3476 = vunpack.c.l.b16 %v796
    %v3477 = vunpack.c.h.b16 %v796
    %v3478 = vunpack.c.l.b16 %v797
    %v3479 = vunpack.c.h.b16 %v797
    %v3480 = vunpack.c.l.b16 %v798
    %v3481 = vunpack.c.h.b16 %v798
    %v3482 = vunpack.c.l.b16 %v799
    %v3483 = vunpack.c.h.b16 %v799
    %v3484 = vunpack.c.l.b16 %v800
    %v3485 = vunpack.c.h.b16 %v800
    %v3486 = vunpack.c.l.b16 %v801
    %v3487 = vunpack.c.h.b16 %v801
    %v3488 = vunpack.c.l.b16 %v802
    %v3489 = vunpack.c.h.b16 %v802
    %v3490 = vunpack.c.l.b16 %v803
    %v3491 = vunpack.c.h.b16 %v803
    %v3492 = vunpack.c.l.b16 %v804
    %v3493 = vunpack.c.h.b16 %v804
    %v3494 = vunpack.c.l.b16 %v805
    %v3495 = vunpack.c.h.b16 %v805
    %v3496 = vunpack.c.l.b16 %v806
    %v3497 = vunpack.c.h.b16 %v806
    %v3498 = vunpack.c.l.b16 %v807
    %v3499 = vunpack.c.h.b16 %v807
    %v3500 = vunpack.c.l.b16 %v808
    %v3501 = vunpack.c.h.b16 %v808
    %v3502 = vunpack.c.l.b16 %v809
    %v3503 = vunpack.c.h.b16 %v809
    %v3504 = vunpack.c.l.b16 %v810
    %v3505 = vunpack.c.h.b16 %v810
    %v3506 = vunpack.c.l.b16 %v811
    %v3507 = vunpack.c.h.b16 %v811
    %v3508 = vunpack.c.l.b16 %v812
    %v3509 = vunpack.c.h.b16 %v812
    %v3510 = vunpack.c.l.b16 %v813
    %v3511 = vunpack.c.h.b16 %v813
    %v3512 = vunpack.c.l.b16 %v814
    %v3513 = vunpack.c.h.b16 %v814
    %v3514 = vunpack.c.l.b16 %v815
    %v3515 = vunpack.c.h.b16 %v815
    %v3516 = vunpack.c.l.b16 %v816
    %v3517 = vunpack.c.h.b16 %v816
    %v3518 = vunpack.c.l.b16 %v817
    %v3519 = vunpack.c.h.b16 %v817
    %v3520 = vunpack.c.l.b16 %v818
    %v3521 = vunpack.c.h.b16 %v818
    %v3522 = vunpack.c.l.b16 %v819
    %v3523 = vunpack.c.h.b16 %v819
    %v3524 = vunpack.c.l.b16 %v820
    %v3525 = vunpack.c.h.b16 %v820
    %v3526 = vunpack.c.l.b16 %v821
    %v3527 = vunpack.c.h.b16 %v821
    %v3528 = vunpack.c.l.b16 %v822
    %v3529 = vunpack.c.h.b16 %v822
    %v3530 = vunpack.c.l.b16 %v823
    %v3531 = vunpack.c.h.b16 %v823
    %v3532 = vunpack.c.l.b16 %v824
    %v3533 = vunpack.c.h.b16 %v824
    %v3534 = vunpack.c.l.b16 %v825
    %v3535 = vunpack.c.h.b16 %v825
    %v3536 = vunpack.c.l.b16 %v826
    %v3537 = vunpack.c.h.b16 %v826
    %v3538 = vunpack.c.l.b16 %v827
    %v3539 = vunpack.c.h.b16 %v827
    %v3540 = vunpack.c.l.b16 %v828
    %v3541 = vunpack.c.h.b16 %v828
    %v3542 = vunpack.c.l.b16 %v829
    %v3543 = vunpack.c.h.b16 %v829
    %v3544 = vunpack.c.l.b16 %v830
    %v3545 = vunpack.c.h.b16 %v830
    %v3546 = vunpack.c.l.b16 %v831
    %v3547 = vunpack.c.h.b16 %v831
    %v3548 = vunpack.c.l.b16 %v832
    %v3549 = vunpack.c.h.b16 %v832
    %v3550 = vunpack.c.l.b16 %v833
    %v3551 = vunpack.c.h.b16 %v833
    %v3552 = vunpack.c.l.b16 %v834
    %v3553 = vunpack.c.h.b16 %v834
    %v3554 = vunpack.c.l.b16 %v835
    %v3555 = vunpack.c.h.b16 %v835
    %v3556 = vunpack.c.l.b16 %v836
    %v3557 = vunpack.c.h.b16 %v836
    %v3558 = vunpack.c.l.b16 %v837
    %v3559 = vunpack.c.h.b16 %v837
    %v3560 = vunpack.c.l.b16 %v838
    %v3561 = vunpack.c.h.b16 %v838
    %v3562 = vunpack.c.l.b16 %v839
    %v3563 = vunpack.c.h.b16 %v839
    %v3564 = vunpack.c.l.b16 %v840
    %v3565 = vunpack.c.h.b16 %v840
    %v3566 = vunpack.c.l.b16 %v841
    %v3567 = vunpack.c.h.b16 %v841
    %v3568 = vunpack.c.l.b16 %v842
    %v3569 = vunpack.c.h.b16 %v842
    %v3570 = vunpack.c.l.b16 %v843
    %v3571 = vunpack.c.h.b16 %v843
    %v3572 = vunpack.c.l.b16 %v844
    %v3573 = vunpack.c.h.b16 %v844
    %v3574 = vunpack.c.l.b16 %v845
    %v3575 = vunpack.c.h.b16 %v845
    %v3576 = vunpack.c.l.b16 %v846
    %v3577 = vunpack.c.h.b16 %v846
    %v3578 = vunpack.c.l.b16 %v847
    %v3579 = vunpack.c.h.b16 %v847
    %v3580 = vunpack.c.l.b16 %v848
    %v3581 = vunpack.c.h.b16 %v848
    %v3582 = vunpack.c.l.b16 %v849
    %v3583 = vunpack.c.h.b16 %v849
    %v3584 = vunpack.c.l.b16 %v850
    %v3585 = vunpack.c.h.b16 %v850
    %v3586 = vunpack.c.l.b16 %v851
    %v3587 = vunpack.c.h.b16 %v851
    %v3588 = vunpack.c.l.b16 %v852
    %v3589 = vunpack.c.h.b16 %v852
    %v3590 = vunpack.c.l.b16 %v853
    %v3591 = vunpack.c.h.b16 %v853
    %v3592 = vunpack.c.l.b16 %v854
    %v3593 = vunpack.c.h.b16 %v854
    %v3594 = vunpack.c.l.b16 %v855
    %v3595 = vunpack.c.h.b16 %v855
    %v3596 = vunpack.c.l.b16 %v856
    %v3597 = vunpack.c.h.b16 %v856
    %v3598 = vunpack.c.l.b16 %v857
    %v3599 = vunpack.c.h.b16 %v857
    %v3600 = vunpack.c.l.b16 %v858
    %v3601 = vunpack.c.h.b16 %v858
    %v3602 = vunpack.c.l.b16 %v859
    %v3603 = vunpack.c.h.b16 %v859
    %v3604 = vunpack.c.l.b16 %v860
    %v3605 = vunpack.c.h.b16 %v860
    %v3606 = vunpack.c.l.b16 %v861
    %v3607 = vunpack.c.h.b16 %v861
    %v3608 = vunpack.c.l.b16 %v862
    %v3609 = vunpack.c.h.b16 %v862
    %v3610 = vunpack.c.l.b16 %v863
    %v3611 = vunpack.c.h.b16 %v863
    %v3612 = vunpack.c.l.b16 %v864
    %v3613 = vunpack.c.h.b16 %v864
    %v3614 = vunpack.c.l.b16 %v865
    %v3615 = vunpack.c.h.b16 %v865
    %v3616 = vunpack.c.l.b16 %v866
    %v3617 = vunpack.c.h.b16 %v866
    %v3618 = vunpack.c.l.b16 %v867
    %v3619 = vunpack.c.h.b16 %v867
    %v3620 = vunpack.c.l.b16 %v868
    %v3621 = vunpack.c.h.b16 %v868
    %v3622 = vunpack.c.l.b16 %v869
    %v3623 = vunpack.c.h.b16 %v869
    %v3624 = vunpack.c.l.b16 %v870
    %v3625 = vunpack.c.h.b16 %v870
    %v3626 = vunpack.c.l.b16 %v871
    %v3627 = vunpack.c.h.b16 %v871
    %v3628 = vunpack.c.l.b16 %v872
    %v3629 = vunpack.c.h.b16 %v872
    %v3630 = vunpack.c.l.b16 %v873
    %v3631 = vunpack.c.h.b16 %v873
    %v3632 = vunpack.c.l.b16 %v874
    %v3633 = vunpack.c.h.b16 %v874
    %v3634 = vunpack.c.l.b16 %v875
    %v3635 = vunpack.c.h.b16 %v875
    %v3636 = vunpack.c.l.b16 %v876
    %v3637 = vunpack.c.h.b16 %v876
    %v3638 = vunpack.c.l.b16 %v877
    %v3639 = vunpack.c.h.b16 %v877
    %v3640 = vunpack.c.l.b16 %v878
    %v3641 = vunpack.c.h.b16 %v878
    %v3642 = vunpack.c.l.b16 %v879
    %v3643 = vunpack.c.h.b16 %v879
    %v3644 = vunpack.c.l.b16 %v880
    %v3645 = vunpack.c.h.b16 %v880
    %v3646 = vunpack.c.l.b16 %v881
    %v3647 = vunpack.c.h.b16 %v881
    %v3648 = vunpack.c.l.b16 %v882
    %v3649 = vunpack.c.h.b16 %v882
    %v3650 = vunpack.c.l.b16 %v883
    %v3651 = vunpack.c.h.b16 %v883
    %v3652 = vunpack.c.l.b16 %v884
    %v3653 = vunpack.c.h.b16 %v884
    %v3654 = vunpack.c.l.b16 %v885
    %v3655 = vunpack.c.h.b16 %v885
    %v3656 = vunpack.c.l.b16 %v886
    %v3657 = vunpack.c.h.b16 %v886
    %v3658 = vunpack.c.l.b16 %v887
    %v3659 = vunpack.c.h.b16 %v887
    %v3660 = vunpack.c.l.b16 %v888
    %v3661 = vunpack.c.h.b16 %v888
    %v3662 = vunpack.c.l.b16 %v889
    %v3663 = vunpack.c.h.b16 %v889
    %v3664 = vunpack.c.l.b16 %v890
    %v3665 = vunpack.c.h.b16 %v890
    %v3666 = vunpack.c.l.b16 %v891
    %v3667 = vunpack.c.h.b16 %v891
    %v3668 = vunpack.c.l.b16 %v892
    %v3669 = vunpack.c.h.b16 %v892
    %v3670 = vunpack.c.l.b16 %v893
    %v3671 = vunpack.c.h.b16 %v893
    %v3672 = vunpack.c.l.b16 %v894
    %v3673 = vunpack.c.h.b16 %v894
    %v3674 = vunpack.c.l.b16 %v895
    %v3675 = vunpack.c.h.b16 %v895
    %v3676 = vunpack.c.l.b16 %v896
    %v3677 = vunpack.c.h.b16 %v896
    %v3678 = vunpack.c.l.b16 %v897
    %v3679 = vunpack.c.h.b16 %v897
    %v3680 = vunpack.c.l.b16 %v898
    %v3681 = vunpack.c.h.b16 %v898
    %v3682 = vunpack.c.l.b16 %v899
    %v3683 = vunpack.c.h.b16 %v899
    %v3684 = vunpack.c.l.b16 %v900
    %v3685 = vunpack.c.h.b16 %v900
    %v3686 = vunpack.c.l.b16 %v901
    %v3687 = vunpack.c.h.b16 %v901
    %v3688 = vunpack.c.l.b16 %v902
    %v3689 = vunpack.c.h.b16 %v902
    %v3690 = vunpack.c.l.b16 %v903
    %v3691 = vunpack.c.h.b16 %v903
    %v3692 = vunpack.c.l.b16 %v904
    %v3693 = vunpack.c.h.b16 %v904
    %v3694 = vunpack.c.l.b16 %v905
    %v3695 = vunpack.c.h.b16 %v905
    %v3696 = vunpack.c.l.b16 %v906
    %v3697 = vunpack.c.h.b16 %v906
    %v3698 = vunpack.c.l.b16 %v907
    %v3699 = vunpack.c.h.b16 %v907
    %v3700 = vunpack.c.l.b16 %v908
    %v3701 = vunpack.c.h.b16 %v908
    %v3702 = vunpack.c.l.b16 %v909
    %v3703 = vunpack.c.h.b16 %v909
    %v3704 = vunpack.c.l.b16 %v910
    %v3705 = vunpack.c.h.b16 %v910
    %v3706 = vunpack.c.l.b16 %v911
    %v3707 = vunpack.c.h.b16 %v911
    %v3708 = vunpack.c.l.b16 %v912
    %v3709 = vunpack.c.h.b16 %v912
    %v3710 = vunpack.c.l.b16 %v913
    %v3711 = vunpack.c.h.b16 %v913
    %v3712 = vunpack.c.l.b16 %v914
    %v3713 = vunpack.c.h.b16 %v914
    %v3714 = vunpack.c.l.b16 %v915
    %v3715 = vunpack.c.h.b16 %v915
    %v3716 = vunpack.c.l.b16 %v916
    %v3717 = vunpack.c.h.b16 %v916
    %v3718 = vunpack.c.l.b16 %v917
    %v3719 = vunpack.c.h.b16 %v917
    %v3720 = vunpack.c.l.b16 %v918
    %v3721 = vunpack.c.h.b16 %v918
    %v3722 = vunpack.c.l.b16 %v919
    %v3723 = vunpack.c.h.b16 %v919
    %v3724 = vunpack.c.l.b16 %v920
    %v3725 = vunpack.c.h.b16 %v920
    %v3726 = vunpack.c.l.b16 %v921
    %v3727 = vunpack.c.h.b16 %v921
    %v3728 = vunpack.c.l.b16 %v922
    %v3729 = vunpack.c.h.b16 %v922
    %v3730 = vunpack.c.l.b16 %v923
    %v3731 = vunpack.c.h.b16 %v923
    %v3732 = vunpack.c.l.b16 %v924
    %v3733 = vunpack.c.h.b16 %v924
    %v3734 = vunpack.c.l.b16 %v925
    %v3735 = vunpack.c.h.b16 %v925
    %v3736 = vunpack.c.l.b16 %v926
    %v3737 = vunpack.c.h.b16 %v926
    %v3738 = vunpack.c.l.b16 %v927
    %v3739 = vunpack.c.h.b16 %v927
    %v3740 = vunpack.c.l.b16 %v928
    %v3741 = vunpack.c.h.b16 %v928
    %v3742 = vunpack.c.l.b16 %v929
    %v3743 = vunpack.c.h.b16 %v929
    %v3744 = vunpack.c.l.b16 %v930
    %v3745 = vunpack.c.h.b16 %v930
    %v3746 = vunpack.c.l.b16 %v931
    %v3747 = vunpack.c.h.b16 %v931
    %v3748 = vunpack.c.l.b16 %v932
    %v3749 = vunpack.c.h.b16 %v932
    %v3750 = vunpack.c.l.b16 %v933
    %v3751 = vunpack.c.h.b16 %v933
    %v3752 = vunpack.c.l.b16 %v934
    %v3753 = vunpack.c.h.b16 %v934
    %v3754 = vunpack.c.l.b16 %v935
    %v3755 = vunpack.c.h.b16 %v935
    %v3756 = vunpack.c.l.b16 %v936
    %v3757 = vunpack.c.h.b16 %v936
    %v3758 = vunpack.c.l.b16 %v937
    %v3759 = vunpack.c.h.b16 %v937
    %v3760 = vunpack.c.l.b16 %v938
    %v3761 = vunpack.c.h.b16 %v938
    %v3762 = vunpack.c.l.b16 %v939
    %v3763 = vunpack.c.h.b16 %v939
    %v3764 = vunpack.c.l.b16 %v940
    %v3765 = vunpack.c.h.b16 %v940
    %v3766 = vunpack.c.l.b16 %v941
    %v3767 = vunpack.c.h.b16 %v941
    %v3768 = vunpack.c.l.b16 %v942
    %v3769 = vunpack.c.h.b16 %v942
    %v3770 = vunpack.c.l.b16 %v943
    %v3771 = vunpack.c.h.b16 %v943
    %v3772 = vunpack.c.l.b16 %v944
    %v3773 = vunpack.c.h.b16 %v944
    %v3774 = vunpack.c.l.b16 %v945
    %v3775 = vunpack.c.h.b16 %v945
    %v3776 = vunpack.c.l.b16 %v946
    %v3777 = vunpack.c.h.b16 %v946
    %v3778 = vunpack.c.l.b16 %v947
    %v3779 = vunpack.c.h.b16 %v947
    %v3780 = vunpack.c.l.b16 %v948
    %v3781 = vunpack.c.h.b16 %v948
    %v3782 = vunpack.c.l.b16 %v949
    %v3783 = vunpack.c.h.b16 %v949
    %v3784 = vunpack.c.l.b16 %v950
    %v3785 = vunpack.c.h.b16 %v950
    %v3786 = vunpack.c.l.b16 %v951
    %v3787 = vunpack.c.h.b16 %v951
    %v3788 = vunpack.c.l.b16 %v952
    %v3789 = vunpack.c.h.b16 %v952
    %v3790 = vunpack.c.l.b16 %v953
    %v3791 = vunpack.c.h.b16 %v953
    %v3792 = vunpack.c.l.b16 %v954
    %v3793 = vunpack.c.h.b16 %v954
    %v3794 = vunpack.c.l.b16 %v955
    %v3795 = vunpack.c.h.b16 %v955
    %v3796 = vunpack.c.l.b16 %v956
    %v3797 = vunpack.c.h.b16 %v956
    %v3798 = vunpack.c.l.b16 %v957
    %v3799 = vunpack.c.h.b16 %v957
    %v3800 = vunpack.c.l.b16 %v958
    %v3801 = vunpack.c.h.b16 %v958
    %v3802 = vunpack.c.l.b16 %v959
    %v3803 = vunpack.c.h.b16 %v959
    %v3804 = vunpack.c.l.b16 %v960
    %v3805 = vunpack.c.h.b16 %v960
    %v3806 = vunpack.c.l.b16 %v961
    %v3807 = vunpack.c.h.b16 %v961
    %v3808 = vunpack.c.l.b16 %v962
    %v3809 = vunpack.c.h.b16 %v962
    %v3810 = vunpack.c.l.b16 %v963
    %v3811 = vunpack.c.h.b16 %v963
    %v3812 = vunpack.c.l.b16 %v964
    %v3813 = vunpack.c.h.b16 %v964
    %v3814 = vunpack.c.l.b16 %v965
    %v3815 = vunpack.c.h.b16 %v965
    %v3816 = vunpack.c.l.b16 %v966
    %v3817 = vunpack.c.h.b16 %v966
    %v3818 = vunpack.c.l.b16 %v967
    %v3819 = vunpack.c.h.b16 %v967
    %v3820 = vunpack.c.l.b16 %v968
    %v3821 = vunpack.c.h.b16 %v968
    %v3822 = vunpack.c.l.b16 %v969
    %v3823 = vunpack.c.h.b16 %v969
    %v3824 = vunpack.c.l.b16 %v970
    %v3825 = vunpack.c.h.b16 %v970
    %v3826 = vunpack.c.l.b16 %v971
    %v3827 = vunpack.c.h.b16 %v971
    %v3828 = vunpack.c.l.b16 %v972
    %v3829 = vunpack.c.h.b16 %v972
    %v3830 = vunpack.c.l.b16 %v973
    %v3831 = vunpack.c.h.b16 %v973
    %v3832 = vunpack.c.l.b16 %v974
    %v3833 = vunpack.c.h.b16 %v974
    %v3834 = vunpack.c.l.b16 %v975
    %v3835 = vunpack.c.h.b16 %v975
    %v3836 = vunpack.c.l.b16 %v976
    %v3837 = vunpack.c.h.b16 %v976
    %v3838 = vunpack.c.l.b16 %v977
    %v3839 = vunpack.c.h.b16 %v977
    %v3840 = vunpack.c.l.b16 %v978
    %v3841 = vunpack.c.h.b16 %v978
    %v3842 = vunpack.c.l.b16 %v979
    %v3843 = vunpack.c.h.b16 %v979
    %v3844 = vunpack.c.l.b16 %v980
    %v3845 = vunpack.c.h.b16 %v980
    %v3846 = vunpack.c.l.b16 %v981
    %v3847 = vunpack.c.h.b16 %v981
    %v3848 = vunpack.c.l.b16 %v982
    %v3849 = vunpack.c.h.b16 %v982
    %v3850 = vunpack.c.l.b16 %v983
    %v3851 = vunpack.c.h.b16 %v983
    %v3852 = vunpack.c.l.b16 %v984
    %v3853 = vunpack.c.h.b16 %v984
    %v3854 = vunpack.c.l.b16 %v985
    %v3855 = vunpack.c.h.b16 %v985
    %v3856 = vunpack.c.l.b16 %v986
    %v3857 = vunpack.c.h.b16 %v986
    %v3858 = vunpack.c.l.b16 %v987
    %v3859 = vunpack.c.h.b16 %v987
    %v3860 = vunpack.c.l.b16 %v988
    %v3861 = vunpack.c.h.b16 %v988
    %v3862 = vunpack.c.l.b16 %v989
    %v3863 = vunpack.c.h.b16 %v989
    %v3864 = vunpack.c.l.b16 %v990
    %v3865 = vunpack.c.h.b16 %v990
    %v3866 = vunpack.c.l.b16 %v991
    %v3867 = vunpack.c.h.b16 %v991
    %v3868 = vunpack.c.l.b16 %v992
    %v3869 = vunpack.c.h.b16 %v992
    %v3870 = vunpack.c.l.b16 %v993
    %v3871 = vunpack.c.h.b16 %v993
    %v3872 = vunpack.c.l.b16 %v994
    %v3873 = vunpack.c.h.b16 %v994
    %v3874 = vunpack.c.l.b16 %v995
    %v3875 = vunpack.c.h.b16 %v995
    %v3876 = vunpack.c.l.b16 %v996
    %v3877 = vunpack.c.h.b16 %v996
    %v3878 = vunpack.c.l.b16 %v997
    %v3879 = vunpack.c.h.b16 %v997
    %v3880 = vunpack.c.l.b16 %v998
    %v3881 = vunpack.c.h.b16 %v998
    %v3882 = vunpack.c.l.b16 %v999
    %v3883 = vunpack.c.h.b16 %v999
    %v3884 = vunpack.c.l.b16 %v1000
    %v3885 = vunpack.c.h.b16 %v1000
    %v3886 = vunpack.c.l.b16 %v1001
    %v3887 = vunpack.c.h.b16 %v1001
    %v3888 = vunpack.c.l.b16 %v1002
    %v3889 = vunpack.c.h.b16 %v1002
    %v3890 = vunpack.c.l.b16 %v1003
    %v3891 = vunpack.c.h.b16 %v1003
    %v3892 = vunpack.c.l.b16 %v1004
    %v3893 = vunpack.c.h.b16 %v1004
    %v3894 = vunpack.c.l.b16 %v1005
    %v3895 = vunpack.c.h.b16 %v1005
    %v3896 = vunpack.c.l.b16 %v1006
    %v3897 = vunpack.c.h.b16 %v1006
    %v3898 = vunpack.c.l.b16 %v1007
    %v3899 = vunpack.c.h.b16 %v1007
    %v3900 = vunpack.c.l.b16 %v1008
    %v3901 = vunpack.c.h.b16 %v1008
    %v3902 = vunpack.c.l.b16 %v1009
    %v3903 = vunpack.c.h.b16 %v1009
    %v3904 = vunpack.c.l.b16 %v1010
    %v3905 = vunpack.c.h.b16 %v1010
    %v3906 = vunpack.c.l.b16 %v1011
    %v3907 = vunpack.c.h.b16 %v1011
    %v3908 = vunpack.c.l.b16 %v1012
    %v3909 = vunpack.c.h.b16 %v1012
    %v3910 = vunpack.c.l.b16 %v1013
    %v3911 = vunpack.c.h.b16 %v1013
    %v3912 = vunpack.c.l.b16 %v1014
    %v3913 = vunpack.c.h.b16 %v1014
    %v3914 = vunpack.c.l.b16 %v1015
    %v3915 = vunpack.c.h.b16 %v1015
    %v3916 = vunpack.c.l.b16 %v1016
    %v3917 = vunpack.c.h.b16 %v1016
    %v3918 = vunpack.c.l.b16 %v1017
    %v3919 = vunpack.c.h.b16 %v1017
    %v3920 = vunpack.c.l.b16 %v1018
    %v3921 = vunpack.c.h.b16 %v1018
    %v3922 = vunpack.c.l.b16 %v1019
    %v3923 = vunpack.c.h.b16 %v1019
    %v3924 = vunpack.c.l.b16 %v1020
    %v3925 = vunpack.c.h.b16 %v1020
    %v3926 = vunpack.c.l.b16 %v1021
    %v3927 = vunpack.c.h.b16 %v1021
    %v3928 = vunpack.c.l.b16 %v1022
    %v3929 = vunpack.c.h.b16 %v1022
    %v3930 = vunpack.c.l.b16 %v1023
    %v3931 = vunpack.c.h.b16 %v1023
    %v3932 = vunpack.c.l.b16 %v1024
    %v3933 = vunpack.c.h.b16 %v1024
    %v3934 = vunpack.c.l.b16 %v1025
    %v3935 = vunpack.c.h.b16 %v1025
    %v3936 = vunpack.c.l.b16 %v1026
    %v3937 = vunpack.c.h.b16 %v1026
    %v3938 = vunpack.c.l.b16 %v1027
    %v3939 = vunpack.c.h.b16 %v1027
    %v3940 = vunpack.c.l.b16 %v1028
    %v3941 = vunpack.c.h.b16 %v1028
    %v3942 = vunpack.c.l.b16 %v1029
    %v3943 = vunpack.c.h.b16 %v1029
    %v3944 = vunpack.c.l.b16 %v1030
    %v3945 = vunpack.c.h.b16 %v1030
    %v3946 = vunpack.c.l.b16 %v1031
    %v3947 = vunpack.c.h.b16 %v1031
    %v3948 = vunpack.c.l.b16 %v1032
    %v3949 = vunpack.c.h.b16 %v1032
    %v3950 = vunpack.c.l.b16 %v1033
    %v3951 = vunpack.c.h.b16 %v1033
    %v3952 = vunpack.c.l.b16 %v1034
    %v3953 = vunpack.c.h.b16 %v1034
    %v3954 = vunpack.c.l.b16 %v1035
    %v3955 = vunpack.c.h.b16 %v1035
    %v3956 = vunpack.c.l.b16 %v1036
    %v3957 = vunpack.c.h.b16 %v1036
    %v3958 = vunpack.c.l.b16 %v1037
    %v3959 = vunpack.c.h.b16 %v1037
    %v3960 = vunpack.c.l.b16 %v1038
    %v3961 = vunpack.c.h.b16 %v1038
    %v3962 = vunpack.c.l.b16 %v1039
    %v3963 = vunpack.c.h.b16 %v1039
    %v3964 = vunpack.c.l.b16 %v1040
    %v3965 = vunpack.c.h.b16 %v1040
    %v3966 = vunpack.c.l.b16 %v1041
    %v3967 = vunpack.c.h.b16 %v1041
    %v3968 = vunpack.c.l.b16 %v1042
    %v3969 = vunpack.c.h.b16 %v1042
    %v3970 = vunpack.c.l.b16 %v1043
    %v3971 = vunpack.c.h.b16 %v1043
    %v3972 = vunpack.c.l.b16 %v1044
    %v3973 = vunpack.c.h.b16 %v1044
    %v3974 = vunpack.c.l.b16 %v1045
    %v3975 = vunpack.c.h.b16 %v1045
    %v3976 = vunpack.c.l.b16 %v1046
    %v3977 = vunpack.c.h.b16 %v1046
    %v3978 = vunpack.c.l.b16 %v1047
    %v3979 = vunpack.c.h.b16 %v1047
    %v3980 = vunpack.c.l.b16 %v1048
    %v3981 = vunpack.c.h.b16 %v1048
    %v3982 = vunpack.c.l.b16 %v1049
    %v3983 = vunpack.c.h.b16 %v1049
    %v3984 = vunpack.c.l.b16 %v1050
    %v3985 = vunpack.c.h.b16 %v1050
    %v3986 = vunpack.c.l.b16 %v1051
    %v3987 = vunpack.c.h.b16 %v1051
    %v3988 = vunpack.c.l.b16 %v1052
    %v3989 = vunpack.c.h.b16 %v1052
    %v3990 = vunpack.c.l.b16 %v1053
    %v3991 = vunpack.c.h.b16 %v1053
    %v3992 = vunpack.c.l.b16 %v1054
    %v3993 = vunpack.c.h.b16 %v1054
    %v3994 = vunpack.c.l.b16 %v1055
    %v3995 = vunpack.c.h.b16 %v1055
    %v3996 = vunpack.c.l.b16 %v1056
    %v3997 = vunpack.c.h.b16 %v1056
    %v3998 = vunpack.c.l.b16 %v1057
    %v3999 = vunpack.c.h.b16 %v1057
    %v4000 = vunpack.c.l.b16 %v1058
    %v4001 = vunpack.c.h.b16 %v1058
    %v4002 = vunpack.c.l.b16 %v1059
    %v4003 = vunpack.c.h.b16 %v1059
    %v4004 = vunpack.c.l.b16 %v1060
    %v4005 = vunpack.c.h.b16 %v1060
    %v4006 = vunpack.c.l.b16 %v1061
    %v4007 = vunpack.c.h.b16 %v1061
    %v4008 = vunpack.c.l.b16 %v1062
    %v4009 = vunpack.c.h.b16 %v1062
    %v4010 = vunpack.c.l.b16 %v1063
    %v4011 = vunpack.c.h.b16 %v1063
    %v4012 = vunpack.c.l.b16 %v1064
    %v4013 = vunpack.c.h.b16 %v1064
    %v4014 = vunpack.c.l.b16 %v1065
    %v4015 = vunpack.c.h.b16 %v1065
    %v4016 = vunpack.c.l.b16 %v1066
    %v4017 = vunpack.c.h.b16 %v1066
    %v4018 = vunpack.c.l.b16 %v1067
    %v4019 = vunpack.c.h.b16 %v1067
    %v4020 = vunpack.c.l.b16 %v1068
    %v4021 = vunpack.c.h.b16 %v1068
    %v4022 = vunpack.c.l.b16 %v1069
    %v4023 = vunpack.c.h.b16 %v1069
    %v4024 = vunpack.c.l.b16 %v1070
    %v4025 = vunpack.c.h.b16 %v1070
    %v4026 = vunpack.c.l.b16 %v1071
    %v4027 = vunpack.c.h.b16 %v1071
    %v4028 = vunpack.c.l.b16 %v1072
    %v4029 = vunpack.c.h.b16 %v1072
    %v4030 = vunpack.c.l.b16 %v1073
    %v4031 = vunpack.c.h.b16 %v1073
    %v4032 = vunpack.c.l.b16 %v1074
    %v4033 = vunpack.c.h.b16 %v1074
    %v4034 = vunpack.c.l.b16 %v1075
    %v4035 = vunpack.c.h.b16 %v1075
    %v4036 = vunpack.c.l.b16 %v1076
    %v4037 = vunpack.c.h.b16 %v1076
    %v4038 = vunpack.c.l.b16 %v1077
    %v4039 = vunpack.c.h.b16 %v1077
    %v4040 = vunpack.c.l.b16 %v1078
    %v4041 = vunpack.c.h.b16 %v1078
    %v4042 = vunpack.c.l.b16 %v1079
    %v4043 = vunpack.c.h.b16 %v1079
    %v4044 = vunpack.c.l.b16 %v1080
    %v4045 = vunpack.c.h.b16 %v1080
    %v4046 = vunpack.c.l.b16 %v1081
    %v4047 = vunpack.c.h.b16 %v1081
    %v4048 = vunpack.c.l.b16 %v1082
    %v4049 = vunpack.c.h.b16 %v1082
    %v4050 = vunpack.c.l.b16 %v1083
    %v4051 = vunpack.c.h.b16 %v1083
    %v4052 = vunpack.c.l.b16 %v1084
    %v4053 = vunpack.c.h.b16 %v1084
    %v4054 = vunpack.c.l.b16 %v1085
    %v4055 = vunpack.c.h.b16 %v1085
    %v4056 = vunpack.c.l.b16 %v1086
    %v4057 = vunpack.c.h.b16 %v1086
    %v4058 = vunpack.c.l.b16 %v1087
    %v4059 = vunpack.c.h.b16 %v1087
    %v4060 = vunpack.c.l.b16 %v1088
    %v4061 = vunpack.c.h.b16 %v1088
    %v4062 = vunpack.c.l.b16 %v1089
    %v4063 = vunpack.c.h.b16 %v1089
    %v4064 = vunpack.c.l.b16 %v1090
    %v4065 = vunpack.c.h.b16 %v1090
    %v4066 = vunpack.c.l.b16 %v1091
    %v4067 = vunpack.c.h.b16 %v1091
    %v4068 = vunpack.c.l.b16 %v1092
    %v4069 = vunpack.c.h.b16 %v1092
    %v4070 = vunpack.c.l.b16 %v1093
    %v4071 = vunpack.c.h.b16 %v1093
    %v4072 = vunpack.c.l.b16 %v1094
    %v4073 = vunpack.c.h.b16 %v1094
    %v4074 = vunpack.c.l.b16 %v1095
    %v4075 = vunpack.c.h.b16 %v1095
    %v4076 = vunpack.c.l.b16 %v1096
    %v4077 = vunpack.c.h.b16 %v1096
    %v4078 = vunpack.c.l.b16 %v1097
    %v4079 = vunpack.c.h.b16 %v1097
    %v4080 = vunpack.c.l.b16 %v1098
    %v4081 = vunpack.c.h.b16 %v1098
    %v4082 = vunpack.c.l.b16 %v1099
    %v4083 = vunpack.c.h.b16 %v1099
    %v4084 = vunpack.c.l.b16 %v1100
    %v4085 = vunpack.c.h.b16 %v1100
    %v4086 = vunpack.c.l.b16 %v1101
    %v4087 = vunpack.c.h.b16 %v1101
    %v4088 = vunpack.c.l.b16 %v1102
    %v4089 = vunpack.c.h.b16 %v1102
    %v4090 = vunpack.c.l.b16 %v1103
    %v4091 = vunpack.c.h.b16 %v1103
    %v4092 = vunpack.c.l.b16 %v1104
    %v4093 = vunpack.c.h.b16 %v1104
    %v4094 = vunpack.c.l.b16 %v1105
    %v4095 = vunpack.c.h.b16 %v1105
    %v4096 = vunpack.c.l.b16 %v1106
    %v4097 = vunpack.c.h.b16 %v1106
    %v4098 = vunpack.c.l.b16 %v1107
    %v4099 = vunpack.c.h.b16 %v1107
    %v4100 = vunpack.c.l.b16 %v1108
    %v4101 = vunpack.c.h.b16 %v1108
    %v4102 = vunpack.c.l.b16 %v1109
    %v4103 = vunpack.c.h.b16 %v1109
    %v4104 = vunpack.c.l.b16 %v1110
    %v4105 = vunpack.c.h.b16 %v1110
    %v4106 = vunpack.c.l.b16 %v1111
    %v4107 = vunpack.c.h.b16 %v1111
    %v4108 = vunpack.c.l.b16 %v1112
    %v4109 = vunpack.c.h.b16 %v1112
    %v4110 = vunpack.c.l.b16 %v1113
    %v4111 = vunpack.c.h.b16 %v1113
    %v4112 = vunpack.c.l.b16 %v1114
    %v4113 = vunpack.c.h.b16 %v1114
    %v4114 = vunpack.c.l.b16 %v1115
    %v4115 = vunpack.c.h.b16 %v1115
    %v4116 = vpack.c.b16 %v2124, %v2116
    %v4117 = vpack.c.b16 %v2125, %v2117
    %v4118 = vpack.c.b16 %v2126, %v2118
    %v4119 = vpack.c.b16 %v2127, %v2119
    %v4120 = vpack.c.b16 %v2128, %v2120
    %v4121 = vpack.c.b16 %v2129, %v2121
    %v4122 = vpack.c.b16 %v2130, %v2122
    %v4123 = vpack.c.b16 %v2131, %v2123
    %v4124 = vpack.c.b16 %v2140, %v2132
    %v4125 = vpack.c.b16 %v2141, %v2133
    %v4126 = vpack.c.b16 %v2142, %v2134
    %v4127 = vpack.c.b16 %v2143, %v2135
    %v4128 = vpack.c.b16 %v2144, %v2136
    %v4129 = vpack.c.b16 %v2145, %v2137
    %v4130 = vpack.c.b16 %v2146, %v2138
    %v4131 = vpack.c.b16 %v2147, %v2139
    %v4132 = vpack.c.b16 %v2156, %v2148
    %v4133 = vpack.c.b16 %v2157, %v2149
    %v4134 = vpack.c.b16 %v2158, %v2150
    %v4135 = vpack.c.b16 %v2159, %v2151
    %v4136 = vpack.c.b16 %v2160, %v2152
    %v4137 = vpack.c.b16 %v2161, %v2153
    %v4138 = vpack.c.b16 %v2162, %v2154
    %v4139 = vpack.c.b16 %v2163, %v2155
    %v4140 = vpack.c.b16 %v2172, %v2164
    %v4141 = vpack.c.b16 %v2173, %v2165
    %v4142 = vpack.c.b16 %v2174, %v2166
    %v4143 = vpack.c.b16 %v2175, %v2167
    %v4144 = vpack.c.b16 %v2176, %v2168
    %v4145 = vpack.c.b16 %v2177, %v2169
    %v4146 = vpack.c.b16 %v2178, %v2170
    %v4147 = vpack.c.b16 %v2179, %v2171
    %v4148 = vpack.c.b16 %v2188, %v2180
    %v4149 = vpack.c.b16 %v2189, %v2181
    %v4150 = vpack.c.b16 %v2190, %v2182
    %v4151 = vpack.c.b16 %v2191, %v2183
    %v4152 = vpack.c.b16 %v2192, %v2184
    %v4153 = vpack.c.b16 %v2193, %v2185
    %v4154 = vpack.c.b16 %v2194, %v2186
    %v4155 = vpack.c.b16 %v2195, %v2187
    %v4156 = vpack.c.b16 %v2204, %v2196
    %v4157 = vpack.c.b16 %v2205, %v2197
    %v4158 = vpack.c.b16 %v2206, %v2198
    %v4159 = vpack.c.b16 %v2207, %v2199
    %v4160 = vpack.c.b16 %v2208, %v2200
    %v4161 = vpack.c.b16 %v2209, %v2201
    %v4162 = vpack.c.b16 %v2210, %v2202
    %v4163 = vpack.c.b16 %v2211, %v2203
    %v4164 = vpack.c.b16 %v2220, %v2212
    %v4165 = vpack.c.b16 %v2221, %v2213
    %v4166 = vpack.c.b16 %v2222, %v2214
    %v4167 = vpack.c.b16 %v2223, %v2215
    %v4168 = vpack.c.b16 %v2224, %v2216
    %v4169 = vpack.c.b16 %v2225, %v2217
    %v4170 = vpack.c.b16 %v2226, %v2218
    %v4171 = vpack.c.b16 %v2227, %v2219
    %v4172 = vpack.c.b16 %v2236, %v2228
    %v4173 = vpack.c.b16 %v2237, %v2229
    %v4174 = vpack.c.b16 %v2238, %v2230
    %v4175 = vpack.c.b16 %v2239, %v2231
    %v4176 = vpack.c.b16 %v2240, %v2232
    %v4177 = vpack.c.b16 %v2241, %v2233
    %v4178 = vpack.c.b16 %v2242, %v2234
    %v4179 = vpack.c.b16 %v2243, %v2235
    %v4180 = vpack.c.b16 %v2252, %v2244
    %v4181 = vpack.c.b16 %v2253, %v2245
    %v4182 = vpack.c.b16 %v2254, %v2246
    %v4183 = vpack.c.b16 %v2255, %v2247
    %v4184 = vpack.c.b16 %v2256, %v2248
    %v4185 = vpack.c.b16 %v2257, %v2249
    %v4186 = vpack.c.b16 %v2258, %v2250
    %v4187 = vpack.c.b16 %v2259, %v2251
    %v4188 = vpack.c.b16 %v2268, %v2260
    %v4189 = vpack.c.b16 %v2269, %v2261
    %v4190 = vpack.c.b16 %v2270, %v2262
    %v4191 = vpack.c.b16 %v2271, %v2263
    %v4192 = vpack.c.b16 %v2272, %v2264
    %v4193 = vpack.c.b16 %v2273, %v2265
    %v4194 = vpack.c.b16 %v2274, %v2266
    %v4195 = vpack.c.b16 %v2275, %v2267
    %v4196 = vpack.c.b16 %v2284, %v2276
    %v4197 = vpack.c.b16 %v2285, %v2277
    %v4198 = vpack.c.b16 %v2286, %v2278
    %v4199 = vpack.c.b16 %v2287, %v2279
    %v4200 = vpack.c.b16 %v2288, %v2280
    %v4201 = vpack.c.b16 %v2289, %v2281
    %v4202 = vpack.c.b16 %v2290, %v2282
    %v4203 = vpack.c.b16 %v2291, %v2283
    %v4204 = vpack.c.b16 %v2300, %v2292
    %v4205 = vpack.c.b16 %v2301, %v2293
    %v4206 = vpack.c.b16 %v2302, %v2294
    %v4207 = vpack.c.b16 %v2303, %v2295
    %v4208 = vpack.c.b16 %v2304, %v2296
    %v4209 = vpack.c.b16 %v2305, %v2297
    %v4210 = vpack.c.b16 %v2306, %v2298
    %v4211 = vpack.c.b16 %v2307, %v2299
    %v4212 = vpack.c.b16 %v2316, %v2308
    %v4213 = vpack.c.b16 %v2317, %v2309
    %v4214 = vpack.c.b16 %v2318, %v2310
    %v4215 = vpack.c.b16 %v2319, %v2311
    %v4216 = vpack.c.b16 %v2320, %v2312
    %v4217 = vpack.c.b16 %v2321, %v2313
    %v4218 = vpack.c.b16 %v2322, %v2314
    %v4219 = vpack.c.b16 %v2323, %v2315
    %v4220 = vpack.c.b16 %v2332, %v2324
    %v4221 = vpack.c.b16 %v2333, %v2325
    %v4222 = vpack.c.b16 %v2334, %v2326
    %v4223 = vpack.c.b16 %v2335, %v2327
    %v4224 = vpack.c.b16 %v2336, %v2328
    %v4225 = vpack.c.b16 %v2337, %v2329
    %v4226 = vpack.c.b16 %v2338, %v2330
    %v4227 = vpack.c.b16 %v2339, %v2331
    %v4228 = vpack.c.b16 %v2348, %v2340
    %v4229 = vpack.c.b16 %v2349, %v2341
    %v4230 = vpack.c.b16 %v2350, %v2342
    %v4231 = vpack.c.b16 %v2351, %v2343
    %v4232 = vpack.c.b16 %v2352, %v2344
    %v4233 = vpack.c.b16 %v2353, %v2345
    %v4234 = vpack.c.b16 %v2354, %v2346
    %v4235 = vpack.c.b16 %v2355, %v2347
    %v4236 = vpack.c.b16 %v2364, %v2356
    %v4237 = vpack.c.b16 %v2365, %v2357
    %v4238 = vpack.c.b16 %v2366, %v2358
    %v4239 = vpack.c.b16 %v2367, %v2359
    %v4240 = vpack.c.b16 %v2368, %v2360
    %v4241 = vpack.c.b16 %v2369, %v2361
    %v4242 = vpack.c.b16 %v2370, %v2362
    %v4243 = vpack.c.b16 %v2371, %v2363
    %v4244 = vpack.c.b16 %v2380, %v2372
    %v4245 = vpack.c.b16 %v2381, %v2373
    %v4246 = vpack.c.b16 %v2382, %v2374
    %v4247 = vpack.c.b16 %v2383, %v2375
    %v4248 = vpack.c.b16 %v2384, %v2376
    %v4249 = vpack.c.b16 %v2385, %v2377
    %v4250 = vpack.c.b16 %v2386, %v2378
    %v4251 = vpack.c.b16 %v2387, %v2379
    %v4252 = vpack.c.b16 %v2396, %v2388
    %v4253 = vpack.c.b16 %v2397, %v2389
    %v4254 = vpack.c.b16 %v2398, %v2390
    %v4255 = vpack.c.b16 %v2399, %v2391
    %v4256 = vpack.c.b16 %v2400, %v2392
    %v4257 = vpack.c.b16 %v2401, %v2393
    %v4258 = vpack.c.b16 %v2402, %v2394
    %v4259 = vpack.c.b16 %v2403, %v2395
    %v4260 = vpack.c.b16 %v2412, %v2404
    %v4261 = vpack.c.b16 %v2413, %v2405
    %v4262 = vpack.c.b16 %v2414, %v2406
    %v4263 = vpack.c.b16 %v2415, %v2407
    %v4264 = vpack.c.b16 %v2416, %v2408
    %v4265 = vpack.c.b16 %v2417, %v2409
    %v4266 = vpack.c.b16 %v2418, %v2410
    %v4267 = vpack.c.b16 %v2419, %v2411
    %v4268 = vpack.c.b16 %v2428, %v2420
    %v4269 = vpack.c.b16 %v2429, %v2421
    %v4270 = vpack.c.b16 %v2430, %v2422
    %v4271 = vpack.c.b16 %v2431, %v2423
    %v4272 = vpack.c.b16 %v2432, %v2424
    %v4273 = vpack.c.b16 %v2433, %v2425
    %v4274 = vpack.c.b16 %v2434, %v2426
    %v4275 = vpack.c.b16 %v2435, %v2427
    %v4276 = vpack.c.b16 %v2444, %v2436
    %v4277 = vpack.c.b16 %v2445, %v2437
    %v4278 = vpack.c.b16 %v2446, %v2438
    %v4279 = vpack.c.b16 %v2447, %v2439
    %v4280 = vpack.c.b16 %v2448, %v2440
    %v4281 = vpack.c.b16 %v2449, %v2441
    %v4282 = vpack.c.b16 %v2450, %v2442
    %v4283 = vpack.c.b16 %v2451, %v2443
    %v4284 = vpack.c.b16 %v2460, %v2452
    %v4285 = vpack.c.b16 %v2461, %v2453
    %v4286 = vpack.c.b16 %v2462, %v2454
    %v4287 = vpack.c.b16 %v2463, %v2455
    %v4288 = vpack.c.b16 %v2464, %v2456
    %v4289 = vpack.c.b16 %v2465, %v2457
    %v4290 = vpack.c.b16 %v2466, %v2458
    %v4291 = vpack.c.b16 %v2467, %v2459
    %v4292 = vpack.c.b16 %v2476, %v2468
    %v4293 = vpack.c.b16 %v2477, %v2469
    %v4294 = vpack.c.b16 %v2478, %v2470
    %v4295 = vpack.c.b16 %v2479, %v2471
    %v4296 = vpack.c.b16 %v2480, %v2472
    %v4297 = vpack.c.b16 %v2481, %v2473
    %v4298 = vpack.c.b16 %v2482, %v2474
    %v4299 = vpack.c.b16 %v2483, %v2475
    %v4300 = vpack.c.b16 %v2492, %v2484
    %v4301 = vpack.c.b16 %v2493, %v2485
    %v4302 = vpack.c.b16 %v2494, %v2486
    %v4303 = vpack.c.b16 %v2495, %v2487
    %v4304 = vpack.c.b16 %v2496, %v2488
    %v4305 = vpack.c.b16 %v2497, %v2489
    %v4306 = vpack.c.b16 %v2498, %v2490
    %v4307 = vpack.c.b16 %v2499, %v2491
    %v4308 = vpack.c.b16 %v2508, %v2500
    %v4309 = vpack.c.b16 %v2509, %v2501
    %v4310 = vpack.c.b16 %v2510, %v2502
    %v4311 = vpack.c.b16 %v2511, %v2503
    %v4312 = vpack.c.b16 %v2512, %v2504
    %v4313 = vpack.c.b16 %v2513, %v2505
    %v4314 = vpack.c.b16 %v2514, %v2506
    %v4315 = vpack.c.b16 %v2515, %v2507
    %v4316 = vpack.c.b16 %v2524, %v2516
    %v4317 = vpack.c.b16 %v2525, %v2517
    %v4318 = vpack.c.b16 %v2526, %v2518
    %v4319 = vpack.c.b16 %v2527, %v2519
    %v4320 = vpack.c.b16 %v2528, %v2520
    %v4321 = vpack.c.b16 %v2529, %v2521
    %v4322 = vpack.c.b16 %v2530, %v2522
    %v4323 = vpack.c.b16 %v2531, %v2523
    %v4324 = vpack.c.b16 %v2540, %v2532
    %v4325 = vpack.c.b16 %v2541, %v2533
    %v4326 = vpack.c.b16 %v2542, %v2534
    %v4327 = vpack.c.b16 %v2543, %v2535
    %v4328 = vpack.c.b16 %v2544, %v2536
    %v4329 = vpack.c.b16 %v2545, %v2537
    %v4330 = vpack.c.b16 %v2546, %v2538
    %v4331 = vpack.c.b16 %v2547, %v2539
    %v4332 = vpack.c.b16 %v2556, %v2548
    %v4333 = vpack.c.b16 %v2557, %v2549
    %v4334 = vpack.c.b16 %v2558, %v2550
    %v4335 = vpack.c.b16 %v2559, %v2551
    %v4336 = vpack.c.b16 %v2560, %v2552
    %v4337 = vpack.c.b16 %v2561, %v2553
    %v4338 = vpack.c.b16 %v2562, %v2554
    %v4339 = vpack.c.b16 %v2563, %v2555
    %v4340 = vpack.c.b16 %v2572, %v2564
    %v4341 = vpack.c.b16 %v2573, %v2565
    %v4342 = vpack.c.b16 %v2574, %v2566
    %v4343 = vpack.c.b16 %v2575, %v2567
    %v4344 = vpack.c.b16 %v2576, %v2568
    %v4345 = vpack.c.b16 %v2577, %v2569
    %v4346 = vpack.c.b16 %v2578, %v2570
    %v4347 = vpack.c.b16 %v2579, %v2571
    %v4348 = vpack.c.b16 %v2588, %v2580
    %v4349 = vpack.c.b16 %v2589, %v2581
    %v4350 = vpack.c.b16 %v2590, %v2582
    %v4351 = vpack.c.b16 %v2591, %v2583
    %v4352 = vpack.c.b16 %v2592, %v2584
    %v4353 = vpack.c.b16 %v2593, %v2585
    %v4354 = vpack.c.b16 %v2594, %v2586
    %v4355 = vpack.c.b16 %v2595, %v2587
    %v4356 = vpack.c.b16 %v2604, %v2596
    %v4357 = vpack.c.b16 %v2605, %v2597
    %v4358 = vpack.c.b16 %v2606, %v2598
    %v4359 = vpack.c.b16 %v2607, %v2599
    %v4360 = vpack.c.b16 %v2608, %v2600
    %v4361 = vpack.c.b16 %v2609, %v2601
    %v4362 = vpack.c.b16 %v2610, %v2602
    %v4363 = vpack.c.b16 %v2611, %v2603
    %v4364 = vpack.c.b16 %v2620, %v2612
    %v4365 = vpack.c.b16 %v2621, %v2613
    %v4366 = vpack.c.b16 %v2622, %v2614
    %v4367 = vpack.c.b16 %v2623, %v2615
    %v4368 = vpack.c.b16 %v2624, %v2616
    %v4369 = vpack.c.b16 %v2625, %v2617
    %v4370 = vpack.c.b16 %v2626, %v2618
    %v4371 = vpack.c.b16 %v2627, %v2619
    %v4372 = vpack.c.b16 %v2636, %v2628
    %v4373 = vpack.c.b16 %v2637, %v2629
    %v4374 = vpack.c.b16 %v2638, %v2630
    %v4375 = vpack.c.b16 %v2639, %v2631
    %v4376 = vpack.c.b16 %v2640, %v2632
    %v4377 = vpack.c.b16 %v2641, %v2633
    %v4378 = vpack.c.b16 %v2642, %v2634
    %v4379 = vpack.c.b16 %v2643, %v2635
    %v4380 = vpack.c.b16 %v2652, %v2644
    %v4381 = vpack.c.b16 %v2653, %v2645
    %v4382 = vpack.c.b16 %v2654, %v2646
    %v4383 = vpack.c.b16 %v2655, %v2647
    %v4384 = vpack.c.b16 %v2656, %v2648
    %v4385 = vpack.c.b16 %v2657, %v2649
    %v4386 = vpack.c.b16 %v2658, %v2650
    %v4387 = vpack.c.b16 %v2659, %v2651
    %v4388 = vpack.c.b16 %v2668, %v2660
    %v4389 = vpack.c.b16 %v2669, %v2661
    %v4390 = vpack.c.b16 %v2670, %v2662
    %v4391 = vpack.c.b16 %v2671, %v2663
    %v4392 = vpack.c.b16 %v2672, %v2664
    %v4393 = vpack.c.b16 %v2673, %v2665
    %v4394 = vpack.c.b16 %v2674, %v2666
    %v4395 = vpack.c.b16 %v2675, %v2667
    %v4396 = vpack.c.b16 %v2684, %v2676
    %v4397 = vpack.c.b16 %v2685, %v2677
    %v4398 = vpack.c.b16 %v2686, %v2678
    %v4399 = vpack.c.b16 %v2687, %v2679
    %v4400 = vpack.c.b16 %v2688, %v2680
    %v4401 = vpack.c.b16 %v2689, %v2681
    %v4402 = vpack.c.b16 %v2690, %v2682
    %v4403 = vpack.c.b16 %v2691, %v2683
    %v4404 = vpack.c.b16 %v2700, %v2692
    %v4405 = vpack.c.b16 %v2701, %v2693
    %v4406 = vpack.c.b16 %v2702, %v2694
    %v4407 = vpack.c.b16 %v2703, %v2695
    %v4408 = vpack.c.b16 %v2704, %v2696
    %v4409 = vpack.c.b16 %v2705, %v2697
    %v4410 = vpack.c.b16 %v2706, %v2698
    %v4411 = vpack.c.b16 %v2707, %v2699
    %v4412 = vpack.c.b16 %v2716, %v2708
    %v4413 = vpack.c.b16 %v2717, %v2709
    %v4414 = vpack.c.b16 %v2718, %v2710
    %v4415 = vpack.c.b16 %v2719, %v2711
    %v4416 = vpack.c.b16 %v2720, %v2712
    %v4417 = vpack.c.b16 %v2721, %v2713
    %v4418 = vpack.c.b16 %v2722, %v2714
    %v4419 = vpack.c.b16 %v2723, %v2715
    %v4420 = vpack.c.b16 %v2732, %v2724
    %v4421 = vpack.c.b16 %v2733, %v2725
    %v4422 = vpack.c.b16 %v2734, %v2726
    %v4423 = vpack.c.b16 %v2735, %v2727
    %v4424 = vpack.c.b16 %v2736, %v2728
    %v4425 = vpack.c.b16 %v2737, %v2729
    %v4426 = vpack.c.b16 %v2738, %v2730
    %v4427 = vpack.c.b16 %v2739, %v2731
    %v4428 = vpack.c.b16 %v2748, %v2740
    %v4429 = vpack.c.b16 %v2749, %v2741
    %v4430 = vpack.c.b16 %v2750, %v2742
    %v4431 = vpack.c.b16 %v2751, %v2743
    %v4432 = vpack.c.b16 %v2752, %v2744
    %v4433 = vpack.c.b16 %v2753, %v2745
    %v4434 = vpack.c.b16 %v2754, %v2746
    %v4435 = vpack.c.b16 %v2755, %v2747
    %v4436 = vpack.c.b16 %v2764, %v2756
    %v4437 = vpack.c.b16 %v2765, %v2757
    %v4438 = vpack.c.b16 %v2766, %v2758
    %v4439 = vpack.c.b16 %v2767, %v2759
    %v4440 = vpack.c.b16 %v2768, %v2760
    %v4441 = vpack.c.b16 %v2769, %v2761
    %v4442 = vpack.c.b16 %v2770, %v2762
    %v4443 = vpack.c.b16 %v2771, %v2763
    %v4444 = vpack.c.b16 %v2780, %v2772
    %v4445 = vpack.c.b16 %v2781, %v2773
    %v4446 = vpack.c.b16 %v2782, %v2774
    %v4447 = vpack.c.b16 %v2783, %v2775
    %v4448 = vpack.c.b16 %v2784, %v2776
    %v4449 = vpack.c.b16 %v2785, %v2777
    %v4450 = vpack.c.b16 %v2786, %v2778
    %v4451 = vpack.c.b16 %v2787, %v2779
    %v4452 = vpack.c.b16 %v2796, %v2788
    %v4453 = vpack.c.b16 %v2797, %v2789
    %v4454 = vpack.c.b16 %v2798, %v2790
    %v4455 = vpack.c.b16 %v2799, %v2791
    %v4456 = vpack.c.b16 %v2800, %v2792
    %v4457 = vpack.c.b16 %v2801, %v2793
    %v4458 = vpack.c.b16 %v2802, %v2794
    %v4459 = vpack.c.b16 %v2803, %v2795
    %v4460 = vpack.c.b16 %v2812, %v2804
    %v4461 = vpack.c.b16 %v2813, %v2805
    %v4462 = vpack.c.b16 %v2814, %v2806
    %v4463 = vpack.c.b16 %v2815, %v2807
    %v4464 = vpack.c.b16 %v2816, %v2808
    %v4465 = vpack.c.b16 %v2817, %v2809
    %v4466 = vpack.c.b16 %v2818, %v2810
    %v4467 = vpack.c.b16 %v2819, %v2811
    %v4468 = vpack.c.b16 %v2828, %v2820
    %v4469 = vpack.c.b16 %v2829, %v2821
    %v4470 = vpack.c.b16 %v2830, %v2822
    %v4471 = vpack.c.b16 %v2831, %v2823
    %v4472 = vpack.c.b16 %v2832, %v2824
    %v4473 = vpack.c.b16 %v2833, %v2825
    %v4474 = vpack.c.b16 %v2834, %v2826
    %v4475 = vpack.c.b16 %v2835, %v2827
    %v4476 = vpack.c.b16 %v2844, %v2836
    %v4477 = vpack.c.b16 %v2845, %v2837
    %v4478 = vpack.c.b16 %v2846, %v2838
    %v4479 = vpack.c.b16 %v2847, %v2839
    %v4480 = vpack.c.b16 %v2848, %v2840
    %v4481 = vpack.c.b16 %v2849, %v2841
    %v4482 = vpack.c.b16 %v2850, %v2842
    %v4483 = vpack.c.b16 %v2851, %v2843
    %v4484 = vpack.c.b16 %v2860, %v2852
    %v4485 = vpack.c.b16 %v2861, %v2853
    %v4486 = vpack.c.b16 %v2862, %v2854
    %v4487 = vpack.c.b16 %v2863, %v2855
    %v4488 = vpack.c.b16 %v2864, %v2856
    %v4489 = vpack.c.b16 %v2865, %v2857
    %v4490 = vpack.c.b16 %v2866, %v2858
    %v4491 = vpack.c.b16 %v2867, %v2859
    %v4492 = vpack.c.b16 %v2876, %v2868
    %v4493 = vpack.c.b16 %v2877, %v2869
    %v4494 = vpack.c.b16 %v2878, %v2870
    %v4495 = vpack.c.b16 %v2879, %v2871
    %v4496 = vpack.c.b16 %v2880, %v2872
    %v4497 = vpack.c.b16 %v2881, %v2873
    %v4498 = vpack.c.b16 %v2882, %v2874
    %v4499 = vpack.c.b16 %v2883, %v2875
    %v4500 = vpack.c.b16 %v2892, %v2884
    %v4501 = vpack.c.b16 %v2893, %v2885
    %v4502 = vpack.c.b16 %v2894, %v2886
    %v4503 = vpack.c.b16 %v2895, %v2887
    %v4504 = vpack.c.b16 %v2896, %v2888
    %v4505 = vpack.c.b16 %v2897, %v2889
    %v4506 = vpack.c.b16 %v2898, %v2890
    %v4507 = vpack.c.b16 %v2899, %v2891
    %v4508 = vpack.c.b16 %v2908, %v2900
    %v4509 = vpack.c.b16 %v2909, %v2901
    %v4510 = vpack.c.b16 %v2910, %v2902
    %v4511 = vpack.c.b16 %v2911, %v2903
    %v4512 = vpack.c.b16 %v2912, %v2904
    %v4513 = vpack.c.b16 %v2913, %v2905
    %v4514 = vpack.c.b16 %v2914, %v2906
    %v4515 = vpack.c.b16 %v2915, %v2907
    %v4516 = vpack.c.b16 %v2924, %v2916
    %v4517 = vpack.c.b16 %v2925, %v2917
    %v4518 = vpack.c.b16 %v2926, %v2918
    %v4519 = vpack.c.b16 %v2927, %v2919
    %v4520 = vpack.c.b16 %v2928, %v2920
    %v4521 = vpack.c.b16 %v2929, %v2921
    %v4522 = vpack.c.b16 %v2930, %v2922
    %v4523 = vpack.c.b16 %v2931, %v2923
    %v4524 = vpack.c.b16 %v2940, %v2932
    %v4525 = vpack.c.b16 %v2941, %v2933
    %v4526 = vpack.c.b16 %v2942, %v2934
    %v4527 = vpack.c.b16 %v2943, %v2935
    %v4528 = vpack.c.b16 %v2944, %v2936
    %v4529 = vpack.c.b16 %v2945, %v2937
    %v4530 = vpack.c.b16 %v2946, %v2938
    %v4531 = vpack.c.b16 %v2947, %v2939
    %v4532 = vpack.c.b16 %v2956, %v2948
    %v4533 = vpack.c.b16 %v2957, %v2949
    %v4534 = vpack.c.b16 %v2958, %v2950
    %v4535 = vpack.c.b16 %v2959, %v2951
    %v4536 = vpack.c.b16 %v2960, %v2952
    %v4537 = vpack.c.b16 %v2961, %v2953
    %v4538 = vpack.c.b16 %v2962, %v2954
    %v4539 = vpack.c.b16 %v2963, %v2955
    %v4540 = vpack.c.b16 %v2972, %v2964
    %v4541 = vpack.c.b16 %v2973, %v2965
    %v4542 = vpack.c.b16 %v2974, %v2966
    %v4543 = vpack.c.b16 %v2975, %v2967
    %v4544 = vpack.c.b16 %v2976, %v2968
    %v4545 = vpack.c.b16 %v2977, %v2969
    %v4546 = vpack.c.b16 %v2978, %v2970
    %v4547 = vpack.c.b16 %v2979, %v2971
    %v4548 = vpack.c.b16 %v2988, %v2980
    %v4549 = vpack.c.b16 %v2989, %v2981
    %v4550 = vpack.c.b16 %v2990, %v2982
    %v4551 = vpack.c.b16 %v2991, %v2983
    %v4552 = vpack.c.b16 %v2992, %v2984
    %v4553 = vpack.c.b16 %v2993, %v2985
    %v4554 = vpack.c.b16 %v2994, %v2986
    %v4555 = vpack.c.b16 %v2995, %v2987
    %v4556 = vpack.c.b16 %v3004, %v2996
    %v4557 = vpack.c.b16 %v3005, %v2997
    %v4558 = vpack.c.b16 %v3006, %v2998
    %v4559 = vpack.c.b16 %v3007, %v2999
    %v4560 = vpack.c.b16 %v3008, %v3000
    %v4561 = vpack.c.b16 %v3009, %v3001
    %v4562 = vpack.c.b16 %v3010, %v3002
    %v4563 = vpack.c.b16 %v3011, %v3003
    %v4564 = vpack.c.b16 %v3020, %v3012
    %v4565 = vpack.c.b16 %v3021, %v3013
    %v4566 = vpack.c.b16 %v3022, %v3014
    %v4567 = vpack.c.b16 %v3023, %v3015
    %v4568 = vpack.c.b16 %v3024, %v3016
    %v4569 = vpack.c.b16 %v3025, %v3017
    %v4570 = vpack.c.b16 %v3026, %v3018
    %v4571 = vpack.c.b16 %v3027, %v3019
    %v4572 = vpack.c.b16 %v3036, %v3028
    %v4573 = vpack.c.b16 %v3037, %v3029
    %v4574 = vpack.c.b16 %v3038, %v3030
    %v4575 = vpack.c.b16 %v3039, %v3031
    %v4576 = vpack.c.b16 %v3040, %v3032
    %v4577 = vpack.c.b16 %v3041, %v3033
    %v4578 = vpack.c.b16 %v3042, %v3034
    %v4579 = vpack.c.b16 %v3043, %v3035
    %v4580 = vpack.c.b16 %v3052, %v3044
    %v4581 = vpack.c.b16 %v3053, %v3045
    %v4582 = vpack.c.b16 %v3054, %v3046
    %v4583 = vpack.c.b16 %v3055, %v3047
    %v4584 = vpack.c.b16 %v3056, %v3048
    %v4585 = vpack.c.b16 %v3057, %v3049
    %v4586 = vpack.c.b16 %v3058, %v3050
    %v4587 = vpack.c.b16 %v3059, %v3051
    %v4588 = vpack.c.b16 %v3068, %v3060
    %v4589 = vpack.c.b16 %v3069, %v3061
    %v4590 = vpack.c.b16 %v3070, %v3062
    %v4591 = vpack.c.b16 %v3071, %v3063
    %v4592 = vpack.c.b16 %v3072, %v3064
    %v4593 = vpack.c.b16 %v3073, %v3065
    %v4594 = vpack.c.b16 %v3074, %v3066
    %v4595 = vpack.c.b16 %v3075, %v3067
    %v4596 = vpack.c.b16 %v3084, %v3076
    %v4597 = vpack.c.b16 %v3085, %v3077
    %v4598 = vpack.c.b16 %v3086, %v3078
    %v4599 = vpack.c.b16 %v3087, %v3079
    %v4600 = vpack.c.b16 %v3088, %v3080
    %v4601 = vpack.c.b16 %v3089, %v3081
    %v4602 = vpack.c.b16 %v3090, %v3082
    %v4603 = vpack.c.b16 %v3091, %v3083
    %v4604 = vpack.c.b16 %v3100, %v3092
    %v4605 = vpack.c.b16 %v3101, %v3093
    %v4606 = vpack.c.b16 %v3102, %v3094
    %v4607 = vpack.c.b16 %v3103, %v3095
    %v4608 = vpack.c.b16 %v3104, %v3096
    %v4609 = vpack.c.b16 %v3105, %v3097
    %v4610 = vpack.c.b16 %v3106, %v3098
    %v4611 = vpack.c.b16 %v3107, %v3099
    %v4612 = vpack.c.b16 %v3116, %v3108
    %v4613 = vpack.c.b16 %v3117, %v3109
    %v4614 = vpack.c.b16 %v3118, %v3110
    %v4615 = vpack.c.b16 %v3119, %v3111
    %v4616 = vpack.c.b16 %v3120, %v3112
    %v4617 = vpack.c.b16 %v3121, %v3113
    %v4618 = vpack.c.b16 %v3122, %v3114
    %v4619 = vpack.c.b16 %v3123, %v3115
    %v4620 = vpack.c.b16 %v3132, %v3124
    %v4621 = vpack.c.b16 %v3133, %v3125
    %v4622 = vpack.c.b16 %v3134, %v3126
    %v4623 = vpack.c.b16 %v3135, %v3127
    %v4624 = vpack.c.b16 %v3136, %v3128
    %v4625 = vpack.c.b16 %v3137, %v3129
    %v4626 = vpack.c.b16 %v3138, %v3130
    %v4627 = vpack.c.b16 %v3139, %v3131
    %v4628 = vpack.c.b16 %v3148, %v3140
    %v4629 = vpack.c.b16 %v3149, %v3141
    %v4630 = vpack.c.b16 %v3150, %v3142
    %v4631 = vpack.c.b16 %v3151, %v3143
    %v4632 = vpack.c.b16 %v3152, %v3144
    %v4633 = vpack.c.b16 %v3153, %v3145
    %v4634 = vpack.c.b16 %v3154, %v3146
    %v4635 = vpack.c.b16 %v3155, %v3147
    %v4636 = vpack.c.b16 %v3164, %v3156
    %v4637 = vpack.c.b16 %v3165, %v3157
    %v4638 = vpack.c.b16 %v3166, %v3158
    %v4639 = vpack.c.b16 %v3167, %v3159
    %v4640 = vpack.c.b16 %v3168, %v3160
    %v4641 = vpack.c.b16 %v3169, %v3161
    %v4642 = vpack.c.b16 %v3170, %v3162
    %v4643 = vpack.c.b16 %v3171, %v3163
    %v4644 = vpack.c.b16 %v3180, %v3172
    %v4645 = vpack.c.b16 %v3181, %v3173
    %v4646 = vpack.c.b16 %v3182, %v3174
    %v4647 = vpack.c.b16 %v3183, %v3175
    %v4648 = vpack.c.b16 %v3184, %v3176
    %v4649 = vpack.c.b16 %v3185, %v3177
    %v4650 = vpack.c.b16 %v3186, %v3178
    %v4651 = vpack.c.b16 %v3187, %v3179
    %v4652 = vpack.c.b16 %v3196, %v3188
    %v4653 = vpack.c.b16 %v3197, %v3189
    %v4654 = vpack.c.b16 %v3198, %v3190
    %v4655 = vpack.c.b16 %v3199, %v3191
    %v4656 = vpack.c.b16 %v3200, %v3192
    %v4657 = vpack.c.b16 %v3201, %v3193
    %v4658 = vpack.c.b16 %v3202, %v3194
    %v4659 = vpack.c.b16 %v3203, %v3195
    %v4660 = vpack.c.b16 %v3212, %v3204
    %v4661 = vpack.c.b16 %v3213, %v3205
    %v4662 = vpack.c.b16 %v3214, %v3206
    %v4663 = vpack.c.b16 %v3215, %v3207
    %v4664 = vpack.c.b16 %v3216, %v3208
    %v4665 = vpack.c.b16 %v3217, %v3209
    %v4666 = vpack.c.b16 %v3218, %v3210
    %v4667 = vpack.c.b16 %v3219, %v3211
    %v4668 = vpack.c.b16 %v3228, %v3220
    %v4669 = vpack.c.b16 %v3229, %v3221
    %v4670 = vpack.c.b16 %v3230, %v3222
    %v4671 = vpack.c.b16 %v3231, %v3223
    %v4672 = vpack.c.b16 %v3232, %v3224
    %v4673 = vpack.c.b16 %v3233, %v3225
    %v4674 = vpack.c.b16 %v3234, %v3226
    %v4675 = vpack.c.b16 %v3235, %v3227
    %v4676 = vpack.c.b16 %v3244, %v3236
    %v4677 = vpack.c.b16 %v3245, %v3237
    %v4678 = vpack.c.b16 %v3246, %v3238
    %v4679 = vpack.c.b16 %v3247, %v3239
    %v4680 = vpack.c.b16 %v3248, %v3240
    %v4681 = vpack.c.b16 %v3249, %v3241
    %v4682 = vpack.c.b16 %v3250, %v3242
    %v4683 = vpack.c.b16 %v3251, %v3243
    %v4684 = vpack.c.b16 %v3260, %v3252
    %v4685 = vpack.c.b16 %v3261, %v3253
    %v4686 = vpack.c.b16 %v3262, %v3254
    %v4687 = vpack.c.b16 %v3263, %v3255
    %v4688 = vpack.c.b16 %v3264, %v3256
    %v4689 = vpack.c.b16 %v3265, %v3257
    %v4690 = vpack.c.b16 %v3266, %v3258
    %v4691 = vpack.c.b16 %v3267, %v3259
    %v4692 = vpack.c.b16 %v3276, %v3268
    %v4693 = vpack.c.b16 %v3277, %v3269
    %v4694 = vpack.c.b16 %v3278, %v3270
    %v4695 = vpack.c.b16 %v3279, %v3271
    %v4696 = vpack.c.b16 %v3280, %v3272
    %v4697 = vpack.c.b16 %v3281, %v3273
    %v4698 = vpack.c.b16 %v3282, %v3274
    %v4699 = vpack.c.b16 %v3283, %v3275
    %v4700 = vpack.c.b16 %v3292, %v3284
    %v4701 = vpack.c.b16 %v3293, %v3285
    %v4702 = vpack.c.b16 %v3294, %v3286
    %v4703 = vpack.c.b16 %v3295, %v3287
    %v4704 = vpack.c.b16 %v3296, %v3288
    %v4705 = vpack.c.b16 %v3297, %v3289
    %v4706 = vpack.c.b16 %v3298, %v3290
    %v4707 = vpack.c.b16 %v3299, %v3291
    %v4708 = vpack.c.b16 %v3308, %v3300
    %v4709 = vpack.c.b16 %v3309, %v3301
    %v4710 = vpack.c.b16 %v3310, %v3302
    %v4711 = vpack.c.b16 %v3311, %v3303
    %v4712 = vpack.c.b16 %v3312, %v3304
    %v4713 = vpack.c.b16 %v3313, %v3305
    %v4714 = vpack.c.b16 %v3314, %v3306
    %v4715 = vpack.c.b16 %v3315, %v3307
    %v4716 = vpack.c.b16 %v3324, %v3316
    %v4717 = vpack.c.b16 %v3325, %v3317
    %v4718 = vpack.c.b16 %v3326, %v3318
    %v4719 = vpack.c.b16 %v3327, %v3319
    %v4720 = vpack.c.b16 %v3328, %v3320
    %v4721 = vpack.c.b16 %v3329, %v3321
    %v4722 = vpack.c.b16 %v3330, %v3322
    %v4723 = vpack.c.b16 %v3331, %v3323
    %v4724 = vpack.c.b16 %v3340, %v3332
    %v4725 = vpack.c.b16 %v3341, %v3333
    %v4726 = vpack.c.b16 %v3342, %v3334
    %v4727 = vpack.c.b16 %v3343, %v3335
    %v4728 = vpack.c.b16 %v3344, %v3336
    %v4729 = vpack.c.b16 %v3345, %v3337
    %v4730 = vpack.c.b16 %v3346, %v3338
    %v4731 = vpack.c.b16 %v3347, %v3339
    %v4732 = vpack.c.b16 %v3356, %v3348
    %v4733 = vpack.c.b16 %v3357, %v3349
    %v4734 = vpack.c.b16 %v3358, %v3350
    %v4735 = vpack.c.b16 %v3359, %v3351
    %v4736 = vpack.c.b16 %v3360, %v3352
    %v4737 = vpack.c.b16 %v3361, %v3353
    %v4738 = vpack.c.b16 %v3362, %v3354
    %v4739 = vpack.c.b16 %v3363, %v3355
    %v4740 = vpack.c.b16 %v3372, %v3364
    %v4741 = vpack.c.b16 %v3373, %v3365
    %v4742 = vpack.c.b16 %v3374, %v3366
    %v4743 = vpack.c.b16 %v3375, %v3367
    %v4744 = vpack.c.b16 %v3376, %v3368
    %v4745 = vpack.c.b16 %v3377, %v3369
    %v4746 = vpack.c.b16 %v3378, %v3370
    %v4747 = vpack.c.b16 %v3379, %v3371
    %v4748 = vpack.c.b16 %v3388, %v3380
    %v4749 = vpack.c.b16 %v3389, %v3381
    %v4750 = vpack.c.b16 %v3390, %v3382
    %v4751 = vpack.c.b16 %v3391, %v3383
    %v4752 = vpack.c.b16 %v3392, %v3384
    %v4753 = vpack.c.b16 %v3393, %v3385
    %v4754 = vpack.c.b16 %v3394, %v3386
    %v4755 = vpack.c.b16 %v3395, %v3387
    %v4756 = vpack.c.b16 %v3404, %v3396
    %v4757 = vpack.c.b16 %v3405, %v3397
    %v4758 = vpack.c.b16 %v3406, %v3398
    %v4759 = vpack.c.b16 %v3407, %v3399
    %v4760 = vpack.c.b16 %v3408, %v3400
    %v4761 = vpack.c.b16 %v3409, %v3401
    %v4762 = vpack.c.b16 %v3410, %v3402
    %v4763 = vpack.c.b16 %v3411, %v3403
    %v4764 = vpack.c.b16 %v3420, %v3412
    %v4765 = vpack.c.b16 %v3421, %v3413
    %v4766 = vpack.c.b16 %v3422, %v3414
    %v4767 = vpack.c.b16 %v3423, %v3415
    %v4768 = vpack.c.b16 %v3424, %v3416
    %v4769 = vpack.c.b16 %v3425, %v3417
    %v4770 = vpack.c.b16 %v3426, %v3418
    %v4771 = vpack.c.b16 %v3427, %v3419
    %v4772 = vpack.c.b16 %v3436, %v3428
    %v4773 = vpack.c.b16 %v3437, %v3429
    %v4774 = vpack.c.b16 %v3438, %v3430
    %v4775 = vpack.c.b16 %v3439, %v3431
    %v4776 = vpack.c.b16 %v3440, %v3432
    %v4777 = vpack.c.b16 %v3441, %v3433
    %v4778 = vpack.c.b16 %v3442, %v3434
    %v4779 = vpack.c.b16 %v3443, %v3435
    %v4780 = vpack.c.b16 %v3452, %v3444
    %v4781 = vpack.c.b16 %v3453, %v3445
    %v4782 = vpack.c.b16 %v3454, %v3446
    %v4783 = vpack.c.b16 %v3455, %v3447
    %v4784 = vpack.c.b16 %v3456, %v3448
    %v4785 = vpack.c.b16 %v3457, %v3449
    %v4786 = vpack.c.b16 %v3458, %v3450
    %v4787 = vpack.c.b16 %v3459, %v3451
    %v4788 = vpack.c.b16 %v3468, %v3460
    %v4789 = vpack.c.b16 %v3469, %v3461
    %v4790 = vpack.c.b16 %v3470, %v3462
    %v4791 = vpack.c.b16 %v3471, %v3463
    %v4792 = vpack.c.b16 %v3472, %v3464
    %v4793 = vpack.c.b16 %v3473, %v3465
    %v4794 = vpack.c.b16 %v3474, %v3466
    %v4795 = vpack.c.b16 %v3475, %v3467
    %v4796 = vpack.c.b16 %v3484, %v3476
    %v4797 = vpack.c.b16 %v3485, %v3477
    %v4798 = vpack.c.b16 %v3486, %v3478
    %v4799 = vpack.c.b16 %v3487, %v3479
    %v4800 = vpack.c.b16 %v3488, %v3480
    %v4801 = vpack.c.b16 %v3489, %v3481
    %v4802 = vpack.c.b16 %v3490, %v3482
    %v4803 = vpack.c.b16 %v3491, %v3483
    %v4804 = vpack.c.b16 %v3500, %v3492
    %v4805 = vpack.c.b16 %v3501, %v3493
    %v4806 = vpack.c.b16 %v3502, %v3494
    %v4807 = vpack.c.b16 %v3503, %v3495
    %v4808 = vpack.c.b16 %v3504, %v3496
    %v4809 = vpack.c.b16 %v3505, %v3497
    %v4810 = vpack.c.b16 %v3506, %v3498
    %v4811 = vpack.c.b16 %v3507, %v3499
    %v4812 = vpack.c.b16 %v3516, %v3508
    %v4813 = vpack.c.b16 %v3517, %v3509
    %v4814 = vpack.c.b16 %v3518, %v3510
    %v4815 = vpack.c.b16 %v3519, %v3511
    %v4816 = vpack.c.b16 %v3520, %v3512
    %v4817 = vpack.c.b16 %v3521, %v3513
    %v4818 = vpack.c.b16 %v3522, %v3514
    %v4819 = vpack.c.b16 %v3523, %v3515
    %v4820 = vpack.c.b16 %v3532, %v3524
    %v4821 = vpack.c.b16 %v3533, %v3525
    %v4822 = vpack.c.b16 %v3534, %v3526
    %v4823 = vpack.c.b16 %v3535, %v3527
    %v4824 = vpack.c.b16 %v3536, %v3528
    %v4825 = vpack.c.b16 %v3537, %v3529
    %v4826 = vpack.c.b16 %v3538, %v3530
    %v4827 = vpack.c.b16 %v3539, %v3531
    %v4828 = vpack.c.b16 %v3548, %v3540
    %v4829 = vpack.c.b16 %v3549, %v3541
    %v4830 = vpack.c.b16 %v3550, %v3542
    %v4831 = vpack.c.b16 %v3551, %v3543
    %v4832 = vpack.c.b16 %v3552, %v3544
    %v4833 = vpack.c.b16 %v3553, %v3545
    %v4834 = vpack.c.b16 %v3554, %v3546
    %v4835 = vpack.c.b16 %v3555, %v3547
    %v4836 = vpack.c.b16 %v3564, %v3556
    %v4837 = vpack.c.b16 %v3565, %v3557
    %v4838 = vpack.c.b16 %v3566, %v3558
    %v4839 = vpack.c.b16 %v3567, %v3559
    %v4840 = vpack.c.b16 %v3568, %v3560
    %v4841 = vpack.c.b16 %v3569, %v3561
    %v4842 = vpack.c.b16 %v3570, %v3562
    %v4843 = vpack.c.b16 %v3571, %v3563
    %v4844 = vpack.c.b16 %v3580, %v3572
    %v4845 = vpack.c.b16 %v3581, %v3573
    %v4846 = vpack.c.b16 %v3582, %v3574
    %v4847 = vpack.c.b16 %v3583, %v3575
    %v4848 = vpack.c.b16 %v3584, %v3576
    %v4849 = vpack.c.b16 %v3585, %v3577
    %v4850 = vpack.c.b16 %v3586, %v3578
    %v4851 = vpack.c.b16 %v3587, %v3579
    %v4852 = vpack.c.b16 %v3596, %v3588
    %v4853 = vpack.c.b16 %v3597, %v3589
    %v4854 = vpack.c.b16 %v3598, %v3590
    %v4855 = vpack.c.b16 %v3599, %v3591
    %v4856 = vpack.c.b16 %v3600, %v3592
    %v4857 = vpack.c.b16 %v3601, %v3593
    %v4858 = vpack.c.b16 %v3602, %v3594
    %v4859 = vpack.c.b16 %v3603, %v3595
    %v4860 = vpack.c.b16 %v3612, %v3604
    %v4861 = vpack.c.b16 %v3613, %v3605
    %v4862 = vpack.c.b16 %v3614, %v3606
    %v4863 = vpack.c.b16 %v3615, %v3607
    %v4864 = vpack.c.b16 %v3616, %v3608
    %v4865 = vpack.c.b16 %v3617, %v3609
    %v4866 = vpack.c.b16 %v3618, %v3610
    %v4867 = vpack.c.b16 %v3619, %v3611
    %v4868 = vpack.c.b16 %v3628, %v3620
    %v4869 = vpack.c.b16 %v3629, %v3621
    %v4870 = vpack.c.b16 %v3630, %v3622
    %v4871 = vpack.c.b16 %v3631, %v3623
    %v4872 = vpack.c.b16 %v3632, %v3624
    %v4873 = vpack.c.b16 %v3633, %v3625
    %v4874 = vpack.c.b16 %v3634, %v3626
    %v4875 = vpack.c.b16 %v3635, %v3627
    %v4876 = vpack.c.b16 %v3644, %v3636
    %v4877 = vpack.c.b16 %v3645, %v3637
    %v4878 = vpack.c.b16 %v3646, %v3638
    %v4879 = vpack.c.b16 %v3647, %v3639
    %v4880 = vpack.c.b16 %v3648, %v3640
    %v4881 = vpack.c.b16 %v3649, %v3641
    %v4882 = vpack.c.b16 %v3650, %v3642
    %v4883 = vpack.c.b16 %v3651, %v3643
    %v4884 = vpack.c.b16 %v3660, %v3652
    %v4885 = vpack.c.b16 %v3661, %v3653
    %v4886 = vpack.c.b16 %v3662, %v3654
    %v4887 = vpack.c.b16 %v3663, %v3655
    %v4888 = vpack.c.b16 %v3664, %v3656
    %v4889 = vpack.c.b16 %v3665, %v3657
    %v4890 = vpack.c.b16 %v3666, %v3658
    %v4891 = vpack.c.b16 %v3667, %v3659
    %v4892 = vpack.c.b16 %v3676, %v3668
    %v4893 = vpack.c.b16 %v3677, %v3669
    %v4894 = vpack.c.b16 %v3678, %v3670
    %v4895 = vpack.c.b16 %v3679, %v3671
    %v4896 = vpack.c.b16 %v3680, %v3672
    %v4897 = vpack.c.b16 %v3681, %v3673
    %v4898 = vpack.c.b16 %v3682, %v3674
    %v4899 = vpack.c.b16 %v3683, %v3675
    %v4900 = vpack.c.b16 %v3692, %v3684
    %v4901 = vpack.c.b16 %v3693, %v3685
    %v4902 = vpack.c.b16 %v3694, %v3686
    %v4903 = vpack.c.b16 %v3695, %v3687
    %v4904 = vpack.c.b16 %v3696, %v3688
    %v4905 = vpack.c.b16 %v3697, %v3689
    %v4906 = vpack.c.b16 %v3698, %v3690
    %v4907 = vpack.c.b16 %v3699, %v3691
    %v4908 = vpack.c.b16 %v3708, %v3700
    %v4909 = vpack.c.b16 %v3709, %v3701
    %v4910 = vpack.c.b16 %v3710, %v3702
    %v4911 = vpack.c.b16 %v3711, %v3703
    %v4912 = vpack.c.b16 %v3712, %v3704
    %v4913 = vpack.c.b16 %v3713, %v3705
    %v4914 = vpack.c.b16 %v3714, %v3706
    %v4915 = vpack.c.b16 %v3715, %v3707
    %v4916 = vpack.c.b16 %v3724, %v3716
    %v4917 = vpack.c.b16 %v3725, %v3717
    %v4918 = vpack.c.b16 %v3726, %v3718
    %v4919 = vpack.c.b16 %v3727, %v3719
    %v4920 = vpack.c.b16 %v3728, %v3720
    %v4921 = vpack.c.b16 %v3729, %v3721
    %v4922 = vpack.c.b16 %v3730, %v3722
    %v4923 = vpack.c.b16 %v3731, %v3723
    %v4924 = vpack.c.b16 %v3740, %v3732
    %v4925 = vpack.c.b16 %v3741, %v3733
    %v4926 = vpack.c.b16 %v3742, %v3734
    %v4927 = vpack.c.b16 %v3743, %v3735
    %v4928 = vpack.c.b16 %v3744, %v3736
    %v4929 = vpack.c.b16 %v3745, %v3737
    %v4930 = vpack.c.b16 %v3746, %v3738
    %v4931 = vpack.c.b16 %v3747, %v3739
    %v4932 = vpack.c.b16 %v3756, %v3748
    %v4933 = vpack.c.b16 %v3757, %v3749
    %v4934 = vpack.c.b16 %v3758, %v3750
    %v4935 = vpack.c.b16 %v3759, %v3751
    %v4936 = vpack.c.b16 %v3760, %v3752
    %v4937 = vpack.c.b16 %v3761, %v3753
    %v4938 = vpack.c.b16 %v3762, %v3754
    %v4939 = vpack.c.b16 %v3763, %v3755
    %v4940 = vpack.c.b16 %v3772, %v3764
    %v4941 = vpack.c.b16 %v3773, %v3765
    %v4942 = vpack.c.b16 %v3774, %v3766
    %v4943 = vpack.c.b16 %v3775, %v3767
    %v4944 = vpack.c.b16 %v3776, %v3768
    %v4945 = vpack.c.b16 %v3777, %v3769
    %v4946 = vpack.c.b16 %v3778, %v3770
    %v4947 = vpack.c.b16 %v3779, %v3771
    %v4948 = vpack.c.b16 %v3788, %v3780
    %v4949 = vpack.c.b16 %v3789, %v3781
    %v4950 = vpack.c.b16 %v3790, %v3782
    %v4951 = vpack.c.b16 %v3791, %v3783
    %v4952 = vpack.c.b16 %v3792, %v3784
    %v4953 = vpack.c.b16 %v3793, %v3785
    %v4954 = vpack.c.b16 %v3794, %v3786
    %v4955 = vpack.c.b16 %v3795, %v3787
    %v4956 = vpack.c.b16 %v3804, %v3796
    %v4957 = vpack.c.b16 %v3805, %v3797
    %v4958 = vpack.c.b16 %v3806, %v3798
    %v4959 = vpack.c.b16 %v3807, %v3799
    %v4960 = vpack.c.b16 %v3808, %v3800
    %v4961 = vpack.c.b16 %v3809, %v3801
    %v4962 = vpack.c.b16 %v3810, %v3802
    %v4963 = vpack.c.b16 %v3811, %v3803
    %v4964 = vpack.c.b16 %v3820, %v3812
    %v4965 = vpack.c.b16 %v3821, %v3813
    %v4966 = vpack.c.b16 %v3822, %v3814
    %v4967 = vpack.c.b16 %v3823, %v3815
    %v4968 = vpack.c.b16 %v3824, %v3816
    %v4969 = vpack.c.b16 %v3825, %v3817
    %v4970 = vpack.c.b16 %v3826, %v3818
    %v4971 = vpack.c.b16 %v3827, %v3819
    %v4972 = vpack.c.b16 %v3836, %v3828
    %v4973 = vpack.c.b16 %v3837, %v3829
    %v4974 = vpack.c.b16 %v3838, %v3830
    %v4975 = vpack.c.b16 %v3839, %v3831
    %v4976 = vpack.c.b16 %v3840, %v3832
    %v4977 = vpack.c.b16 %v3841, %v3833
    %v4978 = vpack.c.b16 %v3842, %v3834
    %v4979 = vpack.c.b16 %v3843, %v3835
    %v4980 = vpack.c.b16 %v3852, %v3844
    %v4981 = vpack.c.b16 %v3853, %v3845
    %v4982 = vpack.c.b16 %v3854, %v3846
    %v4983 = vpack.c.b16 %v3855, %v3847
    %v4984 = vpack.c.b16 %v3856, %v3848
    %v4985 = vpack.c.b16 %v3857, %v3849
    %v4986 = vpack.c.b16 %v3858, %v3850
    %v4987 = vpack.c.b16 %v3859, %v3851
    %v4988 = vpack.c.b16 %v3868, %v3860
    %v4989 = vpack.c.b16 %v3869, %v3861
    %v4990 = vpack.c.b16 %v3870, %v3862
    %v4991 = vpack.c.b16 %v3871, %v3863
    %v4992 = vpack.c.b16 %v3872, %v3864
    %v4993 = vpack.c.b16 %v3873, %v3865
    %v4994 = vpack.c.b16 %v3874, %v3866
    %v4995 = vpack.c.b16 %v3875, %v3867
    %v4996 = vpack.c.b16 %v3884, %v3876
    %v4997 = vpack.c.b16 %v3885, %v3877
    %v4998 = vpack.c.b16 %v3886, %v3878
    %v4999 = vpack.c.b16 %v3887, %v3879
    %v5000 = vpack.c.b16 %v3888, %v3880
    %v5001 = vpack.c.b16 %v3889, %v3881
    %v5002 = vpack.c.b16 %v3890, %v3882
    %v5003 = vpack.c.b16 %v3891, %v3883
    %v5004 = vpack.c.b16 %v3900, %v3892
    %v5005 = vpack.c.b16 %v3901, %v3893
    %v5006 = vpack.c.b16 %v3902, %v3894
    %v5007 = vpack.c.b16 %v3903, %v3895
    %v5008 = vpack.c.b16 %v3904, %v3896
    %v5009 = vpack.c.b16 %v3905, %v3897
    %v5010 = vpack.c.b16 %v3906, %v3898
    %v5011 = vpack.c.b16 %v3907, %v3899
    %v5012 = vpack.c.b16 %v3916, %v3908
    %v5013 = vpack.c.b16 %v3917, %v3909
    %v5014 = vpack.c.b16 %v3918, %v3910
    %v5015 = vpack.c.b16 %v3919, %v3911
    %v5016 = vpack.c.b16 %v3920, %v3912
    %v5017 = vpack.c.b16 %v3921, %v3913
    %v5018 = vpack.c.b16 %v3922, %v3914
    %v5019 = vpack.c.b16 %v3923, %v3915
    %v5020 = vpack.c.b16 %v3932, %v3924
    %v5021 = vpack.c.b16 %v3933, %v3925
    %v5022 = vpack.c.b16 %v3934, %v3926
    %v5023 = vpack.c.b16 %v3935, %v3927
    %v5024 = vpack.c.b16 %v3936, %v3928
    %v5025 = vpack.c.b16 %v3937, %v3929
    %v5026 = vpack.c.b16 %v3938, %v3930
    %v5027 = vpack.c.b16 %v3939, %v3931
    %v5028 = vpack.c.b16 %v3948, %v3940
    %v5029 = vpack.c.b16 %v3949, %v3941
    %v5030 = vpack.c.b16 %v3950, %v3942
    %v5031 = vpack.c.b16 %v3951, %v3943
    %v5032 = vpack.c.b16 %v3952, %v3944
    %v5033 = vpack.c.b16 %v3953, %v3945
    %v5034 = vpack.c.b16 %v3954, %v3946
    %v5035 = vpack.c.b16 %v3955, %v3947
    %v5036 = vpack.c.b16 %v3964, %v3956
    %v5037 = vpack.c.b16 %v3965, %v3957
    %v5038 = vpack.c.b16 %v3966, %v3958
    %v5039 = vpack.c.b16 %v3967, %v3959
    %v5040 = vpack.c.b16 %v3968, %v3960
    %v5041 = vpack.c.b16 %v3969, %v3961
    %v5042 = vpack.c.b16 %v3970, %v3962
    %v5043 = vpack.c.b16 %v3971, %v3963
    %v5044 = vpack.c.b16 %v3980, %v3972
    %v5045 = vpack.c.b16 %v3981, %v3973
    %v5046 = vpack.c.b16 %v3982, %v3974
    %v5047 = vpack.c.b16 %v3983, %v3975
    %v5048 = vpack.c.b16 %v3984, %v3976
    %v5049 = vpack.c.b16 %v3985, %v3977
    %v5050 = vpack.c.b16 %v3986, %v3978
    %v5051 = vpack.c.b16 %v3987, %v3979
    %v5052 = vpack.c.b16 %v3996, %v3988
    %v5053 = vpack.c.b16 %v3997, %v3989
    %v5054 = vpack.c.b16 %v3998, %v3990
    %v5055 = vpack.c.b16 %v3999, %v3991
    %v5056 = vpack.c.b16 %v4000, %v3992
    %v5057 = vpack.c.b16 %v4001, %v3993
    %v5058 = vpack.c.b16 %v4002, %v3994
    %v5059 = vpack.c.b16 %v4003, %v3995
    %v5060 = vpack.c.b16 %v4012, %v4004
    %v5061 = vpack.c.b16 %v4013, %v4005
    %v5062 = vpack.c.b16 %v4014, %v4006
    %v5063 = vpack.c.b16 %v4015, %v4007
    %v5064 = vpack.c.b16 %v4016, %v4008
    %v5065 = vpack.c.b16 %v4017, %v4009
    %v5066 = vpack.c.b16 %v4018, %v4010
    %v5067 = vpack.c.b16 %v4019, %v4011
    %v5068 = vpack.c.b16 %v4028, %v4020
    %v5069 = vpack.c.b16 %v4029, %v4021
    %v5070 = vpack.c.b16 %v4030, %v4022
    %v5071 = vpack.c.b16 %v4031, %v4023
    %v5072 = vpack.c.b16 %v4032, %v4024
    %v5073 = vpack.c.b16 %v4033, %v4025
    %v5074 = vpack.c.b16 %v4034, %v4026
    %v5075 = vpack.c.b16 %v4035, %v4027
    %v5076 = vpack.c.b16 %v4044, %v4036
    %v5077 = vpack.c.b16 %v4045, %v4037
    %v5078 = vpack.c.b16 %v4046, %v4038
    %v5079 = vpack.c.b16 %v4047, %v4039
    %v5080 = vpack.c.b16 %v4048, %v4040
    %v5081 = vpack.c.b16 %v4049, %v4041
    %v5082 = vpack.c.b16 %v4050, %v4042
    %v5083 = vpack.c.b16 %v4051, %v4043
    %v5084 = vpack.c.b16 %v4060, %v4052
    %v5085 = vpack.c.b16 %v4061, %v4053
    %v5086 = vpack.c.b16 %v4062, %v4054
    %v5087 = vpack.c.b16 %v4063, %v4055
    %v5088 = vpack.c.b16 %v4064, %v4056
    %v5089 = vpack.c.b16 %v4065, %v4057
    %v5090 = vpack.c.b16 %v4066, %v4058
    %v5091 = vpack.c.b16 %v4067, %v4059
    %v5092 = vpack.c.b16 %v4076, %v4068
    %v5093 = vpack.c.b16 %v4077, %v4069
    %v5094 = vpack.c.b16 %v4078, %v4070
    %v5095 = vpack.c.b16 %v4079, %v4071
    %v5096 = vpack.c.b16 %v4080, %v4072
    %v5097 = vpack.c.b16 %v4081, %v4073
    %v5098 = vpack.c.b16 %v4082, %v4074
    %v5099 = vpack.c.b16 %v4083, %v4075
    %v5100 = vpack.c.b16 %v4092, %v4084
    %v5101 = vpack.c.b16 %v4093, %v4085
    %v5102 = vpack.c.b16 %v4094, %v4086
    %v5103 = vpack.c.b16 %v4095, %v4087
    %v5104 = vpack.c.b16 %v4096, %v4088
    %v5105 = vpack.c.b16 %v4097, %v4089
    %v5106 = vpack.c.b16 %v4098, %v4090
    %v5107 = vpack.c.b16 %v4099, %v4091
    %v5108 = vpack.c.b16 %v4108, %v4100
    %v5109 = vpack.c.b16 %v4109, %v4101
    %v5110 = vpack.c.b16 %v4110, %v4102
    %v5111 = vpack.c.b16 %v4111, %v4103
    %v5112 = vpack.c.b16 %v4112, %v4104
    %v5113 = vpack.c.b16 %v4113, %v4105
    %v5114 = vpack.c.b16 %v4114, %v4106
    %v5115 = vpack.c.b16 %v4115, %v4107
    %vm6116 = vcmask 654336
    %v6118 = vsel %vm6116, %v115, 0
    %6120 = vmatprep.subr.bf16.mxu0 %v4173
    %6121 = vmatpush1.bf16.msra.mxu0 %v4172
    %6122 = vmatprep.subr.bf16.mxu0 %v4165
    %6123 = vmatpush1.bf16.msra.mxu0 %v4164
    %6124 = vmatprep.subr.bf16.mxu0 %v4157
    %6125 = vmatpush1.bf16.msra.mxu0 %v4156
    %6126 = vmatprep.subr.bf16.mxu0 %v4149
    %6127 = vmatpush1.bf16.msra.mxu0 %v4148
    %6128 = vmatprep.subr.bf16.mxu0 %v4141
    %6129 = vmatpush1.bf16.msra.mxu0 %v4140
    %6130 = vmatprep.subr.bf16.mxu0 %v4133
    %6131 = vmatpush1.bf16.msra.mxu0 %v4132
    %6132 = vmatprep.subr.bf16.mxu0 %v4125
    %6133 = vmatpush1.bf16.msra.mxu0 %v4124
    %6134 = vmatprep.subr.bf16.mxu0 %v4117
    %6135 = vmatpush1.bf16.msra.mxu0 %v4116
    %6136 = vmatprep.subr.bf16.mxu0 %v4237
    %6137 = vmatpush2.bf16.msra.mxu0 %v4236
    %6138 = vmatprep.subr.bf16.mxu0 %v4229
    %6139 = vmatpush2.bf16.msra.mxu0 %v4228
    %6140 = vmatprep.subr.bf16.mxu0 %v4221
    %6141 = vmatpush2.bf16.msra.mxu0 %v4220
    %6142 = vmatprep.subr.bf16.mxu0 %v4213
    %6143 = vmatpush2.bf16.msra.mxu0 %v4212
    %6144 = vmatprep.subr.bf16.mxu0 %v4205
    %6145 = vmatpush2.bf16.msra.mxu0 %v4204
    %6146 = vmatprep.subr.bf16.mxu0 %v4197
    %6147 = vmatpush2.bf16.msra.mxu0 %v4196
    %6148 = vmatprep.subr.bf16.mxu0 %v4189
    %6149 = vmatpush2.bf16.msra.mxu0 %v4188
    %6150 = vmatprep.subr.bf16.mxu0 %v4181
    %6151 = vmatpush2.bf16.msra.mxu0 %v4180
    %6152 = vmatprep.mubr.bf16.mxu0 %v101
    %6153 = vmatmul.mubr.bf16.gmra.mxu0 %v100
    %v6154 = vpop.f32.mrf.mxu0
    %v6155 = vadd.f32 0.0, %v6154
    %v6156 = vpop.f32.mrf.mxu0
    %v6157 = vadd.f32 0.0, %v6156
    %v6158 = vpop.f32.mrf.mxu0
    %v6159 = vpop.f32.mrf.mxu0
    %6160 = vdwg.mxu0
    %6161 = vmatprep.subr.bf16.mxu0 %v4301
    %6162 = vmatpush1.bf16.msra.mxu0 %v4300
    %6163 = vmatprep.subr.bf16.mxu0 %v4293
    %6164 = vmatpush1.bf16.msra.mxu0 %v4292
    %6165 = vmatprep.subr.bf16.mxu0 %v4285
    %6166 = vmatpush1.bf16.msra.mxu0 %v4284
    %6167 = vmatprep.subr.bf16.mxu0 %v4277
    %6168 = vmatpush1.bf16.msra.mxu0 %v4276
    %6169 = vmatprep.subr.bf16.mxu0 %v4269
    %6170 = vmatpush1.bf16.msra.mxu0 %v4268
    %6171 = vmatprep.subr.bf16.mxu0 %v4261
    %6172 = vmatpush1.bf16.msra.mxu0 %v4260
    %6173 = vmatprep.subr.bf16.mxu0 %v4253
    %6174 = vmatpush1.bf16.msra.mxu0 %v4252
    %6175 = vmatprep.subr.bf16.mxu0 %v4245
    %6176 = vmatpush1.bf16.msra.mxu0 %v4244
    %6177 = vmatprep.subr.bf16.mxu0 %v4365
    %6178 = vmatpush2.bf16.msra.mxu0 %v4364
    %6179 = vmatprep.subr.bf16.mxu0 %v4357
    %6180 = vmatpush2.bf16.msra.mxu0 %v4356
    %6181 = vmatprep.subr.bf16.mxu0 %v4349
    %6182 = vmatpush2.bf16.msra.mxu0 %v4348
    %6183 = vmatprep.subr.bf16.mxu0 %v4341
    %6184 = vmatpush2.bf16.msra.mxu0 %v4340
    %6185 = vmatprep.subr.bf16.mxu0 %v4333
    %6186 = vmatpush2.bf16.msra.mxu0 %v4332
    %6187 = vmatprep.subr.bf16.mxu0 %v4325
    %6188 = vmatpush2.bf16.msra.mxu0 %v4324
    %6189 = vmatprep.subr.bf16.mxu0 %v4317
    %6190 = vmatpush2.bf16.msra.mxu0 %v4316
    %6191 = vmatprep.subr.bf16.mxu0 %v4309
    %6192 = vmatpush2.bf16.msra.mxu0 %v4308
    %6193 = vmatprep.mubr.bf16.mxu0 %v103
    %6194 = vmatmul.mubr.bf16.gmra.mxu0 %v102
    %v6195 = vpop.f32.mrf.mxu0
    %v6196 = vadd.f32 %v6155, %v6195
    %v6197 = vpop.f32.mrf.mxu0
    %v6198 = vadd.f32 %v6157, %v6197
    %v6199 = vpop.f32.mrf.mxu0
    %v6200 = vpop.f32.mrf.mxu0
    %6201 = vdwg.mxu0
    %6202 = vmatprep.subr.bf16.mxu0 %v4429
    %6203 = vmatpush1.bf16.msra.mxu0 %v4428
    %6204 = vmatprep.subr.bf16.mxu0 %v4421
    %6205 = vmatpush1.bf16.msra.mxu0 %v4420
    %6206 = vmatprep.subr.bf16.mxu0 %v4413
    %6207 = vmatpush1.bf16.msra.mxu0 %v4412
    %6208 = vmatprep.subr.bf16.mxu0 %v4405
    %6209 = vmatpush1.bf16.msra.mxu0 %v4404
    %6210 = vmatprep.subr.bf16.mxu0 %v4397
    %6211 = vmatpush1.bf16.msra.mxu0 %v4396
    %6212 = vmatprep.subr.bf16.mxu0 %v4389
    %6213 = vmatpush1.bf16.msra.mxu0 %v4388
    %6214 = vmatprep.subr.bf16.mxu0 %v4381
    %6215 = vmatpush1.bf16.msra.mxu0 %v4380
    %6216 = vmatprep.subr.bf16.mxu0 %v4373
    %6217 = vmatpush1.bf16.msra.mxu0 %v4372
    %6218 = vmatprep.subr.bf16.mxu0 %v4493
    %6219 = vmatpush2.bf16.msra.mxu0 %v4492
    %6220 = vmatprep.subr.bf16.mxu0 %v4485
    %6221 = vmatpush2.bf16.msra.mxu0 %v4484
    %6222 = vmatprep.subr.bf16.mxu0 %v4477
    %6223 = vmatpush2.bf16.msra.mxu0 %v4476
    %6224 = vmatprep.subr.bf16.mxu0 %v4469
    %6225 = vmatpush2.bf16.msra.mxu0 %v4468
    %6226 = vmatprep.subr.bf16.mxu0 %v4461
    %6227 = vmatpush2.bf16.msra.mxu0 %v4460
    %6228 = vmatprep.subr.bf16.mxu0 %v4453
    %6229 = vmatpush2.bf16.msra.mxu0 %v4452
    %6230 = vmatprep.subr.bf16.mxu0 %v4445
    %6231 = vmatpush2.bf16.msra.mxu0 %v4444
    %6232 = vmatprep.subr.bf16.mxu0 %v4437
    %6233 = vmatpush2.bf16.msra.mxu0 %v4436
    %6234 = vmatprep.mubr.bf16.mxu0 %v105
    %6235 = vmatmul.mubr.bf16.gmra.mxu0 %v104
    %v6236 = vpop.f32.mrf.mxu0
    %v6237 = vadd.f32 %v6196, %v6236
    %v6238 = vpop.f32.mrf.mxu0
    %v6239 = vadd.f32 %v6198, %v6238
    %v6240 = vpop.f32.mrf.mxu0
    %v6241 = vpop.f32.mrf.mxu0
    %6242 = vdwg.mxu0
    %6243 = vmatprep.subr.bf16.mxu0 %v4557
    %6244 = vmatpush1.bf16.msra.mxu0 %v4556
    %6245 = vmatprep.subr.bf16.mxu0 %v4549
    %6246 = vmatpush1.bf16.msra.mxu0 %v4548
    %6247 = vmatprep.subr.bf16.mxu0 %v4541
    %6248 = vmatpush1.bf16.msra.mxu0 %v4540
    %6249 = vmatprep.subr.bf16.mxu0 %v4533
    %6250 = vmatpush1.bf16.msra.mxu0 %v4532
    %6251 = vmatprep.subr.bf16.mxu0 %v4525
    %6252 = vmatpush1.bf16.msra.mxu0 %v4524
    %6253 = vmatprep.subr.bf16.mxu0 %v4517
    %6254 = vmatpush1.bf16.msra.mxu0 %v4516
    %6255 = vmatprep.subr.bf16.mxu0 %v4509
    %6256 = vmatpush1.bf16.msra.mxu0 %v4508
    %6257 = vmatprep.subr.bf16.mxu0 %v4501
    %6258 = vmatpush1.bf16.msra.mxu0 %v4500
    %6259 = vmatprep.subr.bf16.mxu0 %v4621
    %6260 = vmatpush2.bf16.msra.mxu0 %v4620
    %6261 = vmatprep.subr.bf16.mxu0 %v4613
    %6262 = vmatpush2.bf16.msra.mxu0 %v4612
    %6263 = vmatprep.subr.bf16.mxu0 %v4605
    %6264 = vmatpush2.bf16.msra.mxu0 %v4604
    %6265 = vmatprep.subr.bf16.mxu0 %v4597
    %6266 = vmatpush2.bf16.msra.mxu0 %v4596
    %6267 = vmatprep.subr.bf16.mxu0 %v4589
    %6268 = vmatpush2.bf16.msra.mxu0 %v4588
    %6269 = vmatprep.subr.bf16.mxu0 %v4581
    %6270 = vmatpush2.bf16.msra.mxu0 %v4580
    %6271 = vmatprep.subr.bf16.mxu0 %v4573
    %6272 = vmatpush2.bf16.msra.mxu0 %v4572
    %6273 = vmatprep.subr.bf16.mxu0 %v4565
    %6274 = vmatpush2.bf16.msra.mxu0 %v4564
    %6275 = vmatprep.mubr.bf16.mxu0 %v107
    %6276 = vmatmul.mubr.bf16.gmra.mxu0 %v106
    %v6277 = vpop.f32.mrf.mxu0
    %v6278 = vadd.f32 %v6237, %v6277
    %v6279 = vpop.f32.mrf.mxu0
    %v6280 = vadd.f32 %v6239, %v6279
    %v6281 = vpop.f32.mrf.mxu0
    %v6282 = vpop.f32.mrf.mxu0
    %6283 = vdwg.mxu0
    %6284 = vmatprep.subr.bf16.mxu0 %v4685
    %6285 = vmatpush1.bf16.msra.mxu0 %v4684
    %6286 = vmatprep.subr.bf16.mxu0 %v4677
    %6287 = vmatpush1.bf16.msra.mxu0 %v4676
    %6288 = vmatprep.subr.bf16.mxu0 %v4669
    %6289 = vmatpush1.bf16.msra.mxu0 %v4668
    %6290 = vmatprep.subr.bf16.mxu0 %v4661
    %6291 = vmatpush1.bf16.msra.mxu0 %v4660
    %6292 = vmatprep.subr.bf16.mxu0 %v4653
    %6293 = vmatpush1.bf16.msra.mxu0 %v4652
    %6294 = vmatprep.subr.bf16.mxu0 %v4645
    %6295 = vmatpush1.bf16.msra.mxu0 %v4644
    %6296 = vmatprep.subr.bf16.mxu0 %v4637
    %6297 = vmatpush1.bf16.msra.mxu0 %v4636
    %6298 = vmatprep.subr.bf16.mxu0 %v4629
    %6299 = vmatpush1.bf16.msra.mxu0 %v4628
    %6300 = vmatprep.subr.bf16.mxu0 %v4749
    %6301 = vmatpush2.bf16.msra.mxu0 %v4748
    %6302 = vmatprep.subr.bf16.mxu0 %v4741
    %6303 = vmatpush2.bf16.msra.mxu0 %v4740
    %6304 = vmatprep.subr.bf16.mxu0 %v4733
    %6305 = vmatpush2.bf16.msra.mxu0 %v4732
    %6306 = vmatprep.subr.bf16.mxu0 %v4725
    %6307 = vmatpush2.bf16.msra.mxu0 %v4724
    %6308 = vmatprep.subr.bf16.mxu0 %v4717
    %6309 = vmatpush2.bf16.msra.mxu0 %v4716
    %6310 = vmatprep.subr.bf16.mxu0 %v4709
    %6311 = vmatpush2.bf16.msra.mxu0 %v4708
    %6312 = vmatprep.subr.bf16.mxu0 %v4701
    %6313 = vmatpush2.bf16.msra.mxu0 %v4700
    %6314 = vmatprep.subr.bf16.mxu0 %v4693
    %6315 = vmatpush2.bf16.msra.mxu0 %v4692
    %6316 = vmatprep.mubr.bf16.mxu0 %v109
    %6317 = vmatmul.mubr.bf16.gmra.mxu0 %v108
    %v6318 = vpop.f32.mrf.mxu0
    %v6319 = vadd.f32 %v6278, %v6318
    %v6320 = vpop.f32.mrf.mxu0
    %v6321 = vadd.f32 %v6280, %v6320
    %v6322 = vpop.f32.mrf.mxu0
    %v6323 = vpop.f32.mrf.mxu0
    %6324 = vdwg.mxu0
    %6325 = vmatprep.subr.bf16.mxu0 %v4813
    %6326 = vmatpush1.bf16.msra.mxu0 %v4812
    %6327 = vmatprep.subr.bf16.mxu0 %v4805
    %6328 = vmatpush1.bf16.msra.mxu0 %v4804
    %6329 = vmatprep.subr.bf16.mxu0 %v4797
    %6330 = vmatpush1.bf16.msra.mxu0 %v4796
    %6331 = vmatprep.subr.bf16.mxu0 %v4789
    %6332 = vmatpush1.bf16.msra.mxu0 %v4788
    %6333 = vmatprep.subr.bf16.mxu0 %v4781
    %6334 = vmatpush1.bf16.msra.mxu0 %v4780
    %6335 = vmatprep.subr.bf16.mxu0 %v4773
    %6336 = vmatpush1.bf16.msra.mxu0 %v4772
    %6337 = vmatprep.subr.bf16.mxu0 %v4765
    %6338 = vmatpush1.bf16.msra.mxu0 %v4764
    %6339 = vmatprep.subr.bf16.mxu0 %v4757
    %6340 = vmatpush1.bf16.msra.mxu0 %v4756
    %6341 = vmatprep.subr.bf16.mxu0 %v4877
    %6342 = vmatpush2.bf16.msra.mxu0 %v4876
    %6343 = vmatprep.subr.bf16.mxu0 %v4869
    %6344 = vmatpush2.bf16.msra.mxu0 %v4868
    %6345 = vmatprep.subr.bf16.mxu0 %v4861
    %6346 = vmatpush2.bf16.msra.mxu0 %v4860
    %6347 = vmatprep.subr.bf16.mxu0 %v4853
    %6348 = vmatpush2.bf16.msra.mxu0 %v4852
    %6349 = vmatprep.subr.bf16.mxu0 %v4845
    %6350 = vmatpush2.bf16.msra.mxu0 %v4844
    %6351 = vmatprep.subr.bf16.mxu0 %v4837
    %6352 = vmatpush2.bf16.msra.mxu0 %v4836
    %6353 = vmatprep.subr.bf16.mxu0 %v4829
    %6354 = vmatpush2.bf16.msra.mxu0 %v4828
    %6355 = vmatprep.subr.bf16.mxu0 %v4821
    %6356 = vmatpush2.bf16.msra.mxu0 %v4820
    %6357 = vmatprep.mubr.bf16.mxu0 %v111
    %6358 = vmatmul.mubr.bf16.gmra.mxu0 %v110
    %v6359 = vpop.f32.mrf.mxu0
    %v6360 = vadd.f32 %v6319, %v6359
    %v6361 = vpop.f32.mrf.mxu0
    %v6362 = vadd.f32 %v6321, %v6361
    %v6363 = vpop.f32.mrf.mxu0
    %v6364 = vpop.f32.mrf.mxu0
    %6365 = vdwg.mxu0
    %6366 = vmatprep.subr.bf16.mxu0 %v4941
    %6367 = vmatpush1.bf16.msra.mxu0 %v4940
    %6368 = vmatprep.subr.bf16.mxu0 %v4933
    %6369 = vmatpush1.bf16.msra.mxu0 %v4932
    %6370 = vmatprep.subr.bf16.mxu0 %v4925
    %6371 = vmatpush1.bf16.msra.mxu0 %v4924
    %6372 = vmatprep.subr.bf16.mxu0 %v4917
    %6373 = vmatpush1.bf16.msra.mxu0 %v4916
    %6374 = vmatprep.subr.bf16.mxu0 %v4909
    %6375 = vmatpush1.bf16.msra.mxu0 %v4908
    %6376 = vmatprep.subr.bf16.mxu0 %v4901
    %6377 = vmatpush1.bf16.msra.mxu0 %v4900
    %6378 = vmatprep.subr.bf16.mxu0 %v4893
    %6379 = vmatpush1.bf16.msra.mxu0 %v4892
    %6380 = vmatprep.subr.bf16.mxu0 %v4885
    %6381 = vmatpush1.bf16.msra.mxu0 %v4884
    %6382 = vmatprep.subr.bf16.mxu0 %v5005
    %6383 = vmatpush2.bf16.msra.mxu0 %v5004
    %6384 = vmatprep.subr.bf16.mxu0 %v4997
    %6385 = vmatpush2.bf16.msra.mxu0 %v4996
    %6386 = vmatprep.subr.bf16.mxu0 %v4989
    %6387 = vmatpush2.bf16.msra.mxu0 %v4988
    %6388 = vmatprep.subr.bf16.mxu0 %v4981
    %6389 = vmatpush2.bf16.msra.mxu0 %v4980
    %6390 = vmatprep.subr.bf16.mxu0 %v4973
    %6391 = vmatpush2.bf16.msra.mxu0 %v4972
    %6392 = vmatprep.subr.bf16.mxu0 %v4965
    %6393 = vmatpush2.bf16.msra.mxu0 %v4964
    %6394 = vmatprep.subr.bf16.mxu0 %v4957
    %6395 = vmatpush2.bf16.msra.mxu0 %v4956
    %6396 = vmatprep.subr.bf16.mxu0 %v4949
    %6397 = vmatpush2.bf16.msra.mxu0 %v4948
    %6398 = vmatprep.mubr.bf16.mxu0 %v113
    %6399 = vmatmul.mubr.bf16.gmra.mxu0 %v112
    %v6400 = vpop.f32.mrf.mxu0
    %v6401 = vadd.f32 %v6360, %v6400
    %v6402 = vpop.f32.mrf.mxu0
    %v6403 = vadd.f32 %v6362, %v6402
    %v6404 = vpop.f32.mrf.mxu0
    %v6405 = vpop.f32.mrf.mxu0
    %6406 = vdwg.mxu0
    %6407 = vmatprep.subr.bf16.mxu0 %v5069
    %6408 = vmatpush1.bf16.msra.mxu0 %v5068
    %6409 = vmatprep.subr.bf16.mxu0 %v5061
    %6410 = vmatpush1.bf16.msra.mxu0 %v5060
    %6411 = vmatprep.subr.bf16.mxu0 %v5053
    %6412 = vmatpush1.bf16.msra.mxu0 %v5052
    %6413 = vmatprep.subr.bf16.mxu0 %v5045
    %6414 = vmatpush1.bf16.msra.mxu0 %v5044
    %6415 = vmatprep.subr.bf16.mxu0 %v5037
    %6416 = vmatpush1.bf16.msra.mxu0 %v5036
    %6417 = vmatprep.subr.bf16.mxu0 %v5029
    %6418 = vmatpush1.bf16.msra.mxu0 %v5028
    %6419 = vmatprep.subr.bf16.mxu0 %v5021
    %6420 = vmatpush1.bf16.msra.mxu0 %v5020
    %6421 = vmatprep.subr.bf16.mxu0 %v5013
    %6422 = vmatpush1.bf16.msra.mxu0 %v5012
    %6423 = vmatprep.subr.bf16.mxu0 0
    %6424 = vmatpush2.bf16.msra.mxu0 0
    %6425 = vmatprep.subr.bf16.mxu0 0
    %6426 = vmatpush2.bf16.msra.mxu0 0
    %6427 = vmatprep.subr.bf16.mxu0 0
    %6428 = vmatpush2.bf16.msra.mxu0 0
    %6429 = vmatprep.subr.bf16.mxu0 %v5109
    %6430 = vmatpush2.bf16.msra.mxu0 %v5108
    %6431 = vmatprep.subr.bf16.mxu0 %v5101
    %6432 = vmatpush2.bf16.msra.mxu0 %v5100
    %6433 = vmatprep.subr.bf16.mxu0 %v5093
    %6434 = vmatpush2.bf16.msra.mxu0 %v5092
    %6435 = vmatprep.subr.bf16.mxu0 %v5085
    %6436 = vmatpush2.bf16.msra.mxu0 %v5084
    %6437 = vmatprep.subr.bf16.mxu0 %v5077
    %6438 = vmatpush2.bf16.msra.mxu0 %v5076
    %6439 = vmatprep.mubr.bf16.mxu0 %v6118
    %6440 = vmatmul.mubr.bf16.gmra.mxu0 %v114
    %v6441 = vpop.f32.mrf.mxu0
    %v6442 = vadd.f32 %v6401, %v6441
    %v6443 = vpop.f32.mrf.mxu0
    %v6444 = vadd.f32 %v6403, %v6443
    %v6445 = vpop.f32.mrf.mxu0
    %v6446 = vpop.f32.mrf.mxu0
    %6447 = vdwg.mxu0
    %6448 = vmatprep.subr.bf16.mxu0 %v4175
    %6449 = vmatpush1.bf16.msra.mxu0 %v4174
    %6450 = vmatprep.subr.bf16.mxu0 %v4167
    %6451 = vmatpush1.bf16.msra.mxu0 %v4166
    %6452 = vmatprep.subr.bf16.mxu0 %v4159
    %6453 = vmatpush1.bf16.msra.mxu0 %v4158
    %6454 = vmatprep.subr.bf16.mxu0 %v4151
    %6455 = vmatpush1.bf16.msra.mxu0 %v4150
    %6456 = vmatprep.subr.bf16.mxu0 %v4143
    %6457 = vmatpush1.bf16.msra.mxu0 %v4142
    %6458 = vmatprep.subr.bf16.mxu0 %v4135
    %6459 = vmatpush1.bf16.msra.mxu0 %v4134
    %6460 = vmatprep.subr.bf16.mxu0 %v4127
    %6461 = vmatpush1.bf16.msra.mxu0 %v4126
    %6462 = vmatprep.subr.bf16.mxu0 %v4119
    %6463 = vmatpush1.bf16.msra.mxu0 %v4118
    %6464 = vmatprep.subr.bf16.mxu0 %v4239
    %6465 = vmatpush2.bf16.msra.mxu0 %v4238
    %6466 = vmatprep.subr.bf16.mxu0 %v4231
    %6467 = vmatpush2.bf16.msra.mxu0 %v4230
    %6468 = vmatprep.subr.bf16.mxu0 %v4223
    %6469 = vmatpush2.bf16.msra.mxu0 %v4222
    %6470 = vmatprep.subr.bf16.mxu0 %v4215
    %6471 = vmatpush2.bf16.msra.mxu0 %v4214
    %6472 = vmatprep.subr.bf16.mxu0 %v4207
    %6473 = vmatpush2.bf16.msra.mxu0 %v4206
    %6474 = vmatprep.subr.bf16.mxu0 %v4199
    %6475 = vmatpush2.bf16.msra.mxu0 %v4198
    %6476 = vmatprep.subr.bf16.mxu0 %v4191
    %6477 = vmatpush2.bf16.msra.mxu0 %v4190
    %6478 = vmatprep.subr.bf16.mxu0 %v4183
    %6479 = vmatpush2.bf16.msra.mxu0 %v4182
    %6480 = vmatprep.mubr.bf16.mxu0 %v101
    %6481 = vmatmul.mubr.bf16.gmra.mxu0 %v100
    %v6482 = vpop.f32.mrf.mxu0
    %v6483 = vadd.f32 0.0, %v6482
    %v6484 = vpop.f32.mrf.mxu0
    %v6485 = vadd.f32 0.0, %v6484
    %v6486 = vpop.f32.mrf.mxu0
    %v6487 = vpop.f32.mrf.mxu0
    %6488 = vdwg.mxu0
    %6489 = vmatprep.subr.bf16.mxu0 %v4303
    %6490 = vmatpush1.bf16.msra.mxu0 %v4302
    %6491 = vmatprep.subr.bf16.mxu0 %v4295
    %6492 = vmatpush1.bf16.msra.mxu0 %v4294
    %6493 = vmatprep.subr.bf16.mxu0 %v4287
    %6494 = vmatpush1.bf16.msra.mxu0 %v4286
    %6495 = vmatprep.subr.bf16.mxu0 %v4279
    %6496 = vmatpush1.bf16.msra.mxu0 %v4278
    %6497 = vmatprep.subr.bf16.mxu0 %v4271
    %6498 = vmatpush1.bf16.msra.mxu0 %v4270
    %6499 = vmatprep.subr.bf16.mxu0 %v4263
    %6500 = vmatpush1.bf16.msra.mxu0 %v4262
    %6501 = vmatprep.subr.bf16.mxu0 %v4255
    %6502 = vmatpush1.bf16.msra.mxu0 %v4254
    %6503 = vmatprep.subr.bf16.mxu0 %v4247
    %6504 = vmatpush1.bf16.msra.mxu0 %v4246
    %6505 = vmatprep.subr.bf16.mxu0 %v4367
    %6506 = vmatpush2.bf16.msra.mxu0 %v4366
    %6507 = vmatprep.subr.bf16.mxu0 %v4359
    %6508 = vmatpush2.bf16.msra.mxu0 %v4358
    %6509 = vmatprep.subr.bf16.mxu0 %v4351
    %6510 = vmatpush2.bf16.msra.mxu0 %v4350
    %6511 = vmatprep.subr.bf16.mxu0 %v4343
    %6512 = vmatpush2.bf16.msra.mxu0 %v4342
    %6513 = vmatprep.subr.bf16.mxu0 %v4335
    %6514 = vmatpush2.bf16.msra.mxu0 %v4334
    %6515 = vmatprep.subr.bf16.mxu0 %v4327
    %6516 = vmatpush2.bf16.msra.mxu0 %v4326
    %6517 = vmatprep.subr.bf16.mxu0 %v4319
    %6518 = vmatpush2.bf16.msra.mxu0 %v4318
    %6519 = vmatprep.subr.bf16.mxu0 %v4311
    %6520 = vmatpush2.bf16.msra.mxu0 %v4310
    %6521 = vmatprep.mubr.bf16.mxu0 %v103
    %6522 = vmatmul.mubr.bf16.gmra.mxu0 %v102
    %v6523 = vpop.f32.mrf.mxu0
    %v6524 = vadd.f32 %v6483, %v6523
    %v6525 = vpop.f32.mrf.mxu0
    %v6526 = vadd.f32 %v6485, %v6525
    %v6527 = vpop.f32.mrf.mxu0
    %v6528 = vpop.f32.mrf.mxu0
    %6529 = vdwg.mxu0
    %6530 = vmatprep.subr.bf16.mxu0 %v4431
    %6531 = vmatpush1.bf16.msra.mxu0 %v4430
    %6532 = vmatprep.subr.bf16.mxu0 %v4423
    %6533 = vmatpush1.bf16.msra.mxu0 %v4422
    %6534 = vmatprep.subr.bf16.mxu0 %v4415
    %6535 = vmatpush1.bf16.msra.mxu0 %v4414
    %6536 = vmatprep.subr.bf16.mxu0 %v4407
    %6537 = vmatpush1.bf16.msra.mxu0 %v4406
    %6538 = vmatprep.subr.bf16.mxu0 %v4399
    %6539 = vmatpush1.bf16.msra.mxu0 %v4398
    %6540 = vmatprep.subr.bf16.mxu0 %v4391
    %6541 = vmatpush1.bf16.msra.mxu0 %v4390
    %6542 = vmatprep.subr.bf16.mxu0 %v4383
    %6543 = vmatpush1.bf16.msra.mxu0 %v4382
    %6544 = vmatprep.subr.bf16.mxu0 %v4375
    %6545 = vmatpush1.bf16.msra.mxu0 %v4374
    %6546 = vmatprep.subr.bf16.mxu0 %v4495
    %6547 = vmatpush2.bf16.msra.mxu0 %v4494
    %6548 = vmatprep.subr.bf16.mxu0 %v4487
    %6549 = vmatpush2.bf16.msra.mxu0 %v4486
    %6550 = vmatprep.subr.bf16.mxu0 %v4479
    %6551 = vmatpush2.bf16.msra.mxu0 %v4478
    %6552 = vmatprep.subr.bf16.mxu0 %v4471
    %6553 = vmatpush2.bf16.msra.mxu0 %v4470
    %6554 = vmatprep.subr.bf16.mxu0 %v4463
    %6555 = vmatpush2.bf16.msra.mxu0 %v4462
    %6556 = vmatprep.subr.bf16.mxu0 %v4455
    %6557 = vmatpush2.bf16.msra.mxu0 %v4454
    %6558 = vmatprep.subr.bf16.mxu0 %v4447
    %6559 = vmatpush2.bf16.msra.mxu0 %v4446
    %6560 = vmatprep.subr.bf16.mxu0 %v4439
    %6561 = vmatpush2.bf16.msra.mxu0 %v4438
    %6562 = vmatprep.mubr.bf16.mxu0 %v105
    %6563 = vmatmul.mubr.bf16.gmra.mxu0 %v104
    %v6564 = vpop.f32.mrf.mxu0
    %v6565 = vadd.f32 %v6524, %v6564
    %v6566 = vpop.f32.mrf.mxu0
    %v6567 = vadd.f32 %v6526, %v6566
    %v6568 = vpop.f32.mrf.mxu0
    %v6569 = vpop.f32.mrf.mxu0
    %6570 = vdwg.mxu0
    %6571 = vmatprep.subr.bf16.mxu0 %v4559
    %6572 = vmatpush1.bf16.msra.mxu0 %v4558
    %6573 = vmatprep.subr.bf16.mxu0 %v4551
    %6574 = vmatpush1.bf16.msra.mxu0 %v4550
    %6575 = vmatprep.subr.bf16.mxu0 %v4543
    %6576 = vmatpush1.bf16.msra.mxu0 %v4542
    %6577 = vmatprep.subr.bf16.mxu0 %v4535
    %6578 = vmatpush1.bf16.msra.mxu0 %v4534
    %6579 = vmatprep.subr.bf16.mxu0 %v4527
    %6580 = vmatpush1.bf16.msra.mxu0 %v4526
    %6581 = vmatprep.subr.bf16.mxu0 %v4519
    %6582 = vmatpush1.bf16.msra.mxu0 %v4518
    %6583 = vmatprep.subr.bf16.mxu0 %v4511
    %6584 = vmatpush1.bf16.msra.mxu0 %v4510
    %6585 = vmatprep.subr.bf16.mxu0 %v4503
    %6586 = vmatpush1.bf16.msra.mxu0 %v4502
    %6587 = vmatprep.subr.bf16.mxu0 %v4623
    %6588 = vmatpush2.bf16.msra.mxu0 %v4622
    %6589 = vmatprep.subr.bf16.mxu0 %v4615
    %6590 = vmatpush2.bf16.msra.mxu0 %v4614
    %6591 = vmatprep.subr.bf16.mxu0 %v4607
    %6592 = vmatpush2.bf16.msra.mxu0 %v4606
    %6593 = vmatprep.subr.bf16.mxu0 %v4599
    %6594 = vmatpush2.bf16.msra.mxu0 %v4598
    %6595 = vmatprep.subr.bf16.mxu0 %v4591
    %6596 = vmatpush2.bf16.msra.mxu0 %v4590
    %6597 = vmatprep.subr.bf16.mxu0 %v4583
    %6598 = vmatpush2.bf16.msra.mxu0 %v4582
    %6599 = vmatprep.subr.bf16.mxu0 %v4575
    %6600 = vmatpush2.bf16.msra.mxu0 %v4574
    %6601 = vmatprep.subr.bf16.mxu0 %v4567
    %6602 = vmatpush2.bf16.msra.mxu0 %v4566
    %6603 = vmatprep.mubr.bf16.mxu0 %v107
    %6604 = vmatmul.mubr.bf16.gmra.mxu0 %v106
    %v6605 = vpop.f32.mrf.mxu0
    %v6606 = vadd.f32 %v6565, %v6605
    %v6607 = vpop.f32.mrf.mxu0
    %v6608 = vadd.f32 %v6567, %v6607
    %v6609 = vpop.f32.mrf.mxu0
    %v6610 = vpop.f32.mrf.mxu0
    %6611 = vdwg.mxu0
    %6612 = vmatprep.subr.bf16.mxu0 %v4687
    %6613 = vmatpush1.bf16.msra.mxu0 %v4686
    %6614 = vmatprep.subr.bf16.mxu0 %v4679
    %6615 = vmatpush1.bf16.msra.mxu0 %v4678
    %6616 = vmatprep.subr.bf16.mxu0 %v4671
    %6617 = vmatpush1.bf16.msra.mxu0 %v4670
    %6618 = vmatprep.subr.bf16.mxu0 %v4663
    %6619 = vmatpush1.bf16.msra.mxu0 %v4662
    %6620 = vmatprep.subr.bf16.mxu0 %v4655
    %6621 = vmatpush1.bf16.msra.mxu0 %v4654
    %6622 = vmatprep.subr.bf16.mxu0 %v4647
    %6623 = vmatpush1.bf16.msra.mxu0 %v4646
    %6624 = vmatprep.subr.bf16.mxu0 %v4639
    %6625 = vmatpush1.bf16.msra.mxu0 %v4638
    %6626 = vmatprep.subr.bf16.mxu0 %v4631
    %6627 = vmatpush1.bf16.msra.mxu0 %v4630
    %6628 = vmatprep.subr.bf16.mxu0 %v4751
    %6629 = vmatpush2.bf16.msra.mxu0 %v4750
    %6630 = vmatprep.subr.bf16.mxu0 %v4743
    %6631 = vmatpush2.bf16.msra.mxu0 %v4742
    %6632 = vmatprep.subr.bf16.mxu0 %v4735
    %6633 = vmatpush2.bf16.msra.mxu0 %v4734
    %6634 = vmatprep.subr.bf16.mxu0 %v4727
    %6635 = vmatpush2.bf16.msra.mxu0 %v4726
    %6636 = vmatprep.subr.bf16.mxu0 %v4719
    %6637 = vmatpush2.bf16.msra.mxu0 %v4718
    %6638 = vmatprep.subr.bf16.mxu0 %v4711
    %6639 = vmatpush2.bf16.msra.mxu0 %v4710
    %6640 = vmatprep.subr.bf16.mxu0 %v4703
    %6641 = vmatpush2.bf16.msra.mxu0 %v4702
    %6642 = vmatprep.subr.bf16.mxu0 %v4695
    %6643 = vmatpush2.bf16.msra.mxu0 %v4694
    %6644 = vmatprep.mubr.bf16.mxu0 %v109
    %6645 = vmatmul.mubr.bf16.gmra.mxu0 %v108
    %v6646 = vpop.f32.mrf.mxu0
    %v6647 = vadd.f32 %v6606, %v6646
    %v6648 = vpop.f32.mrf.mxu0
    %v6649 = vadd.f32 %v6608, %v6648
    %v6650 = vpop.f32.mrf.mxu0
    %v6651 = vpop.f32.mrf.mxu0
    %6652 = vdwg.mxu0
    %6653 = vmatprep.subr.bf16.mxu0 %v4815
    %6654 = vmatpush1.bf16.msra.mxu0 %v4814
    %6655 = vmatprep.subr.bf16.mxu0 %v4807
    %6656 = vmatpush1.bf16.msra.mxu0 %v4806
    %6657 = vmatprep.subr.bf16.mxu0 %v4799
    %6658 = vmatpush1.bf16.msra.mxu0 %v4798
    %6659 = vmatprep.subr.bf16.mxu0 %v4791
    %6660 = vmatpush1.bf16.msra.mxu0 %v4790
    %6661 = vmatprep.subr.bf16.mxu0 %v4783
    %6662 = vmatpush1.bf16.msra.mxu0 %v4782
    %6663 = vmatprep.subr.bf16.mxu0 %v4775
    %6664 = vmatpush1.bf16.msra.mxu0 %v4774
    %6665 = vmatprep.subr.bf16.mxu0 %v4767
    %6666 = vmatpush1.bf16.msra.mxu0 %v4766
    %6667 = vmatprep.subr.bf16.mxu0 %v4759
    %6668 = vmatpush1.bf16.msra.mxu0 %v4758
    %6669 = vmatprep.subr.bf16.mxu0 %v4879
    %6670 = vmatpush2.bf16.msra.mxu0 %v4878
    %6671 = vmatprep.subr.bf16.mxu0 %v4871
    %6672 = vmatpush2.bf16.msra.mxu0 %v4870
    %6673 = vmatprep.subr.bf16.mxu0 %v4863
    %6674 = vmatpush2.bf16.msra.mxu0 %v4862
    %6675 = vmatprep.subr.bf16.mxu0 %v4855
    %6676 = vmatpush2.bf16.msra.mxu0 %v4854
    %6677 = vmatprep.subr.bf16.mxu0 %v4847
    %6678 = vmatpush2.bf16.msra.mxu0 %v4846
    %6679 = vmatprep.subr.bf16.mxu0 %v4839
    %6680 = vmatpush2.bf16.msra.mxu0 %v4838
    %6681 = vmatprep.subr.bf16.mxu0 %v4831
    %6682 = vmatpush2.bf16.msra.mxu0 %v4830
    %6683 = vmatprep.subr.bf16.mxu0 %v4823
    %6684 = vmatpush2.bf16.msra.mxu0 %v4822
    %6685 = vmatprep.mubr.bf16.mxu0 %v111
    %6686 = vmatmul.mubr.bf16.gmra.mxu0 %v110
    %v6687 = vpop.f32.mrf.mxu0
    %v6688 = vadd.f32 %v6647, %v6687
    %v6689 = vpop.f32.mrf.mxu0
    %v6690 = vadd.f32 %v6649, %v6689
    %v6691 = vpop.f32.mrf.mxu0
    %v6692 = vpop.f32.mrf.mxu0
    %6693 = vdwg.mxu0
    %6694 = vmatprep.subr.bf16.mxu0 %v4943
    %6695 = vmatpush1.bf16.msra.mxu0 %v4942
    %6696 = vmatprep.subr.bf16.mxu0 %v4935
    %6697 = vmatpush1.bf16.msra.mxu0 %v4934
    %6698 = vmatprep.subr.bf16.mxu0 %v4927
    %6699 = vmatpush1.bf16.msra.mxu0 %v4926
    %6700 = vmatprep.subr.bf16.mxu0 %v4919
    %6701 = vmatpush1.bf16.msra.mxu0 %v4918
    %6702 = vmatprep.subr.bf16.mxu0 %v4911
    %6703 = vmatpush1.bf16.msra.mxu0 %v4910
    %6704 = vmatprep.subr.bf16.mxu0 %v4903
    %6705 = vmatpush1.bf16.msra.mxu0 %v4902
    %6706 = vmatprep.subr.bf16.mxu0 %v4895
    %6707 = vmatpush1.bf16.msra.mxu0 %v4894
    %6708 = vmatprep.subr.bf16.mxu0 %v4887
    %6709 = vmatpush1.bf16.msra.mxu0 %v4886
    %6710 = vmatprep.subr.bf16.mxu0 %v5007
    %6711 = vmatpush2.bf16.msra.mxu0 %v5006
    %6712 = vmatprep.subr.bf16.mxu0 %v4999
    %6713 = vmatpush2.bf16.msra.mxu0 %v4998
    %6714 = vmatprep.subr.bf16.mxu0 %v4991
    %6715 = vmatpush2.bf16.msra.mxu0 %v4990
    %6716 = vmatprep.subr.bf16.mxu0 %v4983
    %6717 = vmatpush2.bf16.msra.mxu0 %v4982
    %6718 = vmatprep.subr.bf16.mxu0 %v4975
    %6719 = vmatpush2.bf16.msra.mxu0 %v4974
    %6720 = vmatprep.subr.bf16.mxu0 %v4967
    %6721 = vmatpush2.bf16.msra.mxu0 %v4966
    %6722 = vmatprep.subr.bf16.mxu0 %v4959
    %6723 = vmatpush2.bf16.msra.mxu0 %v4958
    %6724 = vmatprep.subr.bf16.mxu0 %v4951
    %6725 = vmatpush2.bf16.msra.mxu0 %v4950
    %6726 = vmatprep.mubr.bf16.mxu0 %v113
    %6727 = vmatmul.mubr.bf16.gmra.mxu0 %v112
    %v6728 = vpop.f32.mrf.mxu0
    %v6729 = vadd.f32 %v6688, %v6728
    %v6730 = vpop.f32.mrf.mxu0
    %v6731 = vadd.f32 %v6690, %v6730
    %v6732 = vpop.f32.mrf.mxu0
    %v6733 = vpop.f32.mrf.mxu0
    %6734 = vdwg.mxu0
    %6735 = vmatprep.subr.bf16.mxu0 %v5071
    %6736 = vmatpush1.bf16.msra.mxu0 %v5070
    %6737 = vmatprep.subr.bf16.mxu0 %v5063
    %6738 = vmatpush1.bf16.msra.mxu0 %v5062
    %6739 = vmatprep.subr.bf16.mxu0 %v5055
    %6740 = vmatpush1.bf16.msra.mxu0 %v5054
    %6741 = vmatprep.subr.bf16.mxu0 %v5047
    %6742 = vmatpush1.bf16.msra.mxu0 %v5046
    %6743 = vmatprep.subr.bf16.mxu0 %v5039
    %6744 = vmatpush1.bf16.msra.mxu0 %v5038
    %6745 = vmatprep.subr.bf16.mxu0 %v5031
    %6746 = vmatpush1.bf16.msra.mxu0 %v5030
    %6747 = vmatprep.subr.bf16.mxu0 %v5023
    %6748 = vmatpush1.bf16.msra.mxu0 %v5022
    %6749 = vmatprep.subr.bf16.mxu0 %v5015
    %6750 = vmatpush1.bf16.msra.mxu0 %v5014
    %6751 = vmatprep.subr.bf16.mxu0 0
    %6752 = vmatpush2.bf16.msra.mxu0 0
    %6753 = vmatprep.subr.bf16.mxu0 0
    %6754 = vmatpush2.bf16.msra.mxu0 0
    %6755 = vmatprep.subr.bf16.mxu0 0
    %6756 = vmatpush2.bf16.msra.mxu0 0
    %6757 = vmatprep.subr.bf16.mxu0 %v5111
    %6758 = vmatpush2.bf16.msra.mxu0 %v5110
    %6759 = vmatprep.subr.bf16.mxu0 %v5103
    %6760 = vmatpush2.bf16.msra.mxu0 %v5102
    %6761 = vmatprep.subr.bf16.mxu0 %v5095
    %6762 = vmatpush2.bf16.msra.mxu0 %v5094
    %6763 = vmatprep.subr.bf16.mxu0 %v5087
    %6764 = vmatpush2.bf16.msra.mxu0 %v5086
    %6765 = vmatprep.subr.bf16.mxu0 %v5079
    %6766 = vmatpush2.bf16.msra.mxu0 %v5078
    %6767 = vmatprep.mubr.bf16.mxu0 %v6118
    %6768 = vmatmul.mubr.bf16.gmra.mxu0 %v114
    %v6769 = vpop.f32.mrf.mxu0
    %v6770 = vadd.f32 %v6729, %v6769
    %v6771 = vpop.f32.mrf.mxu0
    %v6772 = vadd.f32 %v6731, %v6771
    %v6773 = vpop.f32.mrf.mxu0
    %v6774 = vpop.f32.mrf.mxu0
    %6775 = vdwg.mxu0
    %6776 = vmatprep.subr.bf16.mxu0 %v4177
    %6777 = vmatpush1.bf16.msra.mxu0 %v4176
    %6778 = vmatprep.subr.bf16.mxu0 %v4169
    %6779 = vmatpush1.bf16.msra.mxu0 %v4168
    %6780 = vmatprep.subr.bf16.mxu0 %v4161
    %6781 = vmatpush1.bf16.msra.mxu0 %v4160
    %6782 = vmatprep.subr.bf16.mxu0 %v4153
    %6783 = vmatpush1.bf16.msra.mxu0 %v4152
    %6784 = vmatprep.subr.bf16.mxu0 %v4145
    %6785 = vmatpush1.bf16.msra.mxu0 %v4144
    %6786 = vmatprep.subr.bf16.mxu0 %v4137
    %6787 = vmatpush1.bf16.msra.mxu0 %v4136
    %6788 = vmatprep.subr.bf16.mxu0 %v4129
    %6789 = vmatpush1.bf16.msra.mxu0 %v4128
    %6790 = vmatprep.subr.bf16.mxu0 %v4121
    %6791 = vmatpush1.bf16.msra.mxu0 %v4120
    %6792 = vmatprep.subr.bf16.mxu0 %v4241
    %6793 = vmatpush2.bf16.msra.mxu0 %v4240
    %6794 = vmatprep.subr.bf16.mxu0 %v4233
    %6795 = vmatpush2.bf16.msra.mxu0 %v4232
    %6796 = vmatprep.subr.bf16.mxu0 %v4225
    %6797 = vmatpush2.bf16.msra.mxu0 %v4224
    %6798 = vmatprep.subr.bf16.mxu0 %v4217
    %6799 = vmatpush2.bf16.msra.mxu0 %v4216
    %6800 = vmatprep.subr.bf16.mxu0 %v4209
    %6801 = vmatpush2.bf16.msra.mxu0 %v4208
    %6802 = vmatprep.subr.bf16.mxu0 %v4201
    %6803 = vmatpush2.bf16.msra.mxu0 %v4200
    %6804 = vmatprep.subr.bf16.mxu0 %v4193
    %6805 = vmatpush2.bf16.msra.mxu0 %v4192
    %6806 = vmatprep.subr.bf16.mxu0 %v4185
    %6807 = vmatpush2.bf16.msra.mxu0 %v4184
    %6808 = vmatprep.mubr.bf16.mxu0 %v101
    %6809 = vmatmul.mubr.bf16.gmra.mxu0 %v100
    %v6810 = vpop.f32.mrf.mxu0
    %v6811 = vadd.f32 0.0, %v6810
    %v6812 = vpop.f32.mrf.mxu0
    %v6813 = vadd.f32 0.0, %v6812
    %v6814 = vpop.f32.mrf.mxu0
    %v6815 = vpop.f32.mrf.mxu0
    %6816 = vdwg.mxu0
    %6817 = vmatprep.subr.bf16.mxu0 %v4305
    %6818 = vmatpush1.bf16.msra.mxu0 %v4304
    %6819 = vmatprep.subr.bf16.mxu0 %v4297
    %6820 = vmatpush1.bf16.msra.mxu0 %v4296
    %6821 = vmatprep.subr.bf16.mxu0 %v4289
    %6822 = vmatpush1.bf16.msra.mxu0 %v4288
    %6823 = vmatprep.subr.bf16.mxu0 %v4281
    %6824 = vmatpush1.bf16.msra.mxu0 %v4280
    %6825 = vmatprep.subr.bf16.mxu0 %v4273
    %6826 = vmatpush1.bf16.msra.mxu0 %v4272
    %6827 = vmatprep.subr.bf16.mxu0 %v4265
    %6828 = vmatpush1.bf16.msra.mxu0 %v4264
    %6829 = vmatprep.subr.bf16.mxu0 %v4257
    %6830 = vmatpush1.bf16.msra.mxu0 %v4256
    %6831 = vmatprep.subr.bf16.mxu0 %v4249
    %6832 = vmatpush1.bf16.msra.mxu0 %v4248
    %6833 = vmatprep.subr.bf16.mxu0 %v4369
    %6834 = vmatpush2.bf16.msra.mxu0 %v4368
    %6835 = vmatprep.subr.bf16.mxu0 %v4361
    %6836 = vmatpush2.bf16.msra.mxu0 %v4360
    %6837 = vmatprep.subr.bf16.mxu0 %v4353
    %6838 = vmatpush2.bf16.msra.mxu0 %v4352
    %6839 = vmatprep.subr.bf16.mxu0 %v4345
    %6840 = vmatpush2.bf16.msra.mxu0 %v4344
    %6841 = vmatprep.subr.bf16.mxu0 %v4337
    %6842 = vmatpush2.bf16.msra.mxu0 %v4336
    %6843 = vmatprep.subr.bf16.mxu0 %v4329
    %6844 = vmatpush2.bf16.msra.mxu0 %v4328
    %6845 = vmatprep.subr.bf16.mxu0 %v4321
    %6846 = vmatpush2.bf16.msra.mxu0 %v4320
    %6847 = vmatprep.subr.bf16.mxu0 %v4313
    %6848 = vmatpush2.bf16.msra.mxu0 %v4312
    %6849 = vmatprep.mubr.bf16.mxu0 %v103
    %6850 = vmatmul.mubr.bf16.gmra.mxu0 %v102
    %v6851 = vpop.f32.mrf.mxu0
    %v6852 = vadd.f32 %v6811, %v6851
    %v6853 = vpop.f32.mrf.mxu0
    %v6854 = vadd.f32 %v6813, %v6853
    %v6855 = vpop.f32.mrf.mxu0
    %v6856 = vpop.f32.mrf.mxu0
    %6857 = vdwg.mxu0
    %6858 = vmatprep.subr.bf16.mxu0 %v4433
    %6859 = vmatpush1.bf16.msra.mxu0 %v4432
    %6860 = vmatprep.subr.bf16.mxu0 %v4425
    %6861 = vmatpush1.bf16.msra.mxu0 %v4424
    %6862 = vmatprep.subr.bf16.mxu0 %v4417
    %6863 = vmatpush1.bf16.msra.mxu0 %v4416
    %6864 = vmatprep.subr.bf16.mxu0 %v4409
    %6865 = vmatpush1.bf16.msra.mxu0 %v4408
    %6866 = vmatprep.subr.bf16.mxu0 %v4401
    %6867 = vmatpush1.bf16.msra.mxu0 %v4400
    %6868 = vmatprep.subr.bf16.mxu0 %v4393
    %6869 = vmatpush1.bf16.msra.mxu0 %v4392
    %6870 = vmatprep.subr.bf16.mxu0 %v4385
    %6871 = vmatpush1.bf16.msra.mxu0 %v4384
    %6872 = vmatprep.subr.bf16.mxu0 %v4377
    %6873 = vmatpush1.bf16.msra.mxu0 %v4376
    %6874 = vmatprep.subr.bf16.mxu0 %v4497
    %6875 = vmatpush2.bf16.msra.mxu0 %v4496
    %6876 = vmatprep.subr.bf16.mxu0 %v4489
    %6877 = vmatpush2.bf16.msra.mxu0 %v4488
    %6878 = vmatprep.subr.bf16.mxu0 %v4481
    %6879 = vmatpush2.bf16.msra.mxu0 %v4480
    %6880 = vmatprep.subr.bf16.mxu0 %v4473
    %6881 = vmatpush2.bf16.msra.mxu0 %v4472
    %6882 = vmatprep.subr.bf16.mxu0 %v4465
    %6883 = vmatpush2.bf16.msra.mxu0 %v4464
    %6884 = vmatprep.subr.bf16.mxu0 %v4457
    %6885 = vmatpush2.bf16.msra.mxu0 %v4456
    %6886 = vmatprep.subr.bf16.mxu0 %v4449
    %6887 = vmatpush2.bf16.msra.mxu0 %v4448
    %6888 = vmatprep.subr.bf16.mxu0 %v4441
    %6889 = vmatpush2.bf16.msra.mxu0 %v4440
    %6890 = vmatprep.mubr.bf16.mxu0 %v105
    %6891 = vmatmul.mubr.bf16.gmra.mxu0 %v104
    %v6892 = vpop.f32.mrf.mxu0
    %v6893 = vadd.f32 %v6852, %v6892
    %v6894 = vpop.f32.mrf.mxu0
    %v6895 = vadd.f32 %v6854, %v6894
    %v6896 = vpop.f32.mrf.mxu0
    %v6897 = vpop.f32.mrf.mxu0
    %6898 = vdwg.mxu0
    %6899 = vmatprep.subr.bf16.mxu0 %v4561
    %6900 = vmatpush1.bf16.msra.mxu0 %v4560
    %6901 = vmatprep.subr.bf16.mxu0 %v4553
    %6902 = vmatpush1.bf16.msra.mxu0 %v4552
    %6903 = vmatprep.subr.bf16.mxu0 %v4545
    %6904 = vmatpush1.bf16.msra.mxu0 %v4544
    %6905 = vmatprep.subr.bf16.mxu0 %v4537
    %6906 = vmatpush1.bf16.msra.mxu0 %v4536
    %6907 = vmatprep.subr.bf16.mxu0 %v4529
    %6908 = vmatpush1.bf16.msra.mxu0 %v4528
    %6909 = vmatprep.subr.bf16.mxu0 %v4521
    %6910 = vmatpush1.bf16.msra.mxu0 %v4520
    %6911 = vmatprep.subr.bf16.mxu0 %v4513
    %6912 = vmatpush1.bf16.msra.mxu0 %v4512
    %6913 = vmatprep.subr.bf16.mxu0 %v4505
    %6914 = vmatpush1.bf16.msra.mxu0 %v4504
    %6915 = vmatprep.subr.bf16.mxu0 %v4625
    %6916 = vmatpush2.bf16.msra.mxu0 %v4624
    %6917 = vmatprep.subr.bf16.mxu0 %v4617
    %6918 = vmatpush2.bf16.msra.mxu0 %v4616
    %6919 = vmatprep.subr.bf16.mxu0 %v4609
    %6920 = vmatpush2.bf16.msra.mxu0 %v4608
    %6921 = vmatprep.subr.bf16.mxu0 %v4601
    %6922 = vmatpush2.bf16.msra.mxu0 %v4600
    %6923 = vmatprep.subr.bf16.mxu0 %v4593
    %6924 = vmatpush2.bf16.msra.mxu0 %v4592
    %6925 = vmatprep.subr.bf16.mxu0 %v4585
    %6926 = vmatpush2.bf16.msra.mxu0 %v4584
    %6927 = vmatprep.subr.bf16.mxu0 %v4577
    %6928 = vmatpush2.bf16.msra.mxu0 %v4576
    %6929 = vmatprep.subr.bf16.mxu0 %v4569
    %6930 = vmatpush2.bf16.msra.mxu0 %v4568
    %6931 = vmatprep.mubr.bf16.mxu0 %v107
    %6932 = vmatmul.mubr.bf16.gmra.mxu0 %v106
    %v6933 = vpop.f32.mrf.mxu0
    %v6934 = vadd.f32 %v6893, %v6933
    %v6935 = vpop.f32.mrf.mxu0
    %v6936 = vadd.f32 %v6895, %v6935
    %v6937 = vpop.f32.mrf.mxu0
    %v6938 = vpop.f32.mrf.mxu0
    %6939 = vdwg.mxu0
    %6940 = vmatprep.subr.bf16.mxu0 %v4689
    %6941 = vmatpush1.bf16.msra.mxu0 %v4688
    %6942 = vmatprep.subr.bf16.mxu0 %v4681
    %6943 = vmatpush1.bf16.msra.mxu0 %v4680
    %6944 = vmatprep.subr.bf16.mxu0 %v4673
    %6945 = vmatpush1.bf16.msra.mxu0 %v4672
    %6946 = vmatprep.subr.bf16.mxu0 %v4665
    %6947 = vmatpush1.bf16.msra.mxu0 %v4664
    %6948 = vmatprep.subr.bf16.mxu0 %v4657
    %6949 = vmatpush1.bf16.msra.mxu0 %v4656
    %6950 = vmatprep.subr.bf16.mxu0 %v4649
    %6951 = vmatpush1.bf16.msra.mxu0 %v4648
    %6952 = vmatprep.subr.bf16.mxu0 %v4641
    %6953 = vmatpush1.bf16.msra.mxu0 %v4640
    %6954 = vmatprep.subr.bf16.mxu0 %v4633
    %6955 = vmatpush1.bf16.msra.mxu0 %v4632
    %6956 = vmatprep.subr.bf16.mxu0 %v4753
    %6957 = vmatpush2.bf16.msra.mxu0 %v4752
    %6958 = vmatprep.subr.bf16.mxu0 %v4745
    %6959 = vmatpush2.bf16.msra.mxu0 %v4744
    %6960 = vmatprep.subr.bf16.mxu0 %v4737
    %6961 = vmatpush2.bf16.msra.mxu0 %v4736
    %6962 = vmatprep.subr.bf16.mxu0 %v4729
    %6963 = vmatpush2.bf16.msra.mxu0 %v4728
    %6964 = vmatprep.subr.bf16.mxu0 %v4721
    %6965 = vmatpush2.bf16.msra.mxu0 %v4720
    %6966 = vmatprep.subr.bf16.mxu0 %v4713
    %6967 = vmatpush2.bf16.msra.mxu0 %v4712
    %6968 = vmatprep.subr.bf16.mxu0 %v4705
    %6969 = vmatpush2.bf16.msra.mxu0 %v4704
    %6970 = vmatprep.subr.bf16.mxu0 %v4697
    %6971 = vmatpush2.bf16.msra.mxu0 %v4696
    %6972 = vmatprep.mubr.bf16.mxu0 %v109
    %6973 = vmatmul.mubr.bf16.gmra.mxu0 %v108
    %v6974 = vpop.f32.mrf.mxu0
    %v6975 = vadd.f32 %v6934, %v6974
    %v6976 = vpop.f32.mrf.mxu0
    %v6977 = vadd.f32 %v6936, %v6976
    %v6978 = vpop.f32.mrf.mxu0
    %v6979 = vpop.f32.mrf.mxu0
    %6980 = vdwg.mxu0
    %6981 = vmatprep.subr.bf16.mxu0 %v4817
    %6982 = vmatpush1.bf16.msra.mxu0 %v4816
    %6983 = vmatprep.subr.bf16.mxu0 %v4809
    %6984 = vmatpush1.bf16.msra.mxu0 %v4808
    %6985 = vmatprep.subr.bf16.mxu0 %v4801
    %6986 = vmatpush1.bf16.msra.mxu0 %v4800
    %6987 = vmatprep.subr.bf16.mxu0 %v4793
    %6988 = vmatpush1.bf16.msra.mxu0 %v4792
    %6989 = vmatprep.subr.bf16.mxu0 %v4785
    %6990 = vmatpush1.bf16.msra.mxu0 %v4784
    %6991 = vmatprep.subr.bf16.mxu0 %v4777
    %6992 = vmatpush1.bf16.msra.mxu0 %v4776
    %6993 = vmatprep.subr.bf16.mxu0 %v4769
    %6994 = vmatpush1.bf16.msra.mxu0 %v4768
    %6995 = vmatprep.subr.bf16.mxu0 %v4761
    %6996 = vmatpush1.bf16.msra.mxu0 %v4760
    %6997 = vmatprep.subr.bf16.mxu0 %v4881
    %6998 = vmatpush2.bf16.msra.mxu0 %v4880
    %6999 = vmatprep.subr.bf16.mxu0 %v4873
    %7000 = vmatpush2.bf16.msra.mxu0 %v4872
    %7001 = vmatprep.subr.bf16.mxu0 %v4865
    %7002 = vmatpush2.bf16.msra.mxu0 %v4864
    %7003 = vmatprep.subr.bf16.mxu0 %v4857
    %7004 = vmatpush2.bf16.msra.mxu0 %v4856
    %7005 = vmatprep.subr.bf16.mxu0 %v4849
    %7006 = vmatpush2.bf16.msra.mxu0 %v4848
    %7007 = vmatprep.subr.bf16.mxu0 %v4841
    %7008 = vmatpush2.bf16.msra.mxu0 %v4840
    %7009 = vmatprep.subr.bf16.mxu0 %v4833
    %7010 = vmatpush2.bf16.msra.mxu0 %v4832
    %7011 = vmatprep.subr.bf16.mxu0 %v4825
    %7012 = vmatpush2.bf16.msra.mxu0 %v4824
    %7013 = vmatprep.mubr.bf16.mxu0 %v111
    %7014 = vmatmul.mubr.bf16.gmra.mxu0 %v110
    %v7015 = vpop.f32.mrf.mxu0
    %v7016 = vadd.f32 %v6975, %v7015
    %v7017 = vpop.f32.mrf.mxu0
    %v7018 = vadd.f32 %v6977, %v7017
    %v7019 = vpop.f32.mrf.mxu0
    %v7020 = vpop.f32.mrf.mxu0
    %7021 = vdwg.mxu0
    %7022 = vmatprep.subr.bf16.mxu0 %v4945
    %7023 = vmatpush1.bf16.msra.mxu0 %v4944
    %7024 = vmatprep.subr.bf16.mxu0 %v4937
    %7025 = vmatpush1.bf16.msra.mxu0 %v4936
    %7026 = vmatprep.subr.bf16.mxu0 %v4929
    %7027 = vmatpush1.bf16.msra.mxu0 %v4928
    %7028 = vmatprep.subr.bf16.mxu0 %v4921
    %7029 = vmatpush1.bf16.msra.mxu0 %v4920
    %7030 = vmatprep.subr.bf16.mxu0 %v4913
    %7031 = vmatpush1.bf16.msra.mxu0 %v4912
    %7032 = vmatprep.subr.bf16.mxu0 %v4905
    %7033 = vmatpush1.bf16.msra.mxu0 %v4904
    %7034 = vmatprep.subr.bf16.mxu0 %v4897
    %7035 = vmatpush1.bf16.msra.mxu0 %v4896
    %7036 = vmatprep.subr.bf16.mxu0 %v4889
    %7037 = vmatpush1.bf16.msra.mxu0 %v4888
    %7038 = vmatprep.subr.bf16.mxu0 %v5009
    %7039 = vmatpush2.bf16.msra.mxu0 %v5008
    %7040 = vmatprep.subr.bf16.mxu0 %v5001
    %7041 = vmatpush2.bf16.msra.mxu0 %v5000
    %7042 = vmatprep.subr.bf16.mxu0 %v4993
    %7043 = vmatpush2.bf16.msra.mxu0 %v4992
    %7044 = vmatprep.subr.bf16.mxu0 %v4985
    %7045 = vmatpush2.bf16.msra.mxu0 %v4984
    %7046 = vmatprep.subr.bf16.mxu0 %v4977
    %7047 = vmatpush2.bf16.msra.mxu0 %v4976
    %7048 = vmatprep.subr.bf16.mxu0 %v4969
    %7049 = vmatpush2.bf16.msra.mxu0 %v4968
    %7050 = vmatprep.subr.bf16.mxu0 %v4961
    %7051 = vmatpush2.bf16.msra.mxu0 %v4960
    %7052 = vmatprep.subr.bf16.mxu0 %v4953
    %7053 = vmatpush2.bf16.msra.mxu0 %v4952
    %7054 = vmatprep.mubr.bf16.mxu0 %v113
    %7055 = vmatmul.mubr.bf16.gmra.mxu0 %v112
    %v7056 = vpop.f32.mrf.mxu0
    %v7057 = vadd.f32 %v7016, %v7056
    %v7058 = vpop.f32.mrf.mxu0
    %v7059 = vadd.f32 %v7018, %v7058
    %v7060 = vpop.f32.mrf.mxu0
    %v7061 = vpop.f32.mrf.mxu0
    %7062 = vdwg.mxu0
    %7063 = vmatprep.subr.bf16.mxu0 %v5073
    %7064 = vmatpush1.bf16.msra.mxu0 %v5072
    %7065 = vmatprep.subr.bf16.mxu0 %v5065
    %7066 = vmatpush1.bf16.msra.mxu0 %v5064
    %7067 = vmatprep.subr.bf16.mxu0 %v5057
    %7068 = vmatpush1.bf16.msra.mxu0 %v5056
    %7069 = vmatprep.subr.bf16.mxu0 %v5049
    %7070 = vmatpush1.bf16.msra.mxu0 %v5048
    %7071 = vmatprep.subr.bf16.mxu0 %v5041
    %7072 = vmatpush1.bf16.msra.mxu0 %v5040
    %7073 = vmatprep.subr.bf16.mxu0 %v5033
    %7074 = vmatpush1.bf16.msra.mxu0 %v5032
    %7075 = vmatprep.subr.bf16.mxu0 %v5025
    %7076 = vmatpush1.bf16.msra.mxu0 %v5024
    %7077 = vmatprep.subr.bf16.mxu0 %v5017
    %7078 = vmatpush1.bf16.msra.mxu0 %v5016
    %7079 = vmatprep.subr.bf16.mxu0 0
    %7080 = vmatpush2.bf16.msra.mxu0 0
    %7081 = vmatprep.subr.bf16.mxu0 0
    %7082 = vmatpush2.bf16.msra.mxu0 0
    %7083 = vmatprep.subr.bf16.mxu0 0
    %7084 = vmatpush2.bf16.msra.mxu0 0
    %7085 = vmatprep.subr.bf16.mxu0 %v5113
    %7086 = vmatpush2.bf16.msra.mxu0 %v5112
    %7087 = vmatprep.subr.bf16.mxu0 %v5105
    %7088 = vmatpush2.bf16.msra.mxu0 %v5104
    %7089 = vmatprep.subr.bf16.mxu0 %v5097
    %7090 = vmatpush2.bf16.msra.mxu0 %v5096
    %7091 = vmatprep.subr.bf16.mxu0 %v5089
    %7092 = vmatpush2.bf16.msra.mxu0 %v5088
    %7093 = vmatprep.subr.bf16.mxu0 %v5081
    %7094 = vmatpush2.bf16.msra.mxu0 %v5080
    %7095 = vmatprep.mubr.bf16.mxu0 %v6118
    %7096 = vmatmul.mubr.bf16.gmra.mxu0 %v114
    %v7097 = vpop.f32.mrf.mxu0
    %v7098 = vadd.f32 %v7057, %v7097
    %v7099 = vpop.f32.mrf.mxu0
    %v7100 = vadd.f32 %v7059, %v7099
    %v7101 = vpop.f32.mrf.mxu0
    %v7102 = vpop.f32.mrf.mxu0
    %7103 = vdwg.mxu0
    %7104 = vmatprep.subr.bf16.mxu0 %v4179
    %7105 = vmatpush1.bf16.msra.mxu0 %v4178
    %7106 = vmatprep.subr.bf16.mxu0 %v4171
    %7107 = vmatpush1.bf16.msra.mxu0 %v4170
    %7108 = vmatprep.subr.bf16.mxu0 %v4163
    %7109 = vmatpush1.bf16.msra.mxu0 %v4162
    %7110 = vmatprep.subr.bf16.mxu0 %v4155
    %7111 = vmatpush1.bf16.msra.mxu0 %v4154
    %7112 = vmatprep.subr.bf16.mxu0 %v4147
    %7113 = vmatpush1.bf16.msra.mxu0 %v4146
    %7114 = vmatprep.subr.bf16.mxu0 %v4139
    %7115 = vmatpush1.bf16.msra.mxu0 %v4138
    %7116 = vmatprep.subr.bf16.mxu0 %v4131
    %7117 = vmatpush1.bf16.msra.mxu0 %v4130
    %7118 = vmatprep.subr.bf16.mxu0 %v4123
    %7119 = vmatpush1.bf16.msra.mxu0 %v4122
    %7120 = vmatprep.subr.bf16.mxu0 %v4243
    %7121 = vmatpush2.bf16.msra.mxu0 %v4242
    %7122 = vmatprep.subr.bf16.mxu0 %v4235
    %7123 = vmatpush2.bf16.msra.mxu0 %v4234
    %7124 = vmatprep.subr.bf16.mxu0 %v4227
    %7125 = vmatpush2.bf16.msra.mxu0 %v4226
    %7126 = vmatprep.subr.bf16.mxu0 %v4219
    %7127 = vmatpush2.bf16.msra.mxu0 %v4218
    %7128 = vmatprep.subr.bf16.mxu0 %v4211
    %7129 = vmatpush2.bf16.msra.mxu0 %v4210
    %7130 = vmatprep.subr.bf16.mxu0 %v4203
    %7131 = vmatpush2.bf16.msra.mxu0 %v4202
    %7132 = vmatprep.subr.bf16.mxu0 %v4195
    %7133 = vmatpush2.bf16.msra.mxu0 %v4194
    %7134 = vmatprep.subr.bf16.mxu0 %v4187
    %7135 = vmatpush2.bf16.msra.mxu0 %v4186
    %7136 = vmatprep.mubr.bf16.mxu0 %v101
    %7137 = vmatmul.mubr.bf16.gmra.mxu0 %v100
    %v7138 = vpop.f32.mrf.mxu0
    %v7139 = vadd.f32 0.0, %v7138
    %v7140 = vpop.f32.mrf.mxu0
    %v7141 = vadd.f32 0.0, %v7140
    %v7142 = vpop.f32.mrf.mxu0
    %v7143 = vpop.f32.mrf.mxu0
    %7144 = vdwg.mxu0
    %7145 = vmatprep.subr.bf16.mxu0 %v4307
    %7146 = vmatpush1.bf16.msra.mxu0 %v4306
    %7147 = vmatprep.subr.bf16.mxu0 %v4299
    %7148 = vmatpush1.bf16.msra.mxu0 %v4298
    %7149 = vmatprep.subr.bf16.mxu0 %v4291
    %7150 = vmatpush1.bf16.msra.mxu0 %v4290
    %7151 = vmatprep.subr.bf16.mxu0 %v4283
    %7152 = vmatpush1.bf16.msra.mxu0 %v4282
    %7153 = vmatprep.subr.bf16.mxu0 %v4275
    %7154 = vmatpush1.bf16.msra.mxu0 %v4274
    %7155 = vmatprep.subr.bf16.mxu0 %v4267
    %7156 = vmatpush1.bf16.msra.mxu0 %v4266
    %7157 = vmatprep.subr.bf16.mxu0 %v4259
    %7158 = vmatpush1.bf16.msra.mxu0 %v4258
    %7159 = vmatprep.subr.bf16.mxu0 %v4251
    %7160 = vmatpush1.bf16.msra.mxu0 %v4250
    %7161 = vmatprep.subr.bf16.mxu0 %v4371
    %7162 = vmatpush2.bf16.msra.mxu0 %v4370
    %7163 = vmatprep.subr.bf16.mxu0 %v4363
    %7164 = vmatpush2.bf16.msra.mxu0 %v4362
    %7165 = vmatprep.subr.bf16.mxu0 %v4355
    %7166 = vmatpush2.bf16.msra.mxu0 %v4354
    %7167 = vmatprep.subr.bf16.mxu0 %v4347
    %7168 = vmatpush2.bf16.msra.mxu0 %v4346
    %7169 = vmatprep.subr.bf16.mxu0 %v4339
    %7170 = vmatpush2.bf16.msra.mxu0 %v4338
    %7171 = vmatprep.subr.bf16.mxu0 %v4331
    %7172 = vmatpush2.bf16.msra.mxu0 %v4330
    %7173 = vmatprep.subr.bf16.mxu0 %v4323
    %7174 = vmatpush2.bf16.msra.mxu0 %v4322
    %7175 = vmatprep.subr.bf16.mxu0 %v4315
    %7176 = vmatpush2.bf16.msra.mxu0 %v4314
    %7177 = vmatprep.mubr.bf16.mxu0 %v103
    %7178 = vmatmul.mubr.bf16.gmra.mxu0 %v102
    %v7179 = vpop.f32.mrf.mxu0
    %v7180 = vadd.f32 %v7139, %v7179
    %v7181 = vpop.f32.mrf.mxu0
    %v7182 = vadd.f32 %v7141, %v7181
    %v7183 = vpop.f32.mrf.mxu0
    %v7184 = vpop.f32.mrf.mxu0
    %7185 = vdwg.mxu0
    %7186 = vmatprep.subr.bf16.mxu0 %v4435
    %7187 = vmatpush1.bf16.msra.mxu0 %v4434
    %7188 = vmatprep.subr.bf16.mxu0 %v4427
    %7189 = vmatpush1.bf16.msra.mxu0 %v4426
    %7190 = vmatprep.subr.bf16.mxu0 %v4419
    %7191 = vmatpush1.bf16.msra.mxu0 %v4418
    %7192 = vmatprep.subr.bf16.mxu0 %v4411
    %7193 = vmatpush1.bf16.msra.mxu0 %v4410
    %7194 = vmatprep.subr.bf16.mxu0 %v4403
    %7195 = vmatpush1.bf16.msra.mxu0 %v4402
    %7196 = vmatprep.subr.bf16.mxu0 %v4395
    %7197 = vmatpush1.bf16.msra.mxu0 %v4394
    %7198 = vmatprep.subr.bf16.mxu0 %v4387
    %7199 = vmatpush1.bf16.msra.mxu0 %v4386
    %7200 = vmatprep.subr.bf16.mxu0 %v4379
    %7201 = vmatpush1.bf16.msra.mxu0 %v4378
    %7202 = vmatprep.subr.bf16.mxu0 %v4499
    %7203 = vmatpush2.bf16.msra.mxu0 %v4498
    %7204 = vmatprep.subr.bf16.mxu0 %v4491
    %7205 = vmatpush2.bf16.msra.mxu0 %v4490
    %7206 = vmatprep.subr.bf16.mxu0 %v4483
    %7207 = vmatpush2.bf16.msra.mxu0 %v4482
    %7208 = vmatprep.subr.bf16.mxu0 %v4475
    %7209 = vmatpush2.bf16.msra.mxu0 %v4474
    %7210 = vmatprep.subr.bf16.mxu0 %v4467
    %7211 = vmatpush2.bf16.msra.mxu0 %v4466
    %7212 = vmatprep.subr.bf16.mxu0 %v4459
    %7213 = vmatpush2.bf16.msra.mxu0 %v4458
    %7214 = vmatprep.subr.bf16.mxu0 %v4451
    %7215 = vmatpush2.bf16.msra.mxu0 %v4450
    %7216 = vmatprep.subr.bf16.mxu0 %v4443
    %7217 = vmatpush2.bf16.msra.mxu0 %v4442
    %7218 = vmatprep.mubr.bf16.mxu0 %v105
    %7219 = vmatmul.mubr.bf16.gmra.mxu0 %v104
    %v7220 = vpop.f32.mrf.mxu0
    %v7221 = vadd.f32 %v7180, %v7220
    %v7222 = vpop.f32.mrf.mxu0
    %v7223 = vadd.f32 %v7182, %v7222
    %v7224 = vpop.f32.mrf.mxu0
    %v7225 = vpop.f32.mrf.mxu0
    %7226 = vdwg.mxu0
    %7227 = vmatprep.subr.bf16.mxu0 %v4563
    %7228 = vmatpush1.bf16.msra.mxu0 %v4562
    %7229 = vmatprep.subr.bf16.mxu0 %v4555
    %7230 = vmatpush1.bf16.msra.mxu0 %v4554
    %7231 = vmatprep.subr.bf16.mxu0 %v4547
    %7232 = vmatpush1.bf16.msra.mxu0 %v4546
    %7233 = vmatprep.subr.bf16.mxu0 %v4539
    %7234 = vmatpush1.bf16.msra.mxu0 %v4538
    %7235 = vmatprep.subr.bf16.mxu0 %v4531
    %7236 = vmatpush1.bf16.msra.mxu0 %v4530
    %7237 = vmatprep.subr.bf16.mxu0 %v4523
    %7238 = vmatpush1.bf16.msra.mxu0 %v4522
    %7239 = vmatprep.subr.bf16.mxu0 %v4515
    %7240 = vmatpush1.bf16.msra.mxu0 %v4514
    %7241 = vmatprep.subr.bf16.mxu0 %v4507
    %7242 = vmatpush1.bf16.msra.mxu0 %v4506
    %7243 = vmatprep.subr.bf16.mxu0 %v4627
    %7244 = vmatpush2.bf16.msra.mxu0 %v4626
    %7245 = vmatprep.subr.bf16.mxu0 %v4619
    %7246 = vmatpush2.bf16.msra.mxu0 %v4618
    %7247 = vmatprep.subr.bf16.mxu0 %v4611
    %7248 = vmatpush2.bf16.msra.mxu0 %v4610
    %7249 = vmatprep.subr.bf16.mxu0 %v4603
    %7250 = vmatpush2.bf16.msra.mxu0 %v4602
    %7251 = vmatprep.subr.bf16.mxu0 %v4595
    %7252 = vmatpush2.bf16.msra.mxu0 %v4594
    %7253 = vmatprep.subr.bf16.mxu0 %v4587
    %7254 = vmatpush2.bf16.msra.mxu0 %v4586
    %7255 = vmatprep.subr.bf16.mxu0 %v4579
    %7256 = vmatpush2.bf16.msra.mxu0 %v4578
    %7257 = vmatprep.subr.bf16.mxu0 %v4571
    %7258 = vmatpush2.bf16.msra.mxu0 %v4570
    %7259 = vmatprep.mubr.bf16.mxu0 %v107
    %7260 = vmatmul.mubr.bf16.gmra.mxu0 %v106
    %v7261 = vpop.f32.mrf.mxu0
    %v7262 = vadd.f32 %v7221, %v7261
    %v7263 = vpop.f32.mrf.mxu0
    %v7264 = vadd.f32 %v7223, %v7263
    %v7265 = vpop.f32.mrf.mxu0
    %v7266 = vpop.f32.mrf.mxu0
    %7267 = vdwg.mxu0
    %7268 = vmatprep.subr.bf16.mxu0 %v4691
    %7269 = vmatpush1.bf16.msra.mxu0 %v4690
    %7270 = vmatprep.subr.bf16.mxu0 %v4683
    %7271 = vmatpush1.bf16.msra.mxu0 %v4682
    %7272 = vmatprep.subr.bf16.mxu0 %v4675
    %7273 = vmatpush1.bf16.msra.mxu0 %v4674
    %7274 = vmatprep.subr.bf16.mxu0 %v4667
    %7275 = vmatpush1.bf16.msra.mxu0 %v4666
    %7276 = vmatprep.subr.bf16.mxu0 %v4659
    %7277 = vmatpush1.bf16.msra.mxu0 %v4658
    %7278 = vmatprep.subr.bf16.mxu0 %v4651
    %7279 = vmatpush1.bf16.msra.mxu0 %v4650
    %7280 = vmatprep.subr.bf16.mxu0 %v4643
    %7281 = vmatpush1.bf16.msra.mxu0 %v4642
    %7282 = vmatprep.subr.bf16.mxu0 %v4635
    %7283 = vmatpush1.bf16.msra.mxu0 %v4634
    %7284 = vmatprep.subr.bf16.mxu0 %v4755
    %7285 = vmatpush2.bf16.msra.mxu0 %v4754
    %7286 = vmatprep.subr.bf16.mxu0 %v4747
    %7287 = vmatpush2.bf16.msra.mxu0 %v4746
    %7288 = vmatprep.subr.bf16.mxu0 %v4739
    %7289 = vmatpush2.bf16.msra.mxu0 %v4738
    %7290 = vmatprep.subr.bf16.mxu0 %v4731
    %7291 = vmatpush2.bf16.msra.mxu0 %v4730
    %7292 = vmatprep.subr.bf16.mxu0 %v4723
    %7293 = vmatpush2.bf16.msra.mxu0 %v4722
    %7294 = vmatprep.subr.bf16.mxu0 %v4715
    %7295 = vmatpush2.bf16.msra.mxu0 %v4714
    %7296 = vmatprep.subr.bf16.mxu0 %v4707
    %7297 = vmatpush2.bf16.msra.mxu0 %v4706
    %7298 = vmatprep.subr.bf16.mxu0 %v4699
    %7299 = vmatpush2.bf16.msra.mxu0 %v4698
    %7300 = vmatprep.mubr.bf16.mxu0 %v109
    %7301 = vmatmul.mubr.bf16.gmra.mxu0 %v108
    %v7302 = vpop.f32.mrf.mxu0
    %v7303 = vadd.f32 %v7262, %v7302
    %v7304 = vpop.f32.mrf.mxu0
    %v7305 = vadd.f32 %v7264, %v7304
    %v7306 = vpop.f32.mrf.mxu0
    %v7307 = vpop.f32.mrf.mxu0
    %7308 = vdwg.mxu0
    %7309 = vmatprep.subr.bf16.mxu0 %v4819
    %7310 = vmatpush1.bf16.msra.mxu0 %v4818
    %7311 = vmatprep.subr.bf16.mxu0 %v4811
    %7312 = vmatpush1.bf16.msra.mxu0 %v4810
    %7313 = vmatprep.subr.bf16.mxu0 %v4803
    %7314 = vmatpush1.bf16.msra.mxu0 %v4802
    %7315 = vmatprep.subr.bf16.mxu0 %v4795
    %7316 = vmatpush1.bf16.msra.mxu0 %v4794
    %7317 = vmatprep.subr.bf16.mxu0 %v4787
    %7318 = vmatpush1.bf16.msra.mxu0 %v4786
    %7319 = vmatprep.subr.bf16.mxu0 %v4779
    %7320 = vmatpush1.bf16.msra.mxu0 %v4778
    %7321 = vmatprep.subr.bf16.mxu0 %v4771
    %7322 = vmatpush1.bf16.msra.mxu0 %v4770
    %7323 = vmatprep.subr.bf16.mxu0 %v4763
    %7324 = vmatpush1.bf16.msra.mxu0 %v4762
    %7325 = vmatprep.subr.bf16.mxu0 %v4883
    %7326 = vmatpush2.bf16.msra.mxu0 %v4882
    %7327 = vmatprep.subr.bf16.mxu0 %v4875
    %7328 = vmatpush2.bf16.msra.mxu0 %v4874
    %7329 = vmatprep.subr.bf16.mxu0 %v4867
    %7330 = vmatpush2.bf16.msra.mxu0 %v4866
    %7331 = vmatprep.subr.bf16.mxu0 %v4859
    %7332 = vmatpush2.bf16.msra.mxu0 %v4858
    %7333 = vmatprep.subr.bf16.mxu0 %v4851
    %7334 = vmatpush2.bf16.msra.mxu0 %v4850
    %7335 = vmatprep.subr.bf16.mxu0 %v4843
    %7336 = vmatpush2.bf16.msra.mxu0 %v4842
    %7337 = vmatprep.subr.bf16.mxu0 %v4835
    %7338 = vmatpush2.bf16.msra.mxu0 %v4834
    %7339 = vmatprep.subr.bf16.mxu0 %v4827
    %7340 = vmatpush2.bf16.msra.mxu0 %v4826
    %7341 = vmatprep.mubr.bf16.mxu0 %v111
    %7342 = vmatmul.mubr.bf16.gmra.mxu0 %v110
    %v7343 = vpop.f32.mrf.mxu0
    %v7344 = vadd.f32 %v7303, %v7343
    %v7345 = vpop.f32.mrf.mxu0
    %v7346 = vadd.f32 %v7305, %v7345
    %v7347 = vpop.f32.mrf.mxu0
    %v7348 = vpop.f32.mrf.mxu0
    %7349 = vdwg.mxu0
    %7350 = vmatprep.subr.bf16.mxu0 %v4947
    %7351 = vmatpush1.bf16.msra.mxu0 %v4946
    %7352 = vmatprep.subr.bf16.mxu0 %v4939
    %7353 = vmatpush1.bf16.msra.mxu0 %v4938
    %7354 = vmatprep.subr.bf16.mxu0 %v4931
    %7355 = vmatpush1.bf16.msra.mxu0 %v4930
    %7356 = vmatprep.subr.bf16.mxu0 %v4923
    %7357 = vmatpush1.bf16.msra.mxu0 %v4922
    %7358 = vmatprep.subr.bf16.mxu0 %v4915
    %7359 = vmatpush1.bf16.msra.mxu0 %v4914
    %7360 = vmatprep.subr.bf16.mxu0 %v4907
    %7361 = vmatpush1.bf16.msra.mxu0 %v4906
    %7362 = vmatprep.subr.bf16.mxu0 %v4899
    %7363 = vmatpush1.bf16.msra.mxu0 %v4898
    %7364 = vmatprep.subr.bf16.mxu0 %v4891
    %7365 = vmatpush1.bf16.msra.mxu0 %v4890
    %7366 = vmatprep.subr.bf16.mxu0 %v5011
    %7367 = vmatpush2.bf16.msra.mxu0 %v5010
    %7368 = vmatprep.subr.bf16.mxu0 %v5003
    %7369 = vmatpush2.bf16.msra.mxu0 %v5002
    %7370 = vmatprep.subr.bf16.mxu0 %v4995
    %7371 = vmatpush2.bf16.msra.mxu0 %v4994
    %7372 = vmatprep.subr.bf16.mxu0 %v4987
    %7373 = vmatpush2.bf16.msra.mxu0 %v4986
    %7374 = vmatprep.subr.bf16.mxu0 %v4979
    %7375 = vmatpush2.bf16.msra.mxu0 %v4978
    %7376 = vmatprep.subr.bf16.mxu0 %v4971
    %7377 = vmatpush2.bf16.msra.mxu0 %v4970
    %7378 = vmatprep.subr.bf16.mxu0 %v4963
    %7379 = vmatpush2.bf16.msra.mxu0 %v4962
    %7380 = vmatprep.subr.bf16.mxu0 %v4955
    %7381 = vmatpush2.bf16.msra.mxu0 %v4954
    %7382 = vmatprep.mubr.bf16.mxu0 %v113
    %7383 = vmatmul.mubr.bf16.gmra.mxu0 %v112
    %v7384 = vpop.f32.mrf.mxu0
    %v7385 = vadd.f32 %v7344, %v7384
    %v7386 = vpop.f32.mrf.mxu0
    %v7387 = vadd.f32 %v7346, %v7386
    %v7388 = vpop.f32.mrf.mxu0
    %v7389 = vpop.f32.mrf.mxu0
    %7390 = vdwg.mxu0
    %7391 = vmatprep.subr.bf16.mxu0 %v5075
    %7392 = vmatpush1.bf16.msra.mxu0 %v5074
    %7393 = vmatprep.subr.bf16.mxu0 %v5067
    %7394 = vmatpush1.bf16.msra.mxu0 %v5066
    %7395 = vmatprep.subr.bf16.mxu0 %v5059
    %7396 = vmatpush1.bf16.msra.mxu0 %v5058
    %7397 = vmatprep.subr.bf16.mxu0 %v5051
    %7398 = vmatpush1.bf16.msra.mxu0 %v5050
    %7399 = vmatprep.subr.bf16.mxu0 %v5043
    %7400 = vmatpush1.bf16.msra.mxu0 %v5042
    %7401 = vmatprep.subr.bf16.mxu0 %v5035
    %7402 = vmatpush1.bf16.msra.mxu0 %v5034
    %7403 = vmatprep.subr.bf16.mxu0 %v5027
    %7404 = vmatpush1.bf16.msra.mxu0 %v5026
    %7405 = vmatprep.subr.bf16.mxu0 %v5019
    %7406 = vmatpush1.bf16.msra.mxu0 %v5018
    %7407 = vmatprep.subr.bf16.mxu0 0
    %7408 = vmatpush2.bf16.msra.mxu0 0
    %7409 = vmatprep.subr.bf16.mxu0 0
    %7410 = vmatpush2.bf16.msra.mxu0 0
    %7411 = vmatprep.subr.bf16.mxu0 0
    %7412 = vmatpush2.bf16.msra.mxu0 0
    %7413 = vmatprep.subr.bf16.mxu0 %v5115
    %7414 = vmatpush2.bf16.msra.mxu0 %v5114
    %7415 = vmatprep.subr.bf16.mxu0 %v5107
    %7416 = vmatpush2.bf16.msra.mxu0 %v5106
    %7417 = vmatprep.subr.bf16.mxu0 %v5099
    %7418 = vmatpush2.bf16.msra.mxu0 %v5098
    %7419 = vmatprep.subr.bf16.mxu0 %v5091
    %7420 = vmatpush2.bf16.msra.mxu0 %v5090
    %7421 = vmatprep.subr.bf16.mxu0 %v5083
    %7422 = vmatpush2.bf16.msra.mxu0 %v5082
    %7423 = vmatprep.mubr.bf16.mxu0 %v6118
    %7424 = vmatmul.mubr.bf16.gmra.mxu0 %v114
    %v7425 = vpop.f32.mrf.mxu0
    %v7426 = vadd.f32 %v7385, %v7425
    %v7427 = vpop.f32.mrf.mxu0
    %v7428 = vadd.f32 %v7387, %v7427
    %v7429 = vpop.f32.mrf.mxu0
    %v7430 = vpop.f32.mrf.mxu0
    %7431 = vdwg.mxu0
    %v7432 = vpack.c.bf16 %v6442, %v6442
    %v7433 = vpack.c.bf16 %v6444, %v6444
    %v7434 = vpack.c.bf16 %v6770, %v6770
    %v7435 = vpack.c.bf16 %v6772, %v6772
    %v7436 = vpack.c.bf16 %v7098, %v7098
    %v7437 = vpack.c.bf16 %v7100, %v7100
    %v7438 = vpack.c.bf16 %v7426, %v7426
    %v7439 = vpack.c.bf16 %v7428, %v7428
    %v7440 = vld [vmem:[#allocation7] sm:$0xff]
    %v7442 = vcombine.high %v7440, %v7440
    %v7444 = vunpack.c.l.s4 1966171168
    %v7445 = vunpack.c.0.s8 %v7444
    %v7446 = vlaneseq
    %v7447 = vshrl.u32 %v7446, 7
    %v7448 = vsub.s32 %v7445, %v7447
    %v7449 = vrot.slane %v7440, %v7448
    %v7451 = vunpack.c.l.s4 1966171168
    %v7452 = vunpack.c.0.s8 %v7451
    %v7453 = vlaneseq
    %v7454 = vshrl.u32 %v7453, 7
    %v7455 = vsub.s32 %v7452, %v7454
    %v7456 = vrot.slane %v7442, %v7455
    %v7457 = vcombine.high %v7449, %v7449
    %v7458 = vcombine.high %v7456, %v7456
    %v7460 = vunpack.c.l.s4 1966171168
    %v7461 = vunpack.c.0.s8 %v7460
    %v7462 = vlaneseq
    %v7463 = vshrl.u32 %v7462, 7
    %v7464 = vsub.s32 %v7461, %v7463
    %v7465 = vrot.slane %v7449, %v7464
    %v7467 = vunpack.c.l.s4 1966171168
    %v7468 = vunpack.c.0.s8 %v7467
    %v7469 = vlaneseq
    %v7470 = vshrl.u32 %v7469, 7
    %v7471 = vsub.s32 %v7468, %v7470
    %v7472 = vrot.slane %v7456, %v7471
    %v7474 = vunpack.c.l.s4 1966171168
    %v7475 = vunpack.c.0.s8 %v7474
    %v7476 = vlaneseq
    %v7477 = vshrl.u32 %v7476, 7
    %v7478 = vsub.s32 %v7475, %v7477
    %v7479 = vrot.slane %v7457, %v7478
    %v7481 = vunpack.c.l.s4 1966171168
    %v7482 = vunpack.c.0.s8 %v7481
    %v7483 = vlaneseq
    %v7484 = vshrl.u32 %v7483, 7
    %v7485 = vsub.s32 %v7482, %v7484
    %v7486 = vrot.slane %v7458, %v7485
    %v7487 = vcombine.high %v7465, %v7465
    %v7488 = vcombine.high %v7472, %v7472
    %v7489 = vcombine.high %v7479, %v7479
    %v7490 = vcombine.high %v7486, %v7486
    %v7492 = vpack.i.b16 %v7465, %v7465
    %v7494 = vlaneseq
    %v7495 = vshrl.u32 %v7494, 7
    %v7496 = vsub.s32 0, %v7495
    %v7497 = vrot.slane %v7492, %v7496
    %v7499 = vpack.i.b16 %v7479, %v7479
    %v7501 = vlaneseq
    %v7502 = vshrl.u32 %v7501, 7
    %v7503 = vsub.s32 0, %v7502
    %v7504 = vrot.slane %v7499, %v7503
    %v7506 = vpack.i.b16 %v7487, %v7487
    %v7508 = vlaneseq
    %v7509 = vshrl.u32 %v7508, 7
    %v7510 = vsub.s32 0, %v7509
    %v7511 = vrot.slane %v7506, %v7510
    %v7513 = vpack.i.b16 %v7489, %v7489
    %v7515 = vlaneseq
    %v7516 = vshrl.u32 %v7515, 7
    %v7517 = vsub.s32 0, %v7516
    %v7518 = vrot.slane %v7513, %v7517
    %v7520 = vpack.i.b16 %v7472, %v7472
    %v7522 = vlaneseq
    %v7523 = vshrl.u32 %v7522, 7
    %v7524 = vsub.s32 0, %v7523
    %v7525 = vrot.slane %v7520, %v7524
    %v7527 = vpack.i.b16 %v7486, %v7486
    %v7529 = vlaneseq
    %v7530 = vshrl.u32 %v7529, 7
    %v7531 = vsub.s32 0, %v7530
    %v7532 = vrot.slane %v7527, %v7531
    %v7534 = vpack.i.b16 %v7488, %v7488
    %v7536 = vlaneseq
    %v7537 = vshrl.u32 %v7536, 7
    %v7538 = vsub.s32 0, %v7537
    %v7539 = vrot.slane %v7534, %v7538
    %v7541 = vpack.i.b16 %v7490, %v7490
    %v7543 = vlaneseq
    %v7544 = vshrl.u32 %v7543, 7
    %v7545 = vsub.s32 0, %v7544
    %v7546 = vrot.slane %v7541, %v7545
    %v7547 = vadd.bf16 %v7432, %v7497
    %v7548 = vadd.bf16 %v7433, %v7504
    %v7549 = vadd.bf16 %v7434, %v7511
    %v7550 = vadd.bf16 %v7435, %v7518
    %v7551 = vadd.bf16 %v7436, %v7525
    %v7552 = vadd.bf16 %v7437, %v7532
    %v7553 = vadd.bf16 %v7438, %v7539
    %v7554 = vadd.bf16 %v7439, %v7546
    %v7555 = vmax.bf16 %v7547, 0
    %v7556 = vmax.bf16 %v7548, 0
    %v7557 = vmax.bf16 %v7549, 0
    %v7558 = vmax.bf16 %v7550, 0
    %v7559 = vmax.bf16 %v7551, 0
    %v7560 = vmax.bf16 %v7552, 0
    %v7561 = vmax.bf16 %v7553, 0
    %v7562 = vmax.bf16 %v7554, 0
    %v7563 = vld [vmem:[#allocation8] sm:$0xf]
    %v7564 = vld [vmem:[#allocation8 + $0x4] sm:$0xf]
    %v7565 = vld [vmem:[#allocation8 + $0x8] sm:$0xf]
    %v7566 = vld [vmem:[#allocation8 + $0xc] sm:$0xf]
    %v7567 = vld [vmem:[#allocation8 + $0x10] sm:$0xf]
    %v7568 = vld [vmem:[#allocation8 + $0x14] sm:$0xf]
    %v7569 = vld [vmem:[#allocation8 + $0x18] sm:$0xf]
    %v7570 = vld [vmem:[#allocation8 + $0x1c] sm:$0xf]
    %v7571 = vld [vmem:[#allocation8 + $0x20] sm:$0xf]
    %v7572 = vld [vmem:[#allocation8 + $0x24] sm:$0xf]
    %v7573 = vld [vmem:[#allocation8 + $0x28] sm:$0xf]
    %v7574 = vld [vmem:[#allocation8 + $0x2c] sm:$0xf]
    %v7575 = vld [vmem:[#allocation8 + $0x30] sm:$0xf]
    %v7576 = vld [vmem:[#allocation8 + $0x34] sm:$0xf]
    %v7577 = vld [vmem:[#allocation8 + $0x38] sm:$0xf]
    %v7578 = vld [vmem:[#allocation8 + $0x3c] sm:$0xf]
    %v7579 = vld [vmem:[#allocation8 + $0x40] sm:$0xf]
    %v7580 = vld [vmem:[#allocation8 + $0x44] sm:$0xf]
    %v7581 = vld [vmem:[#allocation8 + $0x48] sm:$0xf]
    %v7582 = vld [vmem:[#allocation8 + $0x4c] sm:$0xf]
    %v7583 = vld [vmem:[#allocation8 + $0x50] sm:$0xf]
    %v7584 = vld [vmem:[#allocation8 + $0x54] sm:$0xf]
    %v7585 = vld [vmem:[#allocation8 + $0x58] sm:$0xf]
    %v7586 = vld [vmem:[#allocation8 + $0x5c] sm:$0xf]
    %v7587 = vld [vmem:[#allocation8 + $0x60] sm:$0xf]
    %v7588 = vld [vmem:[#allocation8 + $0x64] sm:$0xf]
    %v7589 = vld [vmem:[#allocation8 + $0x68] sm:$0xf]
    %v7590 = vld [vmem:[#allocation8 + $0x6c] sm:$0xf]
    %v7591 = vld [vmem:[#allocation8 + $0x70] sm:$0xf]
    %v7592 = vld [vmem:[#allocation8 + $0x74] sm:$0xf]
    %v7593 = vld [vmem:[#allocation8 + $0x78] sm:$0xf]
    %v7594 = vld [vmem:[#allocation8 + $0x7c] sm:$0xf]
    %v7595 = vld [vmem:[#allocation8 + $0x80] sm:$0xf]
    %v7596 = vld [vmem:[#allocation8 + $0x84] sm:$0xf]
    %v7597 = vld [vmem:[#allocation8 + $0x88] sm:$0xf]
    %v7598 = vld [vmem:[#allocation8 + $0x8c] sm:$0xf]
    %v7599 = vld [vmem:[#allocation8 + $0x90] sm:$0xf]
    %v7600 = vld [vmem:[#allocation8 + $0x94] sm:$0xf]
    %v7601 = vld [vmem:[#allocation8 + $0x98] sm:$0xf]
    %v7602 = vld [vmem:[#allocation8 + $0x9c] sm:$0xf]
    %v7603 = vld [vmem:[#allocation8 + $0xa0] sm:$0xf]
    %v7604 = vld [vmem:[#allocation8 + $0xa4] sm:$0xf]
    %v7605 = vld [vmem:[#allocation8 + $0xa8] sm:$0xf]
    %v7606 = vld [vmem:[#allocation8 + $0xac] sm:$0xf]
    %v7607 = vld [vmem:[#allocation8 + $0xb0] sm:$0xf]
    %v7608 = vld [vmem:[#allocation8 + $0xb4] sm:$0xf]
    %v7609 = vld [vmem:[#allocation8 + $0xb8] sm:$0xf]
    %v7610 = vld [vmem:[#allocation8 + $0xbc] sm:$0xf]
    %v7611 = vld [vmem:[#allocation8 + $0xc0] sm:$0xf]
    %v7612 = vld [vmem:[#allocation8 + $0xc4] sm:$0xf]
    %v7613 = vld [vmem:[#allocation8 + $0xc8] sm:$0xf]
    %v7614 = vld [vmem:[#allocation8 + $0xcc] sm:$0xf]
    %v7615 = vld [vmem:[#allocation8 + $0xd0] sm:$0xf]
    %v7616 = vld [vmem:[#allocation8 + $0xd4] sm:$0xf]
    %v7617 = vld [vmem:[#allocation8 + $0xd8] sm:$0xf]
    %v7618 = vld [vmem:[#allocation8 + $0xdc] sm:$0xf]
    %v7619 = vld [vmem:[#allocation8 + $0xe0] sm:$0xf]
    %v7620 = vld [vmem:[#allocation8 + $0xe4] sm:$0xf]
    %v7621 = vld [vmem:[#allocation8 + $0xe8] sm:$0xf]
    %v7622 = vld [vmem:[#allocation8 + $0xec] sm:$0xf]
    %v7623 = vld [vmem:[#allocation8 + $0xf0] sm:$0xf]
    %v7624 = vld [vmem:[#allocation8 + $0xf4] sm:$0xf]
    %v7625 = vld [vmem:[#allocation8 + $0xf8] sm:$0xf]
    %v7626 = vld [vmem:[#allocation8 + $0xfc] sm:$0xf]
    %v7627 = vld [vmem:[#allocation8 + $0x100] sm:$0xf]
    %v7628 = vld [vmem:[#allocation8 + $0x104] sm:$0xf]
    %v7629 = vld [vmem:[#allocation8 + $0x108] sm:$0xf]
    %v7630 = vld [vmem:[#allocation8 + $0x10c] sm:$0xf]
    %v7631 = vld [vmem:[#allocation8 + $0x110] sm:$0xf]
    %v7632 = vld [vmem:[#allocation8 + $0x114] sm:$0xf]
    %v7633 = vld [vmem:[#allocation8 + $0x118] sm:$0xf]
    %v7634 = vld [vmem:[#allocation8 + $0x11c] sm:$0xf]
    %v7635 = vld [vmem:[#allocation8 + $0x120] sm:$0xf]
    %v7636 = vld [vmem:[#allocation8 + $0x124] sm:$0xf]
    %v7637 = vld [vmem:[#allocation8 + $0x128] sm:$0xf]
    %v7638 = vld [vmem:[#allocation8 + $0x12c] sm:$0xf]
    %v7639 = vld [vmem:[#allocation8 + $0x130] sm:$0xf]
    %v7640 = vld [vmem:[#allocation8 + $0x134] sm:$0xf]
    %v7641 = vld [vmem:[#allocation8 + $0x138] sm:$0xf]
    %v7642 = vld [vmem:[#allocation8 + $0x13c] sm:$0xf]
    %v7643 = vld [vmem:[#allocation8 + $0x140] sm:$0xf]
    %v7644 = vld [vmem:[#allocation8 + $0x144] sm:$0xf]
    %v7645 = vld [vmem:[#allocation8 + $0x148] sm:$0xf]
    %v7646 = vld [vmem:[#allocation8 + $0x14c] sm:$0xf]
    %v7647 = vld [vmem:[#allocation8 + $0x150] sm:$0xf]
    %v7648 = vld [vmem:[#allocation8 + $0x154] sm:$0xf]
    %v7649 = vld [vmem:[#allocation8 + $0x158] sm:$0xf]
    %v7650 = vld [vmem:[#allocation8 + $0x15c] sm:$0xf]
    %v7651 = vld [vmem:[#allocation8 + $0x160] sm:$0xf]
    %v7652 = vld [vmem:[#allocation8 + $0x164] sm:$0xf]
    %v7653 = vld [vmem:[#allocation8 + $0x168] sm:$0xf]
    %v7654 = vld [vmem:[#allocation8 + $0x16c] sm:$0xf]
    %v7655 = vld [vmem:[#allocation8 + $0x170] sm:$0xf]
    %v7656 = vld [vmem:[#allocation8 + $0x174] sm:$0xf]
    %v7657 = vld [vmem:[#allocation8 + $0x178] sm:$0xf]
    %v7658 = vld [vmem:[#allocation8 + $0x17c] sm:$0xf]
    %v7659 = vld [vmem:[#allocation8 + $0x180] sm:$0xf]
    %v7660 = vld [vmem:[#allocation8 + $0x184] sm:$0xf]
    %v7661 = vld [vmem:[#allocation8 + $0x188] sm:$0xf]
    %v7662 = vld [vmem:[#allocation8 + $0x18c] sm:$0xf]
    %v7663 = vld [vmem:[#allocation8 + $0x190] sm:$0xf]
    %v7664 = vld [vmem:[#allocation8 + $0x194] sm:$0xf]
    %v7665 = vld [vmem:[#allocation8 + $0x198] sm:$0xf]
    %v7666 = vld [vmem:[#allocation8 + $0x19c] sm:$0xf]
    %v7667 = vld [vmem:[#allocation8 + $0x1a0] sm:$0xf]
    %v7668 = vld [vmem:[#allocation8 + $0x1a4] sm:$0xf]
    %v7669 = vld [vmem:[#allocation8 + $0x1a8] sm:$0xf]
    %v7670 = vld [vmem:[#allocation8 + $0x1ac] sm:$0xf]
    %v7671 = vld [vmem:[#allocation8 + $0x1b0] sm:$0xf]
    %v7672 = vld [vmem:[#allocation8 + $0x1b4] sm:$0xf]
    %v7673 = vld [vmem:[#allocation8 + $0x1b8] sm:$0xf]
    %v7674 = vld [vmem:[#allocation8 + $0x1bc] sm:$0xf]
    %v7675 = vld [vmem:[#allocation8 + $0x1c0] sm:$0xf]
    %v7676 = vld [vmem:[#allocation8 + $0x1c4] sm:$0xf]
    %v7677 = vld [vmem:[#allocation8 + $0x1c8] sm:$0xf]
    %v7678 = vld [vmem:[#allocation8 + $0x1cc] sm:$0xf]
    %v7679 = vld [vmem:[#allocation8 + $0x1d0] sm:$0xf]
    %v7680 = vld [vmem:[#allocation8 + $0x1d4] sm:$0xf]
    %v7681 = vld [vmem:[#allocation8 + $0x1d8] sm:$0xf]
    %v7682 = vld [vmem:[#allocation8 + $0x1dc] sm:$0xf]
    %v7683 = vld [vmem:[#allocation8 + $0x1e0] sm:$0xf]
    %v7684 = vld [vmem:[#allocation8 + $0x1e4] sm:$0xf]
    %v7685 = vld [vmem:[#allocation8 + $0x1e8] sm:$0xf]
    %v7686 = vld [vmem:[#allocation8 + $0x1ec] sm:$0xf]
    %v7687 = vld [vmem:[#allocation8 + $0x1f0] sm:$0xf]
    %v7688 = vld [vmem:[#allocation8 + $0x1f4] sm:$0xf]
    %v7689 = vld [vmem:[#allocation8 + $0x1f8] sm:$0xf]
    %v7690 = vld [vmem:[#allocation8 + $0x1fc] sm:$0xf]
    %v7691 = vld [vmem:[#allocation10] sm:$0x1]
    %v7693 = vlaneseq
    %v7694 = vshrl.u32 %v7693, 7
    %v7695 = vsub.s32 0, %v7694
    %v7696 = vrot.slane %v7691, %v7695
    %v7826 = vunpack.c.l.b16 %v7563
    %v7827 = vunpack.c.l.b16 %v7564
    %v7828 = vunpack.c.l.b16 %v7565
    %v7829 = vunpack.c.l.b16 %v7566
    %v7830 = vunpack.c.l.b16 %v7567
    %v7831 = vunpack.c.l.b16 %v7568
    %v7832 = vunpack.c.l.b16 %v7569
    %v7833 = vunpack.c.l.b16 %v7570
    %v7834 = vunpack.c.l.b16 %v7571
    %v7835 = vunpack.c.l.b16 %v7572
    %v7836 = vunpack.c.l.b16 %v7573
    %v7837 = vunpack.c.l.b16 %v7574
    %v7838 = vunpack.c.l.b16 %v7575
    %v7839 = vunpack.c.l.b16 %v7576
    %v7840 = vunpack.c.l.b16 %v7577
    %v7841 = vunpack.c.l.b16 %v7578
    %v7842 = vunpack.c.l.b16 %v7579
    %v7843 = vunpack.c.l.b16 %v7580
    %v7844 = vunpack.c.l.b16 %v7581
    %v7845 = vunpack.c.l.b16 %v7582
    %v7846 = vunpack.c.l.b16 %v7583
    %v7847 = vunpack.c.l.b16 %v7584
    %v7848 = vunpack.c.l.b16 %v7585
    %v7849 = vunpack.c.l.b16 %v7586
    %v7850 = vunpack.c.l.b16 %v7587
    %v7851 = vunpack.c.l.b16 %v7588
    %v7852 = vunpack.c.l.b16 %v7589
    %v7853 = vunpack.c.l.b16 %v7590
    %v7854 = vunpack.c.l.b16 %v7591
    %v7855 = vunpack.c.l.b16 %v7592
    %v7856 = vunpack.c.l.b16 %v7593
    %v7857 = vunpack.c.l.b16 %v7594
    %v7858 = vunpack.c.l.b16 %v7595
    %v7859 = vunpack.c.l.b16 %v7596
    %v7860 = vunpack.c.l.b16 %v7597
    %v7861 = vunpack.c.l.b16 %v7598
    %v7862 = vunpack.c.l.b16 %v7599
    %v7863 = vunpack.c.l.b16 %v7600
    %v7864 = vunpack.c.l.b16 %v7601
    %v7865 = vunpack.c.l.b16 %v7602
    %v7866 = vunpack.c.l.b16 %v7603
    %v7867 = vunpack.c.l.b16 %v7604
    %v7868 = vunpack.c.l.b16 %v7605
    %v7869 = vunpack.c.l.b16 %v7606
    %v7870 = vunpack.c.l.b16 %v7607
    %v7871 = vunpack.c.l.b16 %v7608
    %v7872 = vunpack.c.l.b16 %v7609
    %v7873 = vunpack.c.l.b16 %v7610
    %v7874 = vunpack.c.l.b16 %v7611
    %v7875 = vunpack.c.l.b16 %v7612
    %v7876 = vunpack.c.l.b16 %v7613
    %v7877 = vunpack.c.l.b16 %v7614
    %v7878 = vunpack.c.l.b16 %v7615
    %v7879 = vunpack.c.l.b16 %v7616
    %v7880 = vunpack.c.l.b16 %v7617
    %v7881 = vunpack.c.l.b16 %v7618
    %v7882 = vunpack.c.l.b16 %v7619
    %v7883 = vunpack.c.l.b16 %v7620
    %v7884 = vunpack.c.l.b16 %v7621
    %v7885 = vunpack.c.l.b16 %v7622
    %v7886 = vunpack.c.l.b16 %v7623
    %v7887 = vunpack.c.l.b16 %v7624
    %v7888 = vunpack.c.l.b16 %v7625
    %v7889 = vunpack.c.l.b16 %v7626
    %v7890 = vunpack.c.l.b16 %v7627
    %v7891 = vunpack.c.l.b16 %v7628
    %v7892 = vunpack.c.l.b16 %v7629
    %v7893 = vunpack.c.l.b16 %v7630
    %v7894 = vunpack.c.l.b16 %v7631
    %v7895 = vunpack.c.l.b16 %v7632
    %v7896 = vunpack.c.l.b16 %v7633
    %v7897 = vunpack.c.l.b16 %v7634
    %v7898 = vunpack.c.l.b16 %v7635
    %v7899 = vunpack.c.l.b16 %v7636
    %v7900 = vunpack.c.l.b16 %v7637
    %v7901 = vunpack.c.l.b16 %v7638
    %v7902 = vunpack.c.l.b16 %v7639
    %v7903 = vunpack.c.l.b16 %v7640
    %v7904 = vunpack.c.l.b16 %v7641
    %v7905 = vunpack.c.l.b16 %v7642
    %v7906 = vunpack.c.l.b16 %v7643
    %v7907 = vunpack.c.l.b16 %v7644
    %v7908 = vunpack.c.l.b16 %v7645
    %v7909 = vunpack.c.l.b16 %v7646
    %v7910 = vunpack.c.l.b16 %v7647
    %v7911 = vunpack.c.l.b16 %v7648
    %v7912 = vunpack.c.l.b16 %v7649
    %v7913 = vunpack.c.l.b16 %v7650
    %v7914 = vunpack.c.l.b16 %v7651
    %v7915 = vunpack.c.l.b16 %v7652
    %v7916 = vunpack.c.l.b16 %v7653
    %v7917 = vunpack.c.l.b16 %v7654
    %v7918 = vunpack.c.l.b16 %v7655
    %v7919 = vunpack.c.l.b16 %v7656
    %v7920 = vunpack.c.l.b16 %v7657
    %v7921 = vunpack.c.l.b16 %v7658
    %v7922 = vunpack.c.l.b16 %v7659
    %v7923 = vunpack.c.l.b16 %v7660
    %v7924 = vunpack.c.l.b16 %v7661
    %v7925 = vunpack.c.l.b16 %v7662
    %v7926 = vunpack.c.l.b16 %v7663
    %v7927 = vunpack.c.l.b16 %v7664
    %v7928 = vunpack.c.l.b16 %v7665
    %v7929 = vunpack.c.l.b16 %v7666
    %v7930 = vunpack.c.l.b16 %v7667
    %v7931 = vunpack.c.l.b16 %v7668
    %v7932 = vunpack.c.l.b16 %v7669
    %v7933 = vunpack.c.l.b16 %v7670
    %v7934 = vunpack.c.l.b16 %v7671
    %v7935 = vunpack.c.l.b16 %v7672
    %v7936 = vunpack.c.l.b16 %v7673
    %v7937 = vunpack.c.l.b16 %v7674
    %v7938 = vunpack.c.l.b16 %v7675
    %v7939 = vunpack.c.l.b16 %v7676
    %v7940 = vunpack.c.l.b16 %v7677
    %v7941 = vunpack.c.l.b16 %v7678
    %v7942 = vunpack.c.l.b16 %v7679
    %v7943 = vunpack.c.l.b16 %v7680
    %v7944 = vunpack.c.l.b16 %v7681
    %v7945 = vunpack.c.l.b16 %v7682
    %v7946 = vunpack.c.l.b16 %v7683
    %v7947 = vunpack.c.l.b16 %v7684
    %v7948 = vunpack.c.l.b16 %v7685
    %v7949 = vunpack.c.l.b16 %v7686
    %v7950 = vunpack.c.l.b16 %v7687
    %v7951 = vunpack.c.l.b16 %v7688
    %v7952 = vunpack.c.l.b16 %v7689
    %v7953 = vunpack.c.l.b16 %v7690
    %v7954 = vpack.c.b16 %v7827, %v7826
    %v7955 = vpack.c.b16 %v7829, %v7828
    %v7956 = vpack.c.b16 %v7831, %v7830
    %v7957 = vpack.c.b16 %v7833, %v7832
    %v7958 = vpack.c.b16 %v7835, %v7834
    %v7959 = vpack.c.b16 %v7837, %v7836
    %v7960 = vpack.c.b16 %v7839, %v7838
    %v7961 = vpack.c.b16 %v7841, %v7840
    %v7962 = vpack.c.b16 %v7843, %v7842
    %v7963 = vpack.c.b16 %v7845, %v7844
    %v7964 = vpack.c.b16 %v7847, %v7846
    %v7965 = vpack.c.b16 %v7849, %v7848
    %v7966 = vpack.c.b16 %v7851, %v7850
    %v7967 = vpack.c.b16 %v7853, %v7852
    %v7968 = vpack.c.b16 %v7855, %v7854
    %v7969 = vpack.c.b16 %v7857, %v7856
    %v7970 = vpack.c.b16 %v7859, %v7858
    %v7971 = vpack.c.b16 %v7861, %v7860
    %v7972 = vpack.c.b16 %v7863, %v7862
    %v7973 = vpack.c.b16 %v7865, %v7864
    %v7974 = vpack.c.b16 %v7867, %v7866
    %v7975 = vpack.c.b16 %v7869, %v7868
    %v7976 = vpack.c.b16 %v7871, %v7870
    %v7977 = vpack.c.b16 %v7873, %v7872
    %v7978 = vpack.c.b16 %v7875, %v7874
    %v7979 = vpack.c.b16 %v7877, %v7876
    %v7980 = vpack.c.b16 %v7879, %v7878
    %v7981 = vpack.c.b16 %v7881, %v7880
    %v7982 = vpack.c.b16 %v7883, %v7882
    %v7983 = vpack.c.b16 %v7885, %v7884
    %v7984 = vpack.c.b16 %v7887, %v7886
    %v7985 = vpack.c.b16 %v7889, %v7888
    %v7986 = vpack.c.b16 %v7891, %v7890
    %v7987 = vpack.c.b16 %v7893, %v7892
    %v7988 = vpack.c.b16 %v7895, %v7894
    %v7989 = vpack.c.b16 %v7897, %v7896
    %v7990 = vpack.c.b16 %v7899, %v7898
    %v7991 = vpack.c.b16 %v7901, %v7900
    %v7992 = vpack.c.b16 %v7903, %v7902
    %v7993 = vpack.c.b16 %v7905, %v7904
    %v7994 = vpack.c.b16 %v7907, %v7906
    %v7995 = vpack.c.b16 %v7909, %v7908
    %v7996 = vpack.c.b16 %v7911, %v7910
    %v7997 = vpack.c.b16 %v7913, %v7912
    %v7998 = vpack.c.b16 %v7915, %v7914
    %v7999 = vpack.c.b16 %v7917, %v7916
    %v8000 = vpack.c.b16 %v7919, %v7918
    %v8001 = vpack.c.b16 %v7921, %v7920
    %v8002 = vpack.c.b16 %v7923, %v7922
    %v8003 = vpack.c.b16 %v7925, %v7924
    %v8004 = vpack.c.b16 %v7927, %v7926
    %v8005 = vpack.c.b16 %v7929, %v7928
    %v8006 = vpack.c.b16 %v7931, %v7930
    %v8007 = vpack.c.b16 %v7933, %v7932
    %v8008 = vpack.c.b16 %v7935, %v7934
    %v8009 = vpack.c.b16 %v7937, %v7936
    %v8010 = vpack.c.b16 %v7939, %v7938
    %v8011 = vpack.c.b16 %v7941, %v7940
    %v8012 = vpack.c.b16 %v7943, %v7942
    %v8013 = vpack.c.b16 %v7945, %v7944
    %v8014 = vpack.c.b16 %v7947, %v7946
    %v8015 = vpack.c.b16 %v7949, %v7948
    %v8016 = vpack.c.b16 %v7951, %v7950
    %v8017 = vpack.c.b16 %v7953, %v7952
    %8082 = vmatprep.subr.bf16.mxu0 0
    %8083 = vmatpush1.bf16.msra.mxu0 %v7961
    %8084 = vmatprep.subr.bf16.mxu0 0
    %8085 = vmatpush1.bf16.msra.mxu0 %v7960
    %8086 = vmatprep.subr.bf16.mxu0 0
    %8087 = vmatpush1.bf16.msra.mxu0 %v7959
    %8088 = vmatprep.subr.bf16.mxu0 0
    %8089 = vmatpush1.bf16.msra.mxu0 %v7958
    %8090 = vmatprep.subr.bf16.mxu0 0
    %8091 = vmatpush1.bf16.msra.mxu0 %v7957
    %8092 = vmatprep.subr.bf16.mxu0 0
    %8093 = vmatpush1.bf16.msra.mxu0 %v7956
    %8094 = vmatprep.subr.bf16.mxu0 0
    %8095 = vmatpush1.bf16.msra.mxu0 %v7955
    %8096 = vmatprep.subr.bf16.mxu0 0
    %8097 = vmatpush1.bf16.msra.mxu0 %v7954
    %8098 = vmatprep.subr.bf16.mxu0 0
    %8099 = vmatpush2.bf16.msra.mxu0 %v7969
    %8100 = vmatprep.subr.bf16.mxu0 0
    %8101 = vmatpush2.bf16.msra.mxu0 %v7968
    %8102 = vmatprep.subr.bf16.mxu0 0
    %8103 = vmatpush2.bf16.msra.mxu0 %v7967
    %8104 = vmatprep.subr.bf16.mxu0 0
    %8105 = vmatpush2.bf16.msra.mxu0 %v7966
    %8106 = vmatprep.subr.bf16.mxu0 0
    %8107 = vmatpush2.bf16.msra.mxu0 %v7965
    %8108 = vmatprep.subr.bf16.mxu0 0
    %8109 = vmatpush2.bf16.msra.mxu0 %v7964
    %8110 = vmatprep.subr.bf16.mxu0 0
    %8111 = vmatpush2.bf16.msra.mxu0 %v7963
    %8112 = vmatprep.subr.bf16.mxu0 0
    %8113 = vmatpush2.bf16.msra.mxu0 %v7962
    %8114 = vmatprep.mubr.bf16.mxu0 %v7556
    %8115 = vmatmul.mubr.bf16.gmra.mxu0 %v7555
    %v8116 = vpop.f32.mrf.mxu0
    %v8117 = vadd.f32 %v7696, %v8116
    %v8118 = vpop.f32.mrf.mxu0
    %v8119 = vpop.f32.mrf.mxu0
    %v8120 = vpop.f32.mrf.mxu0
    %8121 = vdwg.mxu0
    %8122 = vmatprep.subr.bf16.mxu0 0
    %8123 = vmatpush1.bf16.msra.mxu0 %v7977
    %8124 = vmatprep.subr.bf16.mxu0 0
    %8125 = vmatpush1.bf16.msra.mxu0 %v7976
    %8126 = vmatprep.subr.bf16.mxu0 0
    %8127 = vmatpush1.bf16.msra.mxu0 %v7975
    %8128 = vmatprep.subr.bf16.mxu0 0
    %8129 = vmatpush1.bf16.msra.mxu0 %v7974
    %8130 = vmatprep.subr.bf16.mxu0 0
    %8131 = vmatpush1.bf16.msra.mxu0 %v7973
    %8132 = vmatprep.subr.bf16.mxu0 0
    %8133 = vmatpush1.bf16.msra.mxu0 %v7972
    %8134 = vmatprep.subr.bf16.mxu0 0
    %8135 = vmatpush1.bf16.msra.mxu0 %v7971
    %8136 = vmatprep.subr.bf16.mxu0 0
    %8137 = vmatpush1.bf16.msra.mxu0 %v7970
    %8138 = vmatprep.subr.bf16.mxu0 0
    %8139 = vmatpush2.bf16.msra.mxu0 %v7985
    %8140 = vmatprep.subr.bf16.mxu0 0
    %8141 = vmatpush2.bf16.msra.mxu0 %v7984
    %8142 = vmatprep.subr.bf16.mxu0 0
    %8143 = vmatpush2.bf16.msra.mxu0 %v7983
    %8144 = vmatprep.subr.bf16.mxu0 0
    %8145 = vmatpush2.bf16.msra.mxu0 %v7982
    %8146 = vmatprep.subr.bf16.mxu0 0
    %8147 = vmatpush2.bf16.msra.mxu0 %v7981
    %8148 = vmatprep.subr.bf16.mxu0 0
    %8149 = vmatpush2.bf16.msra.mxu0 %v7980
    %8150 = vmatprep.subr.bf16.mxu0 0
    %8151 = vmatpush2.bf16.msra.mxu0 %v7979
    %8152 = vmatprep.subr.bf16.mxu0 0
    %8153 = vmatpush2.bf16.msra.mxu0 %v7978
    %8154 = vmatprep.mubr.bf16.mxu0 %v7558
    %8155 = vmatmul.mubr.bf16.gmra.mxu0 %v7557
    %v8156 = vpop.f32.mrf.mxu0
    %v8157 = vadd.f32 %v8117, %v8156
    %v8158 = vpop.f32.mrf.mxu0
    %v8159 = vpop.f32.mrf.mxu0
    %v8160 = vpop.f32.mrf.mxu0
    %8161 = vdwg.mxu0
    %8162 = vmatprep.subr.bf16.mxu0 0
    %8163 = vmatpush1.bf16.msra.mxu0 %v7993
    %8164 = vmatprep.subr.bf16.mxu0 0
    %8165 = vmatpush1.bf16.msra.mxu0 %v7992
    %8166 = vmatprep.subr.bf16.mxu0 0
    %8167 = vmatpush1.bf16.msra.mxu0 %v7991
    %8168 = vmatprep.subr.bf16.mxu0 0
    %8169 = vmatpush1.bf16.msra.mxu0 %v7990
    %8170 = vmatprep.subr.bf16.mxu0 0
    %8171 = vmatpush1.bf16.msra.mxu0 %v7989
    %8172 = vmatprep.subr.bf16.mxu0 0
    %8173 = vmatpush1.bf16.msra.mxu0 %v7988
    %8174 = vmatprep.subr.bf16.mxu0 0
    %8175 = vmatpush1.bf16.msra.mxu0 %v7987
    %8176 = vmatprep.subr.bf16.mxu0 0
    %8177 = vmatpush1.bf16.msra.mxu0 %v7986
    %8178 = vmatprep.subr.bf16.mxu0 0
    %8179 = vmatpush2.bf16.msra.mxu0 %v8001
    %8180 = vmatprep.subr.bf16.mxu0 0
    %8181 = vmatpush2.bf16.msra.mxu0 %v8000
    %8182 = vmatprep.subr.bf16.mxu0 0
    %8183 = vmatpush2.bf16.msra.mxu0 %v7999
    %8184 = vmatprep.subr.bf16.mxu0 0
    %8185 = vmatpush2.bf16.msra.mxu0 %v7998
    %8186 = vmatprep.subr.bf16.mxu0 0
    %8187 = vmatpush2.bf16.msra.mxu0 %v7997
    %8188 = vmatprep.subr.bf16.mxu0 0
    %8189 = vmatpush2.bf16.msra.mxu0 %v7996
    %8190 = vmatprep.subr.bf16.mxu0 0
    %8191 = vmatpush2.bf16.msra.mxu0 %v7995
    %8192 = vmatprep.subr.bf16.mxu0 0
    %8193 = vmatpush2.bf16.msra.mxu0 %v7994
    %8194 = vmatprep.mubr.bf16.mxu0 %v7560
    %8195 = vmatmul.mubr.bf16.gmra.mxu0 %v7559
    %v8196 = vpop.f32.mrf.mxu0
    %v8197 = vadd.f32 %v8157, %v8196
    %v8198 = vpop.f32.mrf.mxu0
    %v8199 = vpop.f32.mrf.mxu0
    %v8200 = vpop.f32.mrf.mxu0
    %8201 = vdwg.mxu0
    %8202 = vmatprep.subr.bf16.mxu0 0
    %8203 = vmatpush1.bf16.msra.mxu0 %v8009
    %8204 = vmatprep.subr.bf16.mxu0 0
    %8205 = vmatpush1.bf16.msra.mxu0 %v8008
    %8206 = vmatprep.subr.bf16.mxu0 0
    %8207 = vmatpush1.bf16.msra.mxu0 %v8007
    %8208 = vmatprep.subr.bf16.mxu0 0
    %8209 = vmatpush1.bf16.msra.mxu0 %v8006
    %8210 = vmatprep.subr.bf16.mxu0 0
    %8211 = vmatpush1.bf16.msra.mxu0 %v8005
    %8212 = vmatprep.subr.bf16.mxu0 0
    %8213 = vmatpush1.bf16.msra.mxu0 %v8004
    %8214 = vmatprep.subr.bf16.mxu0 0
    %8215 = vmatpush1.bf16.msra.mxu0 %v8003
    %8216 = vmatprep.subr.bf16.mxu0 0
    %8217 = vmatpush1.bf16.msra.mxu0 %v8002
    %8218 = vmatprep.subr.bf16.mxu0 0
    %8219 = vmatpush2.bf16.msra.mxu0 %v8017
    %8220 = vmatprep.subr.bf16.mxu0 0
    %8221 = vmatpush2.bf16.msra.mxu0 %v8016
    %8222 = vmatprep.subr.bf16.mxu0 0
    %8223 = vmatpush2.bf16.msra.mxu0 %v8015
    %8224 = vmatprep.subr.bf16.mxu0 0
    %8225 = vmatpush2.bf16.msra.mxu0 %v8014
    %8226 = vmatprep.subr.bf16.mxu0 0
    %8227 = vmatpush2.bf16.msra.mxu0 %v8013
    %8228 = vmatprep.subr.bf16.mxu0 0
    %8229 = vmatpush2.bf16.msra.mxu0 %v8012
    %8230 = vmatprep.subr.bf16.mxu0 0
    %8231 = vmatpush2.bf16.msra.mxu0 %v8011
    %8232 = vmatprep.subr.bf16.mxu0 0
    %8233 = vmatpush2.bf16.msra.mxu0 %v8010
    %8234 = vmatprep.mubr.bf16.mxu0 %v7562
    %8235 = vmatmul.mubr.bf16.gmra.mxu0 %v7561
    %v8236 = vpop.f32.mrf.mxu0
    %v8237 = vadd.f32 %v8197, %v8236
    %v8238 = vpop.f32.mrf.mxu0
    %v8239 = vpop.f32.mrf.mxu0
    %v8240 = vpop.f32.mrf.mxu0
    %8241 = vdwg.mxu0
    %v8242 = vxor.u32 %v8237, 2147483648
    %v8243 = vmul.f32 %v8242, 1.442695
    %v8244 = vpow.pop %v8243
    %v8245 = vadd.f32 %v8244, 1.0
    %v8246 = vrcp.pop %v8245
    %v8247 = vmul.f32 1.0, %v8246
    %8248 = vst [vmem:[#allocation11] sm:$0xff] %v8247
    // Predicated region
    $region42: #{simple_mlp.1} parent=1 // pred_check
      _
    $region43: #{simple_mlp.1} parent=1 // pred_check_branch
      %8250 = sbr.rel (0) target = $region45
    $region44: #{simple_mlp.1} parent=1 // pred_region
      %s8252 = ssub.s32 128, 128
      %8253 = vsyncadd [#allocation4], %s8252
      %s8255 = sshll.u32 [#allocation11], 4
      %s8256 = int_to_ptr.vmem [resolvable:$true] %s8255
      %8258 = dma.vmem_to_hbm [thread:$0]  %s8256, 128, %s5, [#allocation4]
    $region45: #{simple_mlp.1} parent=1 // pred_fallthru
      _
    // Predicated region
    $region46: #{simple_mlp.1} parent=1 // pred_check
      _
    $region47: #{simple_mlp.1} parent=1 // pred_check_branch
      %8260 = sbr.rel (0) target = $region49
    $region48: #{simple_mlp.1} parent=1 // pred_region
      %8261 = dma.done [#allocation4], 128
    $region49: #{simple_mlp.1} parent=1 // pred_fallthru
      _
    %8262 = vsyncpa [#allocation3], 1
    %8263 = vsyncpa [#allocation6], 1
    %8264 = vsyncpa [#allocation9], 1
    %8265 = vsyncpa [#allocation4], 1

</llo_original>
